<compile_context>
chip_gen: v7x
topology: tpu7x:2x2x1
jax: 0.10.0
libtpu: 0.0.40
codegen_flags: <defaults>
</compile_context>

<pallas_src>
import functools

import jax
import jax.numpy as jnp
from jax import lax
from jax.experimental import pallas as pl
from jax.experimental.pallas import tpu as pltpu


LANE = 128
_M_PAD = 512          # M padding / tile granularity (>=85% of HBM roofline)
_TM_MAX = 4096        # absolute cap on the M tile
_PALLAS_MIN_M = 512   # below this, pallas_call launch + DMA priming > compute


def _round_up(x, m):
    return ((x + m - 1) // m) * m


def _physical_vmem_bytes():
    """Per-core physical VMEM, generation aware; conservative fallback (v7x)."""
    try:
        return int(pltpu.get_tpu_info().vmem_capacity_bytes)
    except Exception:
        return 64 << 20


def _choose_tm(Mp, Kp, tn, out_bytes):
    """Kp/VMEM-aware M tile: largest multiple of _M_PAD whose double-buffered
    input + output tiles fit in ~1/4 of physical VMEM, adjusted so the parallel
    grid has >=2 steps when possible (v7x megacore) and divides Mp exactly."""
    budget = _physical_vmem_bytes() // 4
    per_row = 2 * (Kp * 2) + 2 * (tn * out_bytes)   # dbl-buffered bf16 in + out
    tm = (budget // max(per_row, 1)) // _M_PAD * _M_PAD
    tm = max(_M_PAD, min(_TM_MAX, tm))
    tm = min(tm, Mp)
    if Mp > _M_PAD and Mp // tm < 2:
        tm = _round_up(-(-Mp // 2), _M_PAD)          # split across both TCs
    while Mp % tm:                                   # exact division, no extra pad
        tm -= _M_PAD
    return tm


# ---------------------------------------------------------------------------
# Pallas kernel: (M, N)-tiled matmul (bf16 in, f32 accumulate) + bias + LeakyReLU
# ---------------------------------------------------------------------------
def _matmul_bias_act_kernel(x_ref, w_ref, b_ref, o_ref, *, act):
    # x_ref: (tm, Kp) bf16, w_ref: (Kp, tn) bf16, b_ref: (1, tn) f32
    y = jnp.dot(x_ref[...], w_ref[...], preferred_element_type=jnp.float32)
    y = y + b_ref[...]
    if act == "lrelu":
        y = jnp.where(y >= 0.0, y, 0.2 * y)
    o_ref[...] = y.astype(o_ref.dtype)


def _matmul_bias_act_pallas(x, w, b2d, act, out_dtype, tm, tn):
    """x: (Mp, Kp) bf16, w: (Kp, Np) bf16, b2d: (1, Np) f32 -> (Mp, Np)."""
    Mp, Kp = x.shape
    Np = w.shape[1]
    out_bytes = jnp.dtype(out_dtype).itemsize

    # Resident VMEM: double-buffered x/out tiles + (conservatively x2) w + bias.
    resident = (2 * tm * Kp * 2 + 2 * tm * tn * out_bytes
                + 2 * (Kp * tn * 2 + tn * 4))
    vmem_limit = int(min(_physical_vmem_bytes() * 3 // 4,
                         max(resident + (4 << 20), 16 << 20)))

    cost = pl.CostEstimate(
        flops=2 * Mp * Kp * Np,
        transcendentals=0,
        bytes_accessed=Mp * Kp * 2 + Kp * Np * 2 + Np * 4 + Mp * Np * out_bytes,
    )

    kernel = functools.partial(_matmul_bias_act_kernel, act=act)
    # TODO(synk): single-buffer the constant weight/bias blocks with
    # pipeline_mode=pl.Buffered(1) once verified on all target jax versions.
    return pl.pallas_call(
        kernel,
        out_shape=jax.ShapeDtypeStruct((Mp, Np), out_dtype),
        grid_spec=pltpu.PrefetchScalarGridSpec(
            num_scalar_prefetch=0,
            grid=(Mp // tm, Np // tn),
            in_specs=[
                pl.BlockSpec((tm, Kp), lambda i, j: (i, 0)),
                pl.BlockSpec((Kp, tn), lambda i, j: (0, j)),
                pl.BlockSpec((1, tn), lambda i, j: (0, j)),
            ],
            out_specs=pl.BlockSpec((tm, tn), lambda i, j: (i, j)),
        ),
        compiler_params=pltpu.CompilerParams(
            # Every (M, N) tile is independent -> both axes parallel
            # (sharded across v7x's 2 TensorCores).
            dimension_semantics=("parallel", "parallel"),
            vmem_limit_bytes=vmem_limit,
        ),
        cost_estimate=cost,
    )(x, w, b2d)


def _matmul_bias_act(pm, w_mat, bias, act, out_dtype):
    """pm: (M, K) bf16; w_mat: (Kp, Np) bf16 zero-padded; bias: (Np,) f32."""
    M, K = pm.shape
    Kp, Np = w_mat.shape

    if M < _PALLAS_MIN_M:
        # Degenerate tail layers: plain XLA dot (still bf16 in / f32 acc).
        y = jnp.dot(pm, w_mat[:K, :], preferred_element_type=jnp.float32)
        y = y + bias[None, :]
        if act == "lrelu":
            y = jnp.where(y >= 0.0, y, 0.2 * y)
        return y.astype(out_dtype)

    out_bytes = jnp.dtype(out_dtype).itemsize
    # N tile: 256 feeds the full 256-wide MXU on v6e/v7x when cout >= 256;
    # falls back to 128 otherwise (always optimal on v5e's 128x128 MXU).
    tn = 256 if (Np % 256 == 0) else 128
    Mp = _round_up(M, _M_PAD)
    tm = _choose_tm(Mp, Kp, tn, out_bytes)

    if (Mp != M) or (Kp != K):
        pm = jnp.pad(pm, ((0, Mp - M), (0, Kp - K)))
    out = _matmul_bias_act_pallas(pm, w_mat, bias.reshape(1, Np), act,
                                  out_dtype, tm, tn)
    return out[:M]


# ---------------------------------------------------------------------------
# Conv2dLayer forward (zero-pad -> SN conv -> no norm -> act), NHWC bf16
# ---------------------------------------------------------------------------
def _conv2d_layer_nhwc(x, w_mat, bias, cfg, out_dtype):
    """x: (B, H, W, Cin) bf16; w_mat: (Kp, Np) bf16; bias: (Np,) f32."""
    k, stride, padv, cout, act = cfg
    # im2col in NHWC; output feature order is (Cin, kh, kw)-major -> matches
    # the OIHW flattening used when packing w_mat (validated in __main__).
    # TODO(synk): fuse this patch extraction into the Pallas kernel (halo DMA +
    # k*k shifted dots) for the stride-2 layers to kill the HBM round-trip.
    patches = lax.conv_general_dilated_patches(
        x,
        filter_shape=(k, k),
        window_strides=(stride, stride),
        padding=[(padv, padv), (padv, padv)],
        dimension_numbers=("NHWC", "HWIO", "NHWC"),
    )  # (B, Ho, Wo, Cin*k*k)
    B, Ho, Wo, K = patches.shape
    pm = patches.reshape(B * Ho * Wo, K)
    out = _matmul_bias_act(pm, w_mat, bias, act, out_dtype)   # (M, Np)
    return out[:, :cout].reshape(B, Ho, Wo, cout)


# ---------------------------------------------------------------------------
# CODEGANDiscriminator
# ---------------------------------------------------------------------------
def _spectral_normalize(w, n_iter=8):
    # TODO(synk): PyTorch's spectral_norm persists a randomly-initialized u
    # across calls and runs 1 power iteration per forward; this deterministic
    # multi-iteration variant (hoisted to weight-prep time) matches only
    # approximately.
    o = w.shape[0]
    wm = w.reshape(o, -1).astype(jnp.float32)
    u = jnp.ones((o,), jnp.float32) / jnp.sqrt(jnp.float32(o))
    v = wm.T @ u
    for _ in range(n_iter):
        v = wm.T @ u
        v = v / (jnp.linalg.norm(v) + 1e-12)
        u = wm @ v
        u = u / (jnp.linalg.norm(u) + 1e-12)
    sigma = u @ (wm @ v)
    return w / sigma


def make_discriminator_params(key, in_channels=3, base_channels=32, gain=0.02):
    """Returns (weights, cfgs, ref_params): packed kernel weights, static layer
    configs, and plain f32 OIHW weights for the XLA reference."""
    c = base_channels
    layer_defs = [
        (in_channels, c, 7, 1, 3, "lrelu"),
        (c, 2 * c, 4, 2, 1, "lrelu"),
        (2 * c, 4 * c, 4, 2, 1, "lrelu"),
        (4 * c, 4 * c, 4, 2, 1, "lrelu"),
        (4 * c, 4 * c, 4, 2, 1, "lrelu"),
        (4 * c, 1, 4, 2, 1, "none"),
    ]
    weights, cfgs, ref_params = [], [], []
    for i, (cin, cout, k, s, p, act) in enumerate(layer_defs):
        wk = jax.random.fold_in(key, i)
        fan_in, fan_out = cin * k * k, cout * k * k
        std = gain * jnp.sqrt(2.0 / (fan_in + fan_out))   # xavier_normal_ w/ gain
        w = std * jax.random.normal(wk, (cout, cin, k, k), jnp.float32)
        b = jnp.zeros((cout,), jnp.float32)

        w_sn = _spectral_normalize(w)                     # hoisted out of forward
        K = cin * k * k
        Kp = _round_up(K, LANE)
        Np = _round_up(max(cout, 1), LANE)                # lane-dense, cout>128 OK
        w_mat = jnp.pad(w_sn.reshape(cout, K).T, ((0, Kp - K), (0, Np - cout)))
        bias = jnp.pad(b, (0, Np - cout))

        weights.append((w_mat.astype(jnp.bfloat16), bias.astype(jnp.float32)))
        cfgs.append((k, s, p, cout, act))
        ref_params.append((w_sn, b))
    return tuple(weights), tuple(cfgs), ref_params


@functools.partial(jax.jit, static_argnames=("cfgs",))
def codegan_discriminator_forward(x_nchw, weights, cfgs):
    # NCHW only at the module boundary; NHWC + bf16 inside.
    x = jnp.transpose(x_nchw, (0, 2, 3, 1)).astype(jnp.bfloat16)
    n = len(cfgs)
    # TODO(synk): fuse the tiny tail layers (M <= 512) into one VMEM-resident
    # pallas_call to remove per-layer launch + HBM round-trip overhead.
    for i, cfg in enumerate(cfgs):
        w_mat, bias = weights[i]
        out_dtype = jnp.float32 if i == n - 1 else jnp.bfloat16
        x = _conv2d_layer_nhwc(x, w_mat, bias, cfg, out_dtype)
    return jnp.transpose(x, (0, 3, 1, 2))


# ---------------------------------------------------------------------------
# Plain-XLA f32 reference (same spectrally-normalized weights)
# ---------------------------------------------------------------------------
def reference_forward(x, ref_params, cfgs):
    for (w, b), (k, s, p, cout, act) in zip(ref_params, cfgs):
        x = lax.conv_general_dilated(
            x, w, (s, s), [(p, p), (p, p)],
            dimension_numbers=("NCHW", "OIHW", "NCHW"),
            precision=lax.Precision.HIGHEST)
        x = x + b.reshape(1, -1, 1, 1)
        if act == "lrelu":
            x = jnp.where(x >= 0.0, x, 0.2 * x)
    return x


def _check_im2col_ordering():
    """Tight f32 check: conv_general_dilated_patches feature ordering matches
    the OIHW (Cin, kh, kw) flattening used for weight packing."""
    k, s, p, cin, cout = 4, 2, 1, 5, 7
    kx = jax.random.PRNGKey(42)
    x = jax.random.normal(kx, (2, cin, 9, 11), jnp.float32)
    w = jax.random.normal(jax.random.fold_in(kx, 1), (cout, cin, k, k),
                          jnp.float32)
    ref = lax.conv_general_dilated(
        x, w, (s, s), [(p, p), (p, p)],
        dimension_numbers=("NCHW", "OIHW", "NCHW"),
        precision=lax.Precision.HIGHEST)
    xh = jnp.transpose(x, (0, 2, 3, 1))
    patches = lax.conv_general_dilated_patches(
        xh, (k, k), (s, s), [(p, p), (p, p)],
        dimension_numbers=("NHWC", "HWIO", "NHWC"),
        precision=lax.Precision.HIGHEST)
    B, Ho, Wo, K = patches.shape
    got = jnp.dot(patches.reshape(B * Ho * Wo, K), w.reshape(cout, K).T,
                  precision=lax.Precision.HIGHEST)
    got = jnp.transpose(got.reshape(B, Ho, Wo, cout), (0, 3, 1, 2))
    err = float(jnp.max(jnp.abs(got - ref)))
    assert err < 1e-3, f"im2col ordering mismatch, max abs err {err}"


if __name__ == "__main__":
    _check_im2col_ordering()

    key = jax.random.PRNGKey(0)
    xk, pk = jax.random.split(key)

    B, Cin, H, W = 2, 3, 64, 64
    x = jax.random.normal(xk, (B, Cin, H, W), jnp.float32)

    weights, cfgs, ref_params = make_discriminator_params(
        pk, in_channels=Cin, base_channels=8)

    out = codegan_discriminator_forward(x, weights, cfgs=cfgs)
    out = jax.block_until_ready(out)

    # spatial: 64 -> 64 -> 32 -> 16 -> 8 -> 4 -> 2 ; final channels = 1
    assert out.shape == (B, 1, 2, 2), out.shape
    assert out.dtype == jnp.float32

    # Cross-check against plain-XLA f32 reference (loose tol: bf16 activations).
    ref = reference_forward(x, ref_params, cfgs)
    rel_err = float(jnp.max(jnp.abs(out - ref)) / (jnp.max(jnp.abs(ref)) + 1e-8))
    assert rel_err < 0.1, f"rel_err={rel_err}"

    print("KERNEL_OK")
</pallas_src>

<mosaic_0001>
module attributes {stable_mosaic.version = 11 : i64} {
  func.func @_matmul_bias_act_kernel(%arg0: i32, %arg1: i32, %arg2: memref<4096x256xbf16, #tpu.memory_space<vmem>>, %arg3: memref<256x128xbf16, #tpu.memory_space<vmem>>, %arg4: memref<1x128xf32, #tpu.memory_space<vmem>>, %arg5: memref<4096x128xbf16, #tpu.memory_space<vmem>>) attributes {dimension_semantics = [#tpu.dimension_semantics<parallel>, #tpu.dimension_semantics<parallel>], iteration_bounds = array<i64: 2, 1>, scalar_prefetch = 0 : i64, scratch_operands = 0 : i64, tpu.core_type = #tpu.core_type<tc>, window_params = [{transform_indices = @transform_0, window_bounds = array<i64: 4096, 256>}, {transform_indices = @transform_1, window_bounds = array<i64: 256, 128>}, {transform_indices = @transform_2, window_bounds = array<i64: 1, 128>}, {transform_indices = @transform_3, window_bounds = array<i64: 4096, 128>}]} {
    %c0 = arith.constant 0 : index
    %c0_0 = arith.constant 0 : index
    %0 = vector.load %arg2[%c0, %c0_0] : memref<4096x256xbf16, #tpu.memory_space<vmem>>, vector<4096x256xbf16>
    %c0_1 = arith.constant 0 : index
    %c0_2 = arith.constant 0 : index
    %1 = vector.load %arg3[%c0_1, %c0_2] : memref<256x128xbf16, #tpu.memory_space<vmem>>, vector<256x128xbf16>
    %cst = arith.constant dense<0.000000e+00> : vector<4096x128xf32>
    %2 = tpu.matmul %0, %1, %cst {dimension_numbers = #tpu.dot_dimension_numbers<[1], [0], [0], [1], [0, 0, 1, 1], [], []>} : vector<4096x256xbf16>, vector<256x128xbf16>, vector<4096x128xf32> -> vector<4096x128xf32>
    %c0_3 = arith.constant 0 : index
    %c0_4 = arith.constant 0 : index
    %3 = vector.load %arg4[%c0_3, %c0_4] : memref<1x128xf32, #tpu.memory_space<vmem>>, vector<1x128xf32>
    %4 = vector.broadcast %3 : vector<1x128xf32> to vector<4096x128xf32>
    %5 = arith.addf %2, %4 : vector<4096x128xf32>
    %cst_5 = arith.constant 0.000000e+00 : f32
    %6 = vector.broadcast %cst_5 : f32 to vector<4096x128xf32>
    %7 = arith.cmpf oge, %5, %6 : vector<4096x128xf32>
    %cst_6 = arith.constant 2.000000e-01 : f32
    %8 = vector.broadcast %cst_6 : f32 to vector<4096x128xf32>
    %9 = arith.mulf %8, %5 : vector<4096x128xf32>
    %10 = arith.select %7, %5, %9 : vector<4096x128xi1>, vector<4096x128xf32>
    %11 = arith.truncf %10 : vector<4096x128xf32> to vector<4096x128xbf16>
    %c0_7 = arith.constant 0 : index
    %c0_8 = arith.constant 0 : index
    %12 = vector.load %arg5[%c0_7, %c0_8] : memref<4096x128xbf16, #tpu.memory_space<vmem>>, vector<4096x128xbf16>
    tpu.vector_store %arg5[%c0_7, %c0_8], %11 {strides = array<i32>} : memref<4096x128xbf16, #tpu.memory_space<vmem>>, vector<4096x128xbf16>,
    return
  }
  func.func @transform_0(%arg0: i32, %arg1: i32) -> (i32, i32) {
    %c0_i32 = arith.constant 0 : i32
    %c0_i32_0 = arith.constant 0 : i32
    return %arg0, %c0_i32 : i32, i32
  }
  func.func @transform_1(%arg0: i32, %arg1: i32) -> (i32, i32) {
    %c0_i32 = arith.constant 0 : i32
    %c0_i32_0 = arith.constant 0 : i32
    return %c0_i32, %arg1 : i32, i32
  }
  func.func @transform_2(%arg0: i32, %arg1: i32) -> (i32, i32) {
    %c0_i32 = arith.constant 0 : i32
    %c0_i32_0 = arith.constant 0 : i32
    return %c0_i32, %arg1 : i32, i32
  }
  func.func @transform_3(%arg0: i32, %arg1: i32) -> (i32, i32) {
    %c0_i32 = arith.constant 0 : i32
    return %arg0, %arg1 : i32, i32
  }
}

module attributes {stable_mosaic.version = 11 : i64} {
  func.func @_matmul_bias_act_kernel(%arg0: i32, %arg1: i32, %arg2: memref<1024x128xbf16, #tpu.memory_space<vmem>>, %arg3: memref<128x128xbf16, #tpu.memory_space<vmem>>, %arg4: memref<1x128xf32, #tpu.memory_space<vmem>>, %arg5: memref<1024x128xbf16, #tpu.memory_space<vmem>>) attributes {dimension_semantics = [#tpu.dimension_semantics<parallel>, #tpu.dimension_semantics<parallel>], iteration_bounds = array<i64: 2, 1>, scalar_prefetch = 0 : i64, scratch_operands = 0 : i64, tpu.core_type = #tpu.core_type<tc>, window_params = [{transform_indices = @transform_0, window_bounds = array<i64: 1024, 128>}, {transform_indices = @transform_1, window_bounds = array<i64: 128, 128>}, {transform_indices = @transform_2, window_bounds = array<i64: 1, 128>}, {transform_indices = @transform_3, window_bounds = array<i64: 1024, 128>}]} {
    %c0 = arith.constant 0 : index
    %c0_0 = arith.constant 0 : index
    %0 = vector.load %arg2[%c0, %c0_0] : memref<1024x128xbf16, #tpu.memory_space<vmem>>, vector<1024x128xbf16>
    %c0_1 = arith.constant 0 : index
    %c0_2 = arith.constant 0 : index
    %1 = vector.load %arg3[%c0_1, %c0_2] : memref<128x128xbf16, #tpu.memory_space<vmem>>, vector<128x128xbf16>
    %cst = arith.constant dense<0.000000e+00> : vector<1024x128xf32>
    %2 = tpu.matmul %0, %1, %cst {dimension_numbers = #tpu.dot_dimension_numbers<[1], [0], [0], [1], [0, 0, 1, 1], [], []>} : vector<1024x128xbf16>, vector<128x128xbf16>, vector<1024x128xf32> -> vector<1024x128xf32>
    %c0_3 = arith.constant 0 : index
    %c0_4 = arith.constant 0 : index
    %3 = vector.load %arg4[%c0_3, %c0_4] : memref<1x128xf32, #tpu.memory_space<vmem>>, vector<1x128xf32>
    %4 = vector.broadcast %3 : vector<1x128xf32> to vector<1024x128xf32>
    %5 = arith.addf %2, %4 : vector<1024x128xf32>
    %cst_5 = arith.constant 0.000000e+00 : f32
    %6 = vector.broadcast %cst_5 : f32 to vector<1024x128xf32>
    %7 = arith.cmpf oge, %5, %6 : vector<1024x128xf32>
    %cst_6 = arith.constant 2.000000e-01 : f32
    %8 = vector.broadcast %cst_6 : f32 to vector<1024x128xf32>
    %9 = arith.mulf %8, %5 : vector<1024x128xf32>
    %10 = arith.select %7, %5, %9 : vector<1024x128xi1>, vector<1024x128xf32>
    %11 = arith.truncf %10 : vector<1024x128xf32> to vector<1024x128xbf16>
    %c0_7 = arith.constant 0 : index
    %c0_8 = arith.constant 0 : index
    %12 = vector.load %arg5[%c0_7, %c0_8] : memref<1024x128xbf16, #tpu.memory_space<vmem>>, vector<1024x128xbf16>
    tpu.vector_store %arg5[%c0_7, %c0_8], %11 {strides = array<i32>} : memref<1024x128xbf16, #tpu.memory_space<vmem>>, vector<1024x128xbf16>,
    return
  }
  func.func @transform_0(%arg0: i32, %arg1: i32) -> (i32, i32) {
    %c0_i32 = arith.constant 0 : i32
    %c0_i32_0 = arith.constant 0 : i32
    return %arg0, %c0_i32 : i32, i32
  }
  func.func @transform_1(%arg0: i32, %arg1: i32) -> (i32, i32) {
    %c0_i32 = arith.constant 0 : i32
    %c0_i32_0 = arith.constant 0 : i32
    return %c0_i32, %arg1 : i32, i32
  }
  func.func @transform_2(%arg0: i32, %arg1: i32) -> (i32, i32) {
    %c0_i32 = arith.constant 0 : i32
    %c0_i32_0 = arith.constant 0 : i32
    return %c0_i32, %arg1 : i32, i32
  }
  func.func @transform_3(%arg0: i32, %arg1: i32) -> (i32, i32) {
    %c0_i32 = arith.constant 0 : i32
    return %arg0, %arg1 : i32, i32
  }
}

module attributes {stable_mosaic.version = 11 : i64} {
  func.func @_matmul_bias_act_kernel(%arg0: i32, %arg1: i32, %arg2: memref<512x256xbf16, #tpu.memory_space<vmem>>, %arg3: memref<256x128xbf16, #tpu.memory_space<vmem>>, %arg4: memref<1x128xf32, #tpu.memory_space<vmem>>, %arg5: memref<512x128xbf16, #tpu.memory_space<vmem>>) attributes {dimension_semantics = [#tpu.dimension_semantics<parallel>, #tpu.dimension_semantics<parallel>], iteration_bounds = array<i64: 1, 1>, scalar_prefetch = 0 : i64, scratch_operands = 0 : i64, tpu.core_type = #tpu.core_type<tc>, window_params = [{transform_indices = @transform_0, window_bounds = array<i64: 512, 256>}, {transform_indices = @transform_1, window_bounds = array<i64: 256, 128>}, {transform_indices = @transform_2, window_bounds = array<i64: 1, 128>}, {transform_indices = @transform_3, window_bounds = array<i64: 512, 128>}]} {
    %c0 = arith.constant 0 : index
    %c0_0 = arith.constant 0 : index
    %0 = vector.load %arg2[%c0, %c0_0] : memref<512x256xbf16, #tpu.memory_space<vmem>>, vector<512x256xbf16>
    %c0_1 = arith.constant 0 : index
    %c0_2 = arith.constant 0 : index
    %1 = vector.load %arg3[%c0_1, %c0_2] : memref<256x128xbf16, #tpu.memory_space<vmem>>, vector<256x128xbf16>
    %cst = arith.constant dense<0.000000e+00> : vector<512x128xf32>
    %2 = tpu.matmul %0, %1, %cst {dimension_numbers = #tpu.dot_dimension_numbers<[1], [0], [0], [1], [0, 0, 1, 1], [], []>} : vector<512x256xbf16>, vector<256x128xbf16>, vector<512x128xf32> -> vector<512x128xf32>
    %c0_3 = arith.constant 0 : index
    %c0_4 = arith.constant 0 : index
    %3 = vector.load %arg4[%c0_3, %c0_4] : memref<1x128xf32, #tpu.memory_space<vmem>>, vector<1x128xf32>
    %4 = vector.broadcast %3 : vector<1x128xf32> to vector<512x128xf32>
    %5 = arith.addf %2, %4 : vector<512x128xf32>
    %cst_5 = arith.constant 0.000000e+00 : f32
    %6 = vector.broadcast %cst_5 : f32 to vector<512x128xf32>
    %7 = arith.cmpf oge, %5, %6 : vector<512x128xf32>
    %cst_6 = arith.constant 2.000000e-01 : f32
    %8 = vector.broadcast %cst_6 : f32 to vector<512x128xf32>
    %9 = arith.mulf %8, %5 : vector<512x128xf32>
    %10 = arith.select %7, %5, %9 : vector<512x128xi1>, vector<512x128xf32>
    %11 = arith.truncf %10 : vector<512x128xf32> to vector<512x128xbf16>
    %c0_7 = arith.constant 0 : index
    %c0_8 = arith.constant 0 : index
    %12 = vector.load %arg5[%c0_7, %c0_8] : memref<512x128xbf16, #tpu.memory_space<vmem>>, vector<512x128xbf16>
    tpu.vector_store %arg5[%c0_7, %c0_8], %11 {strides = array<i32>} : memref<512x128xbf16, #tpu.memory_space<vmem>>, vector<512x128xbf16>,
    return
  }
  func.func @transform_0(%arg0: i32, %arg1: i32) -> (i32, i32) {
    %c0_i32 = arith.constant 0 : i32
    %c0_i32_0 = arith.constant 0 : i32
    return %arg0, %c0_i32 : i32, i32
  }
  func.func @transform_1(%arg0: i32, %arg1: i32) -> (i32, i32) {
    %c0_i32 = arith.constant 0 : i32
    %c0_i32_0 = arith.constant 0 : i32
    return %c0_i32, %arg1 : i32, i32
  }
  func.func @transform_2(%arg0: i32, %arg1: i32) -> (i32, i32) {
    %c0_i32 = arith.constant 0 : i32
    %c0_i32_0 = arith.constant 0 : i32
    return %c0_i32, %arg1 : i32, i32
  }
  func.func @transform_3(%arg0: i32, %arg1: i32) -> (i32, i32) {
    %c0_i32 = arith.constant 0 : i32
    return %arg0, %arg1 : i32, i32
  }
}

</mosaic_0001>

<llo_original>
// kernel: codegan_discriminator_forward.3
$region0: #{codegan_discriminator_forward.3}
  #allocation0 [shape = 'u32[]', space=smem, size = 0x4, offset = 0x4, fixed_abs, tag = 'smem constant byte address 0x4 - core index']
  #allocation1 [shape = 'u32[144,128]{1,0:T(1,128)}', space=vmem, size = 0x12000, scoped, tag = 'internal scratch']
  %s0 = inlined_call_operand.vmem [shape: bf16[8192,256], index: 0, kind: input, shape index: {}]
  %s1 = inlined_call_operand.vmem [shape: bf16[256,128], index: 1, kind: input, shape index: {}]
  %s2 = inlined_call_operand.vmem [shape: f32[1,128], index: 2, kind: input, shape index: {}]
  %s3 = inlined_call_operand.vmem [shape: bf16[8192,128], index: 3, kind: output, shape index: {}]
  %s4 = sld [smem:[#allocation0]]
  $region45: #{codegan_discriminator_forward.3} parent=0
    _
  %s6 = ssub.s32 1, %s4
  %s7 = scalar_select 0, %s6, %s4
  loop: start=0, step=1, limit=4
  $region2: #{codegan_discriminator_forward.3} parent=0 // loop_pre_header
    _
  $region3: #{codegan_discriminator_forward.3} parent=0 // loop_header
    %s9 = sphi 0, %s13
    %p10 = scmp.ge.s32.totalorder %s9, 4
    %s16 = sphi 0, %s28
    %s17 = sphi 0, %s24
    %s18 = sphi 0, %s16
    %s19 = sphi 0, %s17
    %s20 = sphi 0, %s18
    %s21 = sphi 0, %s19
    %s31 = sphi 0, %s33
    %s34 = sphi 0, %s31
    %s35 = sphi 0, %s34
    %s51 = sphi 0, %s35
    %s57 = sphi 0, %s59
    %s60 = sphi 0, %s57
    %s61 = sphi 0, %s60
    %s77 = sphi 0, %s61
    %s83 = sphi 0, %s85
    %s86 = sphi 0, %s83
    %s87 = sphi 0, %s86
    %s103 = sphi 0, %s87
    %s111 = sphi 0, %s113
    %s114 = sphi 0, %s111
    %s115 = sphi 0, %s114
    %s131 = sphi 0, %s115
  $region4: #{codegan_discriminator_forward.3} parent=0 // loop_header_branch
    %12 = sbr.rel (%p10) target = $region8
  $region5: #{codegan_discriminator_forward.3} parent=0 // loop_body
    %s14 = ssub.s32 %s9, 1
    %s15 = ssub.s32 %s9, 2
    %s22 = sadd.s32 1, %s17
    %p23 = scmp.ge.s32.totalorder %s22, 1
    %s24 = scalar_select %p23, 0, %s22
    %s25 = sadd.s32 1, %s16
    %s26 = scalar_select %p23, %s25, %s16
    %p27 = scmp.ge.s32.totalorder %s26, 2
    %s28 = scalar_select %p27, 0, %s26
    %s29 = ssub.s32 %s16, %s28
    %p30 = scmp.eq.s32.totalorder %s29, 0
    %s32 = sadd.s32 %s31, 1
    %s33 = scalar_select %p30, %s31, %s32
    %p36 = pneg %p30
    %p37 = scmp.eq.s32.totalorder %s9, 1
    %p38 = por %p36, %p37
    %p39 = scmp.ne.s32.totalorder %s31, %s34
    %p40 = scmp.eq.s32.totalorder %s9, 0
    %p41 = por %p39, %p40
    %p42 = scmp.ne.s32.totalorder %s31, %s34
    %p43 = scmp.eq.s32.totalorder %s14, 1
    %p44 = por %p42, %p43
    %p45 = scmp.ne.s32.totalorder %s34, %s35
    %p46 = scmp.eq.s32.totalorder %s14, 0
    %p47 = por %p45, %p46
    %p48 = scmp.ne.s32.totalorder %s34, %s35
    %p49 = scmp.eq.s32.totalorder %s15, 1
    %p50 = por %p48, %p49
    %p52 = scmp.ne.s32.totalorder %s35, %s51
    %p53 = scmp.eq.s32.totalorder %s15, 0
    %p54 = por %p52, %p53
    %s55 = ssub.s32 %s17, %s24
    %p56 = scmp.eq.s32.totalorder %s55, 0
    %s58 = sadd.s32 %s57, 1
    %s59 = scalar_select %p56, %s57, %s58
    %p62 = pneg %p56
    %p63 = scmp.eq.s32.totalorder %s9, 1
    %p64 = por %p62, %p63
    %p65 = scmp.ne.s32.totalorder %s57, %s60
    %p66 = scmp.eq.s32.totalorder %s9, 0
    %p67 = por %p65, %p66
    %p68 = scmp.ne.s32.totalorder %s57, %s60
    %p69 = scmp.eq.s32.totalorder %s14, 1
    %p70 = por %p68, %p69
    %p71 = scmp.ne.s32.totalorder %s60, %s61
    %p72 = scmp.eq.s32.totalorder %s14, 0
    %p73 = por %p71, %p72
    %p74 = scmp.ne.s32.totalorder %s60, %s61
    %p75 = scmp.eq.s32.totalorder %s15, 1
    %p76 = por %p74, %p75
    %p78 = scmp.ne.s32.totalorder %s61, %s77
    %p79 = scmp.eq.s32.totalorder %s15, 0
    %p80 = por %p78, %p79
    %s81 = ssub.s32 %s17, %s24
    %p82 = scmp.eq.s32.totalorder %s81, 0
    %s84 = sadd.s32 %s83, 1
    %s85 = scalar_select %p82, %s83, %s84
    %p88 = pneg %p82
    %p89 = scmp.eq.s32.totalorder %s9, 1
    %p90 = por %p88, %p89
    %p91 = scmp.ne.s32.totalorder %s83, %s86
    %p92 = scmp.eq.s32.totalorder %s9, 0
    %p93 = por %p91, %p92
    %p94 = scmp.ne.s32.totalorder %s83, %s86
    %p95 = scmp.eq.s32.totalorder %s14, 1
    %p96 = por %p94, %p95
    %p97 = scmp.ne.s32.totalorder %s86, %s87
    %p98 = scmp.eq.s32.totalorder %s14, 0
    %p99 = por %p97, %p98
    %p100 = scmp.ne.s32.totalorder %s86, %s87
    %p101 = scmp.eq.s32.totalorder %s15, 1
    %p102 = por %p100, %p101
    %p104 = scmp.ne.s32.totalorder %s87, %s103
    %p105 = scmp.eq.s32.totalorder %s15, 0
    %p106 = por %p104, %p105
    %s107 = ssub.s32 %s16, %s28
    %s108 = ssub.s32 %s17, %s24
    %s109 = sor.u32 %s107, %s108
    %p110 = scmp.eq.s32.totalorder %s109, 0
    %s112 = sadd.s32 %s111, 1
    %s113 = scalar_select %p110, %s111, %s112
    %p116 = pneg %p110
    %p117 = scmp.eq.s32.totalorder %s9, 1
    %p118 = por %p116, %p117
    %p119 = scmp.ne.s32.totalorder %s111, %s114
    %p120 = scmp.eq.s32.totalorder %s9, 0
    %p121 = por %p119, %p120
    %p122 = scmp.ne.s32.totalorder %s111, %s114
    %p123 = scmp.eq.s32.totalorder %s14, 1
    %p124 = por %p122, %p123
    %p125 = scmp.ne.s32.totalorder %s114, %s115
    %p126 = scmp.eq.s32.totalorder %s14, 0
    %p127 = por %p125, %p126
    %p128 = scmp.ne.s32.totalorder %s114, %s115
    %p129 = scmp.eq.s32.totalorder %s15, 1
    %p130 = por %p128, %p129
    %p132 = scmp.ne.s32.totalorder %s115, %s131
    %p133 = scmp.eq.s32.totalorder %s15, 0
    %p134 = por %p132, %p133
    %p135 = scmp.le.s32.totalorder 1, %s9
    %p136 = scmp.lt.s32.totalorder %s9, 3
    %p137 = pnand %p135, %p136
    %p138 = pneg %p137
    // Predicated region
    $region9: #{codegan_discriminator_forward.3} parent=5 // pred_check
      _
    $region10: #{codegan_discriminator_forward.3} parent=5 // pred_check_branch
      %140 = sbr.rel (%p137) target = $region12
    $region11: #{codegan_discriminator_forward.3} parent=5 // pred_region
      %s141 = ssub.s32 %s9, 1
      // Predicated region
      $region13: #{codegan_discriminator_forward.3} parent=11 // pred_check
        %p142 = pneg %p73
      $region14: #{codegan_discriminator_forward.3} parent=11 // pred_check_branch
        %144 = sbr.rel (%p142) target = $region16
      $region15: #{codegan_discriminator_forward.3} parent=11 // pred_region
        %p145 = scmp.lt.s32.totalorder %s19, 0
        %s146 = scalar_select %p145, %s19, 0
        %s147 = smul.addr %s146, 4
        %s148 = scalar_lea.vmem %s1, %s147
      $region16: #{codegan_discriminator_forward.3} parent=11 // pred_fallthru
        _
      // Predicated region
      $region17: #{codegan_discriminator_forward.3} parent=11 // pred_check
        %p149 = pneg %p99
      $region18: #{codegan_discriminator_forward.3} parent=11 // pred_check_branch
        %151 = sbr.rel (%p149) target = $region20
      $region19: #{codegan_discriminator_forward.3} parent=11 // pred_region
        %p152 = scmp.lt.s32.totalorder %s19, 0
        %s153 = scalar_select %p152, %s19, 0
        %s154 = scalar_lea.vmem %s2, %s153
      $region20: #{codegan_discriminator_forward.3} parent=11 // pred_fallthru
        _
    $region12: #{codegan_discriminator_forward.3} parent=5 // pred_fallthru
      _
    %p155 = scmp.lt.s32.totalorder %s9, 2
    // Predicated region
    $region21: #{codegan_discriminator_forward.3} parent=5 // pred_check
      %p156 = pneg %p155
    $region22: #{codegan_discriminator_forward.3} parent=5 // pred_check_branch
      %158 = sbr.rel (%p156) target = $region24
    $region23: #{codegan_discriminator_forward.3} parent=5 // pred_region
      // Predicated region
      $region25: #{codegan_discriminator_forward.3} parent=23 // pred_check
        %p159 = pneg %p41
      $region26: #{codegan_discriminator_forward.3} parent=23 // pred_check_branch
        %161 = sbr.rel (%p159) target = $region28
      $region27: #{codegan_discriminator_forward.3} parent=23 // pred_region
        %s162 = smul.u32 512, %s16
        %p163 = scmp.lt.s32.totalorder %s162, 1023
        %s164 = scalar_select %p163, %s162, 1023
        %s165 = smul.addr %s164, 2
        %s166 = smul.addr %s165, 4
        %s167 = scalar_lea.vmem %s0, %s166
        %s168 = smul.u32 512, %s16
      $region28: #{codegan_discriminator_forward.3} parent=23 // pred_fallthru
        _
    $region24: #{codegan_discriminator_forward.3} parent=5 // pred_fallthru
      _
    %p169 = scmp.le.s32.totalorder 1, %s9
    %p170 = scmp.lt.s32.totalorder %s9, 3
    %p171 = pnand %p169, %p170
    %p172 = pneg %p171
    // Predicated region
    $region29: #{codegan_discriminator_forward.3} parent=5 // pred_check
      _
    $region30: #{codegan_discriminator_forward.3} parent=5 // pred_check_branch
      %174 = sbr.rel (%p171) target = $region32
    $region31: #{codegan_discriminator_forward.3} parent=5 // pred_region
      %s175 = ssub.s32 %s9, 1
      %s176 = smul.u32 512, %s18
      %p177 = scmp.lt.s32.totalorder %s176, 1023
      %s178 = scalar_select %p177, %s176, 1023
      %s179 = smul.addr %s178, 2
      %s180 = smul.addr %s179, 4
      %s181 = scalar_lea.vmem %s0, %s180
      %p182 = pneg %p47
      %p183 = pneg %p44
      %p184 = scmp.lt.s32.totalorder %s19, 0
      %s185 = scalar_select %p184, %s19, 0
      %s186 = smul.addr %s185, 4
      %s187 = scalar_lea.vmem %s1, %s186
      %p188 = pneg %p73
      %p189 = pneg %p70
      %p190 = scmp.lt.s32.totalorder %s19, 0
      %s191 = scalar_select %p190, %s19, 0
      %s192 = scalar_lea.vmem %s2, %s191
      %p193 = pneg %p99
      %p194 = pneg %p96
      %p195 = pneg %p127
      %p196 = pneg %p124
      %s197 = smul.u32 512, %s18
      %p198 = scmp.lt.s32.totalorder %s197, 1023
      %s199 = scalar_select %p198, %s197, 1023
      %p200 = scmp.lt.s32.totalorder %s19, 0
      %s201 = scalar_select %p200, %s19, 0
      %s202 = sadd.s32 %s201, %s199
      %s203 = smul.addr %s202, 4
      %s204 = scalar_lea.vmem %s3, %s203
      %s205 = smul.u32 512, %s18
      %p206 = scmp.lt.s32.totalorder %s205, 1023
      %s207 = scalar_select %p206, %s205, 1023
      %s208 = smul.addr %s207, 2
      %s209 = smul.addr %s208, 4
      %s210 = scalar_lea.vmem %s0, %s209
      %s211 = smul.u32 512, %s18
      %p212 = scmp.lt.s32.totalorder %s19, 0
      %s213 = scalar_select %p212, %s19, 0
      %s214 = smul.addr %s213, 4
      %s215 = scalar_lea.vmem %s1, %s214
      %p216 = scmp.lt.s32.totalorder %s19, 0
      %s217 = scalar_select %p216, %s19, 0
      %s218 = scalar_lea.vmem %s2, %s217
      %s219 = smul.u32 512, %s18
      %p220 = scmp.lt.s32.totalorder %s219, 1023
      %s221 = scalar_select %p220, %s219, 1023
      %p222 = scmp.lt.s32.totalorder %s19, 0
      %s223 = scalar_select %p222, %s19, 0
      %s224 = sadd.s32 %s223, %s221
      %s225 = smul.addr %s224, 4
      %s226 = scalar_lea.vmem %s3, %s225
      %s227 = smul.u32 512, %s18
      %v229 = vld [vmem:[%s210] sm:$0xff]
      %v230 = vld [vmem:[%s210 + $0x8] sm:$0xff]
      %v231 = vld [vmem:[%s210 + $0x10] sm:$0xff]
      %v232 = vld [vmem:[%s210 + $0x18] sm:$0xff]
      %v233 = vld [vmem:[%s210 + $0x20] sm:$0xff]
      %v234 = vld [vmem:[%s210 + $0x28] sm:$0xff]
      %v235 = vld [vmem:[%s210 + $0x30] sm:$0xff]
      %v236 = vld [vmem:[%s210 + $0x38] sm:$0xff]
      %v237 = vld [vmem:[%s210 + $0x40] sm:$0xff]
      %v238 = vld [vmem:[%s210 + $0x48] sm:$0xff]
      %v239 = vld [vmem:[%s210 + $0x50] sm:$0xff]
      %v240 = vld [vmem:[%s210 + $0x58] sm:$0xff]
      %v241 = vld [vmem:[%s210 + $0x60] sm:$0xff]
      %v242 = vld [vmem:[%s210 + $0x68] sm:$0xff]
      %v243 = vld [vmem:[%s210 + $0x70] sm:$0xff]
      %v244 = vld [vmem:[%s210 + $0x78] sm:$0xff]
      %v245 = vld [vmem:[%s210 + $0x80] sm:$0xff]
      %v246 = vld [vmem:[%s210 + $0x88] sm:$0xff]
      %v247 = vld [vmem:[%s210 + $0x90] sm:$0xff]
      %v248 = vld [vmem:[%s210 + $0x98] sm:$0xff]
      %v249 = vld [vmem:[%s210 + $0xa0] sm:$0xff]
      %v250 = vld [vmem:[%s210 + $0xa8] sm:$0xff]
      %v251 = vld [vmem:[%s210 + $0xb0] sm:$0xff]
      %v252 = vld [vmem:[%s210 + $0xb8] sm:$0xff]
      %v253 = vld [vmem:[%s210 + $0xc0] sm:$0xff]
      %v254 = vld [vmem:[%s210 + $0xc8] sm:$0xff]
      %v255 = vld [vmem:[%s210 + $0xd0] sm:$0xff]
      %v256 = vld [vmem:[%s210 + $0xd8] sm:$0xff]
      %v257 = vld [vmem:[%s210 + $0xe0] sm:$0xff]
      %v258 = vld [vmem:[%s210 + $0xe8] sm:$0xff]
      %v259 = vld [vmem:[%s210 + $0xf0] sm:$0xff]
      %v260 = vld [vmem:[%s210 + $0xf8] sm:$0xff]
      %v261 = vld [vmem:[%s210 + $0x100] sm:$0xff]
      %v262 = vld [vmem:[%s210 + $0x108] sm:$0xff]
      %v263 = vld [vmem:[%s210 + $0x110] sm:$0xff]
      %v264 = vld [vmem:[%s210 + $0x118] sm:$0xff]
      %v265 = vld [vmem:[%s210 + $0x120] sm:$0xff]
      %v266 = vld [vmem:[%s210 + $0x128] sm:$0xff]
      %v267 = vld [vmem:[%s210 + $0x130] sm:$0xff]
      %v268 = vld [vmem:[%s210 + $0x138] sm:$0xff]
      %v269 = vld [vmem:[%s210 + $0x140] sm:$0xff]
      %v270 = vld [vmem:[%s210 + $0x148] sm:$0xff]
      %v271 = vld [vmem:[%s210 + $0x150] sm:$0xff]
      %v272 = vld [vmem:[%s210 + $0x158] sm:$0xff]
      %v273 = vld [vmem:[%s210 + $0x160] sm:$0xff]
      %v274 = vld [vmem:[%s210 + $0x168] sm:$0xff]
      %v275 = vld [vmem:[%s210 + $0x170] sm:$0xff]
      %v276 = vld [vmem:[%s210 + $0x178] sm:$0xff]
      %v277 = vld [vmem:[%s210 + $0x180] sm:$0xff]
      %v278 = vld [vmem:[%s210 + $0x188] sm:$0xff]
      %v279 = vld [vmem:[%s210 + $0x190] sm:$0xff]
      %v280 = vld [vmem:[%s210 + $0x198] sm:$0xff]
      %v281 = vld [vmem:[%s210 + $0x1a0] sm:$0xff]
      %v282 = vld [vmem:[%s210 + $0x1a8] sm:$0xff]
      %v283 = vld [vmem:[%s210 + $0x1b0] sm:$0xff]
      %v284 = vld [vmem:[%s210 + $0x1b8] sm:$0xff]
      %v285 = vld [vmem:[%s210 + $0x1c0] sm:$0xff]
      %v286 = vld [vmem:[%s210 + $0x1c8] sm:$0xff]
      %v287 = vld [vmem:[%s210 + $0x1d0] sm:$0xff]
      %v288 = vld [vmem:[%s210 + $0x1d8] sm:$0xff]
      %v289 = vld [vmem:[%s210 + $0x1e0] sm:$0xff]
      %v290 = vld [vmem:[%s210 + $0x1e8] sm:$0xff]
      %v291 = vld [vmem:[%s210 + $0x1f0] sm:$0xff]
      %v292 = vld [vmem:[%s210 + $0x1f8] sm:$0xff]
      %v293 = vld [vmem:[%s210 + $0x200] sm:$0xff]
      %v294 = vld [vmem:[%s210 + $0x208] sm:$0xff]
      %v295 = vld [vmem:[%s210 + $0x210] sm:$0xff]
      %v296 = vld [vmem:[%s210 + $0x218] sm:$0xff]
      %v297 = vld [vmem:[%s210 + $0x220] sm:$0xff]
      %v298 = vld [vmem:[%s210 + $0x228] sm:$0xff]
      %v299 = vld [vmem:[%s210 + $0x230] sm:$0xff]
      %v300 = vld [vmem:[%s210 + $0x238] sm:$0xff]
      %v301 = vld [vmem:[%s210 + $0x240] sm:$0xff]
      %v302 = vld [vmem:[%s210 + $0x248] sm:$0xff]
      %v303 = vld [vmem:[%s210 + $0x250] sm:$0xff]
      %v304 = vld [vmem:[%s210 + $0x258] sm:$0xff]
      %v305 = vld [vmem:[%s210 + $0x260] sm:$0xff]
      %v306 = vld [vmem:[%s210 + $0x268] sm:$0xff]
      %v307 = vld [vmem:[%s210 + $0x270] sm:$0xff]
      %v308 = vld [vmem:[%s210 + $0x278] sm:$0xff]
      %v309 = vld [vmem:[%s210 + $0x280] sm:$0xff]
      %v310 = vld [vmem:[%s210 + $0x288] sm:$0xff]
      %v311 = vld [vmem:[%s210 + $0x290] sm:$0xff]
      %v312 = vld [vmem:[%s210 + $0x298] sm:$0xff]
      %v313 = vld [vmem:[%s210 + $0x2a0] sm:$0xff]
      %v314 = vld [vmem:[%s210 + $0x2a8] sm:$0xff]
      %v315 = vld [vmem:[%s210 + $0x2b0] sm:$0xff]
      %v316 = vld [vmem:[%s210 + $0x2b8] sm:$0xff]
      %v317 = vld [vmem:[%s210 + $0x2c0] sm:$0xff]
      %v318 = vld [vmem:[%s210 + $0x2c8] sm:$0xff]
      %v319 = vld [vmem:[%s210 + $0x2d0] sm:$0xff]
      %v320 = vld [vmem:[%s210 + $0x2d8] sm:$0xff]
      %v321 = vld [vmem:[%s210 + $0x2e0] sm:$0xff]
      %v322 = vld [vmem:[%s210 + $0x2e8] sm:$0xff]
      %v323 = vld [vmem:[%s210 + $0x2f0] sm:$0xff]
      %v324 = vld [vmem:[%s210 + $0x2f8] sm:$0xff]
      %v325 = vld [vmem:[%s210 + $0x300] sm:$0xff]
      %v326 = vld [vmem:[%s210 + $0x308] sm:$0xff]
      %v327 = vld [vmem:[%s210 + $0x310] sm:$0xff]
      %v328 = vld [vmem:[%s210 + $0x318] sm:$0xff]
      %v329 = vld [vmem:[%s210 + $0x320] sm:$0xff]
      %v330 = vld [vmem:[%s210 + $0x328] sm:$0xff]
      %v331 = vld [vmem:[%s210 + $0x330] sm:$0xff]
      %v332 = vld [vmem:[%s210 + $0x338] sm:$0xff]
      %v333 = vld [vmem:[%s210 + $0x340] sm:$0xff]
      %v334 = vld [vmem:[%s210 + $0x348] sm:$0xff]
      %v335 = vld [vmem:[%s210 + $0x350] sm:$0xff]
      %v336 = vld [vmem:[%s210 + $0x358] sm:$0xff]
      %v337 = vld [vmem:[%s210 + $0x360] sm:$0xff]
      %v338 = vld [vmem:[%s210 + $0x368] sm:$0xff]
      %v339 = vld [vmem:[%s210 + $0x370] sm:$0xff]
      %v340 = vld [vmem:[%s210 + $0x378] sm:$0xff]
      %v341 = vld [vmem:[%s210 + $0x380] sm:$0xff]
      %v342 = vld [vmem:[%s210 + $0x388] sm:$0xff]
      %v343 = vld [vmem:[%s210 + $0x390] sm:$0xff]
      %v344 = vld [vmem:[%s210 + $0x398] sm:$0xff]
      %v345 = vld [vmem:[%s210 + $0x3a0] sm:$0xff]
      %v346 = vld [vmem:[%s210 + $0x3a8] sm:$0xff]
      %v347 = vld [vmem:[%s210 + $0x3b0] sm:$0xff]
      %v348 = vld [vmem:[%s210 + $0x3b8] sm:$0xff]
      %v349 = vld [vmem:[%s210 + $0x3c0] sm:$0xff]
      %v350 = vld [vmem:[%s210 + $0x3c8] sm:$0xff]
      %v351 = vld [vmem:[%s210 + $0x3d0] sm:$0xff]
      %v352 = vld [vmem:[%s210 + $0x3d8] sm:$0xff]
      %v353 = vld [vmem:[%s210 + $0x3e0] sm:$0xff]
      %v354 = vld [vmem:[%s210 + $0x3e8] sm:$0xff]
      %v355 = vld [vmem:[%s210 + $0x3f0] sm:$0xff]
      %v356 = vld [vmem:[%s210 + $0x3f8] sm:$0xff]
      %v357 = vld [vmem:[%s210 + $0x400] sm:$0xff]
      %v358 = vld [vmem:[%s210 + $0x408] sm:$0xff]
      %v359 = vld [vmem:[%s210 + $0x410] sm:$0xff]
      %v360 = vld [vmem:[%s210 + $0x418] sm:$0xff]
      %v361 = vld [vmem:[%s210 + $0x420] sm:$0xff]
      %v362 = vld [vmem:[%s210 + $0x428] sm:$0xff]
      %v363 = vld [vmem:[%s210 + $0x430] sm:$0xff]
      %v364 = vld [vmem:[%s210 + $0x438] sm:$0xff]
      %v365 = vld [vmem:[%s210 + $0x440] sm:$0xff]
      %v366 = vld [vmem:[%s210 + $0x448] sm:$0xff]
      %v367 = vld [vmem:[%s210 + $0x450] sm:$0xff]
      %v368 = vld [vmem:[%s210 + $0x458] sm:$0xff]
      %v369 = vld [vmem:[%s210 + $0x460] sm:$0xff]
      %v370 = vld [vmem:[%s210 + $0x468] sm:$0xff]
      %v371 = vld [vmem:[%s210 + $0x470] sm:$0xff]
      %v372 = vld [vmem:[%s210 + $0x478] sm:$0xff]
      %v373 = vld [vmem:[%s210 + $0x480] sm:$0xff]
      %v374 = vld [vmem:[%s210 + $0x488] sm:$0xff]
      %v375 = vld [vmem:[%s210 + $0x490] sm:$0xff]
      %v376 = vld [vmem:[%s210 + $0x498] sm:$0xff]
      %v377 = vld [vmem:[%s210 + $0x4a0] sm:$0xff]
      %v378 = vld [vmem:[%s210 + $0x4a8] sm:$0xff]
      %v379 = vld [vmem:[%s210 + $0x4b0] sm:$0xff]
      %v380 = vld [vmem:[%s210 + $0x4b8] sm:$0xff]
      %v381 = vld [vmem:[%s210 + $0x4c0] sm:$0xff]
      %v382 = vld [vmem:[%s210 + $0x4c8] sm:$0xff]
      %v383 = vld [vmem:[%s210 + $0x4d0] sm:$0xff]
      %v384 = vld [vmem:[%s210 + $0x4d8] sm:$0xff]
      %v385 = vld [vmem:[%s210 + $0x4e0] sm:$0xff]
      %v386 = vld [vmem:[%s210 + $0x4e8] sm:$0xff]
      %v387 = vld [vmem:[%s210 + $0x4f0] sm:$0xff]
      %v388 = vld [vmem:[%s210 + $0x4f8] sm:$0xff]
      %v389 = vld [vmem:[%s210 + $0x500] sm:$0xff]
      %v390 = vld [vmem:[%s210 + $0x508] sm:$0xff]
      %v391 = vld [vmem:[%s210 + $0x510] sm:$0xff]
      %v392 = vld [vmem:[%s210 + $0x518] sm:$0xff]
      %v393 = vld [vmem:[%s210 + $0x520] sm:$0xff]
      %v394 = vld [vmem:[%s210 + $0x528] sm:$0xff]
      %v395 = vld [vmem:[%s210 + $0x530] sm:$0xff]
      %v396 = vld [vmem:[%s210 + $0x538] sm:$0xff]
      %v397 = vld [vmem:[%s210 + $0x540] sm:$0xff]
      %v398 = vld [vmem:[%s210 + $0x548] sm:$0xff]
      %v399 = vld [vmem:[%s210 + $0x550] sm:$0xff]
      %v400 = vld [vmem:[%s210 + $0x558] sm:$0xff]
      %v401 = vld [vmem:[%s210 + $0x560] sm:$0xff]
      %v402 = vld [vmem:[%s210 + $0x568] sm:$0xff]
      %v403 = vld [vmem:[%s210 + $0x570] sm:$0xff]
      %v404 = vld [vmem:[%s210 + $0x578] sm:$0xff]
      %v405 = vld [vmem:[%s210 + $0x580] sm:$0xff]
      %v406 = vld [vmem:[%s210 + $0x588] sm:$0xff]
      %v407 = vld [vmem:[%s210 + $0x590] sm:$0xff]
      %v408 = vld [vmem:[%s210 + $0x598] sm:$0xff]
      %v409 = vld [vmem:[%s210 + $0x5a0] sm:$0xff]
      %v410 = vld [vmem:[%s210 + $0x5a8] sm:$0xff]
      %v411 = vld [vmem:[%s210 + $0x5b0] sm:$0xff]
      %v412 = vld [vmem:[%s210 + $0x5b8] sm:$0xff]
      %v413 = vld [vmem:[%s210 + $0x5c0] sm:$0xff]
      %v414 = vld [vmem:[%s210 + $0x5c8] sm:$0xff]
      %v415 = vld [vmem:[%s210 + $0x5d0] sm:$0xff]
      %v416 = vld [vmem:[%s210 + $0x5d8] sm:$0xff]
      %v417 = vld [vmem:[%s210 + $0x5e0] sm:$0xff]
      %v418 = vld [vmem:[%s210 + $0x5e8] sm:$0xff]
      %v419 = vld [vmem:[%s210 + $0x5f0] sm:$0xff]
      %v420 = vld [vmem:[%s210 + $0x5f8] sm:$0xff]
      %v421 = vld [vmem:[%s210 + $0x600] sm:$0xff]
      %v422 = vld [vmem:[%s210 + $0x608] sm:$0xff]
      %v423 = vld [vmem:[%s210 + $0x610] sm:$0xff]
      %v424 = vld [vmem:[%s210 + $0x618] sm:$0xff]
      %v425 = vld [vmem:[%s210 + $0x620] sm:$0xff]
      %v426 = vld [vmem:[%s210 + $0x628] sm:$0xff]
      %v427 = vld [vmem:[%s210 + $0x630] sm:$0xff]
      %v428 = vld [vmem:[%s210 + $0x638] sm:$0xff]
      %v429 = vld [vmem:[%s210 + $0x640] sm:$0xff]
      %v430 = vld [vmem:[%s210 + $0x648] sm:$0xff]
      %v431 = vld [vmem:[%s210 + $0x650] sm:$0xff]
      %v432 = vld [vmem:[%s210 + $0x658] sm:$0xff]
      %v433 = vld [vmem:[%s210 + $0x660] sm:$0xff]
      %v434 = vld [vmem:[%s210 + $0x668] sm:$0xff]
      %v435 = vld [vmem:[%s210 + $0x670] sm:$0xff]
      %v436 = vld [vmem:[%s210 + $0x678] sm:$0xff]
      %v437 = vld [vmem:[%s210 + $0x680] sm:$0xff]
      %v438 = vld [vmem:[%s210 + $0x688] sm:$0xff]
      %v439 = vld [vmem:[%s210 + $0x690] sm:$0xff]
      %v440 = vld [vmem:[%s210 + $0x698] sm:$0xff]
      %v441 = vld [vmem:[%s210 + $0x6a0] sm:$0xff]
      %v442 = vld [vmem:[%s210 + $0x6a8] sm:$0xff]
      %v443 = vld [vmem:[%s210 + $0x6b0] sm:$0xff]
      %v444 = vld [vmem:[%s210 + $0x6b8] sm:$0xff]
      %v445 = vld [vmem:[%s210 + $0x6c0] sm:$0xff]
      %v446 = vld [vmem:[%s210 + $0x6c8] sm:$0xff]
      %v447 = vld [vmem:[%s210 + $0x6d0] sm:$0xff]
      %v448 = vld [vmem:[%s210 + $0x6d8] sm:$0xff]
      %v449 = vld [vmem:[%s210 + $0x6e0] sm:$0xff]
      %v450 = vld [vmem:[%s210 + $0x6e8] sm:$0xff]
      %v451 = vld [vmem:[%s210 + $0x6f0] sm:$0xff]
      %v452 = vld [vmem:[%s210 + $0x6f8] sm:$0xff]
      %v453 = vld [vmem:[%s210 + $0x700] sm:$0xff]
      %v454 = vld [vmem:[%s210 + $0x708] sm:$0xff]
      %v455 = vld [vmem:[%s210 + $0x710] sm:$0xff]
      %v456 = vld [vmem:[%s210 + $0x718] sm:$0xff]
      %v457 = vld [vmem:[%s210 + $0x720] sm:$0xff]
      %v458 = vld [vmem:[%s210 + $0x728] sm:$0xff]
      %v459 = vld [vmem:[%s210 + $0x730] sm:$0xff]
      %v460 = vld [vmem:[%s210 + $0x738] sm:$0xff]
      %v461 = vld [vmem:[%s210 + $0x740] sm:$0xff]
      %v462 = vld [vmem:[%s210 + $0x748] sm:$0xff]
      %v463 = vld [vmem:[%s210 + $0x750] sm:$0xff]
      %v464 = vld [vmem:[%s210 + $0x758] sm:$0xff]
      %v465 = vld [vmem:[%s210 + $0x760] sm:$0xff]
      %v466 = vld [vmem:[%s210 + $0x768] sm:$0xff]
      %v467 = vld [vmem:[%s210 + $0x770] sm:$0xff]
      %v468 = vld [vmem:[%s210 + $0x778] sm:$0xff]
      %v469 = vld [vmem:[%s210 + $0x780] sm:$0xff]
      %v470 = vld [vmem:[%s210 + $0x788] sm:$0xff]
      %v471 = vld [vmem:[%s210 + $0x790] sm:$0xff]
      %v472 = vld [vmem:[%s210 + $0x798] sm:$0xff]
      %v473 = vld [vmem:[%s210 + $0x7a0] sm:$0xff]
      %v474 = vld [vmem:[%s210 + $0x7a8] sm:$0xff]
      %v475 = vld [vmem:[%s210 + $0x7b0] sm:$0xff]
      %v476 = vld [vmem:[%s210 + $0x7b8] sm:$0xff]
      %v477 = vld [vmem:[%s210 + $0x7c0] sm:$0xff]
      %v478 = vld [vmem:[%s210 + $0x7c8] sm:$0xff]
      %v479 = vld [vmem:[%s210 + $0x7d0] sm:$0xff]
      %v480 = vld [vmem:[%s210 + $0x7d8] sm:$0xff]
      %v481 = vld [vmem:[%s210 + $0x7e0] sm:$0xff]
      %v482 = vld [vmem:[%s210 + $0x7e8] sm:$0xff]
      %v483 = vld [vmem:[%s210 + $0x7f0] sm:$0xff]
      %v484 = vld [vmem:[%s210 + $0x7f8] sm:$0xff]
      %v485 = vld [vmem:[%s210 + $0x800] sm:$0xff]
      %v486 = vld [vmem:[%s210 + $0x808] sm:$0xff]
      %v487 = vld [vmem:[%s210 + $0x810] sm:$0xff]
      %v488 = vld [vmem:[%s210 + $0x818] sm:$0xff]
      %v489 = vld [vmem:[%s210 + $0x820] sm:$0xff]
      %v490 = vld [vmem:[%s210 + $0x828] sm:$0xff]
      %v491 = vld [vmem:[%s210 + $0x830] sm:$0xff]
      %v492 = vld [vmem:[%s210 + $0x838] sm:$0xff]
      %v493 = vld [vmem:[%s210 + $0x840] sm:$0xff]
      %v494 = vld [vmem:[%s210 + $0x848] sm:$0xff]
      %v495 = vld [vmem:[%s210 + $0x850] sm:$0xff]
      %v496 = vld [vmem:[%s210 + $0x858] sm:$0xff]
      %v497 = vld [vmem:[%s210 + $0x860] sm:$0xff]
      %v498 = vld [vmem:[%s210 + $0x868] sm:$0xff]
      %v499 = vld [vmem:[%s210 + $0x870] sm:$0xff]
      %v500 = vld [vmem:[%s210 + $0x878] sm:$0xff]
      %v501 = vld [vmem:[%s210 + $0x880] sm:$0xff]
      %v502 = vld [vmem:[%s210 + $0x888] sm:$0xff]
      %v503 = vld [vmem:[%s210 + $0x890] sm:$0xff]
      %v504 = vld [vmem:[%s210 + $0x898] sm:$0xff]
      %v505 = vld [vmem:[%s210 + $0x8a0] sm:$0xff]
      %v506 = vld [vmem:[%s210 + $0x8a8] sm:$0xff]
      %v507 = vld [vmem:[%s210 + $0x8b0] sm:$0xff]
      %v508 = vld [vmem:[%s210 + $0x8b8] sm:$0xff]
      %v509 = vld [vmem:[%s210 + $0x8c0] sm:$0xff]
      %v510 = vld [vmem:[%s210 + $0x8c8] sm:$0xff]
      %v511 = vld [vmem:[%s210 + $0x8d0] sm:$0xff]
      %v512 = vld [vmem:[%s210 + $0x8d8] sm:$0xff]
      %v513 = vld [vmem:[%s210 + $0x8e0] sm:$0xff]
      %v514 = vld [vmem:[%s210 + $0x8e8] sm:$0xff]
      %v515 = vld [vmem:[%s210 + $0x8f0] sm:$0xff]
      %v516 = vld [vmem:[%s210 + $0x8f8] sm:$0xff]
      %v517 = vld [vmem:[%s210 + $0x900] sm:$0xff]
      %v518 = vld [vmem:[%s210 + $0x908] sm:$0xff]
      %v519 = vld [vmem:[%s210 + $0x910] sm:$0xff]
      %v520 = vld [vmem:[%s210 + $0x918] sm:$0xff]
      %v521 = vld [vmem:[%s210 + $0x920] sm:$0xff]
      %v522 = vld [vmem:[%s210 + $0x928] sm:$0xff]
      %v523 = vld [vmem:[%s210 + $0x930] sm:$0xff]
      %v524 = vld [vmem:[%s210 + $0x938] sm:$0xff]
      %v525 = vld [vmem:[%s210 + $0x940] sm:$0xff]
      %v526 = vld [vmem:[%s210 + $0x948] sm:$0xff]
      %v527 = vld [vmem:[%s210 + $0x950] sm:$0xff]
      %v528 = vld [vmem:[%s210 + $0x958] sm:$0xff]
      %v529 = vld [vmem:[%s210 + $0x960] sm:$0xff]
      %v530 = vld [vmem:[%s210 + $0x968] sm:$0xff]
      %v531 = vld [vmem:[%s210 + $0x970] sm:$0xff]
      %v532 = vld [vmem:[%s210 + $0x978] sm:$0xff]
      %v533 = vld [vmem:[%s210 + $0x980] sm:$0xff]
      %v534 = vld [vmem:[%s210 + $0x988] sm:$0xff]
      %v535 = vld [vmem:[%s210 + $0x990] sm:$0xff]
      %v536 = vld [vmem:[%s210 + $0x998] sm:$0xff]
      %v537 = vld [vmem:[%s210 + $0x9a0] sm:$0xff]
      %v538 = vld [vmem:[%s210 + $0x9a8] sm:$0xff]
      %v539 = vld [vmem:[%s210 + $0x9b0] sm:$0xff]
      %v540 = vld [vmem:[%s210 + $0x9b8] sm:$0xff]
      %v541 = vld [vmem:[%s210 + $0x9c0] sm:$0xff]
      %v542 = vld [vmem:[%s210 + $0x9c8] sm:$0xff]
      %v543 = vld [vmem:[%s210 + $0x9d0] sm:$0xff]
      %v544 = vld [vmem:[%s210 + $0x9d8] sm:$0xff]
      %v545 = vld [vmem:[%s210 + $0x9e0] sm:$0xff]
      %v546 = vld [vmem:[%s210 + $0x9e8] sm:$0xff]
      %v547 = vld [vmem:[%s210 + $0x9f0] sm:$0xff]
      %v548 = vld [vmem:[%s210 + $0x9f8] sm:$0xff]
      %v549 = vld [vmem:[%s210 + $0xa00] sm:$0xff]
      %v550 = vld [vmem:[%s210 + $0xa08] sm:$0xff]
      %v551 = vld [vmem:[%s210 + $0xa10] sm:$0xff]
      %v552 = vld [vmem:[%s210 + $0xa18] sm:$0xff]
      %v553 = vld [vmem:[%s210 + $0xa20] sm:$0xff]
      %v554 = vld [vmem:[%s210 + $0xa28] sm:$0xff]
      %v555 = vld [vmem:[%s210 + $0xa30] sm:$0xff]
      %v556 = vld [vmem:[%s210 + $0xa38] sm:$0xff]
      %v557 = vld [vmem:[%s210 + $0xa40] sm:$0xff]
      %v558 = vld [vmem:[%s210 + $0xa48] sm:$0xff]
      %v559 = vld [vmem:[%s210 + $0xa50] sm:$0xff]
      %v560 = vld [vmem:[%s210 + $0xa58] sm:$0xff]
      %v561 = vld [vmem:[%s210 + $0xa60] sm:$0xff]
      %v562 = vld [vmem:[%s210 + $0xa68] sm:$0xff]
      %v563 = vld [vmem:[%s210 + $0xa70] sm:$0xff]
      %v564 = vld [vmem:[%s210 + $0xa78] sm:$0xff]
      %v565 = vld [vmem:[%s210 + $0xa80] sm:$0xff]
      %v566 = vld [vmem:[%s210 + $0xa88] sm:$0xff]
      %v567 = vld [vmem:[%s210 + $0xa90] sm:$0xff]
      %v568 = vld [vmem:[%s210 + $0xa98] sm:$0xff]
      %v569 = vld [vmem:[%s210 + $0xaa0] sm:$0xff]
      %v570 = vld [vmem:[%s210 + $0xaa8] sm:$0xff]
      %v571 = vld [vmem:[%s210 + $0xab0] sm:$0xff]
      %v572 = vld [vmem:[%s210 + $0xab8] sm:$0xff]
      %v573 = vld [vmem:[%s210 + $0xac0] sm:$0xff]
      %v574 = vld [vmem:[%s210 + $0xac8] sm:$0xff]
      %v575 = vld [vmem:[%s210 + $0xad0] sm:$0xff]
      %v576 = vld [vmem:[%s210 + $0xad8] sm:$0xff]
      %v577 = vld [vmem:[%s210 + $0xae0] sm:$0xff]
      %v578 = vld [vmem:[%s210 + $0xae8] sm:$0xff]
      %v579 = vld [vmem:[%s210 + $0xaf0] sm:$0xff]
      %v580 = vld [vmem:[%s210 + $0xaf8] sm:$0xff]
      %v581 = vld [vmem:[%s210 + $0xb00] sm:$0xff]
      %v582 = vld [vmem:[%s210 + $0xb08] sm:$0xff]
      %v583 = vld [vmem:[%s210 + $0xb10] sm:$0xff]
      %v584 = vld [vmem:[%s210 + $0xb18] sm:$0xff]
      %v585 = vld [vmem:[%s210 + $0xb20] sm:$0xff]
      %v586 = vld [vmem:[%s210 + $0xb28] sm:$0xff]
      %v587 = vld [vmem:[%s210 + $0xb30] sm:$0xff]
      %v588 = vld [vmem:[%s210 + $0xb38] sm:$0xff]
      %v589 = vld [vmem:[%s210 + $0xb40] sm:$0xff]
      %v590 = vld [vmem:[%s210 + $0xb48] sm:$0xff]
      %v591 = vld [vmem:[%s210 + $0xb50] sm:$0xff]
      %v592 = vld [vmem:[%s210 + $0xb58] sm:$0xff]
      %v593 = vld [vmem:[%s210 + $0xb60] sm:$0xff]
      %v594 = vld [vmem:[%s210 + $0xb68] sm:$0xff]
      %v595 = vld [vmem:[%s210 + $0xb70] sm:$0xff]
      %v596 = vld [vmem:[%s210 + $0xb78] sm:$0xff]
      %v597 = vld [vmem:[%s210 + $0xb80] sm:$0xff]
      %v598 = vld [vmem:[%s210 + $0xb88] sm:$0xff]
      %v599 = vld [vmem:[%s210 + $0xb90] sm:$0xff]
      %v600 = vld [vmem:[%s210 + $0xb98] sm:$0xff]
      %v601 = vld [vmem:[%s210 + $0xba0] sm:$0xff]
      %v602 = vld [vmem:[%s210 + $0xba8] sm:$0xff]
      %v603 = vld [vmem:[%s210 + $0xbb0] sm:$0xff]
      %v604 = vld [vmem:[%s210 + $0xbb8] sm:$0xff]
      %v605 = vld [vmem:[%s210 + $0xbc0] sm:$0xff]
      %v606 = vld [vmem:[%s210 + $0xbc8] sm:$0xff]
      %v607 = vld [vmem:[%s210 + $0xbd0] sm:$0xff]
      %v608 = vld [vmem:[%s210 + $0xbd8] sm:$0xff]
      %v609 = vld [vmem:[%s210 + $0xbe0] sm:$0xff]
      %v610 = vld [vmem:[%s210 + $0xbe8] sm:$0xff]
      %v611 = vld [vmem:[%s210 + $0xbf0] sm:$0xff]
      %v612 = vld [vmem:[%s210 + $0xbf8] sm:$0xff]
      %v613 = vld [vmem:[%s210 + $0xc00] sm:$0xff]
      %v614 = vld [vmem:[%s210 + $0xc08] sm:$0xff]
      %v615 = vld [vmem:[%s210 + $0xc10] sm:$0xff]
      %v616 = vld [vmem:[%s210 + $0xc18] sm:$0xff]
      %v617 = vld [vmem:[%s210 + $0xc20] sm:$0xff]
      %v618 = vld [vmem:[%s210 + $0xc28] sm:$0xff]
      %v619 = vld [vmem:[%s210 + $0xc30] sm:$0xff]
      %v620 = vld [vmem:[%s210 + $0xc38] sm:$0xff]
      %v621 = vld [vmem:[%s210 + $0xc40] sm:$0xff]
      %v622 = vld [vmem:[%s210 + $0xc48] sm:$0xff]
      %v623 = vld [vmem:[%s210 + $0xc50] sm:$0xff]
      %v624 = vld [vmem:[%s210 + $0xc58] sm:$0xff]
      %v625 = vld [vmem:[%s210 + $0xc60] sm:$0xff]
      %v626 = vld [vmem:[%s210 + $0xc68] sm:$0xff]
      %v627 = vld [vmem:[%s210 + $0xc70] sm:$0xff]
      %v628 = vld [vmem:[%s210 + $0xc78] sm:$0xff]
      %v629 = vld [vmem:[%s210 + $0xc80] sm:$0xff]
      %v630 = vld [vmem:[%s210 + $0xc88] sm:$0xff]
      %v631 = vld [vmem:[%s210 + $0xc90] sm:$0xff]
      %v632 = vld [vmem:[%s210 + $0xc98] sm:$0xff]
      %v633 = vld [vmem:[%s210 + $0xca0] sm:$0xff]
      %v634 = vld [vmem:[%s210 + $0xca8] sm:$0xff]
      %v635 = vld [vmem:[%s210 + $0xcb0] sm:$0xff]
      %v636 = vld [vmem:[%s210 + $0xcb8] sm:$0xff]
      %v637 = vld [vmem:[%s210 + $0xcc0] sm:$0xff]
      %v638 = vld [vmem:[%s210 + $0xcc8] sm:$0xff]
      %v639 = vld [vmem:[%s210 + $0xcd0] sm:$0xff]
      %v640 = vld [vmem:[%s210 + $0xcd8] sm:$0xff]
      %v641 = vld [vmem:[%s210 + $0xce0] sm:$0xff]
      %v642 = vld [vmem:[%s210 + $0xce8] sm:$0xff]
      %v643 = vld [vmem:[%s210 + $0xcf0] sm:$0xff]
      %v644 = vld [vmem:[%s210 + $0xcf8] sm:$0xff]
      %v645 = vld [vmem:[%s210 + $0xd00] sm:$0xff]
      %v646 = vld [vmem:[%s210 + $0xd08] sm:$0xff]
      %v647 = vld [vmem:[%s210 + $0xd10] sm:$0xff]
      %v648 = vld [vmem:[%s210 + $0xd18] sm:$0xff]
      %v649 = vld [vmem:[%s210 + $0xd20] sm:$0xff]
      %v650 = vld [vmem:[%s210 + $0xd28] sm:$0xff]
      %v651 = vld [vmem:[%s210 + $0xd30] sm:$0xff]
      %v652 = vld [vmem:[%s210 + $0xd38] sm:$0xff]
      %v653 = vld [vmem:[%s210 + $0xd40] sm:$0xff]
      %v654 = vld [vmem:[%s210 + $0xd48] sm:$0xff]
      %v655 = vld [vmem:[%s210 + $0xd50] sm:$0xff]
      %v656 = vld [vmem:[%s210 + $0xd58] sm:$0xff]
      %v657 = vld [vmem:[%s210 + $0xd60] sm:$0xff]
      %v658 = vld [vmem:[%s210 + $0xd68] sm:$0xff]
      %v659 = vld [vmem:[%s210 + $0xd70] sm:$0xff]
      %v660 = vld [vmem:[%s210 + $0xd78] sm:$0xff]
      %v661 = vld [vmem:[%s210 + $0xd80] sm:$0xff]
      %v662 = vld [vmem:[%s210 + $0xd88] sm:$0xff]
      %v663 = vld [vmem:[%s210 + $0xd90] sm:$0xff]
      %v664 = vld [vmem:[%s210 + $0xd98] sm:$0xff]
      %v665 = vld [vmem:[%s210 + $0xda0] sm:$0xff]
      %v666 = vld [vmem:[%s210 + $0xda8] sm:$0xff]
      %v667 = vld [vmem:[%s210 + $0xdb0] sm:$0xff]
      %v668 = vld [vmem:[%s210 + $0xdb8] sm:$0xff]
      %v669 = vld [vmem:[%s210 + $0xdc0] sm:$0xff]
      %v670 = vld [vmem:[%s210 + $0xdc8] sm:$0xff]
      %v671 = vld [vmem:[%s210 + $0xdd0] sm:$0xff]
      %v672 = vld [vmem:[%s210 + $0xdd8] sm:$0xff]
      %v673 = vld [vmem:[%s210 + $0xde0] sm:$0xff]
      %v674 = vld [vmem:[%s210 + $0xde8] sm:$0xff]
      %v675 = vld [vmem:[%s210 + $0xdf0] sm:$0xff]
      %v676 = vld [vmem:[%s210 + $0xdf8] sm:$0xff]
      %v677 = vld [vmem:[%s210 + $0xe00] sm:$0xff]
      %v678 = vld [vmem:[%s210 + $0xe08] sm:$0xff]
      %v679 = vld [vmem:[%s210 + $0xe10] sm:$0xff]
      %v680 = vld [vmem:[%s210 + $0xe18] sm:$0xff]
      %v681 = vld [vmem:[%s210 + $0xe20] sm:$0xff]
      %v682 = vld [vmem:[%s210 + $0xe28] sm:$0xff]
      %v683 = vld [vmem:[%s210 + $0xe30] sm:$0xff]
      %v684 = vld [vmem:[%s210 + $0xe38] sm:$0xff]
      %v685 = vld [vmem:[%s210 + $0xe40] sm:$0xff]
      %v686 = vld [vmem:[%s210 + $0xe48] sm:$0xff]
      %v687 = vld [vmem:[%s210 + $0xe50] sm:$0xff]
      %v688 = vld [vmem:[%s210 + $0xe58] sm:$0xff]
      %v689 = vld [vmem:[%s210 + $0xe60] sm:$0xff]
      %v690 = vld [vmem:[%s210 + $0xe68] sm:$0xff]
      %v691 = vld [vmem:[%s210 + $0xe70] sm:$0xff]
      %v692 = vld [vmem:[%s210 + $0xe78] sm:$0xff]
      %v693 = vld [vmem:[%s210 + $0xe80] sm:$0xff]
      %v694 = vld [vmem:[%s210 + $0xe88] sm:$0xff]
      %v695 = vld [vmem:[%s210 + $0xe90] sm:$0xff]
      %v696 = vld [vmem:[%s210 + $0xe98] sm:$0xff]
      %v697 = vld [vmem:[%s210 + $0xea0] sm:$0xff]
      %v698 = vld [vmem:[%s210 + $0xea8] sm:$0xff]
      %v699 = vld [vmem:[%s210 + $0xeb0] sm:$0xff]
      %v700 = vld [vmem:[%s210 + $0xeb8] sm:$0xff]
      %v701 = vld [vmem:[%s210 + $0xec0] sm:$0xff]
      %v702 = vld [vmem:[%s210 + $0xec8] sm:$0xff]
      %v703 = vld [vmem:[%s210 + $0xed0] sm:$0xff]
      %v704 = vld [vmem:[%s210 + $0xed8] sm:$0xff]
      %v705 = vld [vmem:[%s210 + $0xee0] sm:$0xff]
      %v706 = vld [vmem:[%s210 + $0xee8] sm:$0xff]
      %v707 = vld [vmem:[%s210 + $0xef0] sm:$0xff]
      %v708 = vld [vmem:[%s210 + $0xef8] sm:$0xff]
      %v709 = vld [vmem:[%s210 + $0xf00] sm:$0xff]
      %v710 = vld [vmem:[%s210 + $0xf08] sm:$0xff]
      %v711 = vld [vmem:[%s210 + $0xf10] sm:$0xff]
      %v712 = vld [vmem:[%s210 + $0xf18] sm:$0xff]
      %v713 = vld [vmem:[%s210 + $0xf20] sm:$0xff]
      %v714 = vld [vmem:[%s210 + $0xf28] sm:$0xff]
      %v715 = vld [vmem:[%s210 + $0xf30] sm:$0xff]
      %v716 = vld [vmem:[%s210 + $0xf38] sm:$0xff]
      %v717 = vld [vmem:[%s210 + $0xf40] sm:$0xff]
      %v718 = vld [vmem:[%s210 + $0xf48] sm:$0xff]
      %v719 = vld [vmem:[%s210 + $0xf50] sm:$0xff]
      %v720 = vld [vmem:[%s210 + $0xf58] sm:$0xff]
      %v721 = vld [vmem:[%s210 + $0xf60] sm:$0xff]
      %v722 = vld [vmem:[%s210 + $0xf68] sm:$0xff]
      %v723 = vld [vmem:[%s210 + $0xf70] sm:$0xff]
      %v724 = vld [vmem:[%s210 + $0xf78] sm:$0xff]
      %v725 = vld [vmem:[%s210 + $0xf80] sm:$0xff]
      %v726 = vld [vmem:[%s210 + $0xf88] sm:$0xff]
      %v727 = vld [vmem:[%s210 + $0xf90] sm:$0xff]
      %v728 = vld [vmem:[%s210 + $0xf98] sm:$0xff]
      %v729 = vld [vmem:[%s210 + $0xfa0] sm:$0xff]
      %v730 = vld [vmem:[%s210 + $0xfa8] sm:$0xff]
      %v731 = vld [vmem:[%s210 + $0xfb0] sm:$0xff]
      %v732 = vld [vmem:[%s210 + $0xfb8] sm:$0xff]
      %v733 = vld [vmem:[%s210 + $0xfc0] sm:$0xff]
      %v734 = vld [vmem:[%s210 + $0xfc8] sm:$0xff]
      %v735 = vld [vmem:[%s210 + $0xfd0] sm:$0xff]
      %v736 = vld [vmem:[%s210 + $0xfd8] sm:$0xff]
      %v737 = vld [vmem:[%s210 + $0xfe0] sm:$0xff]
      %v738 = vld [vmem:[%s210 + $0xfe8] sm:$0xff]
      %v739 = vld [vmem:[%s210 + $0xff0] sm:$0xff]
      %v740 = vld [vmem:[%s210 + $0xff8] sm:$0xff]
      %v741 = vld [vmem:[%s215] sm:$0xf]
      %v742 = vld [vmem:[%s215 + $0x4] sm:$0xf]
      %v743 = vld [vmem:[%s215 + $0x8] sm:$0xf]
      %v744 = vld [vmem:[%s215 + $0xc] sm:$0xf]
      %v745 = vld [vmem:[%s215 + $0x10] sm:$0xf]
      %v746 = vld [vmem:[%s215 + $0x14] sm:$0xf]
      %v747 = vld [vmem:[%s215 + $0x18] sm:$0xf]
      %v748 = vld [vmem:[%s215 + $0x1c] sm:$0xf]
      %v749 = vld [vmem:[%s215 + $0x20] sm:$0xf]
      %v750 = vld [vmem:[%s215 + $0x24] sm:$0xf]
      %v751 = vld [vmem:[%s215 + $0x28] sm:$0xf]
      %v752 = vld [vmem:[%s215 + $0x2c] sm:$0xf]
      %v753 = vld [vmem:[%s215 + $0x30] sm:$0xf]
      %v754 = vld [vmem:[%s215 + $0x34] sm:$0xf]
      %v755 = vld [vmem:[%s215 + $0x38] sm:$0xf]
      %v756 = vld [vmem:[%s215 + $0x3c] sm:$0xf]
      %v757 = vld [vmem:[%s215 + $0x40] sm:$0xf]
      %v758 = vld [vmem:[%s215 + $0x44] sm:$0xf]
      %v759 = vld [vmem:[%s215 + $0x48] sm:$0xf]
      %v760 = vld [vmem:[%s215 + $0x4c] sm:$0xf]
      %v761 = vld [vmem:[%s215 + $0x50] sm:$0xf]
      %v762 = vld [vmem:[%s215 + $0x54] sm:$0xf]
      %v763 = vld [vmem:[%s215 + $0x58] sm:$0xf]
      %v764 = vld [vmem:[%s215 + $0x5c] sm:$0xf]
      %v765 = vld [vmem:[%s215 + $0x60] sm:$0xf]
      %v766 = vld [vmem:[%s215 + $0x64] sm:$0xf]
      %v767 = vld [vmem:[%s215 + $0x68] sm:$0xf]
      %v768 = vld [vmem:[%s215 + $0x6c] sm:$0xf]
      %v769 = vld [vmem:[%s215 + $0x70] sm:$0xf]
      %v770 = vld [vmem:[%s215 + $0x74] sm:$0xf]
      %v771 = vld [vmem:[%s215 + $0x78] sm:$0xf]
      %v772 = vld [vmem:[%s215 + $0x7c] sm:$0xf]
      %v773 = vld [vmem:[%s218] sm:$0x1]
      %v775 = vlaneseq
      %v776 = vshrl.u32 %v775, 7
      %v777 = vsub.s32 0, %v776
      %v778 = vrot.slane %v773, %v777
      %v1292 = vunpack.c.l.b16 %v229
      %v1293 = vunpack.c.h.b16 %v229
      %v1294 = vunpack.c.l.b16 %v230
      %v1295 = vunpack.c.h.b16 %v230
      %v1296 = vunpack.c.l.b16 %v231
      %v1297 = vunpack.c.h.b16 %v231
      %v1298 = vunpack.c.l.b16 %v232
      %v1299 = vunpack.c.h.b16 %v232
      %v1300 = vunpack.c.l.b16 %v233
      %v1301 = vunpack.c.h.b16 %v233
      %v1302 = vunpack.c.l.b16 %v234
      %v1303 = vunpack.c.h.b16 %v234
      %v1304 = vunpack.c.l.b16 %v235
      %v1305 = vunpack.c.h.b16 %v235
      %v1306 = vunpack.c.l.b16 %v236
      %v1307 = vunpack.c.h.b16 %v236
      %v1308 = vunpack.c.l.b16 %v237
      %v1309 = vunpack.c.h.b16 %v237
      %v1310 = vunpack.c.l.b16 %v238
      %v1311 = vunpack.c.h.b16 %v238
      %v1312 = vunpack.c.l.b16 %v239
      %v1313 = vunpack.c.h.b16 %v239
      %v1314 = vunpack.c.l.b16 %v240
      %v1315 = vunpack.c.h.b16 %v240
      %v1316 = vunpack.c.l.b16 %v241
      %v1317 = vunpack.c.h.b16 %v241
      %v1318 = vunpack.c.l.b16 %v242
      %v1319 = vunpack.c.h.b16 %v242
      %v1320 = vunpack.c.l.b16 %v243
      %v1321 = vunpack.c.h.b16 %v243
      %v1322 = vunpack.c.l.b16 %v244
      %v1323 = vunpack.c.h.b16 %v244
      %v1324 = vunpack.c.l.b16 %v245
      %v1325 = vunpack.c.h.b16 %v245
      %v1326 = vunpack.c.l.b16 %v246
      %v1327 = vunpack.c.h.b16 %v246
      %v1328 = vunpack.c.l.b16 %v247
      %v1329 = vunpack.c.h.b16 %v247
      %v1330 = vunpack.c.l.b16 %v248
      %v1331 = vunpack.c.h.b16 %v248
      %v1332 = vunpack.c.l.b16 %v249
      %v1333 = vunpack.c.h.b16 %v249
      %v1334 = vunpack.c.l.b16 %v250
      %v1335 = vunpack.c.h.b16 %v250
      %v1336 = vunpack.c.l.b16 %v251
      %v1337 = vunpack.c.h.b16 %v251
      %v1338 = vunpack.c.l.b16 %v252
      %v1339 = vunpack.c.h.b16 %v252
      %v1340 = vunpack.c.l.b16 %v253
      %v1341 = vunpack.c.h.b16 %v253
      %v1342 = vunpack.c.l.b16 %v254
      %v1343 = vunpack.c.h.b16 %v254
      %v1344 = vunpack.c.l.b16 %v255
      %v1345 = vunpack.c.h.b16 %v255
      %v1346 = vunpack.c.l.b16 %v256
      %v1347 = vunpack.c.h.b16 %v256
      %v1348 = vunpack.c.l.b16 %v257
      %v1349 = vunpack.c.h.b16 %v257
      %v1350 = vunpack.c.l.b16 %v258
      %v1351 = vunpack.c.h.b16 %v258
      %v1352 = vunpack.c.l.b16 %v259
      %v1353 = vunpack.c.h.b16 %v259
      %v1354 = vunpack.c.l.b16 %v260
      %v1355 = vunpack.c.h.b16 %v260
      %v1356 = vunpack.c.l.b16 %v261
      %v1357 = vunpack.c.h.b16 %v261
      %v1358 = vunpack.c.l.b16 %v262
      %v1359 = vunpack.c.h.b16 %v262
      %v1360 = vunpack.c.l.b16 %v263
      %v1361 = vunpack.c.h.b16 %v263
      %v1362 = vunpack.c.l.b16 %v264
      %v1363 = vunpack.c.h.b16 %v264
      %v1364 = vunpack.c.l.b16 %v265
      %v1365 = vunpack.c.h.b16 %v265
      %v1366 = vunpack.c.l.b16 %v266
      %v1367 = vunpack.c.h.b16 %v266
      %v1368 = vunpack.c.l.b16 %v267
      %v1369 = vunpack.c.h.b16 %v267
      %v1370 = vunpack.c.l.b16 %v268
      %v1371 = vunpack.c.h.b16 %v268
      %v1372 = vunpack.c.l.b16 %v269
      %v1373 = vunpack.c.h.b16 %v269
      %v1374 = vunpack.c.l.b16 %v270
      %v1375 = vunpack.c.h.b16 %v270
      %v1376 = vunpack.c.l.b16 %v271
      %v1377 = vunpack.c.h.b16 %v271
      %v1378 = vunpack.c.l.b16 %v272
      %v1379 = vunpack.c.h.b16 %v272
      %v1380 = vunpack.c.l.b16 %v273
      %v1381 = vunpack.c.h.b16 %v273
      %v1382 = vunpack.c.l.b16 %v274
      %v1383 = vunpack.c.h.b16 %v274
      %v1384 = vunpack.c.l.b16 %v275
      %v1385 = vunpack.c.h.b16 %v275
      %v1386 = vunpack.c.l.b16 %v276
      %v1387 = vunpack.c.h.b16 %v276
      %v1388 = vunpack.c.l.b16 %v277
      %v1389 = vunpack.c.h.b16 %v277
      %v1390 = vunpack.c.l.b16 %v278
      %v1391 = vunpack.c.h.b16 %v278
      %v1392 = vunpack.c.l.b16 %v279
      %v1393 = vunpack.c.h.b16 %v279
      %v1394 = vunpack.c.l.b16 %v280
      %v1395 = vunpack.c.h.b16 %v280
      %v1396 = vunpack.c.l.b16 %v281
      %v1397 = vunpack.c.h.b16 %v281
      %v1398 = vunpack.c.l.b16 %v282
      %v1399 = vunpack.c.h.b16 %v282
      %v1400 = vunpack.c.l.b16 %v283
      %v1401 = vunpack.c.h.b16 %v283
      %v1402 = vunpack.c.l.b16 %v284
      %v1403 = vunpack.c.h.b16 %v284
      %v1404 = vunpack.c.l.b16 %v285
      %v1405 = vunpack.c.h.b16 %v285
      %v1406 = vunpack.c.l.b16 %v286
      %v1407 = vunpack.c.h.b16 %v286
      %v1408 = vunpack.c.l.b16 %v287
      %v1409 = vunpack.c.h.b16 %v287
      %v1410 = vunpack.c.l.b16 %v288
      %v1411 = vunpack.c.h.b16 %v288
      %v1412 = vunpack.c.l.b16 %v289
      %v1413 = vunpack.c.h.b16 %v289
      %v1414 = vunpack.c.l.b16 %v290
      %v1415 = vunpack.c.h.b16 %v290
      %v1416 = vunpack.c.l.b16 %v291
      %v1417 = vunpack.c.h.b16 %v291
      %v1418 = vunpack.c.l.b16 %v292
      %v1419 = vunpack.c.h.b16 %v292
      %v1420 = vunpack.c.l.b16 %v293
      %v1421 = vunpack.c.h.b16 %v293
      %v1422 = vunpack.c.l.b16 %v294
      %v1423 = vunpack.c.h.b16 %v294
      %v1424 = vunpack.c.l.b16 %v295
      %v1425 = vunpack.c.h.b16 %v295
      %v1426 = vunpack.c.l.b16 %v296
      %v1427 = vunpack.c.h.b16 %v296
      %v1428 = vunpack.c.l.b16 %v297
      %v1429 = vunpack.c.h.b16 %v297
      %v1430 = vunpack.c.l.b16 %v298
      %v1431 = vunpack.c.h.b16 %v298
      %v1432 = vunpack.c.l.b16 %v299
      %v1433 = vunpack.c.h.b16 %v299
      %v1434 = vunpack.c.l.b16 %v300
      %v1435 = vunpack.c.h.b16 %v300
      %v1436 = vunpack.c.l.b16 %v301
      %v1437 = vunpack.c.h.b16 %v301
      %v1438 = vunpack.c.l.b16 %v302
      %v1439 = vunpack.c.h.b16 %v302
      %v1440 = vunpack.c.l.b16 %v303
      %v1441 = vunpack.c.h.b16 %v303
      %v1442 = vunpack.c.l.b16 %v304
      %v1443 = vunpack.c.h.b16 %v304
      %v1444 = vunpack.c.l.b16 %v305
      %v1445 = vunpack.c.h.b16 %v305
      %v1446 = vunpack.c.l.b16 %v306
      %v1447 = vunpack.c.h.b16 %v306
      %v1448 = vunpack.c.l.b16 %v307
      %v1449 = vunpack.c.h.b16 %v307
      %v1450 = vunpack.c.l.b16 %v308
      %v1451 = vunpack.c.h.b16 %v308
      %v1452 = vunpack.c.l.b16 %v309
      %v1453 = vunpack.c.h.b16 %v309
      %v1454 = vunpack.c.l.b16 %v310
      %v1455 = vunpack.c.h.b16 %v310
      %v1456 = vunpack.c.l.b16 %v311
      %v1457 = vunpack.c.h.b16 %v311
      %v1458 = vunpack.c.l.b16 %v312
      %v1459 = vunpack.c.h.b16 %v312
      %v1460 = vunpack.c.l.b16 %v313
      %v1461 = vunpack.c.h.b16 %v313
      %v1462 = vunpack.c.l.b16 %v314
      %v1463 = vunpack.c.h.b16 %v314
      %v1464 = vunpack.c.l.b16 %v315
      %v1465 = vunpack.c.h.b16 %v315
      %v1466 = vunpack.c.l.b16 %v316
      %v1467 = vunpack.c.h.b16 %v316
      %v1468 = vunpack.c.l.b16 %v317
      %v1469 = vunpack.c.h.b16 %v317
      %v1470 = vunpack.c.l.b16 %v318
      %v1471 = vunpack.c.h.b16 %v318
      %v1472 = vunpack.c.l.b16 %v319
      %v1473 = vunpack.c.h.b16 %v319
      %v1474 = vunpack.c.l.b16 %v320
      %v1475 = vunpack.c.h.b16 %v320
      %v1476 = vunpack.c.l.b16 %v321
      %v1477 = vunpack.c.h.b16 %v321
      %v1478 = vunpack.c.l.b16 %v322
      %v1479 = vunpack.c.h.b16 %v322
      %v1480 = vunpack.c.l.b16 %v323
      %v1481 = vunpack.c.h.b16 %v323
      %v1482 = vunpack.c.l.b16 %v324
      %v1483 = vunpack.c.h.b16 %v324
      %v1484 = vunpack.c.l.b16 %v325
      %v1485 = vunpack.c.h.b16 %v325
      %v1486 = vunpack.c.l.b16 %v326
      %v1487 = vunpack.c.h.b16 %v326
      %v1488 = vunpack.c.l.b16 %v327
      %v1489 = vunpack.c.h.b16 %v327
      %v1490 = vunpack.c.l.b16 %v328
      %v1491 = vunpack.c.h.b16 %v328
      %v1492 = vunpack.c.l.b16 %v329
      %v1493 = vunpack.c.h.b16 %v329
      %v1494 = vunpack.c.l.b16 %v330
      %v1495 = vunpack.c.h.b16 %v330
      %v1496 = vunpack.c.l.b16 %v331
      %v1497 = vunpack.c.h.b16 %v331
      %v1498 = vunpack.c.l.b16 %v332
      %v1499 = vunpack.c.h.b16 %v332
      %v1500 = vunpack.c.l.b16 %v333
      %v1501 = vunpack.c.h.b16 %v333
      %v1502 = vunpack.c.l.b16 %v334
      %v1503 = vunpack.c.h.b16 %v334
      %v1504 = vunpack.c.l.b16 %v335
      %v1505 = vunpack.c.h.b16 %v335
      %v1506 = vunpack.c.l.b16 %v336
      %v1507 = vunpack.c.h.b16 %v336
      %v1508 = vunpack.c.l.b16 %v337
      %v1509 = vunpack.c.h.b16 %v337
      %v1510 = vunpack.c.l.b16 %v338
      %v1511 = vunpack.c.h.b16 %v338
      %v1512 = vunpack.c.l.b16 %v339
      %v1513 = vunpack.c.h.b16 %v339
      %v1514 = vunpack.c.l.b16 %v340
      %v1515 = vunpack.c.h.b16 %v340
      %v1516 = vunpack.c.l.b16 %v341
      %v1517 = vunpack.c.h.b16 %v341
      %v1518 = vunpack.c.l.b16 %v342
      %v1519 = vunpack.c.h.b16 %v342
      %v1520 = vunpack.c.l.b16 %v343
      %v1521 = vunpack.c.h.b16 %v343
      %v1522 = vunpack.c.l.b16 %v344
      %v1523 = vunpack.c.h.b16 %v344
      %v1524 = vunpack.c.l.b16 %v345
      %v1525 = vunpack.c.h.b16 %v345
      %v1526 = vunpack.c.l.b16 %v346
      %v1527 = vunpack.c.h.b16 %v346
      %v1528 = vunpack.c.l.b16 %v347
      %v1529 = vunpack.c.h.b16 %v347
      %v1530 = vunpack.c.l.b16 %v348
      %v1531 = vunpack.c.h.b16 %v348
      %v1532 = vunpack.c.l.b16 %v349
      %v1533 = vunpack.c.h.b16 %v349
      %v1534 = vunpack.c.l.b16 %v350
      %v1535 = vunpack.c.h.b16 %v350
      %v1536 = vunpack.c.l.b16 %v351
      %v1537 = vunpack.c.h.b16 %v351
      %v1538 = vunpack.c.l.b16 %v352
      %v1539 = vunpack.c.h.b16 %v352
      %v1540 = vunpack.c.l.b16 %v353
      %v1541 = vunpack.c.h.b16 %v353
      %v1542 = vunpack.c.l.b16 %v354
      %v1543 = vunpack.c.h.b16 %v354
      %v1544 = vunpack.c.l.b16 %v355
      %v1545 = vunpack.c.h.b16 %v355
      %v1546 = vunpack.c.l.b16 %v356
      %v1547 = vunpack.c.h.b16 %v356
      %v1548 = vunpack.c.l.b16 %v357
      %v1549 = vunpack.c.h.b16 %v357
      %v1550 = vunpack.c.l.b16 %v358
      %v1551 = vunpack.c.h.b16 %v358
      %v1552 = vunpack.c.l.b16 %v359
      %v1553 = vunpack.c.h.b16 %v359
      %v1554 = vunpack.c.l.b16 %v360
      %v1555 = vunpack.c.h.b16 %v360
      %v1556 = vunpack.c.l.b16 %v361
      %v1557 = vunpack.c.h.b16 %v361
      %v1558 = vunpack.c.l.b16 %v362
      %v1559 = vunpack.c.h.b16 %v362
      %v1560 = vunpack.c.l.b16 %v363
      %v1561 = vunpack.c.h.b16 %v363
      %v1562 = vunpack.c.l.b16 %v364
      %v1563 = vunpack.c.h.b16 %v364
      %v1564 = vunpack.c.l.b16 %v365
      %v1565 = vunpack.c.h.b16 %v365
      %v1566 = vunpack.c.l.b16 %v366
      %v1567 = vunpack.c.h.b16 %v366
      %v1568 = vunpack.c.l.b16 %v367
      %v1569 = vunpack.c.h.b16 %v367
      %v1570 = vunpack.c.l.b16 %v368
      %v1571 = vunpack.c.h.b16 %v368
      %v1572 = vunpack.c.l.b16 %v369
      %v1573 = vunpack.c.h.b16 %v369
      %v1574 = vunpack.c.l.b16 %v370
      %v1575 = vunpack.c.h.b16 %v370
      %v1576 = vunpack.c.l.b16 %v371
      %v1577 = vunpack.c.h.b16 %v371
      %v1578 = vunpack.c.l.b16 %v372
      %v1579 = vunpack.c.h.b16 %v372
      %v1580 = vunpack.c.l.b16 %v373
      %v1581 = vunpack.c.h.b16 %v373
      %v1582 = vunpack.c.l.b16 %v374
      %v1583 = vunpack.c.h.b16 %v374
      %v1584 = vunpack.c.l.b16 %v375
      %v1585 = vunpack.c.h.b16 %v375
      %v1586 = vunpack.c.l.b16 %v376
      %v1587 = vunpack.c.h.b16 %v376
      %v1588 = vunpack.c.l.b16 %v377
      %v1589 = vunpack.c.h.b16 %v377
      %v1590 = vunpack.c.l.b16 %v378
      %v1591 = vunpack.c.h.b16 %v378
      %v1592 = vunpack.c.l.b16 %v379
      %v1593 = vunpack.c.h.b16 %v379
      %v1594 = vunpack.c.l.b16 %v380
      %v1595 = vunpack.c.h.b16 %v380
      %v1596 = vunpack.c.l.b16 %v381
      %v1597 = vunpack.c.h.b16 %v381
      %v1598 = vunpack.c.l.b16 %v382
      %v1599 = vunpack.c.h.b16 %v382
      %v1600 = vunpack.c.l.b16 %v383
      %v1601 = vunpack.c.h.b16 %v383
      %v1602 = vunpack.c.l.b16 %v384
      %v1603 = vunpack.c.h.b16 %v384
      %v1604 = vunpack.c.l.b16 %v385
      %v1605 = vunpack.c.h.b16 %v385
      %v1606 = vunpack.c.l.b16 %v386
      %v1607 = vunpack.c.h.b16 %v386
      %v1608 = vunpack.c.l.b16 %v387
      %v1609 = vunpack.c.h.b16 %v387
      %v1610 = vunpack.c.l.b16 %v388
      %v1611 = vunpack.c.h.b16 %v388
      %v1612 = vunpack.c.l.b16 %v389
      %v1613 = vunpack.c.h.b16 %v389
      %v1614 = vunpack.c.l.b16 %v390
      %v1615 = vunpack.c.h.b16 %v390
      %v1616 = vunpack.c.l.b16 %v391
      %v1617 = vunpack.c.h.b16 %v391
      %v1618 = vunpack.c.l.b16 %v392
      %v1619 = vunpack.c.h.b16 %v392
      %v1620 = vunpack.c.l.b16 %v393
      %v1621 = vunpack.c.h.b16 %v393
      %v1622 = vunpack.c.l.b16 %v394
      %v1623 = vunpack.c.h.b16 %v394
      %v1624 = vunpack.c.l.b16 %v395
      %v1625 = vunpack.c.h.b16 %v395
      %v1626 = vunpack.c.l.b16 %v396
      %v1627 = vunpack.c.h.b16 %v396
      %v1628 = vunpack.c.l.b16 %v397
      %v1629 = vunpack.c.h.b16 %v397
      %v1630 = vunpack.c.l.b16 %v398
      %v1631 = vunpack.c.h.b16 %v398
      %v1632 = vunpack.c.l.b16 %v399
      %v1633 = vunpack.c.h.b16 %v399
      %v1634 = vunpack.c.l.b16 %v400
      %v1635 = vunpack.c.h.b16 %v400
      %v1636 = vunpack.c.l.b16 %v401
      %v1637 = vunpack.c.h.b16 %v401
      %v1638 = vunpack.c.l.b16 %v402
      %v1639 = vunpack.c.h.b16 %v402
      %v1640 = vunpack.c.l.b16 %v403
      %v1641 = vunpack.c.h.b16 %v403
      %v1642 = vunpack.c.l.b16 %v404
      %v1643 = vunpack.c.h.b16 %v404
      %v1644 = vunpack.c.l.b16 %v405
      %v1645 = vunpack.c.h.b16 %v405
      %v1646 = vunpack.c.l.b16 %v406
      %v1647 = vunpack.c.h.b16 %v406
      %v1648 = vunpack.c.l.b16 %v407
      %v1649 = vunpack.c.h.b16 %v407
      %v1650 = vunpack.c.l.b16 %v408
      %v1651 = vunpack.c.h.b16 %v408
      %v1652 = vunpack.c.l.b16 %v409
      %v1653 = vunpack.c.h.b16 %v409
      %v1654 = vunpack.c.l.b16 %v410
      %v1655 = vunpack.c.h.b16 %v410
      %v1656 = vunpack.c.l.b16 %v411
      %v1657 = vunpack.c.h.b16 %v411
      %v1658 = vunpack.c.l.b16 %v412
      %v1659 = vunpack.c.h.b16 %v412
      %v1660 = vunpack.c.l.b16 %v413
      %v1661 = vunpack.c.h.b16 %v413
      %v1662 = vunpack.c.l.b16 %v414
      %v1663 = vunpack.c.h.b16 %v414
      %v1664 = vunpack.c.l.b16 %v415
      %v1665 = vunpack.c.h.b16 %v415
      %v1666 = vunpack.c.l.b16 %v416
      %v1667 = vunpack.c.h.b16 %v416
      %v1668 = vunpack.c.l.b16 %v417
      %v1669 = vunpack.c.h.b16 %v417
      %v1670 = vunpack.c.l.b16 %v418
      %v1671 = vunpack.c.h.b16 %v418
      %v1672 = vunpack.c.l.b16 %v419
      %v1673 = vunpack.c.h.b16 %v419
      %v1674 = vunpack.c.l.b16 %v420
      %v1675 = vunpack.c.h.b16 %v420
      %v1676 = vunpack.c.l.b16 %v421
      %v1677 = vunpack.c.h.b16 %v421
      %v1678 = vunpack.c.l.b16 %v422
      %v1679 = vunpack.c.h.b16 %v422
      %v1680 = vunpack.c.l.b16 %v423
      %v1681 = vunpack.c.h.b16 %v423
      %v1682 = vunpack.c.l.b16 %v424
      %v1683 = vunpack.c.h.b16 %v424
      %v1684 = vunpack.c.l.b16 %v425
      %v1685 = vunpack.c.h.b16 %v425
      %v1686 = vunpack.c.l.b16 %v426
      %v1687 = vunpack.c.h.b16 %v426
      %v1688 = vunpack.c.l.b16 %v427
      %v1689 = vunpack.c.h.b16 %v427
      %v1690 = vunpack.c.l.b16 %v428
      %v1691 = vunpack.c.h.b16 %v428
      %v1692 = vunpack.c.l.b16 %v429
      %v1693 = vunpack.c.h.b16 %v429
      %v1694 = vunpack.c.l.b16 %v430
      %v1695 = vunpack.c.h.b16 %v430
      %v1696 = vunpack.c.l.b16 %v431
      %v1697 = vunpack.c.h.b16 %v431
      %v1698 = vunpack.c.l.b16 %v432
      %v1699 = vunpack.c.h.b16 %v432
      %v1700 = vunpack.c.l.b16 %v433
      %v1701 = vunpack.c.h.b16 %v433
      %v1702 = vunpack.c.l.b16 %v434
      %v1703 = vunpack.c.h.b16 %v434
      %v1704 = vunpack.c.l.b16 %v435
      %v1705 = vunpack.c.h.b16 %v435
      %v1706 = vunpack.c.l.b16 %v436
      %v1707 = vunpack.c.h.b16 %v436
      %v1708 = vunpack.c.l.b16 %v437
      %v1709 = vunpack.c.h.b16 %v437
      %v1710 = vunpack.c.l.b16 %v438
      %v1711 = vunpack.c.h.b16 %v438
      %v1712 = vunpack.c.l.b16 %v439
      %v1713 = vunpack.c.h.b16 %v439
      %v1714 = vunpack.c.l.b16 %v440
      %v1715 = vunpack.c.h.b16 %v440
      %v1716 = vunpack.c.l.b16 %v441
      %v1717 = vunpack.c.h.b16 %v441
      %v1718 = vunpack.c.l.b16 %v442
      %v1719 = vunpack.c.h.b16 %v442
      %v1720 = vunpack.c.l.b16 %v443
      %v1721 = vunpack.c.h.b16 %v443
      %v1722 = vunpack.c.l.b16 %v444
      %v1723 = vunpack.c.h.b16 %v444
      %v1724 = vunpack.c.l.b16 %v445
      %v1725 = vunpack.c.h.b16 %v445
      %v1726 = vunpack.c.l.b16 %v446
      %v1727 = vunpack.c.h.b16 %v446
      %v1728 = vunpack.c.l.b16 %v447
      %v1729 = vunpack.c.h.b16 %v447
      %v1730 = vunpack.c.l.b16 %v448
      %v1731 = vunpack.c.h.b16 %v448
      %v1732 = vunpack.c.l.b16 %v449
      %v1733 = vunpack.c.h.b16 %v449
      %v1734 = vunpack.c.l.b16 %v450
      %v1735 = vunpack.c.h.b16 %v450
      %v1736 = vunpack.c.l.b16 %v451
      %v1737 = vunpack.c.h.b16 %v451
      %v1738 = vunpack.c.l.b16 %v452
      %v1739 = vunpack.c.h.b16 %v452
      %v1740 = vunpack.c.l.b16 %v453
      %v1741 = vunpack.c.h.b16 %v453
      %v1742 = vunpack.c.l.b16 %v454
      %v1743 = vunpack.c.h.b16 %v454
      %v1744 = vunpack.c.l.b16 %v455
      %v1745 = vunpack.c.h.b16 %v455
      %v1746 = vunpack.c.l.b16 %v456
      %v1747 = vunpack.c.h.b16 %v456
      %v1748 = vunpack.c.l.b16 %v457
      %v1749 = vunpack.c.h.b16 %v457
      %v1750 = vunpack.c.l.b16 %v458
      %v1751 = vunpack.c.h.b16 %v458
      %v1752 = vunpack.c.l.b16 %v459
      %v1753 = vunpack.c.h.b16 %v459
      %v1754 = vunpack.c.l.b16 %v460
      %v1755 = vunpack.c.h.b16 %v460
      %v1756 = vunpack.c.l.b16 %v461
      %v1757 = vunpack.c.h.b16 %v461
      %v1758 = vunpack.c.l.b16 %v462
      %v1759 = vunpack.c.h.b16 %v462
      %v1760 = vunpack.c.l.b16 %v463
      %v1761 = vunpack.c.h.b16 %v463
      %v1762 = vunpack.c.l.b16 %v464
      %v1763 = vunpack.c.h.b16 %v464
      %v1764 = vunpack.c.l.b16 %v465
      %v1765 = vunpack.c.h.b16 %v465
      %v1766 = vunpack.c.l.b16 %v466
      %v1767 = vunpack.c.h.b16 %v466
      %v1768 = vunpack.c.l.b16 %v467
      %v1769 = vunpack.c.h.b16 %v467
      %v1770 = vunpack.c.l.b16 %v468
      %v1771 = vunpack.c.h.b16 %v468
      %v1772 = vunpack.c.l.b16 %v469
      %v1773 = vunpack.c.h.b16 %v469
      %v1774 = vunpack.c.l.b16 %v470
      %v1775 = vunpack.c.h.b16 %v470
      %v1776 = vunpack.c.l.b16 %v471
      %v1777 = vunpack.c.h.b16 %v471
      %v1778 = vunpack.c.l.b16 %v472
      %v1779 = vunpack.c.h.b16 %v472
      %v1780 = vunpack.c.l.b16 %v473
      %v1781 = vunpack.c.h.b16 %v473
      %v1782 = vunpack.c.l.b16 %v474
      %v1783 = vunpack.c.h.b16 %v474
      %v1784 = vunpack.c.l.b16 %v475
      %v1785 = vunpack.c.h.b16 %v475
      %v1786 = vunpack.c.l.b16 %v476
      %v1787 = vunpack.c.h.b16 %v476
      %v1788 = vunpack.c.l.b16 %v477
      %v1789 = vunpack.c.h.b16 %v477
      %v1790 = vunpack.c.l.b16 %v478
      %v1791 = vunpack.c.h.b16 %v478
      %v1792 = vunpack.c.l.b16 %v479
      %v1793 = vunpack.c.h.b16 %v479
      %v1794 = vunpack.c.l.b16 %v480
      %v1795 = vunpack.c.h.b16 %v480
      %v1796 = vunpack.c.l.b16 %v481
      %v1797 = vunpack.c.h.b16 %v481
      %v1798 = vunpack.c.l.b16 %v482
      %v1799 = vunpack.c.h.b16 %v482
      %v1800 = vunpack.c.l.b16 %v483
      %v1801 = vunpack.c.h.b16 %v483
      %v1802 = vunpack.c.l.b16 %v484
      %v1803 = vunpack.c.h.b16 %v484
      %v1804 = vunpack.c.l.b16 %v485
      %v1805 = vunpack.c.h.b16 %v485
      %v1806 = vunpack.c.l.b16 %v486
      %v1807 = vunpack.c.h.b16 %v486
      %v1808 = vunpack.c.l.b16 %v487
      %v1809 = vunpack.c.h.b16 %v487
      %v1810 = vunpack.c.l.b16 %v488
      %v1811 = vunpack.c.h.b16 %v488
      %v1812 = vunpack.c.l.b16 %v489
      %v1813 = vunpack.c.h.b16 %v489
      %v1814 = vunpack.c.l.b16 %v490
      %v1815 = vunpack.c.h.b16 %v490
      %v1816 = vunpack.c.l.b16 %v491
      %v1817 = vunpack.c.h.b16 %v491
      %v1818 = vunpack.c.l.b16 %v492
      %v1819 = vunpack.c.h.b16 %v492
      %v1820 = vunpack.c.l.b16 %v493
      %v1821 = vunpack.c.h.b16 %v493
      %v1822 = vunpack.c.l.b16 %v494
      %v1823 = vunpack.c.h.b16 %v494
      %v1824 = vunpack.c.l.b16 %v495
      %v1825 = vunpack.c.h.b16 %v495
      %v1826 = vunpack.c.l.b16 %v496
      %v1827 = vunpack.c.h.b16 %v496
      %v1828 = vunpack.c.l.b16 %v497
      %v1829 = vunpack.c.h.b16 %v497
      %v1830 = vunpack.c.l.b16 %v498
      %v1831 = vunpack.c.h.b16 %v498
      %v1832 = vunpack.c.l.b16 %v499
      %v1833 = vunpack.c.h.b16 %v499
      %v1834 = vunpack.c.l.b16 %v500
      %v1835 = vunpack.c.h.b16 %v500
      %v1836 = vunpack.c.l.b16 %v501
      %v1837 = vunpack.c.h.b16 %v501
      %v1838 = vunpack.c.l.b16 %v502
      %v1839 = vunpack.c.h.b16 %v502
      %v1840 = vunpack.c.l.b16 %v503
      %v1841 = vunpack.c.h.b16 %v503
      %v1842 = vunpack.c.l.b16 %v504
      %v1843 = vunpack.c.h.b16 %v504
      %v1844 = vunpack.c.l.b16 %v505
      %v1845 = vunpack.c.h.b16 %v505
      %v1846 = vunpack.c.l.b16 %v506
      %v1847 = vunpack.c.h.b16 %v506
      %v1848 = vunpack.c.l.b16 %v507
      %v1849 = vunpack.c.h.b16 %v507
      %v1850 = vunpack.c.l.b16 %v508
      %v1851 = vunpack.c.h.b16 %v508
      %v1852 = vunpack.c.l.b16 %v509
      %v1853 = vunpack.c.h.b16 %v509
      %v1854 = vunpack.c.l.b16 %v510
      %v1855 = vunpack.c.h.b16 %v510
      %v1856 = vunpack.c.l.b16 %v511
      %v1857 = vunpack.c.h.b16 %v511
      %v1858 = vunpack.c.l.b16 %v512
      %v1859 = vunpack.c.h.b16 %v512
      %v1860 = vunpack.c.l.b16 %v513
      %v1861 = vunpack.c.h.b16 %v513
      %v1862 = vunpack.c.l.b16 %v514
      %v1863 = vunpack.c.h.b16 %v514
      %v1864 = vunpack.c.l.b16 %v515
      %v1865 = vunpack.c.h.b16 %v515
      %v1866 = vunpack.c.l.b16 %v516
      %v1867 = vunpack.c.h.b16 %v516
      %v1868 = vunpack.c.l.b16 %v517
      %v1869 = vunpack.c.h.b16 %v517
      %v1870 = vunpack.c.l.b16 %v518
      %v1871 = vunpack.c.h.b16 %v518
      %v1872 = vunpack.c.l.b16 %v519
      %v1873 = vunpack.c.h.b16 %v519
      %v1874 = vunpack.c.l.b16 %v520
      %v1875 = vunpack.c.h.b16 %v520
      %v1876 = vunpack.c.l.b16 %v521
      %v1877 = vunpack.c.h.b16 %v521
      %v1878 = vunpack.c.l.b16 %v522
      %v1879 = vunpack.c.h.b16 %v522
      %v1880 = vunpack.c.l.b16 %v523
      %v1881 = vunpack.c.h.b16 %v523
      %v1882 = vunpack.c.l.b16 %v524
      %v1883 = vunpack.c.h.b16 %v524
      %v1884 = vunpack.c.l.b16 %v525
      %v1885 = vunpack.c.h.b16 %v525
      %v1886 = vunpack.c.l.b16 %v526
      %v1887 = vunpack.c.h.b16 %v526
      %v1888 = vunpack.c.l.b16 %v527
      %v1889 = vunpack.c.h.b16 %v527
      %v1890 = vunpack.c.l.b16 %v528
      %v1891 = vunpack.c.h.b16 %v528
      %v1892 = vunpack.c.l.b16 %v529
      %v1893 = vunpack.c.h.b16 %v529
      %v1894 = vunpack.c.l.b16 %v530
      %v1895 = vunpack.c.h.b16 %v530
      %v1896 = vunpack.c.l.b16 %v531
      %v1897 = vunpack.c.h.b16 %v531
      %v1898 = vunpack.c.l.b16 %v532
      %v1899 = vunpack.c.h.b16 %v532
      %v1900 = vunpack.c.l.b16 %v533
      %v1901 = vunpack.c.h.b16 %v533
      %v1902 = vunpack.c.l.b16 %v534
      %v1903 = vunpack.c.h.b16 %v534
      %v1904 = vunpack.c.l.b16 %v535
      %v1905 = vunpack.c.h.b16 %v535
      %v1906 = vunpack.c.l.b16 %v536
      %v1907 = vunpack.c.h.b16 %v536
      %v1908 = vunpack.c.l.b16 %v537
      %v1909 = vunpack.c.h.b16 %v537
      %v1910 = vunpack.c.l.b16 %v538
      %v1911 = vunpack.c.h.b16 %v538
      %v1912 = vunpack.c.l.b16 %v539
      %v1913 = vunpack.c.h.b16 %v539
      %v1914 = vunpack.c.l.b16 %v540
      %v1915 = vunpack.c.h.b16 %v540
      %v1916 = vunpack.c.l.b16 %v541
      %v1917 = vunpack.c.h.b16 %v541
      %v1918 = vunpack.c.l.b16 %v542
      %v1919 = vunpack.c.h.b16 %v542
      %v1920 = vunpack.c.l.b16 %v543
      %v1921 = vunpack.c.h.b16 %v543
      %v1922 = vunpack.c.l.b16 %v544
      %v1923 = vunpack.c.h.b16 %v544
      %v1924 = vunpack.c.l.b16 %v545
      %v1925 = vunpack.c.h.b16 %v545
      %v1926 = vunpack.c.l.b16 %v546
      %v1927 = vunpack.c.h.b16 %v546
      %v1928 = vunpack.c.l.b16 %v547
      %v1929 = vunpack.c.h.b16 %v547
      %v1930 = vunpack.c.l.b16 %v548
      %v1931 = vunpack.c.h.b16 %v548
      %v1932 = vunpack.c.l.b16 %v549
      %v1933 = vunpack.c.h.b16 %v549
      %v1934 = vunpack.c.l.b16 %v550
      %v1935 = vunpack.c.h.b16 %v550
      %v1936 = vunpack.c.l.b16 %v551
      %v1937 = vunpack.c.h.b16 %v551
      %v1938 = vunpack.c.l.b16 %v552
      %v1939 = vunpack.c.h.b16 %v552
      %v1940 = vunpack.c.l.b16 %v553
      %v1941 = vunpack.c.h.b16 %v553
      %v1942 = vunpack.c.l.b16 %v554
      %v1943 = vunpack.c.h.b16 %v554
      %v1944 = vunpack.c.l.b16 %v555
      %v1945 = vunpack.c.h.b16 %v555
      %v1946 = vunpack.c.l.b16 %v556
      %v1947 = vunpack.c.h.b16 %v556
      %v1948 = vunpack.c.l.b16 %v557
      %v1949 = vunpack.c.h.b16 %v557
      %v1950 = vunpack.c.l.b16 %v558
      %v1951 = vunpack.c.h.b16 %v558
      %v1952 = vunpack.c.l.b16 %v559
      %v1953 = vunpack.c.h.b16 %v559
      %v1954 = vunpack.c.l.b16 %v560
      %v1955 = vunpack.c.h.b16 %v560
      %v1956 = vunpack.c.l.b16 %v561
      %v1957 = vunpack.c.h.b16 %v561
      %v1958 = vunpack.c.l.b16 %v562
      %v1959 = vunpack.c.h.b16 %v562
      %v1960 = vunpack.c.l.b16 %v563
      %v1961 = vunpack.c.h.b16 %v563
      %v1962 = vunpack.c.l.b16 %v564
      %v1963 = vunpack.c.h.b16 %v564
      %v1964 = vunpack.c.l.b16 %v565
      %v1965 = vunpack.c.h.b16 %v565
      %v1966 = vunpack.c.l.b16 %v566
      %v1967 = vunpack.c.h.b16 %v566
      %v1968 = vunpack.c.l.b16 %v567
      %v1969 = vunpack.c.h.b16 %v567
      %v1970 = vunpack.c.l.b16 %v568
      %v1971 = vunpack.c.h.b16 %v568
      %v1972 = vunpack.c.l.b16 %v569
      %v1973 = vunpack.c.h.b16 %v569
      %v1974 = vunpack.c.l.b16 %v570
      %v1975 = vunpack.c.h.b16 %v570
      %v1976 = vunpack.c.l.b16 %v571
      %v1977 = vunpack.c.h.b16 %v571
      %v1978 = vunpack.c.l.b16 %v572
      %v1979 = vunpack.c.h.b16 %v572
      %v1980 = vunpack.c.l.b16 %v573
      %v1981 = vunpack.c.h.b16 %v573
      %v1982 = vunpack.c.l.b16 %v574
      %v1983 = vunpack.c.h.b16 %v574
      %v1984 = vunpack.c.l.b16 %v575
      %v1985 = vunpack.c.h.b16 %v575
      %v1986 = vunpack.c.l.b16 %v576
      %v1987 = vunpack.c.h.b16 %v576
      %v1988 = vunpack.c.l.b16 %v577
      %v1989 = vunpack.c.h.b16 %v577
      %v1990 = vunpack.c.l.b16 %v578
      %v1991 = vunpack.c.h.b16 %v578
      %v1992 = vunpack.c.l.b16 %v579
      %v1993 = vunpack.c.h.b16 %v579
      %v1994 = vunpack.c.l.b16 %v580
      %v1995 = vunpack.c.h.b16 %v580
      %v1996 = vunpack.c.l.b16 %v581
      %v1997 = vunpack.c.h.b16 %v581
      %v1998 = vunpack.c.l.b16 %v582
      %v1999 = vunpack.c.h.b16 %v582
      %v2000 = vunpack.c.l.b16 %v583
      %v2001 = vunpack.c.h.b16 %v583
      %v2002 = vunpack.c.l.b16 %v584
      %v2003 = vunpack.c.h.b16 %v584
      %v2004 = vunpack.c.l.b16 %v585
      %v2005 = vunpack.c.h.b16 %v585
      %v2006 = vunpack.c.l.b16 %v586
      %v2007 = vunpack.c.h.b16 %v586
      %v2008 = vunpack.c.l.b16 %v587
      %v2009 = vunpack.c.h.b16 %v587
      %v2010 = vunpack.c.l.b16 %v588
      %v2011 = vunpack.c.h.b16 %v588
      %v2012 = vunpack.c.l.b16 %v589
      %v2013 = vunpack.c.h.b16 %v589
      %v2014 = vunpack.c.l.b16 %v590
      %v2015 = vunpack.c.h.b16 %v590
      %v2016 = vunpack.c.l.b16 %v591
      %v2017 = vunpack.c.h.b16 %v591
      %v2018 = vunpack.c.l.b16 %v592
      %v2019 = vunpack.c.h.b16 %v592
      %v2020 = vunpack.c.l.b16 %v593
      %v2021 = vunpack.c.h.b16 %v593
      %v2022 = vunpack.c.l.b16 %v594
      %v2023 = vunpack.c.h.b16 %v594
      %v2024 = vunpack.c.l.b16 %v595
      %v2025 = vunpack.c.h.b16 %v595
      %v2026 = vunpack.c.l.b16 %v596
      %v2027 = vunpack.c.h.b16 %v596
      %v2028 = vunpack.c.l.b16 %v597
      %v2029 = vunpack.c.h.b16 %v597
      %v2030 = vunpack.c.l.b16 %v598
      %v2031 = vunpack.c.h.b16 %v598
      %v2032 = vunpack.c.l.b16 %v599
      %v2033 = vunpack.c.h.b16 %v599
      %v2034 = vunpack.c.l.b16 %v600
      %v2035 = vunpack.c.h.b16 %v600
      %v2036 = vunpack.c.l.b16 %v601
      %v2037 = vunpack.c.h.b16 %v601
      %v2038 = vunpack.c.l.b16 %v602
      %v2039 = vunpack.c.h.b16 %v602
      %v2040 = vunpack.c.l.b16 %v603
      %v2041 = vunpack.c.h.b16 %v603
      %v2042 = vunpack.c.l.b16 %v604
      %v2043 = vunpack.c.h.b16 %v604
      %v2044 = vunpack.c.l.b16 %v605
      %v2045 = vunpack.c.h.b16 %v605
      %v2046 = vunpack.c.l.b16 %v606
      %v2047 = vunpack.c.h.b16 %v606
      %v2048 = vunpack.c.l.b16 %v607
      %v2049 = vunpack.c.h.b16 %v607
      %v2050 = vunpack.c.l.b16 %v608
      %v2051 = vunpack.c.h.b16 %v608
      %v2052 = vunpack.c.l.b16 %v609
      %v2053 = vunpack.c.h.b16 %v609
      %v2054 = vunpack.c.l.b16 %v610
      %v2055 = vunpack.c.h.b16 %v610
      %v2056 = vunpack.c.l.b16 %v611
      %v2057 = vunpack.c.h.b16 %v611
      %v2058 = vunpack.c.l.b16 %v612
      %v2059 = vunpack.c.h.b16 %v612
      %v2060 = vunpack.c.l.b16 %v613
      %v2061 = vunpack.c.h.b16 %v613
      %v2062 = vunpack.c.l.b16 %v614
      %v2063 = vunpack.c.h.b16 %v614
      %v2064 = vunpack.c.l.b16 %v615
      %v2065 = vunpack.c.h.b16 %v615
      %v2066 = vunpack.c.l.b16 %v616
      %v2067 = vunpack.c.h.b16 %v616
      %v2068 = vunpack.c.l.b16 %v617
      %v2069 = vunpack.c.h.b16 %v617
      %v2070 = vunpack.c.l.b16 %v618
      %v2071 = vunpack.c.h.b16 %v618
      %v2072 = vunpack.c.l.b16 %v619
      %v2073 = vunpack.c.h.b16 %v619
      %v2074 = vunpack.c.l.b16 %v620
      %v2075 = vunpack.c.h.b16 %v620
      %v2076 = vunpack.c.l.b16 %v621
      %v2077 = vunpack.c.h.b16 %v621
      %v2078 = vunpack.c.l.b16 %v622
      %v2079 = vunpack.c.h.b16 %v622
      %v2080 = vunpack.c.l.b16 %v623
      %v2081 = vunpack.c.h.b16 %v623
      %v2082 = vunpack.c.l.b16 %v624
      %v2083 = vunpack.c.h.b16 %v624
      %v2084 = vunpack.c.l.b16 %v625
      %v2085 = vunpack.c.h.b16 %v625
      %v2086 = vunpack.c.l.b16 %v626
      %v2087 = vunpack.c.h.b16 %v626
      %v2088 = vunpack.c.l.b16 %v627
      %v2089 = vunpack.c.h.b16 %v627
      %v2090 = vunpack.c.l.b16 %v628
      %v2091 = vunpack.c.h.b16 %v628
      %v2092 = vunpack.c.l.b16 %v629
      %v2093 = vunpack.c.h.b16 %v629
      %v2094 = vunpack.c.l.b16 %v630
      %v2095 = vunpack.c.h.b16 %v630
      %v2096 = vunpack.c.l.b16 %v631
      %v2097 = vunpack.c.h.b16 %v631
      %v2098 = vunpack.c.l.b16 %v632
      %v2099 = vunpack.c.h.b16 %v632
      %v2100 = vunpack.c.l.b16 %v633
      %v2101 = vunpack.c.h.b16 %v633
      %v2102 = vunpack.c.l.b16 %v634
      %v2103 = vunpack.c.h.b16 %v634
      %v2104 = vunpack.c.l.b16 %v635
      %v2105 = vunpack.c.h.b16 %v635
      %v2106 = vunpack.c.l.b16 %v636
      %v2107 = vunpack.c.h.b16 %v636
      %v2108 = vunpack.c.l.b16 %v637
      %v2109 = vunpack.c.h.b16 %v637
      %v2110 = vunpack.c.l.b16 %v638
      %v2111 = vunpack.c.h.b16 %v638
      %v2112 = vunpack.c.l.b16 %v639
      %v2113 = vunpack.c.h.b16 %v639
      %v2114 = vunpack.c.l.b16 %v640
      %v2115 = vunpack.c.h.b16 %v640
      %v2116 = vunpack.c.l.b16 %v641
      %v2117 = vunpack.c.h.b16 %v641
      %v2118 = vunpack.c.l.b16 %v642
      %v2119 = vunpack.c.h.b16 %v642
      %v2120 = vunpack.c.l.b16 %v643
      %v2121 = vunpack.c.h.b16 %v643
      %v2122 = vunpack.c.l.b16 %v644
      %v2123 = vunpack.c.h.b16 %v644
      %v2124 = vunpack.c.l.b16 %v645
      %v2125 = vunpack.c.h.b16 %v645
      %v2126 = vunpack.c.l.b16 %v646
      %v2127 = vunpack.c.h.b16 %v646
      %v2128 = vunpack.c.l.b16 %v647
      %v2129 = vunpack.c.h.b16 %v647
      %v2130 = vunpack.c.l.b16 %v648
      %v2131 = vunpack.c.h.b16 %v648
      %v2132 = vunpack.c.l.b16 %v649
      %v2133 = vunpack.c.h.b16 %v649
      %v2134 = vunpack.c.l.b16 %v650
      %v2135 = vunpack.c.h.b16 %v650
      %v2136 = vunpack.c.l.b16 %v651
      %v2137 = vunpack.c.h.b16 %v651
      %v2138 = vunpack.c.l.b16 %v652
      %v2139 = vunpack.c.h.b16 %v652
      %v2140 = vunpack.c.l.b16 %v653
      %v2141 = vunpack.c.h.b16 %v653
      %v2142 = vunpack.c.l.b16 %v654
      %v2143 = vunpack.c.h.b16 %v654
      %v2144 = vunpack.c.l.b16 %v655
      %v2145 = vunpack.c.h.b16 %v655
      %v2146 = vunpack.c.l.b16 %v656
      %v2147 = vunpack.c.h.b16 %v656
      %v2148 = vunpack.c.l.b16 %v657
      %v2149 = vunpack.c.h.b16 %v657
      %v2150 = vunpack.c.l.b16 %v658
      %v2151 = vunpack.c.h.b16 %v658
      %v2152 = vunpack.c.l.b16 %v659
      %v2153 = vunpack.c.h.b16 %v659
      %v2154 = vunpack.c.l.b16 %v660
      %v2155 = vunpack.c.h.b16 %v660
      %v2156 = vunpack.c.l.b16 %v661
      %v2157 = vunpack.c.h.b16 %v661
      %v2158 = vunpack.c.l.b16 %v662
      %v2159 = vunpack.c.h.b16 %v662
      %v2160 = vunpack.c.l.b16 %v663
      %v2161 = vunpack.c.h.b16 %v663
      %v2162 = vunpack.c.l.b16 %v664
      %v2163 = vunpack.c.h.b16 %v664
      %v2164 = vunpack.c.l.b16 %v665
      %v2165 = vunpack.c.h.b16 %v665
      %v2166 = vunpack.c.l.b16 %v666
      %v2167 = vunpack.c.h.b16 %v666
      %v2168 = vunpack.c.l.b16 %v667
      %v2169 = vunpack.c.h.b16 %v667
      %v2170 = vunpack.c.l.b16 %v668
      %v2171 = vunpack.c.h.b16 %v668
      %v2172 = vunpack.c.l.b16 %v669
      %v2173 = vunpack.c.h.b16 %v669
      %v2174 = vunpack.c.l.b16 %v670
      %v2175 = vunpack.c.h.b16 %v670
      %v2176 = vunpack.c.l.b16 %v671
      %v2177 = vunpack.c.h.b16 %v671
      %v2178 = vunpack.c.l.b16 %v672
      %v2179 = vunpack.c.h.b16 %v672
      %v2180 = vunpack.c.l.b16 %v673
      %v2181 = vunpack.c.h.b16 %v673
      %v2182 = vunpack.c.l.b16 %v674
      %v2183 = vunpack.c.h.b16 %v674
      %v2184 = vunpack.c.l.b16 %v675
      %v2185 = vunpack.c.h.b16 %v675
      %v2186 = vunpack.c.l.b16 %v676
      %v2187 = vunpack.c.h.b16 %v676
      %v2188 = vunpack.c.l.b16 %v677
      %v2189 = vunpack.c.h.b16 %v677
      %v2190 = vunpack.c.l.b16 %v678
      %v2191 = vunpack.c.h.b16 %v678
      %v2192 = vunpack.c.l.b16 %v679
      %v2193 = vunpack.c.h.b16 %v679
      %v2194 = vunpack.c.l.b16 %v680
      %v2195 = vunpack.c.h.b16 %v680
      %v2196 = vunpack.c.l.b16 %v681
      %v2197 = vunpack.c.h.b16 %v681
      %v2198 = vunpack.c.l.b16 %v682
      %v2199 = vunpack.c.h.b16 %v682
      %v2200 = vunpack.c.l.b16 %v683
      %v2201 = vunpack.c.h.b16 %v683
      %v2202 = vunpack.c.l.b16 %v684
      %v2203 = vunpack.c.h.b16 %v684
      %v2204 = vunpack.c.l.b16 %v685
      %v2205 = vunpack.c.h.b16 %v685
      %v2206 = vunpack.c.l.b16 %v686
      %v2207 = vunpack.c.h.b16 %v686
      %v2208 = vunpack.c.l.b16 %v687
      %v2209 = vunpack.c.h.b16 %v687
      %v2210 = vunpack.c.l.b16 %v688
      %v2211 = vunpack.c.h.b16 %v688
      %v2212 = vunpack.c.l.b16 %v689
      %v2213 = vunpack.c.h.b16 %v689
      %v2214 = vunpack.c.l.b16 %v690
      %v2215 = vunpack.c.h.b16 %v690
      %v2216 = vunpack.c.l.b16 %v691
      %v2217 = vunpack.c.h.b16 %v691
      %v2218 = vunpack.c.l.b16 %v692
      %v2219 = vunpack.c.h.b16 %v692
      %v2220 = vunpack.c.l.b16 %v693
      %v2221 = vunpack.c.h.b16 %v693
      %v2222 = vunpack.c.l.b16 %v694
      %v2223 = vunpack.c.h.b16 %v694
      %v2224 = vunpack.c.l.b16 %v695
      %v2225 = vunpack.c.h.b16 %v695
      %v2226 = vunpack.c.l.b16 %v696
      %v2227 = vunpack.c.h.b16 %v696
      %v2228 = vunpack.c.l.b16 %v697
      %v2229 = vunpack.c.h.b16 %v697
      %v2230 = vunpack.c.l.b16 %v698
      %v2231 = vunpack.c.h.b16 %v698
      %v2232 = vunpack.c.l.b16 %v699
      %v2233 = vunpack.c.h.b16 %v699
      %v2234 = vunpack.c.l.b16 %v700
      %v2235 = vunpack.c.h.b16 %v700
      %v2236 = vunpack.c.l.b16 %v701
      %v2237 = vunpack.c.h.b16 %v701
      %v2238 = vunpack.c.l.b16 %v702
      %v2239 = vunpack.c.h.b16 %v702
      %v2240 = vunpack.c.l.b16 %v703
      %v2241 = vunpack.c.h.b16 %v703
      %v2242 = vunpack.c.l.b16 %v704
      %v2243 = vunpack.c.h.b16 %v704
      %v2244 = vunpack.c.l.b16 %v705
      %v2245 = vunpack.c.h.b16 %v705
      %v2246 = vunpack.c.l.b16 %v706
      %v2247 = vunpack.c.h.b16 %v706
      %v2248 = vunpack.c.l.b16 %v707
      %v2249 = vunpack.c.h.b16 %v707
      %v2250 = vunpack.c.l.b16 %v708
      %v2251 = vunpack.c.h.b16 %v708
      %v2252 = vunpack.c.l.b16 %v709
      %v2253 = vunpack.c.h.b16 %v709
      %v2254 = vunpack.c.l.b16 %v710
      %v2255 = vunpack.c.h.b16 %v710
      %v2256 = vunpack.c.l.b16 %v711
      %v2257 = vunpack.c.h.b16 %v711
      %v2258 = vunpack.c.l.b16 %v712
      %v2259 = vunpack.c.h.b16 %v712
      %v2260 = vunpack.c.l.b16 %v713
      %v2261 = vunpack.c.h.b16 %v713
      %v2262 = vunpack.c.l.b16 %v714
      %v2263 = vunpack.c.h.b16 %v714
      %v2264 = vunpack.c.l.b16 %v715
      %v2265 = vunpack.c.h.b16 %v715
      %v2266 = vunpack.c.l.b16 %v716
      %v2267 = vunpack.c.h.b16 %v716
      %v2268 = vunpack.c.l.b16 %v717
      %v2269 = vunpack.c.h.b16 %v717
      %v2270 = vunpack.c.l.b16 %v718
      %v2271 = vunpack.c.h.b16 %v718
      %v2272 = vunpack.c.l.b16 %v719
      %v2273 = vunpack.c.h.b16 %v719
      %v2274 = vunpack.c.l.b16 %v720
      %v2275 = vunpack.c.h.b16 %v720
      %v2276 = vunpack.c.l.b16 %v721
      %v2277 = vunpack.c.h.b16 %v721
      %v2278 = vunpack.c.l.b16 %v722
      %v2279 = vunpack.c.h.b16 %v722
      %v2280 = vunpack.c.l.b16 %v723
      %v2281 = vunpack.c.h.b16 %v723
      %v2282 = vunpack.c.l.b16 %v724
      %v2283 = vunpack.c.h.b16 %v724
      %v2284 = vunpack.c.l.b16 %v725
      %v2285 = vunpack.c.h.b16 %v725
      %v2286 = vunpack.c.l.b16 %v726
      %v2287 = vunpack.c.h.b16 %v726
      %v2288 = vunpack.c.l.b16 %v727
      %v2289 = vunpack.c.h.b16 %v727
      %v2290 = vunpack.c.l.b16 %v728
      %v2291 = vunpack.c.h.b16 %v728
      %v2292 = vunpack.c.l.b16 %v729
      %v2293 = vunpack.c.h.b16 %v729
      %v2294 = vunpack.c.l.b16 %v730
      %v2295 = vunpack.c.h.b16 %v730
      %v2296 = vunpack.c.l.b16 %v731
      %v2297 = vunpack.c.h.b16 %v731
      %v2298 = vunpack.c.l.b16 %v732
      %v2299 = vunpack.c.h.b16 %v732
      %v2300 = vunpack.c.l.b16 %v733
      %v2301 = vunpack.c.h.b16 %v733
      %v2302 = vunpack.c.l.b16 %v734
      %v2303 = vunpack.c.h.b16 %v734
      %v2304 = vunpack.c.l.b16 %v735
      %v2305 = vunpack.c.h.b16 %v735
      %v2306 = vunpack.c.l.b16 %v736
      %v2307 = vunpack.c.h.b16 %v736
      %v2308 = vunpack.c.l.b16 %v737
      %v2309 = vunpack.c.h.b16 %v737
      %v2310 = vunpack.c.l.b16 %v738
      %v2311 = vunpack.c.h.b16 %v738
      %v2312 = vunpack.c.l.b16 %v739
      %v2313 = vunpack.c.h.b16 %v739
      %v2314 = vunpack.c.l.b16 %v740
      %v2315 = vunpack.c.h.b16 %v740
      %v2316 = vpack.c.b16 %v1294, %v1292
      %v2317 = vpack.c.b16 %v1295, %v1293
      %v2318 = vpack.c.b16 %v1298, %v1296
      %v2319 = vpack.c.b16 %v1299, %v1297
      %v2320 = vpack.c.b16 %v1302, %v1300
      %v2321 = vpack.c.b16 %v1303, %v1301
      %v2322 = vpack.c.b16 %v1306, %v1304
      %v2323 = vpack.c.b16 %v1307, %v1305
      %v2324 = vpack.c.b16 %v1310, %v1308
      %v2325 = vpack.c.b16 %v1311, %v1309
      %v2326 = vpack.c.b16 %v1314, %v1312
      %v2327 = vpack.c.b16 %v1315, %v1313
      %v2328 = vpack.c.b16 %v1318, %v1316
      %v2329 = vpack.c.b16 %v1319, %v1317
      %v2330 = vpack.c.b16 %v1322, %v1320
      %v2331 = vpack.c.b16 %v1323, %v1321
      %v2332 = vpack.c.b16 %v1326, %v1324
      %v2333 = vpack.c.b16 %v1327, %v1325
      %v2334 = vpack.c.b16 %v1330, %v1328
      %v2335 = vpack.c.b16 %v1331, %v1329
      %v2336 = vpack.c.b16 %v1334, %v1332
      %v2337 = vpack.c.b16 %v1335, %v1333
      %v2338 = vpack.c.b16 %v1338, %v1336
      %v2339 = vpack.c.b16 %v1339, %v1337
      %v2340 = vpack.c.b16 %v1342, %v1340
      %v2341 = vpack.c.b16 %v1343, %v1341
      %v2342 = vpack.c.b16 %v1346, %v1344
      %v2343 = vpack.c.b16 %v1347, %v1345
      %v2344 = vpack.c.b16 %v1350, %v1348
      %v2345 = vpack.c.b16 %v1351, %v1349
      %v2346 = vpack.c.b16 %v1354, %v1352
      %v2347 = vpack.c.b16 %v1355, %v1353
      %v2348 = vpack.c.b16 %v1358, %v1356
      %v2349 = vpack.c.b16 %v1359, %v1357
      %v2350 = vpack.c.b16 %v1362, %v1360
      %v2351 = vpack.c.b16 %v1363, %v1361
      %v2352 = vpack.c.b16 %v1366, %v1364
      %v2353 = vpack.c.b16 %v1367, %v1365
      %v2354 = vpack.c.b16 %v1370, %v1368
      %v2355 = vpack.c.b16 %v1371, %v1369
      %v2356 = vpack.c.b16 %v1374, %v1372
      %v2357 = vpack.c.b16 %v1375, %v1373
      %v2358 = vpack.c.b16 %v1378, %v1376
      %v2359 = vpack.c.b16 %v1379, %v1377
      %v2360 = vpack.c.b16 %v1382, %v1380
      %v2361 = vpack.c.b16 %v1383, %v1381
      %v2362 = vpack.c.b16 %v1386, %v1384
      %v2363 = vpack.c.b16 %v1387, %v1385
      %v2364 = vpack.c.b16 %v1390, %v1388
      %v2365 = vpack.c.b16 %v1391, %v1389
      %v2366 = vpack.c.b16 %v1394, %v1392
      %v2367 = vpack.c.b16 %v1395, %v1393
      %v2368 = vpack.c.b16 %v1398, %v1396
      %v2369 = vpack.c.b16 %v1399, %v1397
      %v2370 = vpack.c.b16 %v1402, %v1400
      %v2371 = vpack.c.b16 %v1403, %v1401
      %v2372 = vpack.c.b16 %v1406, %v1404
      %v2373 = vpack.c.b16 %v1407, %v1405
      %v2374 = vpack.c.b16 %v1410, %v1408
      %v2375 = vpack.c.b16 %v1411, %v1409
      %v2376 = vpack.c.b16 %v1414, %v1412
      %v2377 = vpack.c.b16 %v1415, %v1413
      %v2378 = vpack.c.b16 %v1418, %v1416
      %v2379 = vpack.c.b16 %v1419, %v1417
      %v2380 = vpack.c.b16 %v1422, %v1420
      %v2381 = vpack.c.b16 %v1423, %v1421
      %v2382 = vpack.c.b16 %v1426, %v1424
      %v2383 = vpack.c.b16 %v1427, %v1425
      %v2384 = vpack.c.b16 %v1430, %v1428
      %v2385 = vpack.c.b16 %v1431, %v1429
      %v2386 = vpack.c.b16 %v1434, %v1432
      %v2387 = vpack.c.b16 %v1435, %v1433
      %v2388 = vpack.c.b16 %v1438, %v1436
      %v2389 = vpack.c.b16 %v1439, %v1437
      %v2390 = vpack.c.b16 %v1442, %v1440
      %v2391 = vpack.c.b16 %v1443, %v1441
      %v2392 = vpack.c.b16 %v1446, %v1444
      %v2393 = vpack.c.b16 %v1447, %v1445
      %v2394 = vpack.c.b16 %v1450, %v1448
      %v2395 = vpack.c.b16 %v1451, %v1449
      %v2396 = vpack.c.b16 %v1454, %v1452
      %v2397 = vpack.c.b16 %v1455, %v1453
      %v2398 = vpack.c.b16 %v1458, %v1456
      %v2399 = vpack.c.b16 %v1459, %v1457
      %v2400 = vpack.c.b16 %v1462, %v1460
      %v2401 = vpack.c.b16 %v1463, %v1461
      %v2402 = vpack.c.b16 %v1466, %v1464
      %v2403 = vpack.c.b16 %v1467, %v1465
      %v2404 = vpack.c.b16 %v1470, %v1468
      %v2405 = vpack.c.b16 %v1471, %v1469
      %v2406 = vpack.c.b16 %v1474, %v1472
      %v2407 = vpack.c.b16 %v1475, %v1473
      %v2408 = vpack.c.b16 %v1478, %v1476
      %v2409 = vpack.c.b16 %v1479, %v1477
      %v2410 = vpack.c.b16 %v1482, %v1480
      %v2411 = vpack.c.b16 %v1483, %v1481
      %v2412 = vpack.c.b16 %v1486, %v1484
      %v2413 = vpack.c.b16 %v1487, %v1485
      %v2414 = vpack.c.b16 %v1490, %v1488
      %v2415 = vpack.c.b16 %v1491, %v1489
      %v2416 = vpack.c.b16 %v1494, %v1492
      %v2417 = vpack.c.b16 %v1495, %v1493
      %v2418 = vpack.c.b16 %v1498, %v1496
      %v2419 = vpack.c.b16 %v1499, %v1497
      %v2420 = vpack.c.b16 %v1502, %v1500
      %v2421 = vpack.c.b16 %v1503, %v1501
      %v2422 = vpack.c.b16 %v1506, %v1504
      %v2423 = vpack.c.b16 %v1507, %v1505
      %v2424 = vpack.c.b16 %v1510, %v1508
      %v2425 = vpack.c.b16 %v1511, %v1509
      %v2426 = vpack.c.b16 %v1514, %v1512
      %v2427 = vpack.c.b16 %v1515, %v1513
      %v2428 = vpack.c.b16 %v1518, %v1516
      %v2429 = vpack.c.b16 %v1519, %v1517
      %v2430 = vpack.c.b16 %v1522, %v1520
      %v2431 = vpack.c.b16 %v1523, %v1521
      %v2432 = vpack.c.b16 %v1526, %v1524
      %v2433 = vpack.c.b16 %v1527, %v1525
      %v2434 = vpack.c.b16 %v1530, %v1528
      %v2435 = vpack.c.b16 %v1531, %v1529
      %v2436 = vpack.c.b16 %v1534, %v1532
      %v2437 = vpack.c.b16 %v1535, %v1533
      %v2438 = vpack.c.b16 %v1538, %v1536
      %v2439 = vpack.c.b16 %v1539, %v1537
      %v2440 = vpack.c.b16 %v1542, %v1540
      %v2441 = vpack.c.b16 %v1543, %v1541
      %v2442 = vpack.c.b16 %v1546, %v1544
      %v2443 = vpack.c.b16 %v1547, %v1545
      %v2444 = vpack.c.b16 %v1550, %v1548
      %v2445 = vpack.c.b16 %v1551, %v1549
      %v2446 = vpack.c.b16 %v1554, %v1552
      %v2447 = vpack.c.b16 %v1555, %v1553
      %v2448 = vpack.c.b16 %v1558, %v1556
      %v2449 = vpack.c.b16 %v1559, %v1557
      %v2450 = vpack.c.b16 %v1562, %v1560
      %v2451 = vpack.c.b16 %v1563, %v1561
      %v2452 = vpack.c.b16 %v1566, %v1564
      %v2453 = vpack.c.b16 %v1567, %v1565
      %v2454 = vpack.c.b16 %v1570, %v1568
      %v2455 = vpack.c.b16 %v1571, %v1569
      %v2456 = vpack.c.b16 %v1574, %v1572
      %v2457 = vpack.c.b16 %v1575, %v1573
      %v2458 = vpack.c.b16 %v1578, %v1576
      %v2459 = vpack.c.b16 %v1579, %v1577
      %v2460 = vpack.c.b16 %v1582, %v1580
      %v2461 = vpack.c.b16 %v1583, %v1581
      %v2462 = vpack.c.b16 %v1586, %v1584
      %v2463 = vpack.c.b16 %v1587, %v1585
      %v2464 = vpack.c.b16 %v1590, %v1588
      %v2465 = vpack.c.b16 %v1591, %v1589
      %v2466 = vpack.c.b16 %v1594, %v1592
      %v2467 = vpack.c.b16 %v1595, %v1593
      %v2468 = vpack.c.b16 %v1598, %v1596
      %v2469 = vpack.c.b16 %v1599, %v1597
      %v2470 = vpack.c.b16 %v1602, %v1600
      %v2471 = vpack.c.b16 %v1603, %v1601
      %v2472 = vpack.c.b16 %v1606, %v1604
      %v2473 = vpack.c.b16 %v1607, %v1605
      %v2474 = vpack.c.b16 %v1610, %v1608
      %v2475 = vpack.c.b16 %v1611, %v1609
      %v2476 = vpack.c.b16 %v1614, %v1612
      %v2477 = vpack.c.b16 %v1615, %v1613
      %v2478 = vpack.c.b16 %v1618, %v1616
      %v2479 = vpack.c.b16 %v1619, %v1617
      %v2480 = vpack.c.b16 %v1622, %v1620
      %v2481 = vpack.c.b16 %v1623, %v1621
      %v2482 = vpack.c.b16 %v1626, %v1624
      %v2483 = vpack.c.b16 %v1627, %v1625
      %v2484 = vpack.c.b16 %v1630, %v1628
      %v2485 = vpack.c.b16 %v1631, %v1629
      %v2486 = vpack.c.b16 %v1634, %v1632
      %v2487 = vpack.c.b16 %v1635, %v1633
      %v2488 = vpack.c.b16 %v1638, %v1636
      %v2489 = vpack.c.b16 %v1639, %v1637
      %v2490 = vpack.c.b16 %v1642, %v1640
      %v2491 = vpack.c.b16 %v1643, %v1641
      %v2492 = vpack.c.b16 %v1646, %v1644
      %v2493 = vpack.c.b16 %v1647, %v1645
      %v2494 = vpack.c.b16 %v1650, %v1648
      %v2495 = vpack.c.b16 %v1651, %v1649
      %v2496 = vpack.c.b16 %v1654, %v1652
      %v2497 = vpack.c.b16 %v1655, %v1653
      %v2498 = vpack.c.b16 %v1658, %v1656
      %v2499 = vpack.c.b16 %v1659, %v1657
      %v2500 = vpack.c.b16 %v1662, %v1660
      %v2501 = vpack.c.b16 %v1663, %v1661
      %v2502 = vpack.c.b16 %v1666, %v1664
      %v2503 = vpack.c.b16 %v1667, %v1665
      %v2504 = vpack.c.b16 %v1670, %v1668
      %v2505 = vpack.c.b16 %v1671, %v1669
      %v2506 = vpack.c.b16 %v1674, %v1672
      %v2507 = vpack.c.b16 %v1675, %v1673
      %v2508 = vpack.c.b16 %v1678, %v1676
      %v2509 = vpack.c.b16 %v1679, %v1677
      %v2510 = vpack.c.b16 %v1682, %v1680
      %v2511 = vpack.c.b16 %v1683, %v1681
      %v2512 = vpack.c.b16 %v1686, %v1684
      %v2513 = vpack.c.b16 %v1687, %v1685
      %v2514 = vpack.c.b16 %v1690, %v1688
      %v2515 = vpack.c.b16 %v1691, %v1689
      %v2516 = vpack.c.b16 %v1694, %v1692
      %v2517 = vpack.c.b16 %v1695, %v1693
      %v2518 = vpack.c.b16 %v1698, %v1696
      %v2519 = vpack.c.b16 %v1699, %v1697
      %v2520 = vpack.c.b16 %v1702, %v1700
      %v2521 = vpack.c.b16 %v1703, %v1701
      %v2522 = vpack.c.b16 %v1706, %v1704
      %v2523 = vpack.c.b16 %v1707, %v1705
      %v2524 = vpack.c.b16 %v1710, %v1708
      %v2525 = vpack.c.b16 %v1711, %v1709
      %v2526 = vpack.c.b16 %v1714, %v1712
      %v2527 = vpack.c.b16 %v1715, %v1713
      %v2528 = vpack.c.b16 %v1718, %v1716
      %v2529 = vpack.c.b16 %v1719, %v1717
      %v2530 = vpack.c.b16 %v1722, %v1720
      %v2531 = vpack.c.b16 %v1723, %v1721
      %v2532 = vpack.c.b16 %v1726, %v1724
      %v2533 = vpack.c.b16 %v1727, %v1725
      %v2534 = vpack.c.b16 %v1730, %v1728
      %v2535 = vpack.c.b16 %v1731, %v1729
      %v2536 = vpack.c.b16 %v1734, %v1732
      %v2537 = vpack.c.b16 %v1735, %v1733
      %v2538 = vpack.c.b16 %v1738, %v1736
      %v2539 = vpack.c.b16 %v1739, %v1737
      %v2540 = vpack.c.b16 %v1742, %v1740
      %v2541 = vpack.c.b16 %v1743, %v1741
      %v2542 = vpack.c.b16 %v1746, %v1744
      %v2543 = vpack.c.b16 %v1747, %v1745
      %v2544 = vpack.c.b16 %v1750, %v1748
      %v2545 = vpack.c.b16 %v1751, %v1749
      %v2546 = vpack.c.b16 %v1754, %v1752
      %v2547 = vpack.c.b16 %v1755, %v1753
      %v2548 = vpack.c.b16 %v1758, %v1756
      %v2549 = vpack.c.b16 %v1759, %v1757
      %v2550 = vpack.c.b16 %v1762, %v1760
      %v2551 = vpack.c.b16 %v1763, %v1761
      %v2552 = vpack.c.b16 %v1766, %v1764
      %v2553 = vpack.c.b16 %v1767, %v1765
      %v2554 = vpack.c.b16 %v1770, %v1768
      %v2555 = vpack.c.b16 %v1771, %v1769
      %v2556 = vpack.c.b16 %v1774, %v1772
      %v2557 = vpack.c.b16 %v1775, %v1773
      %v2558 = vpack.c.b16 %v1778, %v1776
      %v2559 = vpack.c.b16 %v1779, %v1777
      %v2560 = vpack.c.b16 %v1782, %v1780
      %v2561 = vpack.c.b16 %v1783, %v1781
      %v2562 = vpack.c.b16 %v1786, %v1784
      %v2563 = vpack.c.b16 %v1787, %v1785
      %v2564 = vpack.c.b16 %v1790, %v1788
      %v2565 = vpack.c.b16 %v1791, %v1789
      %v2566 = vpack.c.b16 %v1794, %v1792
      %v2567 = vpack.c.b16 %v1795, %v1793
      %v2568 = vpack.c.b16 %v1798, %v1796
      %v2569 = vpack.c.b16 %v1799, %v1797
      %v2570 = vpack.c.b16 %v1802, %v1800
      %v2571 = vpack.c.b16 %v1803, %v1801
      %v2572 = vpack.c.b16 %v1806, %v1804
      %v2573 = vpack.c.b16 %v1807, %v1805
      %v2574 = vpack.c.b16 %v1810, %v1808
      %v2575 = vpack.c.b16 %v1811, %v1809
      %v2576 = vpack.c.b16 %v1814, %v1812
      %v2577 = vpack.c.b16 %v1815, %v1813
      %v2578 = vpack.c.b16 %v1818, %v1816
      %v2579 = vpack.c.b16 %v1819, %v1817
      %v2580 = vpack.c.b16 %v1822, %v1820
      %v2581 = vpack.c.b16 %v1823, %v1821
      %v2582 = vpack.c.b16 %v1826, %v1824
      %v2583 = vpack.c.b16 %v1827, %v1825
      %v2584 = vpack.c.b16 %v1830, %v1828
      %v2585 = vpack.c.b16 %v1831, %v1829
      %v2586 = vpack.c.b16 %v1834, %v1832
      %v2587 = vpack.c.b16 %v1835, %v1833
      %v2588 = vpack.c.b16 %v1838, %v1836
      %v2589 = vpack.c.b16 %v1839, %v1837
      %v2590 = vpack.c.b16 %v1842, %v1840
      %v2591 = vpack.c.b16 %v1843, %v1841
      %v2592 = vpack.c.b16 %v1846, %v1844
      %v2593 = vpack.c.b16 %v1847, %v1845
      %v2594 = vpack.c.b16 %v1850, %v1848
      %v2595 = vpack.c.b16 %v1851, %v1849
      %v2596 = vpack.c.b16 %v1854, %v1852
      %v2597 = vpack.c.b16 %v1855, %v1853
      %v2598 = vpack.c.b16 %v1858, %v1856
      %v2599 = vpack.c.b16 %v1859, %v1857
      %v2600 = vpack.c.b16 %v1862, %v1860
      %v2601 = vpack.c.b16 %v1863, %v1861
      %v2602 = vpack.c.b16 %v1866, %v1864
      %v2603 = vpack.c.b16 %v1867, %v1865
      %v2604 = vpack.c.b16 %v1870, %v1868
      %v2605 = vpack.c.b16 %v1871, %v1869
      %v2606 = vpack.c.b16 %v1874, %v1872
      %v2607 = vpack.c.b16 %v1875, %v1873
      %v2608 = vpack.c.b16 %v1878, %v1876
      %v2609 = vpack.c.b16 %v1879, %v1877
      %v2610 = vpack.c.b16 %v1882, %v1880
      %v2611 = vpack.c.b16 %v1883, %v1881
      %v2612 = vpack.c.b16 %v1886, %v1884
      %v2613 = vpack.c.b16 %v1887, %v1885
      %v2614 = vpack.c.b16 %v1890, %v1888
      %v2615 = vpack.c.b16 %v1891, %v1889
      %v2616 = vpack.c.b16 %v1894, %v1892
      %v2617 = vpack.c.b16 %v1895, %v1893
      %v2618 = vpack.c.b16 %v1898, %v1896
      %v2619 = vpack.c.b16 %v1899, %v1897
      %v2620 = vpack.c.b16 %v1902, %v1900
      %v2621 = vpack.c.b16 %v1903, %v1901
      %v2622 = vpack.c.b16 %v1906, %v1904
      %v2623 = vpack.c.b16 %v1907, %v1905
      %v2624 = vpack.c.b16 %v1910, %v1908
      %v2625 = vpack.c.b16 %v1911, %v1909
      %v2626 = vpack.c.b16 %v1914, %v1912
      %v2627 = vpack.c.b16 %v1915, %v1913
      %v2628 = vpack.c.b16 %v1918, %v1916
      %v2629 = vpack.c.b16 %v1919, %v1917
      %v2630 = vpack.c.b16 %v1922, %v1920
      %v2631 = vpack.c.b16 %v1923, %v1921
      %v2632 = vpack.c.b16 %v1926, %v1924
      %v2633 = vpack.c.b16 %v1927, %v1925
      %v2634 = vpack.c.b16 %v1930, %v1928
      %v2635 = vpack.c.b16 %v1931, %v1929
      %v2636 = vpack.c.b16 %v1934, %v1932
      %v2637 = vpack.c.b16 %v1935, %v1933
      %v2638 = vpack.c.b16 %v1938, %v1936
      %v2639 = vpack.c.b16 %v1939, %v1937
      %v2640 = vpack.c.b16 %v1942, %v1940
      %v2641 = vpack.c.b16 %v1943, %v1941
      %v2642 = vpack.c.b16 %v1946, %v1944
      %v2643 = vpack.c.b16 %v1947, %v1945
      %v2644 = vpack.c.b16 %v1950, %v1948
      %v2645 = vpack.c.b16 %v1951, %v1949
      %v2646 = vpack.c.b16 %v1954, %v1952
      %v2647 = vpack.c.b16 %v1955, %v1953
      %v2648 = vpack.c.b16 %v1958, %v1956
      %v2649 = vpack.c.b16 %v1959, %v1957
      %v2650 = vpack.c.b16 %v1962, %v1960
      %v2651 = vpack.c.b16 %v1963, %v1961
      %v2652 = vpack.c.b16 %v1966, %v1964
      %v2653 = vpack.c.b16 %v1967, %v1965
      %v2654 = vpack.c.b16 %v1970, %v1968
      %v2655 = vpack.c.b16 %v1971, %v1969
      %v2656 = vpack.c.b16 %v1974, %v1972
      %v2657 = vpack.c.b16 %v1975, %v1973
      %v2658 = vpack.c.b16 %v1978, %v1976
      %v2659 = vpack.c.b16 %v1979, %v1977
      %v2660 = vpack.c.b16 %v1982, %v1980
      %v2661 = vpack.c.b16 %v1983, %v1981
      %v2662 = vpack.c.b16 %v1986, %v1984
      %v2663 = vpack.c.b16 %v1987, %v1985
      %v2664 = vpack.c.b16 %v1990, %v1988
      %v2665 = vpack.c.b16 %v1991, %v1989
      %v2666 = vpack.c.b16 %v1994, %v1992
      %v2667 = vpack.c.b16 %v1995, %v1993
      %v2668 = vpack.c.b16 %v1998, %v1996
      %v2669 = vpack.c.b16 %v1999, %v1997
      %v2670 = vpack.c.b16 %v2002, %v2000
      %v2671 = vpack.c.b16 %v2003, %v2001
      %v2672 = vpack.c.b16 %v2006, %v2004
      %v2673 = vpack.c.b16 %v2007, %v2005
      %v2674 = vpack.c.b16 %v2010, %v2008
      %v2675 = vpack.c.b16 %v2011, %v2009
      %v2676 = vpack.c.b16 %v2014, %v2012
      %v2677 = vpack.c.b16 %v2015, %v2013
      %v2678 = vpack.c.b16 %v2018, %v2016
      %v2679 = vpack.c.b16 %v2019, %v2017
      %v2680 = vpack.c.b16 %v2022, %v2020
      %v2681 = vpack.c.b16 %v2023, %v2021
      %v2682 = vpack.c.b16 %v2026, %v2024
      %v2683 = vpack.c.b16 %v2027, %v2025
      %v2684 = vpack.c.b16 %v2030, %v2028
      %v2685 = vpack.c.b16 %v2031, %v2029
      %v2686 = vpack.c.b16 %v2034, %v2032
      %v2687 = vpack.c.b16 %v2035, %v2033
      %v2688 = vpack.c.b16 %v2038, %v2036
      %v2689 = vpack.c.b16 %v2039, %v2037
      %v2690 = vpack.c.b16 %v2042, %v2040
      %v2691 = vpack.c.b16 %v2043, %v2041
      %v2692 = vpack.c.b16 %v2046, %v2044
      %v2693 = vpack.c.b16 %v2047, %v2045
      %v2694 = vpack.c.b16 %v2050, %v2048
      %v2695 = vpack.c.b16 %v2051, %v2049
      %v2696 = vpack.c.b16 %v2054, %v2052
      %v2697 = vpack.c.b16 %v2055, %v2053
      %v2698 = vpack.c.b16 %v2058, %v2056
      %v2699 = vpack.c.b16 %v2059, %v2057
      %v2700 = vpack.c.b16 %v2062, %v2060
      %v2701 = vpack.c.b16 %v2063, %v2061
      %v2702 = vpack.c.b16 %v2066, %v2064
      %v2703 = vpack.c.b16 %v2067, %v2065
      %v2704 = vpack.c.b16 %v2070, %v2068
      %v2705 = vpack.c.b16 %v2071, %v2069
      %v2706 = vpack.c.b16 %v2074, %v2072
      %v2707 = vpack.c.b16 %v2075, %v2073
      %v2708 = vpack.c.b16 %v2078, %v2076
      %v2709 = vpack.c.b16 %v2079, %v2077
      %v2710 = vpack.c.b16 %v2082, %v2080
      %v2711 = vpack.c.b16 %v2083, %v2081
      %v2712 = vpack.c.b16 %v2086, %v2084
      %v2713 = vpack.c.b16 %v2087, %v2085
      %v2714 = vpack.c.b16 %v2090, %v2088
      %v2715 = vpack.c.b16 %v2091, %v2089
      %v2716 = vpack.c.b16 %v2094, %v2092
      %v2717 = vpack.c.b16 %v2095, %v2093
      %v2718 = vpack.c.b16 %v2098, %v2096
      %v2719 = vpack.c.b16 %v2099, %v2097
      %v2720 = vpack.c.b16 %v2102, %v2100
      %v2721 = vpack.c.b16 %v2103, %v2101
      %v2722 = vpack.c.b16 %v2106, %v2104
      %v2723 = vpack.c.b16 %v2107, %v2105
      %v2724 = vpack.c.b16 %v2110, %v2108
      %v2725 = vpack.c.b16 %v2111, %v2109
      %v2726 = vpack.c.b16 %v2114, %v2112
      %v2727 = vpack.c.b16 %v2115, %v2113
      %v2728 = vpack.c.b16 %v2118, %v2116
      %v2729 = vpack.c.b16 %v2119, %v2117
      %v2730 = vpack.c.b16 %v2122, %v2120
      %v2731 = vpack.c.b16 %v2123, %v2121
      %v2732 = vpack.c.b16 %v2126, %v2124
      %v2733 = vpack.c.b16 %v2127, %v2125
      %v2734 = vpack.c.b16 %v2130, %v2128
      %v2735 = vpack.c.b16 %v2131, %v2129
      %v2736 = vpack.c.b16 %v2134, %v2132
      %v2737 = vpack.c.b16 %v2135, %v2133
      %v2738 = vpack.c.b16 %v2138, %v2136
      %v2739 = vpack.c.b16 %v2139, %v2137
      %v2740 = vpack.c.b16 %v2142, %v2140
      %v2741 = vpack.c.b16 %v2143, %v2141
      %v2742 = vpack.c.b16 %v2146, %v2144
      %v2743 = vpack.c.b16 %v2147, %v2145
      %v2744 = vpack.c.b16 %v2150, %v2148
      %v2745 = vpack.c.b16 %v2151, %v2149
      %v2746 = vpack.c.b16 %v2154, %v2152
      %v2747 = vpack.c.b16 %v2155, %v2153
      %v2748 = vpack.c.b16 %v2158, %v2156
      %v2749 = vpack.c.b16 %v2159, %v2157
      %v2750 = vpack.c.b16 %v2162, %v2160
      %v2751 = vpack.c.b16 %v2163, %v2161
      %v2752 = vpack.c.b16 %v2166, %v2164
      %v2753 = vpack.c.b16 %v2167, %v2165
      %v2754 = vpack.c.b16 %v2170, %v2168
      %v2755 = vpack.c.b16 %v2171, %v2169
      %v2756 = vpack.c.b16 %v2174, %v2172
      %v2757 = vpack.c.b16 %v2175, %v2173
      %v2758 = vpack.c.b16 %v2178, %v2176
      %v2759 = vpack.c.b16 %v2179, %v2177
      %v2760 = vpack.c.b16 %v2182, %v2180
      %v2761 = vpack.c.b16 %v2183, %v2181
      %v2762 = vpack.c.b16 %v2186, %v2184
      %v2763 = vpack.c.b16 %v2187, %v2185
      %v2764 = vpack.c.b16 %v2190, %v2188
      %v2765 = vpack.c.b16 %v2191, %v2189
      %v2766 = vpack.c.b16 %v2194, %v2192
      %v2767 = vpack.c.b16 %v2195, %v2193
      %v2768 = vpack.c.b16 %v2198, %v2196
      %v2769 = vpack.c.b16 %v2199, %v2197
      %v2770 = vpack.c.b16 %v2202, %v2200
      %v2771 = vpack.c.b16 %v2203, %v2201
      %v2772 = vpack.c.b16 %v2206, %v2204
      %v2773 = vpack.c.b16 %v2207, %v2205
      %v2774 = vpack.c.b16 %v2210, %v2208
      %v2775 = vpack.c.b16 %v2211, %v2209
      %v2776 = vpack.c.b16 %v2214, %v2212
      %v2777 = vpack.c.b16 %v2215, %v2213
      %v2778 = vpack.c.b16 %v2218, %v2216
      %v2779 = vpack.c.b16 %v2219, %v2217
      %v2780 = vpack.c.b16 %v2222, %v2220
      %v2781 = vpack.c.b16 %v2223, %v2221
      %v2782 = vpack.c.b16 %v2226, %v2224
      %v2783 = vpack.c.b16 %v2227, %v2225
      %v2784 = vpack.c.b16 %v2230, %v2228
      %v2785 = vpack.c.b16 %v2231, %v2229
      %v2786 = vpack.c.b16 %v2234, %v2232
      %v2787 = vpack.c.b16 %v2235, %v2233
      %v2788 = vpack.c.b16 %v2238, %v2236
      %v2789 = vpack.c.b16 %v2239, %v2237
      %v2790 = vpack.c.b16 %v2242, %v2240
      %v2791 = vpack.c.b16 %v2243, %v2241
      %v2792 = vpack.c.b16 %v2246, %v2244
      %v2793 = vpack.c.b16 %v2247, %v2245
      %v2794 = vpack.c.b16 %v2250, %v2248
      %v2795 = vpack.c.b16 %v2251, %v2249
      %v2796 = vpack.c.b16 %v2254, %v2252
      %v2797 = vpack.c.b16 %v2255, %v2253
      %v2798 = vpack.c.b16 %v2258, %v2256
      %v2799 = vpack.c.b16 %v2259, %v2257
      %v2800 = vpack.c.b16 %v2262, %v2260
      %v2801 = vpack.c.b16 %v2263, %v2261
      %v2802 = vpack.c.b16 %v2266, %v2264
      %v2803 = vpack.c.b16 %v2267, %v2265
      %v2804 = vpack.c.b16 %v2270, %v2268
      %v2805 = vpack.c.b16 %v2271, %v2269
      %v2806 = vpack.c.b16 %v2274, %v2272
      %v2807 = vpack.c.b16 %v2275, %v2273
      %v2808 = vpack.c.b16 %v2278, %v2276
      %v2809 = vpack.c.b16 %v2279, %v2277
      %v2810 = vpack.c.b16 %v2282, %v2280
      %v2811 = vpack.c.b16 %v2283, %v2281
      %v2812 = vpack.c.b16 %v2286, %v2284
      %v2813 = vpack.c.b16 %v2287, %v2285
      %v2814 = vpack.c.b16 %v2290, %v2288
      %v2815 = vpack.c.b16 %v2291, %v2289
      %v2816 = vpack.c.b16 %v2294, %v2292
      %v2817 = vpack.c.b16 %v2295, %v2293
      %v2818 = vpack.c.b16 %v2298, %v2296
      %v2819 = vpack.c.b16 %v2299, %v2297
      %v2820 = vpack.c.b16 %v2302, %v2300
      %v2821 = vpack.c.b16 %v2303, %v2301
      %v2822 = vpack.c.b16 %v2306, %v2304
      %v2823 = vpack.c.b16 %v2307, %v2305
      %v2824 = vpack.c.b16 %v2310, %v2308
      %v2825 = vpack.c.b16 %v2311, %v2309
      %v2826 = vpack.c.b16 %v2314, %v2312
      %v2827 = vpack.c.b16 %v2315, %v2313
      %v3372 = vunpack.c.l.b16 %v741
      %v3373 = vunpack.c.l.b16 %v742
      %v3374 = vunpack.c.l.b16 %v743
      %v3375 = vunpack.c.l.b16 %v744
      %v3376 = vunpack.c.l.b16 %v745
      %v3377 = vunpack.c.l.b16 %v746
      %v3378 = vunpack.c.l.b16 %v747
      %v3379 = vunpack.c.l.b16 %v748
      %v3380 = vunpack.c.l.b16 %v749
      %v3381 = vunpack.c.l.b16 %v750
      %v3382 = vunpack.c.l.b16 %v751
      %v3383 = vunpack.c.l.b16 %v752
      %v3384 = vunpack.c.l.b16 %v753
      %v3385 = vunpack.c.l.b16 %v754
      %v3386 = vunpack.c.l.b16 %v755
      %v3387 = vunpack.c.l.b16 %v756
      %v3388 = vunpack.c.l.b16 %v757
      %v3389 = vunpack.c.l.b16 %v758
      %v3390 = vunpack.c.l.b16 %v759
      %v3391 = vunpack.c.l.b16 %v760
      %v3392 = vunpack.c.l.b16 %v761
      %v3393 = vunpack.c.l.b16 %v762
      %v3394 = vunpack.c.l.b16 %v763
      %v3395 = vunpack.c.l.b16 %v764
      %v3396 = vunpack.c.l.b16 %v765
      %v3397 = vunpack.c.l.b16 %v766
      %v3398 = vunpack.c.l.b16 %v767
      %v3399 = vunpack.c.l.b16 %v768
      %v3400 = vunpack.c.l.b16 %v769
      %v3401 = vunpack.c.l.b16 %v770
      %v3402 = vunpack.c.l.b16 %v771
      %v3403 = vunpack.c.l.b16 %v772
      %v3404 = vpack.c.b16 %v3373, %v3372
      %v3405 = vpack.c.b16 %v3375, %v3374
      %v3406 = vpack.c.b16 %v3377, %v3376
      %v3407 = vpack.c.b16 %v3379, %v3378
      %v3408 = vpack.c.b16 %v3381, %v3380
      %v3409 = vpack.c.b16 %v3383, %v3382
      %v3410 = vpack.c.b16 %v3385, %v3384
      %v3411 = vpack.c.b16 %v3387, %v3386
      %v3412 = vpack.c.b16 %v3389, %v3388
      %v3413 = vpack.c.b16 %v3391, %v3390
      %v3414 = vpack.c.b16 %v3393, %v3392
      %v3415 = vpack.c.b16 %v3395, %v3394
      %v3416 = vpack.c.b16 %v3397, %v3396
      %v3417 = vpack.c.b16 %v3399, %v3398
      %v3418 = vpack.c.b16 %v3401, %v3400
      %v3419 = vpack.c.b16 %v3403, %v3402
      %3436 = vmatprep.subr.bf16.mxu0 0
      %3437 = vmatpush1.bf16.msra.mxu0 %v3404
      %3438 = vmatprep.subr.bf16.mxu0 0
      %3439 = vmatpush1.bf16.msra.mxu0 %v3405
      %3440 = vmatprep.subr.bf16.mxu0 0
      %3441 = vmatpush1.bf16.msra.mxu0 %v3406
      %3442 = vmatprep.subr.bf16.mxu0 0
      %3443 = vmatpush1.bf16.msra.mxu0 %v3407
      %3444 = vmatprep.subr.bf16.mxu0 0
      %3445 = vmatpush1.bf16.msra.mxu0 %v3408
      %3446 = vmatprep.subr.bf16.mxu0 0
      %3447 = vmatpush1.bf16.msra.mxu0 %v3409
      %3448 = vmatprep.subr.bf16.mxu0 0
      %3449 = vmatpush1.bf16.msra.mxu0 %v3410
      %3450 = vmatprep.subr.bf16.mxu0 0
      %3451 = vmatpush1.bf16.msra.mxu0 %v3411
      %3452 = vmatprep.subr.bf16.mxu0 0
      %3453 = vmatpush1.bf16.msra.mxu0 %v3412
      %3454 = vmatprep.subr.bf16.mxu0 0
      %3455 = vmatpush1.bf16.msra.mxu0 %v3413
      %3456 = vmatprep.subr.bf16.mxu0 0
      %3457 = vmatpush1.bf16.msra.mxu0 %v3414
      %3458 = vmatprep.subr.bf16.mxu0 0
      %3459 = vmatpush1.bf16.msra.mxu0 %v3415
      %3460 = vmatprep.subr.bf16.mxu0 0
      %3461 = vmatpush1.bf16.msra.mxu0 %v3416
      %3462 = vmatprep.subr.bf16.mxu0 0
      %3463 = vmatpush1.bf16.msra.mxu0 %v3417
      %3464 = vmatprep.subr.bf16.mxu0 0
      %3465 = vmatpush1.bf16.msra.mxu0 %v3418
      %3466 = vmatprep.subr.bf16.mxu0 0
      %3467 = vmatpush1.bf16.msra.mxu0 %v3419
      %3468 = vmatprep.mubr.bf16.mxu0 %v2317
      %3469 = vmatmul.mubr.bf16.gmra.mrb[0].mxu0 %v2316
      %v3470 = vpop.f32.mrb[0].mxu0
      %v3471 = vadd.f32 %v778, %v3470
      %v3472 = vpop.f32.mrb[0].mxu0
      %v3473 = vpop.f32.mrb[0].mxu0
      %v3474 = vadd.f32 %v778, %v3473
      %v3475 = vpop.f32.mrb[0].mxu0
      %3476 = vmatprep.mubr.bf16.mxu0 %v2319
      %3477 = vmatmul.mubr.bf16.gmra.mrb[0].mxu0 %v2318
      %v3478 = vpop.f32.mrb[0].mxu0
      %v3479 = vadd.f32 %v778, %v3478
      %v3480 = vpop.f32.mrb[0].mxu0
      %v3481 = vpop.f32.mrb[0].mxu0
      %v3482 = vadd.f32 %v778, %v3481
      %v3483 = vpop.f32.mrb[0].mxu0
      %3484 = vmatprep.mubr.bf16.mxu0 %v2321
      %3485 = vmatmul.mubr.bf16.gmra.mrb[0].mxu0 %v2320
      %v3486 = vpop.f32.mrb[0].mxu0
      %v3487 = vadd.f32 %v778, %v3486
      %v3488 = vpop.f32.mrb[0].mxu0
      %v3489 = vpop.f32.mrb[0].mxu0
      %v3490 = vadd.f32 %v778, %v3489
      %v3491 = vpop.f32.mrb[0].mxu0
      %3492 = vmatprep.mubr.bf16.mxu0 %v2323
      %3493 = vmatmul.mubr.bf16.gmra.mrb[0].mxu0 %v2322
      %v3494 = vpop.f32.mrb[0].mxu0
      %v3495 = vadd.f32 %v778, %v3494
      %v3496 = vpop.f32.mrb[0].mxu0
      %v3497 = vpop.f32.mrb[0].mxu0
      %v3498 = vadd.f32 %v778, %v3497
      %v3499 = vpop.f32.mrb[0].mxu0
      %3500 = vmatprep.mubr.bf16.mxu0 %v2325
      %3501 = vmatmul.mubr.bf16.gmra.mrb[0].mxu0 %v2324
      %v3502 = vpop.f32.mrb[0].mxu0
      %v3503 = vadd.f32 %v778, %v3502
      %v3504 = vpop.f32.mrb[0].mxu0
      %v3505 = vpop.f32.mrb[0].mxu0
      %v3506 = vadd.f32 %v778, %v3505
      %v3507 = vpop.f32.mrb[0].mxu0
      %3508 = vmatprep.mubr.bf16.mxu0 %v2327
      %3509 = vmatmul.mubr.bf16.gmra.mrb[0].mxu0 %v2326
      %v3510 = vpop.f32.mrb[0].mxu0
      %v3511 = vadd.f32 %v778, %v3510
      %v3512 = vpop.f32.mrb[0].mxu0
      %v3513 = vpop.f32.mrb[0].mxu0
      %v3514 = vadd.f32 %v778, %v3513
      %v3515 = vpop.f32.mrb[0].mxu0
      %3516 = vmatprep.mubr.bf16.mxu0 %v2329
      %3517 = vmatmul.mubr.bf16.gmra.mrb[0].mxu0 %v2328
      %v3518 = vpop.f32.mrb[0].mxu0
      %v3519 = vadd.f32 %v778, %v3518
      %v3520 = vpop.f32.mrb[0].mxu0
      %v3521 = vpop.f32.mrb[0].mxu0
      %v3522 = vadd.f32 %v778, %v3521
      %v3523 = vpop.f32.mrb[0].mxu0
      %3524 = vmatprep.mubr.bf16.mxu0 %v2331
      %3525 = vmatmul.mubr.bf16.gmra.mrb[0].mxu0 %v2330
      %v3526 = vpop.f32.mrb[0].mxu0
      %v3527 = vadd.f32 %v778, %v3526
      %v3528 = vpop.f32.mrb[0].mxu0
      %v3529 = vpop.f32.mrb[0].mxu0
      %v3530 = vadd.f32 %v778, %v3529
      %v3531 = vpop.f32.mrb[0].mxu0
      %3532 = vmatprep.mubr.bf16.mxu0 %v2333
      %3533 = vmatmul.mubr.bf16.gmra.mrb[0].mxu0 %v2332
      %v3534 = vpop.f32.mrb[0].mxu0
      %v3535 = vadd.f32 %v778, %v3534
      %v3536 = vpop.f32.mrb[0].mxu0
      %v3537 = vpop.f32.mrb[0].mxu0
      %v3538 = vadd.f32 %v778, %v3537
      %v3539 = vpop.f32.mrb[0].mxu0
      %3540 = vmatprep.mubr.bf16.mxu0 %v2335
      %3541 = vmatmul.mubr.bf16.gmra.mrb[0].mxu0 %v2334
      %v3542 = vpop.f32.mrb[0].mxu0
      %v3543 = vadd.f32 %v778, %v3542
      %v3544 = vpop.f32.mrb[0].mxu0
      %v3545 = vpop.f32.mrb[0].mxu0
      %v3546 = vadd.f32 %v778, %v3545
      %v3547 = vpop.f32.mrb[0].mxu0
      %3548 = vmatprep.mubr.bf16.mxu0 %v2337
      %3549 = vmatmul.mubr.bf16.gmra.mrb[0].mxu0 %v2336
      %v3550 = vpop.f32.mrb[0].mxu0
      %v3551 = vadd.f32 %v778, %v3550
      %v3552 = vpop.f32.mrb[0].mxu0
      %v3553 = vpop.f32.mrb[0].mxu0
      %v3554 = vadd.f32 %v778, %v3553
      %v3555 = vpop.f32.mrb[0].mxu0
      %3556 = vmatprep.mubr.bf16.mxu0 %v2339
      %3557 = vmatmul.mubr.bf16.gmra.mrb[0].mxu0 %v2338
      %v3558 = vpop.f32.mrb[0].mxu0
      %v3559 = vadd.f32 %v778, %v3558
      %v3560 = vpop.f32.mrb[0].mxu0
      %v3561 = vpop.f32.mrb[0].mxu0
      %v3562 = vadd.f32 %v778, %v3561
      %v3563 = vpop.f32.mrb[0].mxu0
      %3564 = vmatprep.mubr.bf16.mxu0 %v2341
      %3565 = vmatmul.mubr.bf16.gmra.mrb[0].mxu0 %v2340
      %v3566 = vpop.f32.mrb[0].mxu0
      %v3567 = vadd.f32 %v778, %v3566
      %v3568 = vpop.f32.mrb[0].mxu0
      %v3569 = vpop.f32.mrb[0].mxu0
      %v3570 = vadd.f32 %v778, %v3569
      %v3571 = vpop.f32.mrb[0].mxu0
      %3572 = vmatprep.mubr.bf16.mxu0 %v2343
      %3573 = vmatmul.mubr.bf16.gmra.mrb[0].mxu0 %v2342
      %v3574 = vpop.f32.mrb[0].mxu0
      %v3575 = vadd.f32 %v778, %v3574
      %v3576 = vpop.f32.mrb[0].mxu0
      %v3577 = vpop.f32.mrb[0].mxu0
      %v3578 = vadd.f32 %v778, %v3577
      %v3579 = vpop.f32.mrb[0].mxu0
      %3580 = vmatprep.mubr.bf16.mxu0 %v2345
      %3581 = vmatmul.mubr.bf16.gmra.mrb[0].mxu0 %v2344
      %v3582 = vpop.f32.mrb[0].mxu0
      %v3583 = vadd.f32 %v778, %v3582
      %v3584 = vpop.f32.mrb[0].mxu0
      %v3585 = vpop.f32.mrb[0].mxu0
      %v3586 = vadd.f32 %v778, %v3585
      %v3587 = vpop.f32.mrb[0].mxu0
      %3588 = vmatprep.mubr.bf16.mxu0 %v2347
      %3589 = vmatmul.mubr.bf16.gmra.mrb[0].mxu0 %v2346
      %v3590 = vpop.f32.mrb[0].mxu0
      %v3591 = vadd.f32 %v778, %v3590
      %v3592 = vpop.f32.mrb[0].mxu0
      %v3593 = vpop.f32.mrb[0].mxu0
      %v3594 = vadd.f32 %v778, %v3593
      %v3595 = vpop.f32.mrb[0].mxu0
      %3596 = vmatprep.mubr.bf16.mxu0 %v2349
      %3597 = vmatmul.mubr.bf16.gmra.mrb[0].mxu0 %v2348
      %v3598 = vpop.f32.mrb[0].mxu0
      %v3599 = vadd.f32 %v778, %v3598
      %v3600 = vpop.f32.mrb[0].mxu0
      %v3601 = vpop.f32.mrb[0].mxu0
      %v3602 = vadd.f32 %v778, %v3601
      %v3603 = vpop.f32.mrb[0].mxu0
      %3604 = vmatprep.mubr.bf16.mxu0 %v2351
      %3605 = vmatmul.mubr.bf16.gmra.mrb[0].mxu0 %v2350
      %v3606 = vpop.f32.mrb[0].mxu0
      %v3607 = vadd.f32 %v778, %v3606
      %v3608 = vpop.f32.mrb[0].mxu0
      %v3609 = vpop.f32.mrb[0].mxu0
      %v3610 = vadd.f32 %v778, %v3609
      %v3611 = vpop.f32.mrb[0].mxu0
      %3612 = vmatprep.mubr.bf16.mxu0 %v2353
      %3613 = vmatmul.mubr.bf16.gmra.mrb[0].mxu0 %v2352
      %v3614 = vpop.f32.mrb[0].mxu0
      %v3615 = vadd.f32 %v778, %v3614
      %v3616 = vpop.f32.mrb[0].mxu0
      %v3617 = vpop.f32.mrb[0].mxu0
      %v3618 = vadd.f32 %v778, %v3617
      %v3619 = vpop.f32.mrb[0].mxu0
      %3620 = vmatprep.mubr.bf16.mxu0 %v2355
      %3621 = vmatmul.mubr.bf16.gmra.mrb[0].mxu0 %v2354
      %v3622 = vpop.f32.mrb[0].mxu0
      %v3623 = vadd.f32 %v778, %v3622
      %v3624 = vpop.f32.mrb[0].mxu0
      %v3625 = vpop.f32.mrb[0].mxu0
      %v3626 = vadd.f32 %v778, %v3625
      %v3627 = vpop.f32.mrb[0].mxu0
      %3628 = vmatprep.mubr.bf16.mxu0 %v2357
      %3629 = vmatmul.mubr.bf16.gmra.mrb[0].mxu0 %v2356
      %v3630 = vpop.f32.mrb[0].mxu0
      %v3631 = vadd.f32 %v778, %v3630
      %v3632 = vpop.f32.mrb[0].mxu0
      %v3633 = vpop.f32.mrb[0].mxu0
      %v3634 = vadd.f32 %v778, %v3633
      %v3635 = vpop.f32.mrb[0].mxu0
      %3636 = vmatprep.mubr.bf16.mxu0 %v2359
      %3637 = vmatmul.mubr.bf16.gmra.mrb[0].mxu0 %v2358
      %v3638 = vpop.f32.mrb[0].mxu0
      %v3639 = vadd.f32 %v778, %v3638
      %v3640 = vpop.f32.mrb[0].mxu0
      %v3641 = vpop.f32.mrb[0].mxu0
      %v3642 = vadd.f32 %v778, %v3641
      %v3643 = vpop.f32.mrb[0].mxu0
      %3644 = vmatprep.mubr.bf16.mxu0 %v2361
      %3645 = vmatmul.mubr.bf16.gmra.mrb[0].mxu0 %v2360
      %v3646 = vpop.f32.mrb[0].mxu0
      %v3647 = vadd.f32 %v778, %v3646
      %v3648 = vpop.f32.mrb[0].mxu0
      %v3649 = vpop.f32.mrb[0].mxu0
      %v3650 = vadd.f32 %v778, %v3649
      %v3651 = vpop.f32.mrb[0].mxu0
      %3652 = vmatprep.mubr.bf16.mxu0 %v2363
      %3653 = vmatmul.mubr.bf16.gmra.mrb[0].mxu0 %v2362
      %v3654 = vpop.f32.mrb[0].mxu0
      %v3655 = vadd.f32 %v778, %v3654
      %v3656 = vpop.f32.mrb[0].mxu0
      %v3657 = vpop.f32.mrb[0].mxu0
      %v3658 = vadd.f32 %v778, %v3657
      %v3659 = vpop.f32.mrb[0].mxu0
      %3660 = vmatprep.mubr.bf16.mxu0 %v2365
      %3661 = vmatmul.mubr.bf16.gmra.mrb[0].mxu0 %v2364
      %v3662 = vpop.f32.mrb[0].mxu0
      %v3663 = vadd.f32 %v778, %v3662
      %v3664 = vpop.f32.mrb[0].mxu0
      %v3665 = vpop.f32.mrb[0].mxu0
      %v3666 = vadd.f32 %v778, %v3665
      %v3667 = vpop.f32.mrb[0].mxu0
      %3668 = vmatprep.mubr.bf16.mxu0 %v2367
      %3669 = vmatmul.mubr.bf16.gmra.mrb[0].mxu0 %v2366
      %v3670 = vpop.f32.mrb[0].mxu0
      %v3671 = vadd.f32 %v778, %v3670
      %v3672 = vpop.f32.mrb[0].mxu0
      %v3673 = vpop.f32.mrb[0].mxu0
      %v3674 = vadd.f32 %v778, %v3673
      %v3675 = vpop.f32.mrb[0].mxu0
      %3676 = vmatprep.mubr.bf16.mxu0 %v2369
      %3677 = vmatmul.mubr.bf16.gmra.mrb[0].mxu0 %v2368
      %v3678 = vpop.f32.mrb[0].mxu0
      %v3679 = vadd.f32 %v778, %v3678
      %v3680 = vpop.f32.mrb[0].mxu0
      %v3681 = vpop.f32.mrb[0].mxu0
      %v3682 = vadd.f32 %v778, %v3681
      %v3683 = vpop.f32.mrb[0].mxu0
      %3684 = vmatprep.mubr.bf16.mxu0 %v2371
      %3685 = vmatmul.mubr.bf16.gmra.mrb[0].mxu0 %v2370
      %v3686 = vpop.f32.mrb[0].mxu0
      %v3687 = vadd.f32 %v778, %v3686
      %v3688 = vpop.f32.mrb[0].mxu0
      %v3689 = vpop.f32.mrb[0].mxu0
      %v3690 = vadd.f32 %v778, %v3689
      %v3691 = vpop.f32.mrb[0].mxu0
      %3692 = vmatprep.mubr.bf16.mxu0 %v2373
      %3693 = vmatmul.mubr.bf16.gmra.mrb[0].mxu0 %v2372
      %v3694 = vpop.f32.mrb[0].mxu0
      %v3695 = vadd.f32 %v778, %v3694
      %v3696 = vpop.f32.mrb[0].mxu0
      %v3697 = vpop.f32.mrb[0].mxu0
      %v3698 = vadd.f32 %v778, %v3697
      %v3699 = vpop.f32.mrb[0].mxu0
      %3700 = vmatprep.mubr.bf16.mxu0 %v2375
      %3701 = vmatmul.mubr.bf16.gmra.mrb[0].mxu0 %v2374
      %v3702 = vpop.f32.mrb[0].mxu0
      %v3703 = vadd.f32 %v778, %v3702
      %v3704 = vpop.f32.mrb[0].mxu0
      %v3705 = vpop.f32.mrb[0].mxu0
      %v3706 = vadd.f32 %v778, %v3705
      %v3707 = vpop.f32.mrb[0].mxu0
      %3708 = vmatprep.mubr.bf16.mxu0 %v2377
      %3709 = vmatmul.mubr.bf16.gmra.mrb[0].mxu0 %v2376
      %v3710 = vpop.f32.mrb[0].mxu0
      %v3711 = vadd.f32 %v778, %v3710
      %v3712 = vpop.f32.mrb[0].mxu0
      %v3713 = vpop.f32.mrb[0].mxu0
      %v3714 = vadd.f32 %v778, %v3713
      %v3715 = vpop.f32.mrb[0].mxu0
      %3716 = vmatprep.mubr.bf16.mxu0 %v2379
      %3717 = vmatmul.mubr.bf16.gmra.mrb[0].mxu0 %v2378
      %v3718 = vpop.f32.mrb[0].mxu0
      %v3719 = vadd.f32 %v778, %v3718
      %v3720 = vpop.f32.mrb[0].mxu0
      %v3721 = vpop.f32.mrb[0].mxu0
      %v3722 = vadd.f32 %v778, %v3721
      %v3723 = vpop.f32.mrb[0].mxu0
      %3724 = vmatprep.mubr.bf16.mxu0 %v2381
      %3725 = vmatmul.mubr.bf16.gmra.mrb[0].mxu0 %v2380
      %v3726 = vpop.f32.mrb[0].mxu0
      %v3727 = vadd.f32 %v778, %v3726
      %v3728 = vpop.f32.mrb[0].mxu0
      %v3729 = vpop.f32.mrb[0].mxu0
      %v3730 = vadd.f32 %v778, %v3729
      %v3731 = vpop.f32.mrb[0].mxu0
      %3732 = vmatprep.mubr.bf16.mxu0 %v2383
      %3733 = vmatmul.mubr.bf16.gmra.mrb[0].mxu0 %v2382
      %v3734 = vpop.f32.mrb[0].mxu0
      %v3735 = vadd.f32 %v778, %v3734
      %v3736 = vpop.f32.mrb[0].mxu0
      %v3737 = vpop.f32.mrb[0].mxu0
      %v3738 = vadd.f32 %v778, %v3737
      %v3739 = vpop.f32.mrb[0].mxu0
      %3740 = vmatprep.mubr.bf16.mxu0 %v2385
      %3741 = vmatmul.mubr.bf16.gmra.mrb[0].mxu0 %v2384
      %v3742 = vpop.f32.mrb[0].mxu0
      %v3743 = vadd.f32 %v778, %v3742
      %v3744 = vpop.f32.mrb[0].mxu0
      %v3745 = vpop.f32.mrb[0].mxu0
      %v3746 = vadd.f32 %v778, %v3745
      %v3747 = vpop.f32.mrb[0].mxu0
      %3748 = vmatprep.mubr.bf16.mxu0 %v2387
      %3749 = vmatmul.mubr.bf16.gmra.mrb[0].mxu0 %v2386
      %v3750 = vpop.f32.mrb[0].mxu0
      %v3751 = vadd.f32 %v778, %v3750
      %v3752 = vpop.f32.mrb[0].mxu0
      %v3753 = vpop.f32.mrb[0].mxu0
      %v3754 = vadd.f32 %v778, %v3753
      %v3755 = vpop.f32.mrb[0].mxu0
      %3756 = vmatprep.mubr.bf16.mxu0 %v2389
      %3757 = vmatmul.mubr.bf16.gmra.mrb[0].mxu0 %v2388
      %v3758 = vpop.f32.mrb[0].mxu0
      %v3759 = vadd.f32 %v778, %v3758
      %v3760 = vpop.f32.mrb[0].mxu0
      %v3761 = vpop.f32.mrb[0].mxu0
      %v3762 = vadd.f32 %v778, %v3761
      %v3763 = vpop.f32.mrb[0].mxu0
      %3764 = vmatprep.mubr.bf16.mxu0 %v2391
      %3765 = vmatmul.mubr.bf16.gmra.mrb[0].mxu0 %v2390
      %v3766 = vpop.f32.mrb[0].mxu0
      %v3767 = vadd.f32 %v778, %v3766
      %v3768 = vpop.f32.mrb[0].mxu0
      %v3769 = vpop.f32.mrb[0].mxu0
      %v3770 = vadd.f32 %v778, %v3769
      %v3771 = vpop.f32.mrb[0].mxu0
      %3772 = vmatprep.mubr.bf16.mxu0 %v2393
      %3773 = vmatmul.mubr.bf16.gmra.mrb[0].mxu0 %v2392
      %v3774 = vpop.f32.mrb[0].mxu0
      %v3775 = vadd.f32 %v778, %v3774
      %v3776 = vpop.f32.mrb[0].mxu0
      %v3777 = vpop.f32.mrb[0].mxu0
      %v3778 = vadd.f32 %v778, %v3777
      %v3779 = vpop.f32.mrb[0].mxu0
      %3780 = vmatprep.mubr.bf16.mxu0 %v2395
      %3781 = vmatmul.mubr.bf16.gmra.mrb[0].mxu0 %v2394
      %v3782 = vpop.f32.mrb[0].mxu0
      %v3783 = vadd.f32 %v778, %v3782
      %v3784 = vpop.f32.mrb[0].mxu0
      %v3785 = vpop.f32.mrb[0].mxu0
      %v3786 = vadd.f32 %v778, %v3785
      %v3787 = vpop.f32.mrb[0].mxu0
      %3788 = vmatprep.mubr.bf16.mxu0 %v2397
      %3789 = vmatmul.mubr.bf16.gmra.mrb[0].mxu0 %v2396
      %v3790 = vpop.f32.mrb[0].mxu0
      %v3791 = vadd.f32 %v778, %v3790
      %v3792 = vpop.f32.mrb[0].mxu0
      %v3793 = vpop.f32.mrb[0].mxu0
      %v3794 = vadd.f32 %v778, %v3793
      %v3795 = vpop.f32.mrb[0].mxu0
      %3796 = vmatprep.mubr.bf16.mxu0 %v2399
      %3797 = vmatmul.mubr.bf16.gmra.mrb[0].mxu0 %v2398
      %v3798 = vpop.f32.mrb[0].mxu0
      %v3799 = vadd.f32 %v778, %v3798
      %v3800 = vpop.f32.mrb[0].mxu0
      %v3801 = vpop.f32.mrb[0].mxu0
      %v3802 = vadd.f32 %v778, %v3801
      %v3803 = vpop.f32.mrb[0].mxu0
      %3804 = vmatprep.mubr.bf16.mxu0 %v2401
      %3805 = vmatmul.mubr.bf16.gmra.mrb[0].mxu0 %v2400
      %v3806 = vpop.f32.mrb[0].mxu0
      %v3807 = vadd.f32 %v778, %v3806
      %v3808 = vpop.f32.mrb[0].mxu0
      %v3809 = vpop.f32.mrb[0].mxu0
      %v3810 = vadd.f32 %v778, %v3809
      %v3811 = vpop.f32.mrb[0].mxu0
      %3812 = vmatprep.mubr.bf16.mxu0 %v2403
      %3813 = vmatmul.mubr.bf16.gmra.mrb[0].mxu0 %v2402
      %v3814 = vpop.f32.mrb[0].mxu0
      %v3815 = vadd.f32 %v778, %v3814
      %v3816 = vpop.f32.mrb[0].mxu0
      %v3817 = vpop.f32.mrb[0].mxu0
      %v3818 = vadd.f32 %v778, %v3817
      %v3819 = vpop.f32.mrb[0].mxu0
      %3820 = vmatprep.mubr.bf16.mxu0 %v2405
      %3821 = vmatmul.mubr.bf16.gmra.mrb[0].mxu0 %v2404
      %v3822 = vpop.f32.mrb[0].mxu0
      %v3823 = vadd.f32 %v778, %v3822
      %v3824 = vpop.f32.mrb[0].mxu0
      %v3825 = vpop.f32.mrb[0].mxu0
      %v3826 = vadd.f32 %v778, %v3825
      %v3827 = vpop.f32.mrb[0].mxu0
      %3828 = vmatprep.mubr.bf16.mxu0 %v2407
      %3829 = vmatmul.mubr.bf16.gmra.mrb[0].mxu0 %v2406
      %v3830 = vpop.f32.mrb[0].mxu0
      %v3831 = vadd.f32 %v778, %v3830
      %v3832 = vpop.f32.mrb[0].mxu0
      %v3833 = vpop.f32.mrb[0].mxu0
      %v3834 = vadd.f32 %v778, %v3833
      %v3835 = vpop.f32.mrb[0].mxu0
      %3836 = vmatprep.mubr.bf16.mxu0 %v2409
      %3837 = vmatmul.mubr.bf16.gmra.mrb[0].mxu0 %v2408
      %v3838 = vpop.f32.mrb[0].mxu0
      %v3839 = vadd.f32 %v778, %v3838
      %v3840 = vpop.f32.mrb[0].mxu0
      %v3841 = vpop.f32.mrb[0].mxu0
      %v3842 = vadd.f32 %v778, %v3841
      %v3843 = vpop.f32.mrb[0].mxu0
      %3844 = vmatprep.mubr.bf16.mxu0 %v2411
      %3845 = vmatmul.mubr.bf16.gmra.mrb[0].mxu0 %v2410
      %v3846 = vpop.f32.mrb[0].mxu0
      %v3847 = vadd.f32 %v778, %v3846
      %v3848 = vpop.f32.mrb[0].mxu0
      %v3849 = vpop.f32.mrb[0].mxu0
      %v3850 = vadd.f32 %v778, %v3849
      %v3851 = vpop.f32.mrb[0].mxu0
      %3852 = vmatprep.mubr.bf16.mxu0 %v2413
      %3853 = vmatmul.mubr.bf16.gmra.mrb[0].mxu0 %v2412
      %v3854 = vpop.f32.mrb[0].mxu0
      %v3855 = vadd.f32 %v778, %v3854
      %v3856 = vpop.f32.mrb[0].mxu0
      %v3857 = vpop.f32.mrb[0].mxu0
      %v3858 = vadd.f32 %v778, %v3857
      %v3859 = vpop.f32.mrb[0].mxu0
      %3860 = vmatprep.mubr.bf16.mxu0 %v2415
      %3861 = vmatmul.mubr.bf16.gmra.mrb[0].mxu0 %v2414
      %v3862 = vpop.f32.mrb[0].mxu0
      %v3863 = vadd.f32 %v778, %v3862
      %v3864 = vpop.f32.mrb[0].mxu0
      %v3865 = vpop.f32.mrb[0].mxu0
      %v3866 = vadd.f32 %v778, %v3865
      %v3867 = vpop.f32.mrb[0].mxu0
      %3868 = vmatprep.mubr.bf16.mxu0 %v2417
      %3869 = vmatmul.mubr.bf16.gmra.mrb[0].mxu0 %v2416
      %v3870 = vpop.f32.mrb[0].mxu0
      %v3871 = vadd.f32 %v778, %v3870
      %v3872 = vpop.f32.mrb[0].mxu0
      %v3873 = vpop.f32.mrb[0].mxu0
      %v3874 = vadd.f32 %v778, %v3873
      %v3875 = vpop.f32.mrb[0].mxu0
      %3876 = vmatprep.mubr.bf16.mxu0 %v2419
      %3877 = vmatmul.mubr.bf16.gmra.mrb[0].mxu0 %v2418
      %v3878 = vpop.f32.mrb[0].mxu0
      %v3879 = vadd.f32 %v778, %v3878
      %v3880 = vpop.f32.mrb[0].mxu0
      %v3881 = vpop.f32.mrb[0].mxu0
      %v3882 = vadd.f32 %v778, %v3881
      %v3883 = vpop.f32.mrb[0].mxu0
      %3884 = vmatprep.mubr.bf16.mxu0 %v2421
      %3885 = vmatmul.mubr.bf16.gmra.mrb[0].mxu0 %v2420
      %v3886 = vpop.f32.mrb[0].mxu0
      %v3887 = vadd.f32 %v778, %v3886
      %v3888 = vpop.f32.mrb[0].mxu0
      %v3889 = vpop.f32.mrb[0].mxu0
      %v3890 = vadd.f32 %v778, %v3889
      %v3891 = vpop.f32.mrb[0].mxu0
      %3892 = vmatprep.mubr.bf16.mxu0 %v2423
      %3893 = vmatmul.mubr.bf16.gmra.mrb[0].mxu0 %v2422
      %v3894 = vpop.f32.mrb[0].mxu0
      %v3895 = vadd.f32 %v778, %v3894
      %v3896 = vpop.f32.mrb[0].mxu0
      %v3897 = vpop.f32.mrb[0].mxu0
      %v3898 = vadd.f32 %v778, %v3897
      %v3899 = vpop.f32.mrb[0].mxu0
      %3900 = vmatprep.mubr.bf16.mxu0 %v2425
      %3901 = vmatmul.mubr.bf16.gmra.mrb[0].mxu0 %v2424
      %v3902 = vpop.f32.mrb[0].mxu0
      %v3903 = vadd.f32 %v778, %v3902
      %v3904 = vpop.f32.mrb[0].mxu0
      %v3905 = vpop.f32.mrb[0].mxu0
      %v3906 = vadd.f32 %v778, %v3905
      %v3907 = vpop.f32.mrb[0].mxu0
      %3908 = vmatprep.mubr.bf16.mxu0 %v2427
      %3909 = vmatmul.mubr.bf16.gmra.mrb[0].mxu0 %v2426
      %v3910 = vpop.f32.mrb[0].mxu0
      %v3911 = vadd.f32 %v778, %v3910
      %v3912 = vpop.f32.mrb[0].mxu0
      %v3913 = vpop.f32.mrb[0].mxu0
      %v3914 = vadd.f32 %v778, %v3913
      %v3915 = vpop.f32.mrb[0].mxu0
      %3916 = vmatprep.mubr.bf16.mxu0 %v2429
      %3917 = vmatmul.mubr.bf16.gmra.mrb[0].mxu0 %v2428
      %v3918 = vpop.f32.mrb[0].mxu0
      %v3919 = vadd.f32 %v778, %v3918
      %v3920 = vpop.f32.mrb[0].mxu0
      %v3921 = vpop.f32.mrb[0].mxu0
      %v3922 = vadd.f32 %v778, %v3921
      %v3923 = vpop.f32.mrb[0].mxu0
      %3924 = vmatprep.mubr.bf16.mxu0 %v2431
      %3925 = vmatmul.mubr.bf16.gmra.mrb[0].mxu0 %v2430
      %v3926 = vpop.f32.mrb[0].mxu0
      %v3927 = vadd.f32 %v778, %v3926
      %v3928 = vpop.f32.mrb[0].mxu0
      %v3929 = vpop.f32.mrb[0].mxu0
      %v3930 = vadd.f32 %v778, %v3929
      %v3931 = vpop.f32.mrb[0].mxu0
      %3932 = vmatprep.mubr.bf16.mxu0 %v2433
      %3933 = vmatmul.mubr.bf16.gmra.mrb[0].mxu0 %v2432
      %v3934 = vpop.f32.mrb[0].mxu0
      %v3935 = vadd.f32 %v778, %v3934
      %v3936 = vpop.f32.mrb[0].mxu0
      %v3937 = vpop.f32.mrb[0].mxu0
      %v3938 = vadd.f32 %v778, %v3937
      %v3939 = vpop.f32.mrb[0].mxu0
      %3940 = vmatprep.mubr.bf16.mxu0 %v2435
      %3941 = vmatmul.mubr.bf16.gmra.mrb[0].mxu0 %v2434
      %v3942 = vpop.f32.mrb[0].mxu0
      %v3943 = vadd.f32 %v778, %v3942
      %v3944 = vpop.f32.mrb[0].mxu0
      %v3945 = vpop.f32.mrb[0].mxu0
      %v3946 = vadd.f32 %v778, %v3945
      %v3947 = vpop.f32.mrb[0].mxu0
      %3948 = vmatprep.mubr.bf16.mxu0 %v2437
      %3949 = vmatmul.mubr.bf16.gmra.mrb[0].mxu0 %v2436
      %v3950 = vpop.f32.mrb[0].mxu0
      %v3951 = vadd.f32 %v778, %v3950
      %v3952 = vpop.f32.mrb[0].mxu0
      %v3953 = vpop.f32.mrb[0].mxu0
      %v3954 = vadd.f32 %v778, %v3953
      %v3955 = vpop.f32.mrb[0].mxu0
      %3956 = vmatprep.mubr.bf16.mxu0 %v2439
      %3957 = vmatmul.mubr.bf16.gmra.mrb[0].mxu0 %v2438
      %v3958 = vpop.f32.mrb[0].mxu0
      %v3959 = vadd.f32 %v778, %v3958
      %v3960 = vpop.f32.mrb[0].mxu0
      %v3961 = vpop.f32.mrb[0].mxu0
      %v3962 = vadd.f32 %v778, %v3961
      %v3963 = vpop.f32.mrb[0].mxu0
      %3964 = vmatprep.mubr.bf16.mxu0 %v2441
      %3965 = vmatmul.mubr.bf16.gmra.mrb[0].mxu0 %v2440
      %v3966 = vpop.f32.mrb[0].mxu0
      %v3967 = vadd.f32 %v778, %v3966
      %v3968 = vpop.f32.mrb[0].mxu0
      %v3969 = vpop.f32.mrb[0].mxu0
      %v3970 = vadd.f32 %v778, %v3969
      %v3971 = vpop.f32.mrb[0].mxu0
      %3972 = vmatprep.mubr.bf16.mxu0 %v2443
      %3973 = vmatmul.mubr.bf16.gmra.mrb[0].mxu0 %v2442
      %v3974 = vpop.f32.mrb[0].mxu0
      %v3975 = vadd.f32 %v778, %v3974
      %v3976 = vpop.f32.mrb[0].mxu0
      %v3977 = vpop.f32.mrb[0].mxu0
      %v3978 = vadd.f32 %v778, %v3977
      %v3979 = vpop.f32.mrb[0].mxu0
      %3980 = vmatprep.mubr.bf16.mxu0 %v2445
      %3981 = vmatmul.mubr.bf16.gmra.mrb[0].mxu0 %v2444
      %v3982 = vpop.f32.mrb[0].mxu0
      %v3983 = vadd.f32 %v778, %v3982
      %v3984 = vpop.f32.mrb[0].mxu0
      %v3985 = vpop.f32.mrb[0].mxu0
      %v3986 = vadd.f32 %v778, %v3985
      %v3987 = vpop.f32.mrb[0].mxu0
      %3988 = vmatprep.mubr.bf16.mxu0 %v2447
      %3989 = vmatmul.mubr.bf16.gmra.mrb[0].mxu0 %v2446
      %v3990 = vpop.f32.mrb[0].mxu0
      %v3991 = vadd.f32 %v778, %v3990
      %v3992 = vpop.f32.mrb[0].mxu0
      %v3993 = vpop.f32.mrb[0].mxu0
      %v3994 = vadd.f32 %v778, %v3993
      %v3995 = vpop.f32.mrb[0].mxu0
      %3996 = vmatprep.mubr.bf16.mxu0 %v2449
      %3997 = vmatmul.mubr.bf16.gmra.mrb[0].mxu0 %v2448
      %v3998 = vpop.f32.mrb[0].mxu0
      %v3999 = vadd.f32 %v778, %v3998
      %v4000 = vpop.f32.mrb[0].mxu0
      %v4001 = vpop.f32.mrb[0].mxu0
      %v4002 = vadd.f32 %v778, %v4001
      %v4003 = vpop.f32.mrb[0].mxu0
      %4004 = vmatprep.mubr.bf16.mxu0 %v2451
      %4005 = vmatmul.mubr.bf16.gmra.mrb[0].mxu0 %v2450
      %v4006 = vpop.f32.mrb[0].mxu0
      %v4007 = vadd.f32 %v778, %v4006
      %v4008 = vpop.f32.mrb[0].mxu0
      %v4009 = vpop.f32.mrb[0].mxu0
      %v4010 = vadd.f32 %v778, %v4009
      %v4011 = vpop.f32.mrb[0].mxu0
      %4012 = vmatprep.mubr.bf16.mxu0 %v2453
      %4013 = vmatmul.mubr.bf16.gmra.mrb[0].mxu0 %v2452
      %v4014 = vpop.f32.mrb[0].mxu0
      %v4015 = vadd.f32 %v778, %v4014
      %v4016 = vpop.f32.mrb[0].mxu0
      %v4017 = vpop.f32.mrb[0].mxu0
      %v4018 = vadd.f32 %v778, %v4017
      %v4019 = vpop.f32.mrb[0].mxu0
      %4020 = vmatprep.mubr.bf16.mxu0 %v2455
      %4021 = vmatmul.mubr.bf16.gmra.mrb[0].mxu0 %v2454
      %v4022 = vpop.f32.mrb[0].mxu0
      %v4023 = vadd.f32 %v778, %v4022
      %v4024 = vpop.f32.mrb[0].mxu0
      %v4025 = vpop.f32.mrb[0].mxu0
      %v4026 = vadd.f32 %v778, %v4025
      %v4027 = vpop.f32.mrb[0].mxu0
      %4028 = vmatprep.mubr.bf16.mxu0 %v2457
      %4029 = vmatmul.mubr.bf16.gmra.mrb[0].mxu0 %v2456
      %v4030 = vpop.f32.mrb[0].mxu0
      %v4031 = vadd.f32 %v778, %v4030
      %v4032 = vpop.f32.mrb[0].mxu0
      %v4033 = vpop.f32.mrb[0].mxu0
      %v4034 = vadd.f32 %v778, %v4033
      %v4035 = vpop.f32.mrb[0].mxu0
      %4036 = vmatprep.mubr.bf16.mxu0 %v2459
      %4037 = vmatmul.mubr.bf16.gmra.mrb[0].mxu0 %v2458
      %v4038 = vpop.f32.mrb[0].mxu0
      %v4039 = vadd.f32 %v778, %v4038
      %v4040 = vpop.f32.mrb[0].mxu0
      %v4041 = vpop.f32.mrb[0].mxu0
      %v4042 = vadd.f32 %v778, %v4041
      %v4043 = vpop.f32.mrb[0].mxu0
      %4044 = vmatprep.mubr.bf16.mxu0 %v2461
      %4045 = vmatmul.mubr.bf16.gmra.mrb[0].mxu0 %v2460
      %v4046 = vpop.f32.mrb[0].mxu0
      %v4047 = vadd.f32 %v778, %v4046
      %v4048 = vpop.f32.mrb[0].mxu0
      %v4049 = vpop.f32.mrb[0].mxu0
      %v4050 = vadd.f32 %v778, %v4049
      %v4051 = vpop.f32.mrb[0].mxu0
      %4052 = vmatprep.mubr.bf16.mxu0 %v2463
      %4053 = vmatmul.mubr.bf16.gmra.mrb[0].mxu0 %v2462
      %v4054 = vpop.f32.mrb[0].mxu0
      %v4055 = vadd.f32 %v778, %v4054
      %v4056 = vpop.f32.mrb[0].mxu0
      %v4057 = vpop.f32.mrb[0].mxu0
      %v4058 = vadd.f32 %v778, %v4057
      %v4059 = vpop.f32.mrb[0].mxu0
      %4060 = vmatprep.mubr.bf16.mxu0 %v2465
      %4061 = vmatmul.mubr.bf16.gmra.mrb[0].mxu0 %v2464
      %v4062 = vpop.f32.mrb[0].mxu0
      %v4063 = vadd.f32 %v778, %v4062
      %v4064 = vpop.f32.mrb[0].mxu0
      %v4065 = vpop.f32.mrb[0].mxu0
      %v4066 = vadd.f32 %v778, %v4065
      %v4067 = vpop.f32.mrb[0].mxu0
      %4068 = vmatprep.mubr.bf16.mxu0 %v2467
      %4069 = vmatmul.mubr.bf16.gmra.mrb[0].mxu0 %v2466
      %v4070 = vpop.f32.mrb[0].mxu0
      %v4071 = vadd.f32 %v778, %v4070
      %v4072 = vpop.f32.mrb[0].mxu0
      %v4073 = vpop.f32.mrb[0].mxu0
      %v4074 = vadd.f32 %v778, %v4073
      %v4075 = vpop.f32.mrb[0].mxu0
      %4076 = vmatprep.mubr.bf16.mxu0 %v2469
      %4077 = vmatmul.mubr.bf16.gmra.mrb[0].mxu0 %v2468
      %v4078 = vpop.f32.mrb[0].mxu0
      %v4079 = vadd.f32 %v778, %v4078
      %v4080 = vpop.f32.mrb[0].mxu0
      %v4081 = vpop.f32.mrb[0].mxu0
      %v4082 = vadd.f32 %v778, %v4081
      %v4083 = vpop.f32.mrb[0].mxu0
      %4084 = vmatprep.mubr.bf16.mxu0 %v2471
      %4085 = vmatmul.mubr.bf16.gmra.mrb[0].mxu0 %v2470
      %v4086 = vpop.f32.mrb[0].mxu0
      %v4087 = vadd.f32 %v778, %v4086
      %v4088 = vpop.f32.mrb[0].mxu0
      %v4089 = vpop.f32.mrb[0].mxu0
      %v4090 = vadd.f32 %v778, %v4089
      %v4091 = vpop.f32.mrb[0].mxu0
      %4092 = vmatprep.mubr.bf16.mxu0 %v2473
      %4093 = vmatmul.mubr.bf16.gmra.mrb[0].mxu0 %v2472
      %v4094 = vpop.f32.mrb[0].mxu0
      %v4095 = vadd.f32 %v778, %v4094
      %v4096 = vpop.f32.mrb[0].mxu0
      %v4097 = vpop.f32.mrb[0].mxu0
      %v4098 = vadd.f32 %v778, %v4097
      %v4099 = vpop.f32.mrb[0].mxu0
      %4100 = vmatprep.mubr.bf16.mxu0 %v2475
      %4101 = vmatmul.mubr.bf16.gmra.mrb[0].mxu0 %v2474
      %v4102 = vpop.f32.mrb[0].mxu0
      %v4103 = vadd.f32 %v778, %v4102
      %v4104 = vpop.f32.mrb[0].mxu0
      %v4105 = vpop.f32.mrb[0].mxu0
      %v4106 = vadd.f32 %v778, %v4105
      %v4107 = vpop.f32.mrb[0].mxu0
      %4108 = vmatprep.mubr.bf16.mxu0 %v2477
      %4109 = vmatmul.mubr.bf16.gmra.mrb[0].mxu0 %v2476
      %v4110 = vpop.f32.mrb[0].mxu0
      %v4111 = vadd.f32 %v778, %v4110
      %v4112 = vpop.f32.mrb[0].mxu0
      %v4113 = vpop.f32.mrb[0].mxu0
      %v4114 = vadd.f32 %v778, %v4113
      %v4115 = vpop.f32.mrb[0].mxu0
      %4116 = vmatprep.mubr.bf16.mxu0 %v2479
      %4117 = vmatmul.mubr.bf16.gmra.mrb[0].mxu0 %v2478
      %v4118 = vpop.f32.mrb[0].mxu0
      %v4119 = vadd.f32 %v778, %v4118
      %v4120 = vpop.f32.mrb[0].mxu0
      %v4121 = vpop.f32.mrb[0].mxu0
      %v4122 = vadd.f32 %v778, %v4121
      %v4123 = vpop.f32.mrb[0].mxu0
      %4124 = vmatprep.mubr.bf16.mxu0 %v2481
      %4125 = vmatmul.mubr.bf16.gmra.mrb[0].mxu0 %v2480
      %v4126 = vpop.f32.mrb[0].mxu0
      %v4127 = vadd.f32 %v778, %v4126
      %v4128 = vpop.f32.mrb[0].mxu0
      %v4129 = vpop.f32.mrb[0].mxu0
      %v4130 = vadd.f32 %v778, %v4129
      %v4131 = vpop.f32.mrb[0].mxu0
      %4132 = vmatprep.mubr.bf16.mxu0 %v2483
      %4133 = vmatmul.mubr.bf16.gmra.mrb[0].mxu0 %v2482
      %v4134 = vpop.f32.mrb[0].mxu0
      %v4135 = vadd.f32 %v778, %v4134
      %v4136 = vpop.f32.mrb[0].mxu0
      %v4137 = vpop.f32.mrb[0].mxu0
      %v4138 = vadd.f32 %v778, %v4137
      %v4139 = vpop.f32.mrb[0].mxu0
      %4140 = vmatprep.mubr.bf16.mxu0 %v2485
      %4141 = vmatmul.mubr.bf16.gmra.mrb[0].mxu0 %v2484
      %v4142 = vpop.f32.mrb[0].mxu0
      %v4143 = vadd.f32 %v778, %v4142
      %v4144 = vpop.f32.mrb[0].mxu0
      %v4145 = vpop.f32.mrb[0].mxu0
      %v4146 = vadd.f32 %v778, %v4145
      %v4147 = vpop.f32.mrb[0].mxu0
      %4148 = vmatprep.mubr.bf16.mxu0 %v2487
      %4149 = vmatmul.mubr.bf16.gmra.mrb[0].mxu0 %v2486
      %v4150 = vpop.f32.mrb[0].mxu0
      %v4151 = vadd.f32 %v778, %v4150
      %v4152 = vpop.f32.mrb[0].mxu0
      %v4153 = vpop.f32.mrb[0].mxu0
      %v4154 = vadd.f32 %v778, %v4153
      %v4155 = vpop.f32.mrb[0].mxu0
      %4156 = vmatprep.mubr.bf16.mxu0 %v2489
      %4157 = vmatmul.mubr.bf16.gmra.mrb[0].mxu0 %v2488
      %v4158 = vpop.f32.mrb[0].mxu0
      %v4159 = vadd.f32 %v778, %v4158
      %v4160 = vpop.f32.mrb[0].mxu0
      %v4161 = vpop.f32.mrb[0].mxu0
      %v4162 = vadd.f32 %v778, %v4161
      %v4163 = vpop.f32.mrb[0].mxu0
      %4164 = vmatprep.mubr.bf16.mxu0 %v2491
      %4165 = vmatmul.mubr.bf16.gmra.mrb[0].mxu0 %v2490
      %v4166 = vpop.f32.mrb[0].mxu0
      %v4167 = vadd.f32 %v778, %v4166
      %v4168 = vpop.f32.mrb[0].mxu0
      %v4169 = vpop.f32.mrb[0].mxu0
      %v4170 = vadd.f32 %v778, %v4169
      %v4171 = vpop.f32.mrb[0].mxu0
      %4172 = vmatprep.mubr.bf16.mxu0 %v2493
      %4173 = vmatmul.mubr.bf16.gmra.mrb[0].mxu0 %v2492
      %v4174 = vpop.f32.mrb[0].mxu0
      %v4175 = vadd.f32 %v778, %v4174
      %v4176 = vpop.f32.mrb[0].mxu0
      %v4177 = vpop.f32.mrb[0].mxu0
      %v4178 = vadd.f32 %v778, %v4177
      %v4179 = vpop.f32.mrb[0].mxu0
      %4180 = vmatprep.mubr.bf16.mxu0 %v2495
      %4181 = vmatmul.mubr.bf16.gmra.mrb[0].mxu0 %v2494
      %v4182 = vpop.f32.mrb[0].mxu0
      %v4183 = vadd.f32 %v778, %v4182
      %v4184 = vpop.f32.mrb[0].mxu0
      %v4185 = vpop.f32.mrb[0].mxu0
      %v4186 = vadd.f32 %v778, %v4185
      %v4187 = vpop.f32.mrb[0].mxu0
      %4188 = vmatprep.mubr.bf16.mxu0 %v2497
      %4189 = vmatmul.mubr.bf16.gmra.mrb[0].mxu0 %v2496
      %v4190 = vpop.f32.mrb[0].mxu0
      %v4191 = vadd.f32 %v778, %v4190
      %v4192 = vpop.f32.mrb[0].mxu0
      %v4193 = vpop.f32.mrb[0].mxu0
      %v4194 = vadd.f32 %v778, %v4193
      %v4195 = vpop.f32.mrb[0].mxu0
      %4196 = vmatprep.mubr.bf16.mxu0 %v2499
      %4197 = vmatmul.mubr.bf16.gmra.mrb[0].mxu0 %v2498
      %v4198 = vpop.f32.mrb[0].mxu0
      %v4199 = vadd.f32 %v778, %v4198
      %v4200 = vpop.f32.mrb[0].mxu0
      %v4201 = vpop.f32.mrb[0].mxu0
      %v4202 = vadd.f32 %v778, %v4201
      %v4203 = vpop.f32.mrb[0].mxu0
      %4204 = vmatprep.mubr.bf16.mxu0 %v2501
      %4205 = vmatmul.mubr.bf16.gmra.mrb[0].mxu0 %v2500
      %v4206 = vpop.f32.mrb[0].mxu0
      %v4207 = vadd.f32 %v778, %v4206
      %v4208 = vpop.f32.mrb[0].mxu0
      %v4209 = vpop.f32.mrb[0].mxu0
      %v4210 = vadd.f32 %v778, %v4209
      %v4211 = vpop.f32.mrb[0].mxu0
      %4212 = vmatprep.mubr.bf16.mxu0 %v2503
      %4213 = vmatmul.mubr.bf16.gmra.mrb[0].mxu0 %v2502
      %v4214 = vpop.f32.mrb[0].mxu0
      %v4215 = vadd.f32 %v778, %v4214
      %v4216 = vpop.f32.mrb[0].mxu0
      %v4217 = vpop.f32.mrb[0].mxu0
      %v4218 = vadd.f32 %v778, %v4217
      %v4219 = vpop.f32.mrb[0].mxu0
      %4220 = vmatprep.mubr.bf16.mxu0 %v2505
      %4221 = vmatmul.mubr.bf16.gmra.mrb[0].mxu0 %v2504
      %v4222 = vpop.f32.mrb[0].mxu0
      %v4223 = vadd.f32 %v778, %v4222
      %v4224 = vpop.f32.mrb[0].mxu0
      %v4225 = vpop.f32.mrb[0].mxu0
      %v4226 = vadd.f32 %v778, %v4225
      %v4227 = vpop.f32.mrb[0].mxu0
      %4228 = vmatprep.mubr.bf16.mxu0 %v2507
      %4229 = vmatmul.mubr.bf16.gmra.mrb[0].mxu0 %v2506
      %v4230 = vpop.f32.mrb[0].mxu0
      %v4231 = vadd.f32 %v778, %v4230
      %v4232 = vpop.f32.mrb[0].mxu0
      %v4233 = vpop.f32.mrb[0].mxu0
      %v4234 = vadd.f32 %v778, %v4233
      %v4235 = vpop.f32.mrb[0].mxu0
      %4236 = vmatprep.mubr.bf16.mxu0 %v2509
      %4237 = vmatmul.mubr.bf16.gmra.mrb[0].mxu0 %v2508
      %v4238 = vpop.f32.mrb[0].mxu0
      %v4239 = vadd.f32 %v778, %v4238
      %v4240 = vpop.f32.mrb[0].mxu0
      %v4241 = vpop.f32.mrb[0].mxu0
      %v4242 = vadd.f32 %v778, %v4241
      %v4243 = vpop.f32.mrb[0].mxu0
      %4244 = vmatprep.mubr.bf16.mxu0 %v2511
      %4245 = vmatmul.mubr.bf16.gmra.mrb[0].mxu0 %v2510
      %v4246 = vpop.f32.mrb[0].mxu0
      %v4247 = vadd.f32 %v778, %v4246
      %v4248 = vpop.f32.mrb[0].mxu0
      %v4249 = vpop.f32.mrb[0].mxu0
      %v4250 = vadd.f32 %v778, %v4249
      %v4251 = vpop.f32.mrb[0].mxu0
      %4252 = vmatprep.mubr.bf16.mxu0 %v2513
      %4253 = vmatmul.mubr.bf16.gmra.mrb[0].mxu0 %v2512
      %v4254 = vpop.f32.mrb[0].mxu0
      %v4255 = vadd.f32 %v778, %v4254
      %v4256 = vpop.f32.mrb[0].mxu0
      %v4257 = vpop.f32.mrb[0].mxu0
      %v4258 = vadd.f32 %v778, %v4257
      %v4259 = vpop.f32.mrb[0].mxu0
      %4260 = vmatprep.mubr.bf16.mxu0 %v2515
      %4261 = vmatmul.mubr.bf16.gmra.mrb[0].mxu0 %v2514
      %v4262 = vpop.f32.mrb[0].mxu0
      %v4263 = vadd.f32 %v778, %v4262
      %v4264 = vpop.f32.mrb[0].mxu0
      %v4265 = vpop.f32.mrb[0].mxu0
      %v4266 = vadd.f32 %v778, %v4265
      %v4267 = vpop.f32.mrb[0].mxu0
      %4268 = vmatprep.mubr.bf16.mxu0 %v2517
      %4269 = vmatmul.mubr.bf16.gmra.mrb[0].mxu0 %v2516
      %v4270 = vpop.f32.mrb[0].mxu0
      %v4271 = vadd.f32 %v778, %v4270
      %v4272 = vpop.f32.mrb[0].mxu0
      %v4273 = vpop.f32.mrb[0].mxu0
      %v4274 = vadd.f32 %v778, %v4273
      %v4275 = vpop.f32.mrb[0].mxu0
      %4276 = vmatprep.mubr.bf16.mxu0 %v2519
      %4277 = vmatmul.mubr.bf16.gmra.mrb[0].mxu0 %v2518
      %v4278 = vpop.f32.mrb[0].mxu0
      %v4279 = vadd.f32 %v778, %v4278
      %v4280 = vpop.f32.mrb[0].mxu0
      %v4281 = vpop.f32.mrb[0].mxu0
      %v4282 = vadd.f32 %v778, %v4281
      %v4283 = vpop.f32.mrb[0].mxu0
      %4284 = vmatprep.mubr.bf16.mxu0 %v2521
      %4285 = vmatmul.mubr.bf16.gmra.mrb[0].mxu0 %v2520
      %v4286 = vpop.f32.mrb[0].mxu0
      %v4287 = vadd.f32 %v778, %v4286
      %v4288 = vpop.f32.mrb[0].mxu0
      %v4289 = vpop.f32.mrb[0].mxu0
      %v4290 = vadd.f32 %v778, %v4289
      %v4291 = vpop.f32.mrb[0].mxu0
      %4292 = vmatprep.mubr.bf16.mxu0 %v2523
      %4293 = vmatmul.mubr.bf16.gmra.mrb[0].mxu0 %v2522
      %v4294 = vpop.f32.mrb[0].mxu0
      %v4295 = vadd.f32 %v778, %v4294
      %v4296 = vpop.f32.mrb[0].mxu0
      %v4297 = vpop.f32.mrb[0].mxu0
      %v4298 = vadd.f32 %v778, %v4297
      %v4299 = vpop.f32.mrb[0].mxu0
      %4300 = vmatprep.mubr.bf16.mxu0 %v2525
      %4301 = vmatmul.mubr.bf16.gmra.mrb[0].mxu0 %v2524
      %v4302 = vpop.f32.mrb[0].mxu0
      %v4303 = vadd.f32 %v778, %v4302
      %v4304 = vpop.f32.mrb[0].mxu0
      %v4305 = vpop.f32.mrb[0].mxu0
      %v4306 = vadd.f32 %v778, %v4305
      %v4307 = vpop.f32.mrb[0].mxu0
      %4308 = vmatprep.mubr.bf16.mxu0 %v2527
      %4309 = vmatmul.mubr.bf16.gmra.mrb[0].mxu0 %v2526
      %v4310 = vpop.f32.mrb[0].mxu0
      %v4311 = vadd.f32 %v778, %v4310
      %v4312 = vpop.f32.mrb[0].mxu0
      %v4313 = vpop.f32.mrb[0].mxu0
      %v4314 = vadd.f32 %v778, %v4313
      %v4315 = vpop.f32.mrb[0].mxu0
      %4316 = vmatprep.mubr.bf16.mxu0 %v2529
      %4317 = vmatmul.mubr.bf16.gmra.mrb[0].mxu0 %v2528
      %v4318 = vpop.f32.mrb[0].mxu0
      %v4319 = vadd.f32 %v778, %v4318
      %v4320 = vpop.f32.mrb[0].mxu0
      %v4321 = vpop.f32.mrb[0].mxu0
      %v4322 = vadd.f32 %v778, %v4321
      %v4323 = vpop.f32.mrb[0].mxu0
      %4324 = vmatprep.mubr.bf16.mxu0 %v2531
      %4325 = vmatmul.mubr.bf16.gmra.mrb[0].mxu0 %v2530
      %v4326 = vpop.f32.mrb[0].mxu0
      %v4327 = vadd.f32 %v778, %v4326
      %v4328 = vpop.f32.mrb[0].mxu0
      %v4329 = vpop.f32.mrb[0].mxu0
      %v4330 = vadd.f32 %v778, %v4329
      %v4331 = vpop.f32.mrb[0].mxu0
      %4332 = vmatprep.mubr.bf16.mxu0 %v2533
      %4333 = vmatmul.mubr.bf16.gmra.mrb[0].mxu0 %v2532
      %v4334 = vpop.f32.mrb[0].mxu0
      %v4335 = vadd.f32 %v778, %v4334
      %v4336 = vpop.f32.mrb[0].mxu0
      %v4337 = vpop.f32.mrb[0].mxu0
      %v4338 = vadd.f32 %v778, %v4337
      %v4339 = vpop.f32.mrb[0].mxu0
      %4340 = vmatprep.mubr.bf16.mxu0 %v2535
      %4341 = vmatmul.mubr.bf16.gmra.mrb[0].mxu0 %v2534
      %v4342 = vpop.f32.mrb[0].mxu0
      %v4343 = vadd.f32 %v778, %v4342
      %v4344 = vpop.f32.mrb[0].mxu0
      %v4345 = vpop.f32.mrb[0].mxu0
      %v4346 = vadd.f32 %v778, %v4345
      %v4347 = vpop.f32.mrb[0].mxu0
      %4348 = vmatprep.mubr.bf16.mxu0 %v2537
      %4349 = vmatmul.mubr.bf16.gmra.mrb[0].mxu0 %v2536
      %v4350 = vpop.f32.mrb[0].mxu0
      %v4351 = vadd.f32 %v778, %v4350
      %v4352 = vpop.f32.mrb[0].mxu0
      %v4353 = vpop.f32.mrb[0].mxu0
      %v4354 = vadd.f32 %v778, %v4353
      %v4355 = vpop.f32.mrb[0].mxu0
      %4356 = vmatprep.mubr.bf16.mxu0 %v2539
      %4357 = vmatmul.mubr.bf16.gmra.mrb[0].mxu0 %v2538
      %v4358 = vpop.f32.mrb[0].mxu0
      %v4359 = vadd.f32 %v778, %v4358
      %v4360 = vpop.f32.mrb[0].mxu0
      %v4361 = vpop.f32.mrb[0].mxu0
      %v4362 = vadd.f32 %v778, %v4361
      %v4363 = vpop.f32.mrb[0].mxu0
      %4364 = vmatprep.mubr.bf16.mxu0 %v2541
      %4365 = vmatmul.mubr.bf16.gmra.mrb[0].mxu0 %v2540
      %v4366 = vpop.f32.mrb[0].mxu0
      %v4367 = vadd.f32 %v778, %v4366
      %v4368 = vpop.f32.mrb[0].mxu0
      %v4369 = vpop.f32.mrb[0].mxu0
      %v4370 = vadd.f32 %v778, %v4369
      %v4371 = vpop.f32.mrb[0].mxu0
      %4372 = vmatprep.mubr.bf16.mxu0 %v2543
      %4373 = vmatmul.mubr.bf16.gmra.mrb[0].mxu0 %v2542
      %v4374 = vpop.f32.mrb[0].mxu0
      %v4375 = vadd.f32 %v778, %v4374
      %v4376 = vpop.f32.mrb[0].mxu0
      %v4377 = vpop.f32.mrb[0].mxu0
      %v4378 = vadd.f32 %v778, %v4377
      %v4379 = vpop.f32.mrb[0].mxu0
      %4380 = vmatprep.mubr.bf16.mxu0 %v2545
      %4381 = vmatmul.mubr.bf16.gmra.mrb[0].mxu0 %v2544
      %v4382 = vpop.f32.mrb[0].mxu0
      %v4383 = vadd.f32 %v778, %v4382
      %v4384 = vpop.f32.mrb[0].mxu0
      %v4385 = vpop.f32.mrb[0].mxu0
      %v4386 = vadd.f32 %v778, %v4385
      %v4387 = vpop.f32.mrb[0].mxu0
      %4388 = vmatprep.mubr.bf16.mxu0 %v2547
      %4389 = vmatmul.mubr.bf16.gmra.mrb[0].mxu0 %v2546
      %v4390 = vpop.f32.mrb[0].mxu0
      %v4391 = vadd.f32 %v778, %v4390
      %v4392 = vpop.f32.mrb[0].mxu0
      %v4393 = vpop.f32.mrb[0].mxu0
      %v4394 = vadd.f32 %v778, %v4393
      %v4395 = vpop.f32.mrb[0].mxu0
      %4396 = vmatprep.mubr.bf16.mxu0 %v2549
      %4397 = vmatmul.mubr.bf16.gmra.mrb[0].mxu0 %v2548
      %v4398 = vpop.f32.mrb[0].mxu0
      %v4399 = vadd.f32 %v778, %v4398
      %v4400 = vpop.f32.mrb[0].mxu0
      %v4401 = vpop.f32.mrb[0].mxu0
      %v4402 = vadd.f32 %v778, %v4401
      %v4403 = vpop.f32.mrb[0].mxu0
      %4404 = vmatprep.mubr.bf16.mxu0 %v2551
      %4405 = vmatmul.mubr.bf16.gmra.mrb[0].mxu0 %v2550
      %v4406 = vpop.f32.mrb[0].mxu0
      %v4407 = vadd.f32 %v778, %v4406
      %v4408 = vpop.f32.mrb[0].mxu0
      %v4409 = vpop.f32.mrb[0].mxu0
      %v4410 = vadd.f32 %v778, %v4409
      %v4411 = vpop.f32.mrb[0].mxu0
      %4412 = vmatprep.mubr.bf16.mxu0 %v2553
      %4413 = vmatmul.mubr.bf16.gmra.mrb[0].mxu0 %v2552
      %v4414 = vpop.f32.mrb[0].mxu0
      %v4415 = vadd.f32 %v778, %v4414
      %v4416 = vpop.f32.mrb[0].mxu0
      %v4417 = vpop.f32.mrb[0].mxu0
      %v4418 = vadd.f32 %v778, %v4417
      %v4419 = vpop.f32.mrb[0].mxu0
      %4420 = vmatprep.mubr.bf16.mxu0 %v2555
      %4421 = vmatmul.mubr.bf16.gmra.mrb[0].mxu0 %v2554
      %v4422 = vpop.f32.mrb[0].mxu0
      %v4423 = vadd.f32 %v778, %v4422
      %v4424 = vpop.f32.mrb[0].mxu0
      %v4425 = vpop.f32.mrb[0].mxu0
      %v4426 = vadd.f32 %v778, %v4425
      %v4427 = vpop.f32.mrb[0].mxu0
      %4428 = vmatprep.mubr.bf16.mxu0 %v2557
      %4429 = vmatmul.mubr.bf16.gmra.mrb[0].mxu0 %v2556
      %v4430 = vpop.f32.mrb[0].mxu0
      %v4431 = vadd.f32 %v778, %v4430
      %v4432 = vpop.f32.mrb[0].mxu0
      %v4433 = vpop.f32.mrb[0].mxu0
      %v4434 = vadd.f32 %v778, %v4433
      %v4435 = vpop.f32.mrb[0].mxu0
      %4436 = vmatprep.mubr.bf16.mxu0 %v2559
      %4437 = vmatmul.mubr.bf16.gmra.mrb[0].mxu0 %v2558
      %v4438 = vpop.f32.mrb[0].mxu0
      %v4439 = vadd.f32 %v778, %v4438
      %v4440 = vpop.f32.mrb[0].mxu0
      %v4441 = vpop.f32.mrb[0].mxu0
      %v4442 = vadd.f32 %v778, %v4441
      %v4443 = vpop.f32.mrb[0].mxu0
      %4444 = vmatprep.mubr.bf16.mxu0 %v2561
      %4445 = vmatmul.mubr.bf16.gmra.mrb[0].mxu0 %v2560
      %v4446 = vpop.f32.mrb[0].mxu0
      %v4447 = vadd.f32 %v778, %v4446
      %v4448 = vpop.f32.mrb[0].mxu0
      %v4449 = vpop.f32.mrb[0].mxu0
      %v4450 = vadd.f32 %v778, %v4449
      %v4451 = vpop.f32.mrb[0].mxu0
      %4452 = vmatprep.mubr.bf16.mxu0 %v2563
      %4453 = vmatmul.mubr.bf16.gmra.mrb[0].mxu0 %v2562
      %v4454 = vpop.f32.mrb[0].mxu0
      %v4455 = vadd.f32 %v778, %v4454
      %v4456 = vpop.f32.mrb[0].mxu0
      %v4457 = vpop.f32.mrb[0].mxu0
      %v4458 = vadd.f32 %v778, %v4457
      %v4459 = vpop.f32.mrb[0].mxu0
      %4460 = vmatprep.mubr.bf16.mxu0 %v2565
      %4461 = vmatmul.mubr.bf16.gmra.mrb[0].mxu0 %v2564
      %v4462 = vpop.f32.mrb[0].mxu0
      %v4463 = vadd.f32 %v778, %v4462
      %v4464 = vpop.f32.mrb[0].mxu0
      %v4465 = vpop.f32.mrb[0].mxu0
      %v4466 = vadd.f32 %v778, %v4465
      %v4467 = vpop.f32.mrb[0].mxu0
      %4468 = vmatprep.mubr.bf16.mxu0 %v2567
      %4469 = vmatmul.mubr.bf16.gmra.mrb[0].mxu0 %v2566
      %v4470 = vpop.f32.mrb[0].mxu0
      %v4471 = vadd.f32 %v778, %v4470
      %v4472 = vpop.f32.mrb[0].mxu0
      %v4473 = vpop.f32.mrb[0].mxu0
      %v4474 = vadd.f32 %v778, %v4473
      %v4475 = vpop.f32.mrb[0].mxu0
      %4476 = vmatprep.mubr.bf16.mxu0 %v2569
      %4477 = vmatmul.mubr.bf16.gmra.mrb[0].mxu0 %v2568
      %v4478 = vpop.f32.mrb[0].mxu0
      %v4479 = vadd.f32 %v778, %v4478
      %v4480 = vpop.f32.mrb[0].mxu0
      %v4481 = vpop.f32.mrb[0].mxu0
      %v4482 = vadd.f32 %v778, %v4481
      %v4483 = vpop.f32.mrb[0].mxu0
      %4484 = vmatprep.mubr.bf16.mxu0 %v2571
      %4485 = vmatmul.mubr.bf16.gmra.mrb[0].mxu0 %v2570
      %v4486 = vpop.f32.mrb[0].mxu0
      %v4487 = vadd.f32 %v778, %v4486
      %v4488 = vpop.f32.mrb[0].mxu0
      %v4489 = vpop.f32.mrb[0].mxu0
      %v4490 = vadd.f32 %v778, %v4489
      %v4491 = vpop.f32.mrb[0].mxu0
      %4492 = vmatprep.mubr.bf16.mxu0 %v2573
      %4493 = vmatmul.mubr.bf16.gmra.mrb[0].mxu0 %v2572
      %v4494 = vpop.f32.mrb[0].mxu0
      %v4495 = vadd.f32 %v778, %v4494
      %v4496 = vpop.f32.mrb[0].mxu0
      %v4497 = vpop.f32.mrb[0].mxu0
      %v4498 = vadd.f32 %v778, %v4497
      %v4499 = vpop.f32.mrb[0].mxu0
      %4500 = vmatprep.mubr.bf16.mxu0 %v2575
      %4501 = vmatmul.mubr.bf16.gmra.mrb[0].mxu0 %v2574
      %v4502 = vpop.f32.mrb[0].mxu0
      %v4503 = vadd.f32 %v778, %v4502
      %v4504 = vpop.f32.mrb[0].mxu0
      %v4505 = vpop.f32.mrb[0].mxu0
      %v4506 = vadd.f32 %v778, %v4505
      %v4507 = vpop.f32.mrb[0].mxu0
      %4508 = vmatprep.mubr.bf16.mxu0 %v2577
      %4509 = vmatmul.mubr.bf16.gmra.mrb[0].mxu0 %v2576
      %v4510 = vpop.f32.mrb[0].mxu0
      %v4511 = vadd.f32 %v778, %v4510
      %v4512 = vpop.f32.mrb[0].mxu0
      %v4513 = vpop.f32.mrb[0].mxu0
      %v4514 = vadd.f32 %v778, %v4513
      %v4515 = vpop.f32.mrb[0].mxu0
      %4516 = vmatprep.mubr.bf16.mxu0 %v2579
      %4517 = vmatmul.mubr.bf16.gmra.mrb[0].mxu0 %v2578
      %v4518 = vpop.f32.mrb[0].mxu0
      %v4519 = vadd.f32 %v778, %v4518
      %v4520 = vpop.f32.mrb[0].mxu0
      %v4521 = vpop.f32.mrb[0].mxu0
      %v4522 = vadd.f32 %v778, %v4521
      %v4523 = vpop.f32.mrb[0].mxu0
      %4524 = vmatprep.mubr.bf16.mxu0 %v2581
      %4525 = vmatmul.mubr.bf16.gmra.mrb[0].mxu0 %v2580
      %v4526 = vpop.f32.mrb[0].mxu0
      %v4527 = vadd.f32 %v778, %v4526
      %v4528 = vpop.f32.mrb[0].mxu0
      %v4529 = vpop.f32.mrb[0].mxu0
      %v4530 = vadd.f32 %v778, %v4529
      %v4531 = vpop.f32.mrb[0].mxu0
      %4532 = vmatprep.mubr.bf16.mxu0 %v2583
      %4533 = vmatmul.mubr.bf16.gmra.mrb[0].mxu0 %v2582
      %v4534 = vpop.f32.mrb[0].mxu0
      %v4535 = vadd.f32 %v778, %v4534
      %v4536 = vpop.f32.mrb[0].mxu0
      %v4537 = vpop.f32.mrb[0].mxu0
      %v4538 = vadd.f32 %v778, %v4537
      %v4539 = vpop.f32.mrb[0].mxu0
      %4540 = vmatprep.mubr.bf16.mxu0 %v2585
      %4541 = vmatmul.mubr.bf16.gmra.mrb[0].mxu0 %v2584
      %v4542 = vpop.f32.mrb[0].mxu0
      %v4543 = vadd.f32 %v778, %v4542
      %v4544 = vpop.f32.mrb[0].mxu0
      %v4545 = vpop.f32.mrb[0].mxu0
      %v4546 = vadd.f32 %v778, %v4545
      %v4547 = vpop.f32.mrb[0].mxu0
      %4548 = vmatprep.mubr.bf16.mxu0 %v2587
      %4549 = vmatmul.mubr.bf16.gmra.mrb[0].mxu0 %v2586
      %v4550 = vpop.f32.mrb[0].mxu0
      %v4551 = vadd.f32 %v778, %v4550
      %v4552 = vpop.f32.mrb[0].mxu0
      %v4553 = vpop.f32.mrb[0].mxu0
      %v4554 = vadd.f32 %v778, %v4553
      %v4555 = vpop.f32.mrb[0].mxu0
      %4556 = vmatprep.mubr.bf16.mxu0 %v2589
      %4557 = vmatmul.mubr.bf16.gmra.mrb[0].mxu0 %v2588
      %v4558 = vpop.f32.mrb[0].mxu0
      %v4559 = vadd.f32 %v778, %v4558
      %v4560 = vpop.f32.mrb[0].mxu0
      %v4561 = vpop.f32.mrb[0].mxu0
      %v4562 = vadd.f32 %v778, %v4561
      %v4563 = vpop.f32.mrb[0].mxu0
      %4564 = vmatprep.mubr.bf16.mxu0 %v2591
      %4565 = vmatmul.mubr.bf16.gmra.mrb[0].mxu0 %v2590
      %v4566 = vpop.f32.mrb[0].mxu0
      %v4567 = vadd.f32 %v778, %v4566
      %v4568 = vpop.f32.mrb[0].mxu0
      %v4569 = vpop.f32.mrb[0].mxu0
      %v4570 = vadd.f32 %v778, %v4569
      %v4571 = vpop.f32.mrb[0].mxu0
      %4572 = vmatprep.mubr.bf16.mxu0 %v2593
      %4573 = vmatmul.mubr.bf16.gmra.mrb[0].mxu0 %v2592
      %v4574 = vpop.f32.mrb[0].mxu0
      %v4575 = vadd.f32 %v778, %v4574
      %v4576 = vpop.f32.mrb[0].mxu0
      %v4577 = vpop.f32.mrb[0].mxu0
      %v4578 = vadd.f32 %v778, %v4577
      %v4579 = vpop.f32.mrb[0].mxu0
      %4580 = vmatprep.mubr.bf16.mxu0 %v2595
      %4581 = vmatmul.mubr.bf16.gmra.mrb[0].mxu0 %v2594
      %v4582 = vpop.f32.mrb[0].mxu0
      %v4583 = vadd.f32 %v778, %v4582
      %v4584 = vpop.f32.mrb[0].mxu0
      %v4585 = vpop.f32.mrb[0].mxu0
      %v4586 = vadd.f32 %v778, %v4585
      %v4587 = vpop.f32.mrb[0].mxu0
      %4588 = vmatprep.mubr.bf16.mxu0 %v2597
      %4589 = vmatmul.mubr.bf16.gmra.mrb[0].mxu0 %v2596
      %v4590 = vpop.f32.mrb[0].mxu0
      %v4591 = vadd.f32 %v778, %v4590
      %v4592 = vpop.f32.mrb[0].mxu0
      %v4593 = vpop.f32.mrb[0].mxu0
      %v4594 = vadd.f32 %v778, %v4593
      %v4595 = vpop.f32.mrb[0].mxu0
      %4596 = vmatprep.mubr.bf16.mxu0 %v2599
      %4597 = vmatmul.mubr.bf16.gmra.mrb[0].mxu0 %v2598
      %v4598 = vpop.f32.mrb[0].mxu0
      %v4599 = vadd.f32 %v778, %v4598
      %v4600 = vpop.f32.mrb[0].mxu0
      %v4601 = vpop.f32.mrb[0].mxu0
      %v4602 = vadd.f32 %v778, %v4601
      %v4603 = vpop.f32.mrb[0].mxu0
      %4604 = vmatprep.mubr.bf16.mxu0 %v2601
      %4605 = vmatmul.mubr.bf16.gmra.mrb[0].mxu0 %v2600
      %v4606 = vpop.f32.mrb[0].mxu0
      %v4607 = vadd.f32 %v778, %v4606
      %v4608 = vpop.f32.mrb[0].mxu0
      %v4609 = vpop.f32.mrb[0].mxu0
      %v4610 = vadd.f32 %v778, %v4609
      %v4611 = vpop.f32.mrb[0].mxu0
      %4612 = vmatprep.mubr.bf16.mxu0 %v2603
      %4613 = vmatmul.mubr.bf16.gmra.mrb[0].mxu0 %v2602
      %v4614 = vpop.f32.mrb[0].mxu0
      %v4615 = vadd.f32 %v778, %v4614
      %v4616 = vpop.f32.mrb[0].mxu0
      %v4617 = vpop.f32.mrb[0].mxu0
      %v4618 = vadd.f32 %v778, %v4617
      %v4619 = vpop.f32.mrb[0].mxu0
      %4620 = vmatprep.mubr.bf16.mxu0 %v2605
      %4621 = vmatmul.mubr.bf16.gmra.mrb[0].mxu0 %v2604
      %v4622 = vpop.f32.mrb[0].mxu0
      %v4623 = vadd.f32 %v778, %v4622
      %v4624 = vpop.f32.mrb[0].mxu0
      %v4625 = vpop.f32.mrb[0].mxu0
      %v4626 = vadd.f32 %v778, %v4625
      %v4627 = vpop.f32.mrb[0].mxu0
      %4628 = vmatprep.mubr.bf16.mxu0 %v2607
      %4629 = vmatmul.mubr.bf16.gmra.mrb[0].mxu0 %v2606
      %v4630 = vpop.f32.mrb[0].mxu0
      %v4631 = vadd.f32 %v778, %v4630
      %v4632 = vpop.f32.mrb[0].mxu0
      %v4633 = vpop.f32.mrb[0].mxu0
      %v4634 = vadd.f32 %v778, %v4633
      %v4635 = vpop.f32.mrb[0].mxu0
      %4636 = vmatprep.mubr.bf16.mxu0 %v2609
      %4637 = vmatmul.mubr.bf16.gmra.mrb[0].mxu0 %v2608
      %v4638 = vpop.f32.mrb[0].mxu0
      %v4639 = vadd.f32 %v778, %v4638
      %v4640 = vpop.f32.mrb[0].mxu0
      %v4641 = vpop.f32.mrb[0].mxu0
      %v4642 = vadd.f32 %v778, %v4641
      %v4643 = vpop.f32.mrb[0].mxu0
      %4644 = vmatprep.mubr.bf16.mxu0 %v2611
      %4645 = vmatmul.mubr.bf16.gmra.mrb[0].mxu0 %v2610
      %v4646 = vpop.f32.mrb[0].mxu0
      %v4647 = vadd.f32 %v778, %v4646
      %v4648 = vpop.f32.mrb[0].mxu0
      %v4649 = vpop.f32.mrb[0].mxu0
      %v4650 = vadd.f32 %v778, %v4649
      %v4651 = vpop.f32.mrb[0].mxu0
      %4652 = vmatprep.mubr.bf16.mxu0 %v2613
      %4653 = vmatmul.mubr.bf16.gmra.mrb[0].mxu0 %v2612
      %v4654 = vpop.f32.mrb[0].mxu0
      %v4655 = vadd.f32 %v778, %v4654
      %v4656 = vpop.f32.mrb[0].mxu0
      %v4657 = vpop.f32.mrb[0].mxu0
      %v4658 = vadd.f32 %v778, %v4657
      %v4659 = vpop.f32.mrb[0].mxu0
      %4660 = vmatprep.mubr.bf16.mxu0 %v2615
      %4661 = vmatmul.mubr.bf16.gmra.mrb[0].mxu0 %v2614
      %v4662 = vpop.f32.mrb[0].mxu0
      %v4663 = vadd.f32 %v778, %v4662
      %v4664 = vpop.f32.mrb[0].mxu0
      %v4665 = vpop.f32.mrb[0].mxu0
      %v4666 = vadd.f32 %v778, %v4665
      %v4667 = vpop.f32.mrb[0].mxu0
      %4668 = vmatprep.mubr.bf16.mxu0 %v2617
      %4669 = vmatmul.mubr.bf16.gmra.mrb[0].mxu0 %v2616
      %v4670 = vpop.f32.mrb[0].mxu0
      %v4671 = vadd.f32 %v778, %v4670
      %v4672 = vpop.f32.mrb[0].mxu0
      %v4673 = vpop.f32.mrb[0].mxu0
      %v4674 = vadd.f32 %v778, %v4673
      %v4675 = vpop.f32.mrb[0].mxu0
      %4676 = vmatprep.mubr.bf16.mxu0 %v2619
      %4677 = vmatmul.mubr.bf16.gmra.mrb[0].mxu0 %v2618
      %v4678 = vpop.f32.mrb[0].mxu0
      %v4679 = vadd.f32 %v778, %v4678
      %v4680 = vpop.f32.mrb[0].mxu0
      %v4681 = vpop.f32.mrb[0].mxu0
      %v4682 = vadd.f32 %v778, %v4681
      %v4683 = vpop.f32.mrb[0].mxu0
      %4684 = vmatprep.mubr.bf16.mxu0 %v2621
      %4685 = vmatmul.mubr.bf16.gmra.mrb[0].mxu0 %v2620
      %v4686 = vpop.f32.mrb[0].mxu0
      %v4687 = vadd.f32 %v778, %v4686
      %v4688 = vpop.f32.mrb[0].mxu0
      %v4689 = vpop.f32.mrb[0].mxu0
      %v4690 = vadd.f32 %v778, %v4689
      %v4691 = vpop.f32.mrb[0].mxu0
      %4692 = vmatprep.mubr.bf16.mxu0 %v2623
      %4693 = vmatmul.mubr.bf16.gmra.mrb[0].mxu0 %v2622
      %v4694 = vpop.f32.mrb[0].mxu0
      %v4695 = vadd.f32 %v778, %v4694
      %v4696 = vpop.f32.mrb[0].mxu0
      %v4697 = vpop.f32.mrb[0].mxu0
      %v4698 = vadd.f32 %v778, %v4697
      %v4699 = vpop.f32.mrb[0].mxu0
      %4700 = vmatprep.mubr.bf16.mxu0 %v2625
      %4701 = vmatmul.mubr.bf16.gmra.mrb[0].mxu0 %v2624
      %v4702 = vpop.f32.mrb[0].mxu0
      %v4703 = vadd.f32 %v778, %v4702
      %v4704 = vpop.f32.mrb[0].mxu0
      %v4705 = vpop.f32.mrb[0].mxu0
      %v4706 = vadd.f32 %v778, %v4705
      %v4707 = vpop.f32.mrb[0].mxu0
      %4708 = vmatprep.mubr.bf16.mxu0 %v2627
      %4709 = vmatmul.mubr.bf16.gmra.mrb[0].mxu0 %v2626
      %v4710 = vpop.f32.mrb[0].mxu0
      %v4711 = vadd.f32 %v778, %v4710
      %v4712 = vpop.f32.mrb[0].mxu0
      %v4713 = vpop.f32.mrb[0].mxu0
      %v4714 = vadd.f32 %v778, %v4713
      %v4715 = vpop.f32.mrb[0].mxu0
      %4716 = vmatprep.mubr.bf16.mxu0 %v2629
      %4717 = vmatmul.mubr.bf16.gmra.mrb[0].mxu0 %v2628
      %v4718 = vpop.f32.mrb[0].mxu0
      %v4719 = vadd.f32 %v778, %v4718
      %v4720 = vpop.f32.mrb[0].mxu0
      %v4721 = vpop.f32.mrb[0].mxu0
      %v4722 = vadd.f32 %v778, %v4721
      %v4723 = vpop.f32.mrb[0].mxu0
      %4724 = vmatprep.mubr.bf16.mxu0 %v2631
      %4725 = vmatmul.mubr.bf16.gmra.mrb[0].mxu0 %v2630
      %v4726 = vpop.f32.mrb[0].mxu0
      %v4727 = vadd.f32 %v778, %v4726
      %v4728 = vpop.f32.mrb[0].mxu0
      %v4729 = vpop.f32.mrb[0].mxu0
      %v4730 = vadd.f32 %v778, %v4729
      %v4731 = vpop.f32.mrb[0].mxu0
      %4732 = vmatprep.mubr.bf16.mxu0 %v2633
      %4733 = vmatmul.mubr.bf16.gmra.mrb[0].mxu0 %v2632
      %v4734 = vpop.f32.mrb[0].mxu0
      %v4735 = vadd.f32 %v778, %v4734
      %v4736 = vpop.f32.mrb[0].mxu0
      %v4737 = vpop.f32.mrb[0].mxu0
      %v4738 = vadd.f32 %v778, %v4737
      %v4739 = vpop.f32.mrb[0].mxu0
      %4740 = vmatprep.mubr.bf16.mxu0 %v2635
      %4741 = vmatmul.mubr.bf16.gmra.mrb[0].mxu0 %v2634
      %v4742 = vpop.f32.mrb[0].mxu0
      %v4743 = vadd.f32 %v778, %v4742
      %v4744 = vpop.f32.mrb[0].mxu0
      %v4745 = vpop.f32.mrb[0].mxu0
      %v4746 = vadd.f32 %v778, %v4745
      %v4747 = vpop.f32.mrb[0].mxu0
      %4748 = vmatprep.mubr.bf16.mxu0 %v2637
      %4749 = vmatmul.mubr.bf16.gmra.mrb[0].mxu0 %v2636
      %v4750 = vpop.f32.mrb[0].mxu0
      %v4751 = vadd.f32 %v778, %v4750
      %v4752 = vpop.f32.mrb[0].mxu0
      %v4753 = vpop.f32.mrb[0].mxu0
      %v4754 = vadd.f32 %v778, %v4753
      %v4755 = vpop.f32.mrb[0].mxu0
      %4756 = vmatprep.mubr.bf16.mxu0 %v2639
      %4757 = vmatmul.mubr.bf16.gmra.mrb[0].mxu0 %v2638
      %v4758 = vpop.f32.mrb[0].mxu0
      %v4759 = vadd.f32 %v778, %v4758
      %v4760 = vpop.f32.mrb[0].mxu0
      %v4761 = vpop.f32.mrb[0].mxu0
      %v4762 = vadd.f32 %v778, %v4761
      %v4763 = vpop.f32.mrb[0].mxu0
      %4764 = vmatprep.mubr.bf16.mxu0 %v2641
      %4765 = vmatmul.mubr.bf16.gmra.mrb[0].mxu0 %v2640
      %v4766 = vpop.f32.mrb[0].mxu0
      %v4767 = vadd.f32 %v778, %v4766
      %v4768 = vpop.f32.mrb[0].mxu0
      %v4769 = vpop.f32.mrb[0].mxu0
      %v4770 = vadd.f32 %v778, %v4769
      %v4771 = vpop.f32.mrb[0].mxu0
      %4772 = vmatprep.mubr.bf16.mxu0 %v2643
      %4773 = vmatmul.mubr.bf16.gmra.mrb[0].mxu0 %v2642
      %v4774 = vpop.f32.mrb[0].mxu0
      %v4775 = vadd.f32 %v778, %v4774
      %v4776 = vpop.f32.mrb[0].mxu0
      %v4777 = vpop.f32.mrb[0].mxu0
      %v4778 = vadd.f32 %v778, %v4777
      %v4779 = vpop.f32.mrb[0].mxu0
      %4780 = vmatprep.mubr.bf16.mxu0 %v2645
      %4781 = vmatmul.mubr.bf16.gmra.mrb[0].mxu0 %v2644
      %v4782 = vpop.f32.mrb[0].mxu0
      %v4783 = vadd.f32 %v778, %v4782
      %v4784 = vpop.f32.mrb[0].mxu0
      %v4785 = vpop.f32.mrb[0].mxu0
      %v4786 = vadd.f32 %v778, %v4785
      %v4787 = vpop.f32.mrb[0].mxu0
      %4788 = vmatprep.mubr.bf16.mxu0 %v2647
      %4789 = vmatmul.mubr.bf16.gmra.mrb[0].mxu0 %v2646
      %v4790 = vpop.f32.mrb[0].mxu0
      %v4791 = vadd.f32 %v778, %v4790
      %v4792 = vpop.f32.mrb[0].mxu0
      %v4793 = vpop.f32.mrb[0].mxu0
      %v4794 = vadd.f32 %v778, %v4793
      %v4795 = vpop.f32.mrb[0].mxu0
      %4796 = vmatprep.mubr.bf16.mxu0 %v2649
      %4797 = vmatmul.mubr.bf16.gmra.mrb[0].mxu0 %v2648
      %v4798 = vpop.f32.mrb[0].mxu0
      %v4799 = vadd.f32 %v778, %v4798
      %v4800 = vpop.f32.mrb[0].mxu0
      %v4801 = vpop.f32.mrb[0].mxu0
      %v4802 = vadd.f32 %v778, %v4801
      %v4803 = vpop.f32.mrb[0].mxu0
      %4804 = vmatprep.mubr.bf16.mxu0 %v2651
      %4805 = vmatmul.mubr.bf16.gmra.mrb[0].mxu0 %v2650
      %v4806 = vpop.f32.mrb[0].mxu0
      %v4807 = vadd.f32 %v778, %v4806
      %v4808 = vpop.f32.mrb[0].mxu0
      %v4809 = vpop.f32.mrb[0].mxu0
      %v4810 = vadd.f32 %v778, %v4809
      %v4811 = vpop.f32.mrb[0].mxu0
      %4812 = vmatprep.mubr.bf16.mxu0 %v2653
      %4813 = vmatmul.mubr.bf16.gmra.mrb[0].mxu0 %v2652
      %v4814 = vpop.f32.mrb[0].mxu0
      %v4815 = vadd.f32 %v778, %v4814
      %v4816 = vpop.f32.mrb[0].mxu0
      %v4817 = vpop.f32.mrb[0].mxu0
      %v4818 = vadd.f32 %v778, %v4817
      %v4819 = vpop.f32.mrb[0].mxu0
      %4820 = vmatprep.mubr.bf16.mxu0 %v2655
      %4821 = vmatmul.mubr.bf16.gmra.mrb[0].mxu0 %v2654
      %v4822 = vpop.f32.mrb[0].mxu0
      %v4823 = vadd.f32 %v778, %v4822
      %v4824 = vpop.f32.mrb[0].mxu0
      %v4825 = vpop.f32.mrb[0].mxu0
      %v4826 = vadd.f32 %v778, %v4825
      %v4827 = vpop.f32.mrb[0].mxu0
      %4828 = vmatprep.mubr.bf16.mxu0 %v2657
      %4829 = vmatmul.mubr.bf16.gmra.mrb[0].mxu0 %v2656
      %v4830 = vpop.f32.mrb[0].mxu0
      %v4831 = vadd.f32 %v778, %v4830
      %v4832 = vpop.f32.mrb[0].mxu0
      %v4833 = vpop.f32.mrb[0].mxu0
      %v4834 = vadd.f32 %v778, %v4833
      %v4835 = vpop.f32.mrb[0].mxu0
      %4836 = vmatprep.mubr.bf16.mxu0 %v2659
      %4837 = vmatmul.mubr.bf16.gmra.mrb[0].mxu0 %v2658
      %v4838 = vpop.f32.mrb[0].mxu0
      %v4839 = vadd.f32 %v778, %v4838
      %v4840 = vpop.f32.mrb[0].mxu0
      %v4841 = vpop.f32.mrb[0].mxu0
      %v4842 = vadd.f32 %v778, %v4841
      %v4843 = vpop.f32.mrb[0].mxu0
      %4844 = vmatprep.mubr.bf16.mxu0 %v2661
      %4845 = vmatmul.mubr.bf16.gmra.mrb[0].mxu0 %v2660
      %v4846 = vpop.f32.mrb[0].mxu0
      %v4847 = vadd.f32 %v778, %v4846
      %v4848 = vpop.f32.mrb[0].mxu0
      %v4849 = vpop.f32.mrb[0].mxu0
      %v4850 = vadd.f32 %v778, %v4849
      %v4851 = vpop.f32.mrb[0].mxu0
      %4852 = vmatprep.mubr.bf16.mxu0 %v2663
      %4853 = vmatmul.mubr.bf16.gmra.mrb[0].mxu0 %v2662
      %v4854 = vpop.f32.mrb[0].mxu0
      %v4855 = vadd.f32 %v778, %v4854
      %v4856 = vpop.f32.mrb[0].mxu0
      %v4857 = vpop.f32.mrb[0].mxu0
      %v4858 = vadd.f32 %v778, %v4857
      %v4859 = vpop.f32.mrb[0].mxu0
      %4860 = vmatprep.mubr.bf16.mxu0 %v2665
      %4861 = vmatmul.mubr.bf16.gmra.mrb[0].mxu0 %v2664
      %v4862 = vpop.f32.mrb[0].mxu0
      %v4863 = vadd.f32 %v778, %v4862
      %v4864 = vpop.f32.mrb[0].mxu0
      %v4865 = vpop.f32.mrb[0].mxu0
      %v4866 = vadd.f32 %v778, %v4865
      %v4867 = vpop.f32.mrb[0].mxu0
      %4868 = vmatprep.mubr.bf16.mxu0 %v2667
      %4869 = vmatmul.mubr.bf16.gmra.mrb[0].mxu0 %v2666
      %v4870 = vpop.f32.mrb[0].mxu0
      %v4871 = vadd.f32 %v778, %v4870
      %v4872 = vpop.f32.mrb[0].mxu0
      %v4873 = vpop.f32.mrb[0].mxu0
      %v4874 = vadd.f32 %v778, %v4873
      %v4875 = vpop.f32.mrb[0].mxu0
      %4876 = vmatprep.mubr.bf16.mxu0 %v2669
      %4877 = vmatmul.mubr.bf16.gmra.mrb[0].mxu0 %v2668
      %v4878 = vpop.f32.mrb[0].mxu0
      %v4879 = vadd.f32 %v778, %v4878
      %v4880 = vpop.f32.mrb[0].mxu0
      %v4881 = vpop.f32.mrb[0].mxu0
      %v4882 = vadd.f32 %v778, %v4881
      %v4883 = vpop.f32.mrb[0].mxu0
      %4884 = vmatprep.mubr.bf16.mxu0 %v2671
      %4885 = vmatmul.mubr.bf16.gmra.mrb[0].mxu0 %v2670
      %v4886 = vpop.f32.mrb[0].mxu0
      %v4887 = vadd.f32 %v778, %v4886
      %v4888 = vpop.f32.mrb[0].mxu0
      %v4889 = vpop.f32.mrb[0].mxu0
      %v4890 = vadd.f32 %v778, %v4889
      %v4891 = vpop.f32.mrb[0].mxu0
      %4892 = vmatprep.mubr.bf16.mxu0 %v2673
      %4893 = vmatmul.mubr.bf16.gmra.mrb[0].mxu0 %v2672
      %v4894 = vpop.f32.mrb[0].mxu0
      %v4895 = vadd.f32 %v778, %v4894
      %v4896 = vpop.f32.mrb[0].mxu0
      %v4897 = vpop.f32.mrb[0].mxu0
      %v4898 = vadd.f32 %v778, %v4897
      %v4899 = vpop.f32.mrb[0].mxu0
      %4900 = vmatprep.mubr.bf16.mxu0 %v2675
      %4901 = vmatmul.mubr.bf16.gmra.mrb[0].mxu0 %v2674
      %v4902 = vpop.f32.mrb[0].mxu0
      %v4903 = vadd.f32 %v778, %v4902
      %v4904 = vpop.f32.mrb[0].mxu0
      %v4905 = vpop.f32.mrb[0].mxu0
      %v4906 = vadd.f32 %v778, %v4905
      %v4907 = vpop.f32.mrb[0].mxu0
      %4908 = vmatprep.mubr.bf16.mxu0 %v2677
      %4909 = vmatmul.mubr.bf16.gmra.mrb[0].mxu0 %v2676
      %v4910 = vpop.f32.mrb[0].mxu0
      %v4911 = vadd.f32 %v778, %v4910
      %v4912 = vpop.f32.mrb[0].mxu0
      %v4913 = vpop.f32.mrb[0].mxu0
      %v4914 = vadd.f32 %v778, %v4913
      %v4915 = vpop.f32.mrb[0].mxu0
      %4916 = vmatprep.mubr.bf16.mxu0 %v2679
      %4917 = vmatmul.mubr.bf16.gmra.mrb[0].mxu0 %v2678
      %v4918 = vpop.f32.mrb[0].mxu0
      %v4919 = vadd.f32 %v778, %v4918
      %v4920 = vpop.f32.mrb[0].mxu0
      %v4921 = vpop.f32.mrb[0].mxu0
      %v4922 = vadd.f32 %v778, %v4921
      %v4923 = vpop.f32.mrb[0].mxu0
      %4924 = vmatprep.mubr.bf16.mxu0 %v2681
      %4925 = vmatmul.mubr.bf16.gmra.mrb[0].mxu0 %v2680
      %v4926 = vpop.f32.mrb[0].mxu0
      %v4927 = vadd.f32 %v778, %v4926
      %v4928 = vpop.f32.mrb[0].mxu0
      %v4929 = vpop.f32.mrb[0].mxu0
      %v4930 = vadd.f32 %v778, %v4929
      %v4931 = vpop.f32.mrb[0].mxu0
      %4932 = vmatprep.mubr.bf16.mxu0 %v2683
      %4933 = vmatmul.mubr.bf16.gmra.mrb[0].mxu0 %v2682
      %v4934 = vpop.f32.mrb[0].mxu0
      %v4935 = vadd.f32 %v778, %v4934
      %v4936 = vpop.f32.mrb[0].mxu0
      %v4937 = vpop.f32.mrb[0].mxu0
      %v4938 = vadd.f32 %v778, %v4937
      %v4939 = vpop.f32.mrb[0].mxu0
      %4940 = vmatprep.mubr.bf16.mxu0 %v2685
      %4941 = vmatmul.mubr.bf16.gmra.mrb[0].mxu0 %v2684
      %v4942 = vpop.f32.mrb[0].mxu0
      %v4943 = vadd.f32 %v778, %v4942
      %v4944 = vpop.f32.mrb[0].mxu0
      %v4945 = vpop.f32.mrb[0].mxu0
      %v4946 = vadd.f32 %v778, %v4945
      %v4947 = vpop.f32.mrb[0].mxu0
      %4948 = vmatprep.mubr.bf16.mxu0 %v2687
      %4949 = vmatmul.mubr.bf16.gmra.mrb[0].mxu0 %v2686
      %v4950 = vpop.f32.mrb[0].mxu0
      %v4951 = vadd.f32 %v778, %v4950
      %v4952 = vpop.f32.mrb[0].mxu0
      %v4953 = vpop.f32.mrb[0].mxu0
      %v4954 = vadd.f32 %v778, %v4953
      %v4955 = vpop.f32.mrb[0].mxu0
      %4956 = vmatprep.mubr.bf16.mxu0 %v2689
      %4957 = vmatmul.mubr.bf16.gmra.mrb[0].mxu0 %v2688
      %v4958 = vpop.f32.mrb[0].mxu0
      %v4959 = vadd.f32 %v778, %v4958
      %v4960 = vpop.f32.mrb[0].mxu0
      %v4961 = vpop.f32.mrb[0].mxu0
      %v4962 = vadd.f32 %v778, %v4961
      %v4963 = vpop.f32.mrb[0].mxu0
      %4964 = vmatprep.mubr.bf16.mxu0 %v2691
      %4965 = vmatmul.mubr.bf16.gmra.mrb[0].mxu0 %v2690
      %v4966 = vpop.f32.mrb[0].mxu0
      %v4967 = vadd.f32 %v778, %v4966
      %v4968 = vpop.f32.mrb[0].mxu0
      %v4969 = vpop.f32.mrb[0].mxu0
      %v4970 = vadd.f32 %v778, %v4969
      %v4971 = vpop.f32.mrb[0].mxu0
      %4972 = vmatprep.mubr.bf16.mxu0 %v2693
      %4973 = vmatmul.mubr.bf16.gmra.mrb[0].mxu0 %v2692
      %v4974 = vpop.f32.mrb[0].mxu0
      %v4975 = vadd.f32 %v778, %v4974
      %v4976 = vpop.f32.mrb[0].mxu0
      %v4977 = vpop.f32.mrb[0].mxu0
      %v4978 = vadd.f32 %v778, %v4977
      %v4979 = vpop.f32.mrb[0].mxu0
      %4980 = vmatprep.mubr.bf16.mxu0 %v2695
      %4981 = vmatmul.mubr.bf16.gmra.mrb[0].mxu0 %v2694
      %v4982 = vpop.f32.mrb[0].mxu0
      %v4983 = vadd.f32 %v778, %v4982
      %v4984 = vpop.f32.mrb[0].mxu0
      %v4985 = vpop.f32.mrb[0].mxu0
      %v4986 = vadd.f32 %v778, %v4985
      %v4987 = vpop.f32.mrb[0].mxu0
      %4988 = vmatprep.mubr.bf16.mxu0 %v2697
      %4989 = vmatmul.mubr.bf16.gmra.mrb[0].mxu0 %v2696
      %v4990 = vpop.f32.mrb[0].mxu0
      %v4991 = vadd.f32 %v778, %v4990
      %v4992 = vpop.f32.mrb[0].mxu0
      %v4993 = vpop.f32.mrb[0].mxu0
      %v4994 = vadd.f32 %v778, %v4993
      %v4995 = vpop.f32.mrb[0].mxu0
      %4996 = vmatprep.mubr.bf16.mxu0 %v2699
      %4997 = vmatmul.mubr.bf16.gmra.mrb[0].mxu0 %v2698
      %v4998 = vpop.f32.mrb[0].mxu0
      %v4999 = vadd.f32 %v778, %v4998
      %v5000 = vpop.f32.mrb[0].mxu0
      %v5001 = vpop.f32.mrb[0].mxu0
      %v5002 = vadd.f32 %v778, %v5001
      %v5003 = vpop.f32.mrb[0].mxu0
      %5004 = vmatprep.mubr.bf16.mxu0 %v2701
      %5005 = vmatmul.mubr.bf16.gmra.mrb[0].mxu0 %v2700
      %v5006 = vpop.f32.mrb[0].mxu0
      %v5007 = vadd.f32 %v778, %v5006
      %v5008 = vpop.f32.mrb[0].mxu0
      %v5009 = vpop.f32.mrb[0].mxu0
      %v5010 = vadd.f32 %v778, %v5009
      %v5011 = vpop.f32.mrb[0].mxu0
      %5012 = vmatprep.mubr.bf16.mxu0 %v2703
      %5013 = vmatmul.mubr.bf16.gmra.mrb[0].mxu0 %v2702
      %v5014 = vpop.f32.mrb[0].mxu0
      %v5015 = vadd.f32 %v778, %v5014
      %v5016 = vpop.f32.mrb[0].mxu0
      %v5017 = vpop.f32.mrb[0].mxu0
      %v5018 = vadd.f32 %v778, %v5017
      %v5019 = vpop.f32.mrb[0].mxu0
      %5020 = vmatprep.mubr.bf16.mxu0 %v2705
      %5021 = vmatmul.mubr.bf16.gmra.mrb[0].mxu0 %v2704
      %v5022 = vpop.f32.mrb[0].mxu0
      %v5023 = vadd.f32 %v778, %v5022
      %v5024 = vpop.f32.mrb[0].mxu0
      %v5025 = vpop.f32.mrb[0].mxu0
      %v5026 = vadd.f32 %v778, %v5025
      %v5027 = vpop.f32.mrb[0].mxu0
      %5028 = vmatprep.mubr.bf16.mxu0 %v2707
      %5029 = vmatmul.mubr.bf16.gmra.mrb[0].mxu0 %v2706
      %v5030 = vpop.f32.mrb[0].mxu0
      %v5031 = vadd.f32 %v778, %v5030
      %v5032 = vpop.f32.mrb[0].mxu0
      %v5033 = vpop.f32.mrb[0].mxu0
      %v5034 = vadd.f32 %v778, %v5033
      %v5035 = vpop.f32.mrb[0].mxu0
      %5036 = vmatprep.mubr.bf16.mxu0 %v2709
      %5037 = vmatmul.mubr.bf16.gmra.mrb[0].mxu0 %v2708
      %v5038 = vpop.f32.mrb[0].mxu0
      %v5039 = vadd.f32 %v778, %v5038
      %v5040 = vpop.f32.mrb[0].mxu0
      %v5041 = vpop.f32.mrb[0].mxu0
      %v5042 = vadd.f32 %v778, %v5041
      %v5043 = vpop.f32.mrb[0].mxu0
      %5044 = vmatprep.mubr.bf16.mxu0 %v2711
      %5045 = vmatmul.mubr.bf16.gmra.mrb[0].mxu0 %v2710
      %v5046 = vpop.f32.mrb[0].mxu0
      %v5047 = vadd.f32 %v778, %v5046
      %v5048 = vpop.f32.mrb[0].mxu0
      %v5049 = vpop.f32.mrb[0].mxu0
      %v5050 = vadd.f32 %v778, %v5049
      %v5051 = vpop.f32.mrb[0].mxu0
      %5052 = vmatprep.mubr.bf16.mxu0 %v2713
      %5053 = vmatmul.mubr.bf16.gmra.mrb[0].mxu0 %v2712
      %v5054 = vpop.f32.mrb[0].mxu0
      %v5055 = vadd.f32 %v778, %v5054
      %v5056 = vpop.f32.mrb[0].mxu0
      %v5057 = vpop.f32.mrb[0].mxu0
      %v5058 = vadd.f32 %v778, %v5057
      %v5059 = vpop.f32.mrb[0].mxu0
      %5060 = vmatprep.mubr.bf16.mxu0 %v2715
      %5061 = vmatmul.mubr.bf16.gmra.mrb[0].mxu0 %v2714
      %v5062 = vpop.f32.mrb[0].mxu0
      %v5063 = vadd.f32 %v778, %v5062
      %v5064 = vpop.f32.mrb[0].mxu0
      %v5065 = vpop.f32.mrb[0].mxu0
      %v5066 = vadd.f32 %v778, %v5065
      %v5067 = vpop.f32.mrb[0].mxu0
      %5068 = vmatprep.mubr.bf16.mxu0 %v2717
      %5069 = vmatmul.mubr.bf16.gmra.mrb[0].mxu0 %v2716
      %v5070 = vpop.f32.mrb[0].mxu0
      %v5071 = vadd.f32 %v778, %v5070
      %v5072 = vpop.f32.mrb[0].mxu0
      %v5073 = vpop.f32.mrb[0].mxu0
      %v5074 = vadd.f32 %v778, %v5073
      %v5075 = vpop.f32.mrb[0].mxu0
      %5076 = vmatprep.mubr.bf16.mxu0 %v2719
      %5077 = vmatmul.mubr.bf16.gmra.mrb[0].mxu0 %v2718
      %v5078 = vpop.f32.mrb[0].mxu0
      %v5079 = vadd.f32 %v778, %v5078
      %v5080 = vpop.f32.mrb[0].mxu0
      %v5081 = vpop.f32.mrb[0].mxu0
      %v5082 = vadd.f32 %v778, %v5081
      %v5083 = vpop.f32.mrb[0].mxu0
      %5084 = vmatprep.mubr.bf16.mxu0 %v2721
      %5085 = vmatmul.mubr.bf16.gmra.mrb[0].mxu0 %v2720
      %v5086 = vpop.f32.mrb[0].mxu0
      %v5087 = vadd.f32 %v778, %v5086
      %v5088 = vpop.f32.mrb[0].mxu0
      %v5089 = vpop.f32.mrb[0].mxu0
      %v5090 = vadd.f32 %v778, %v5089
      %v5091 = vpop.f32.mrb[0].mxu0
      %5092 = vmatprep.mubr.bf16.mxu0 %v2723
      %5093 = vmatmul.mubr.bf16.gmra.mrb[0].mxu0 %v2722
      %v5094 = vpop.f32.mrb[0].mxu0
      %v5095 = vadd.f32 %v778, %v5094
      %v5096 = vpop.f32.mrb[0].mxu0
      %v5097 = vpop.f32.mrb[0].mxu0
      %v5098 = vadd.f32 %v778, %v5097
      %v5099 = vpop.f32.mrb[0].mxu0
      %5100 = vmatprep.mubr.bf16.mxu0 %v2725
      %5101 = vmatmul.mubr.bf16.gmra.mrb[0].mxu0 %v2724
      %v5102 = vpop.f32.mrb[0].mxu0
      %v5103 = vadd.f32 %v778, %v5102
      %v5104 = vpop.f32.mrb[0].mxu0
      %v5105 = vpop.f32.mrb[0].mxu0
      %v5106 = vadd.f32 %v778, %v5105
      %v5107 = vpop.f32.mrb[0].mxu0
      %5108 = vmatprep.mubr.bf16.mxu0 %v2727
      %5109 = vmatmul.mubr.bf16.gmra.mrb[0].mxu0 %v2726
      %v5110 = vpop.f32.mrb[0].mxu0
      %v5111 = vadd.f32 %v778, %v5110
      %v5112 = vpop.f32.mrb[0].mxu0
      %v5113 = vpop.f32.mrb[0].mxu0
      %v5114 = vadd.f32 %v778, %v5113
      %v5115 = vpop.f32.mrb[0].mxu0
      %5116 = vmatprep.mubr.bf16.mxu0 %v2729
      %5117 = vmatmul.mubr.bf16.gmra.mrb[0].mxu0 %v2728
      %v5118 = vpop.f32.mrb[0].mxu0
      %v5119 = vadd.f32 %v778, %v5118
      %v5120 = vpop.f32.mrb[0].mxu0
      %v5121 = vpop.f32.mrb[0].mxu0
      %v5122 = vadd.f32 %v778, %v5121
      %v5123 = vpop.f32.mrb[0].mxu0
      %5124 = vmatprep.mubr.bf16.mxu0 %v2731
      %5125 = vmatmul.mubr.bf16.gmra.mrb[0].mxu0 %v2730
      %v5126 = vpop.f32.mrb[0].mxu0
      %v5127 = vadd.f32 %v778, %v5126
      %v5128 = vpop.f32.mrb[0].mxu0
      %v5129 = vpop.f32.mrb[0].mxu0
      %v5130 = vadd.f32 %v778, %v5129
      %v5131 = vpop.f32.mrb[0].mxu0
      %5132 = vmatprep.mubr.bf16.mxu0 %v2733
      %5133 = vmatmul.mubr.bf16.gmra.mrb[0].mxu0 %v2732
      %v5134 = vpop.f32.mrb[0].mxu0
      %v5135 = vadd.f32 %v778, %v5134
      %v5136 = vpop.f32.mrb[0].mxu0
      %v5137 = vpop.f32.mrb[0].mxu0
      %v5138 = vadd.f32 %v778, %v5137
      %v5139 = vpop.f32.mrb[0].mxu0
      %5140 = vmatprep.mubr.bf16.mxu0 %v2735
      %5141 = vmatmul.mubr.bf16.gmra.mrb[0].mxu0 %v2734
      %v5142 = vpop.f32.mrb[0].mxu0
      %v5143 = vadd.f32 %v778, %v5142
      %v5144 = vpop.f32.mrb[0].mxu0
      %v5145 = vpop.f32.mrb[0].mxu0
      %v5146 = vadd.f32 %v778, %v5145
      %v5147 = vpop.f32.mrb[0].mxu0
      %5148 = vmatprep.mubr.bf16.mxu0 %v2737
      %5149 = vmatmul.mubr.bf16.gmra.mrb[0].mxu0 %v2736
      %v5150 = vpop.f32.mrb[0].mxu0
      %v5151 = vadd.f32 %v778, %v5150
      %v5152 = vpop.f32.mrb[0].mxu0
      %v5153 = vpop.f32.mrb[0].mxu0
      %v5154 = vadd.f32 %v778, %v5153
      %v5155 = vpop.f32.mrb[0].mxu0
      %5156 = vmatprep.mubr.bf16.mxu0 %v2739
      %5157 = vmatmul.mubr.bf16.gmra.mrb[0].mxu0 %v2738
      %v5158 = vpop.f32.mrb[0].mxu0
      %v5159 = vadd.f32 %v778, %v5158
      %v5160 = vpop.f32.mrb[0].mxu0
      %v5161 = vpop.f32.mrb[0].mxu0
      %v5162 = vadd.f32 %v778, %v5161
      %v5163 = vpop.f32.mrb[0].mxu0
      %5164 = vmatprep.mubr.bf16.mxu0 %v2741
      %5165 = vmatmul.mubr.bf16.gmra.mrb[0].mxu0 %v2740
      %v5166 = vpop.f32.mrb[0].mxu0
      %v5167 = vadd.f32 %v778, %v5166
      %v5168 = vpop.f32.mrb[0].mxu0
      %v5169 = vpop.f32.mrb[0].mxu0
      %v5170 = vadd.f32 %v778, %v5169
      %v5171 = vpop.f32.mrb[0].mxu0
      %5172 = vmatprep.mubr.bf16.mxu0 %v2743
      %5173 = vmatmul.mubr.bf16.gmra.mrb[0].mxu0 %v2742
      %v5174 = vpop.f32.mrb[0].mxu0
      %v5175 = vadd.f32 %v778, %v5174
      %v5176 = vpop.f32.mrb[0].mxu0
      %v5177 = vpop.f32.mrb[0].mxu0
      %v5178 = vadd.f32 %v778, %v5177
      %v5179 = vpop.f32.mrb[0].mxu0
      %5180 = vmatprep.mubr.bf16.mxu0 %v2745
      %5181 = vmatmul.mubr.bf16.gmra.mrb[0].mxu0 %v2744
      %v5182 = vpop.f32.mrb[0].mxu0
      %v5183 = vadd.f32 %v778, %v5182
      %v5184 = vpop.f32.mrb[0].mxu0
      %v5185 = vpop.f32.mrb[0].mxu0
      %v5186 = vadd.f32 %v778, %v5185
      %v5187 = vpop.f32.mrb[0].mxu0
      %5188 = vmatprep.mubr.bf16.mxu0 %v2747
      %5189 = vmatmul.mubr.bf16.gmra.mrb[0].mxu0 %v2746
      %v5190 = vpop.f32.mrb[0].mxu0
      %v5191 = vadd.f32 %v778, %v5190
      %v5192 = vpop.f32.mrb[0].mxu0
      %v5193 = vpop.f32.mrb[0].mxu0
      %v5194 = vadd.f32 %v778, %v5193
      %v5195 = vpop.f32.mrb[0].mxu0
      %5196 = vmatprep.mubr.bf16.mxu0 %v2749
      %5197 = vmatmul.mubr.bf16.gmra.mrb[0].mxu0 %v2748
      %v5198 = vpop.f32.mrb[0].mxu0
      %v5199 = vadd.f32 %v778, %v5198
      %v5200 = vpop.f32.mrb[0].mxu0
      %v5201 = vpop.f32.mrb[0].mxu0
      %v5202 = vadd.f32 %v778, %v5201
      %v5203 = vpop.f32.mrb[0].mxu0
      %5204 = vmatprep.mubr.bf16.mxu0 %v2751
      %5205 = vmatmul.mubr.bf16.gmra.mrb[0].mxu0 %v2750
      %v5206 = vpop.f32.mrb[0].mxu0
      %v5207 = vadd.f32 %v778, %v5206
      %v5208 = vpop.f32.mrb[0].mxu0
      %v5209 = vpop.f32.mrb[0].mxu0
      %v5210 = vadd.f32 %v778, %v5209
      %v5211 = vpop.f32.mrb[0].mxu0
      %5212 = vmatprep.mubr.bf16.mxu0 %v2753
      %5213 = vmatmul.mubr.bf16.gmra.mrb[0].mxu0 %v2752
      %v5214 = vpop.f32.mrb[0].mxu0
      %v5215 = vadd.f32 %v778, %v5214
      %v5216 = vpop.f32.mrb[0].mxu0
      %v5217 = vpop.f32.mrb[0].mxu0
      %v5218 = vadd.f32 %v778, %v5217
      %v5219 = vpop.f32.mrb[0].mxu0
      %5220 = vmatprep.mubr.bf16.mxu0 %v2755
      %5221 = vmatmul.mubr.bf16.gmra.mrb[0].mxu0 %v2754
      %v5222 = vpop.f32.mrb[0].mxu0
      %v5223 = vadd.f32 %v778, %v5222
      %v5224 = vpop.f32.mrb[0].mxu0
      %v5225 = vpop.f32.mrb[0].mxu0
      %v5226 = vadd.f32 %v778, %v5225
      %v5227 = vpop.f32.mrb[0].mxu0
      %5228 = vmatprep.mubr.bf16.mxu0 %v2757
      %5229 = vmatmul.mubr.bf16.gmra.mrb[0].mxu0 %v2756
      %v5230 = vpop.f32.mrb[0].mxu0
      %v5231 = vadd.f32 %v778, %v5230
      %v5232 = vpop.f32.mrb[0].mxu0
      %v5233 = vpop.f32.mrb[0].mxu0
      %v5234 = vadd.f32 %v778, %v5233
      %v5235 = vpop.f32.mrb[0].mxu0
      %5236 = vmatprep.mubr.bf16.mxu0 %v2759
      %5237 = vmatmul.mubr.bf16.gmra.mrb[0].mxu0 %v2758
      %v5238 = vpop.f32.mrb[0].mxu0
      %v5239 = vadd.f32 %v778, %v5238
      %v5240 = vpop.f32.mrb[0].mxu0
      %v5241 = vpop.f32.mrb[0].mxu0
      %v5242 = vadd.f32 %v778, %v5241
      %v5243 = vpop.f32.mrb[0].mxu0
      %5244 = vmatprep.mubr.bf16.mxu0 %v2761
      %5245 = vmatmul.mubr.bf16.gmra.mrb[0].mxu0 %v2760
      %v5246 = vpop.f32.mrb[0].mxu0
      %v5247 = vadd.f32 %v778, %v5246
      %v5248 = vpop.f32.mrb[0].mxu0
      %v5249 = vpop.f32.mrb[0].mxu0
      %v5250 = vadd.f32 %v778, %v5249
      %v5251 = vpop.f32.mrb[0].mxu0
      %5252 = vmatprep.mubr.bf16.mxu0 %v2763
      %5253 = vmatmul.mubr.bf16.gmra.mrb[0].mxu0 %v2762
      %v5254 = vpop.f32.mrb[0].mxu0
      %v5255 = vadd.f32 %v778, %v5254
      %v5256 = vpop.f32.mrb[0].mxu0
      %v5257 = vpop.f32.mrb[0].mxu0
      %v5258 = vadd.f32 %v778, %v5257
      %v5259 = vpop.f32.mrb[0].mxu0
      %5260 = vmatprep.mubr.bf16.mxu0 %v2765
      %5261 = vmatmul.mubr.bf16.gmra.mrb[0].mxu0 %v2764
      %v5262 = vpop.f32.mrb[0].mxu0
      %v5263 = vadd.f32 %v778, %v5262
      %v5264 = vpop.f32.mrb[0].mxu0
      %v5265 = vpop.f32.mrb[0].mxu0
      %v5266 = vadd.f32 %v778, %v5265
      %v5267 = vpop.f32.mrb[0].mxu0
      %5268 = vmatprep.mubr.bf16.mxu0 %v2767
      %5269 = vmatmul.mubr.bf16.gmra.mrb[0].mxu0 %v2766
      %v5270 = vpop.f32.mrb[0].mxu0
      %v5271 = vadd.f32 %v778, %v5270
      %v5272 = vpop.f32.mrb[0].mxu0
      %v5273 = vpop.f32.mrb[0].mxu0
      %v5274 = vadd.f32 %v778, %v5273
      %v5275 = vpop.f32.mrb[0].mxu0
      %5276 = vmatprep.mubr.bf16.mxu0 %v2769
      %5277 = vmatmul.mubr.bf16.gmra.mrb[0].mxu0 %v2768
      %v5278 = vpop.f32.mrb[0].mxu0
      %v5279 = vadd.f32 %v778, %v5278
      %v5280 = vpop.f32.mrb[0].mxu0
      %v5281 = vpop.f32.mrb[0].mxu0
      %v5282 = vadd.f32 %v778, %v5281
      %v5283 = vpop.f32.mrb[0].mxu0
      %5284 = vmatprep.mubr.bf16.mxu0 %v2771
      %5285 = vmatmul.mubr.bf16.gmra.mrb[0].mxu0 %v2770
      %v5286 = vpop.f32.mrb[0].mxu0
      %v5287 = vadd.f32 %v778, %v5286
      %v5288 = vpop.f32.mrb[0].mxu0
      %v5289 = vpop.f32.mrb[0].mxu0
      %v5290 = vadd.f32 %v778, %v5289
      %v5291 = vpop.f32.mrb[0].mxu0
      %5292 = vmatprep.mubr.bf16.mxu0 %v2773
      %5293 = vmatmul.mubr.bf16.gmra.mrb[0].mxu0 %v2772
      %v5294 = vpop.f32.mrb[0].mxu0
      %v5295 = vadd.f32 %v778, %v5294
      %v5296 = vpop.f32.mrb[0].mxu0
      %v5297 = vpop.f32.mrb[0].mxu0
      %v5298 = vadd.f32 %v778, %v5297
      %v5299 = vpop.f32.mrb[0].mxu0
      %5300 = vmatprep.mubr.bf16.mxu0 %v2775
      %5301 = vmatmul.mubr.bf16.gmra.mrb[0].mxu0 %v2774
      %v5302 = vpop.f32.mrb[0].mxu0
      %v5303 = vadd.f32 %v778, %v5302
      %v5304 = vpop.f32.mrb[0].mxu0
      %v5305 = vpop.f32.mrb[0].mxu0
      %v5306 = vadd.f32 %v778, %v5305
      %v5307 = vpop.f32.mrb[0].mxu0
      %5308 = vmatprep.mubr.bf16.mxu0 %v2777
      %5309 = vmatmul.mubr.bf16.gmra.mrb[0].mxu0 %v2776
      %v5310 = vpop.f32.mrb[0].mxu0
      %v5311 = vadd.f32 %v778, %v5310
      %v5312 = vpop.f32.mrb[0].mxu0
      %v5313 = vpop.f32.mrb[0].mxu0
      %v5314 = vadd.f32 %v778, %v5313
      %v5315 = vpop.f32.mrb[0].mxu0
      %5316 = vmatprep.mubr.bf16.mxu0 %v2779
      %5317 = vmatmul.mubr.bf16.gmra.mrb[0].mxu0 %v2778
      %v5318 = vpop.f32.mrb[0].mxu0
      %v5319 = vadd.f32 %v778, %v5318
      %v5320 = vpop.f32.mrb[0].mxu0
      %v5321 = vpop.f32.mrb[0].mxu0
      %v5322 = vadd.f32 %v778, %v5321
      %v5323 = vpop.f32.mrb[0].mxu0
      %5324 = vmatprep.mubr.bf16.mxu0 %v2781
      %5325 = vmatmul.mubr.bf16.gmra.mrb[0].mxu0 %v2780
      %v5326 = vpop.f32.mrb[0].mxu0
      %v5327 = vadd.f32 %v778, %v5326
      %v5328 = vpop.f32.mrb[0].mxu0
      %v5329 = vpop.f32.mrb[0].mxu0
      %v5330 = vadd.f32 %v778, %v5329
      %v5331 = vpop.f32.mrb[0].mxu0
      %5332 = vmatprep.mubr.bf16.mxu0 %v2783
      %5333 = vmatmul.mubr.bf16.gmra.mrb[0].mxu0 %v2782
      %v5334 = vpop.f32.mrb[0].mxu0
      %v5335 = vadd.f32 %v778, %v5334
      %v5336 = vpop.f32.mrb[0].mxu0
      %v5337 = vpop.f32.mrb[0].mxu0
      %v5338 = vadd.f32 %v778, %v5337
      %v5339 = vpop.f32.mrb[0].mxu0
      %5340 = vmatprep.mubr.bf16.mxu0 %v2785
      %5341 = vmatmul.mubr.bf16.gmra.mrb[0].mxu0 %v2784
      %v5342 = vpop.f32.mrb[0].mxu0
      %v5343 = vadd.f32 %v778, %v5342
      %v5344 = vpop.f32.mrb[0].mxu0
      %v5345 = vpop.f32.mrb[0].mxu0
      %v5346 = vadd.f32 %v778, %v5345
      %v5347 = vpop.f32.mrb[0].mxu0
      %5348 = vmatprep.mubr.bf16.mxu0 %v2787
      %5349 = vmatmul.mubr.bf16.gmra.mrb[0].mxu0 %v2786
      %v5350 = vpop.f32.mrb[0].mxu0
      %v5351 = vadd.f32 %v778, %v5350
      %v5352 = vpop.f32.mrb[0].mxu0
      %v5353 = vpop.f32.mrb[0].mxu0
      %v5354 = vadd.f32 %v778, %v5353
      %v5355 = vpop.f32.mrb[0].mxu0
      %5356 = vmatprep.mubr.bf16.mxu0 %v2789
      %5357 = vmatmul.mubr.bf16.gmra.mrb[0].mxu0 %v2788
      %v5358 = vpop.f32.mrb[0].mxu0
      %v5359 = vadd.f32 %v778, %v5358
      %v5360 = vpop.f32.mrb[0].mxu0
      %v5361 = vpop.f32.mrb[0].mxu0
      %v5362 = vadd.f32 %v778, %v5361
      %v5363 = vpop.f32.mrb[0].mxu0
      %5364 = vmatprep.mubr.bf16.mxu0 %v2791
      %5365 = vmatmul.mubr.bf16.gmra.mrb[0].mxu0 %v2790
      %v5366 = vpop.f32.mrb[0].mxu0
      %v5367 = vadd.f32 %v778, %v5366
      %v5368 = vpop.f32.mrb[0].mxu0
      %v5369 = vpop.f32.mrb[0].mxu0
      %v5370 = vadd.f32 %v778, %v5369
      %v5371 = vpop.f32.mrb[0].mxu0
      %5372 = vmatprep.mubr.bf16.mxu0 %v2793
      %5373 = vmatmul.mubr.bf16.gmra.mrb[0].mxu0 %v2792
      %v5374 = vpop.f32.mrb[0].mxu0
      %v5375 = vadd.f32 %v778, %v5374
      %v5376 = vpop.f32.mrb[0].mxu0
      %v5377 = vpop.f32.mrb[0].mxu0
      %v5378 = vadd.f32 %v778, %v5377
      %v5379 = vpop.f32.mrb[0].mxu0
      %5380 = vmatprep.mubr.bf16.mxu0 %v2795
      %5381 = vmatmul.mubr.bf16.gmra.mrb[0].mxu0 %v2794
      %v5382 = vpop.f32.mrb[0].mxu0
      %v5383 = vadd.f32 %v778, %v5382
      %v5384 = vpop.f32.mrb[0].mxu0
      %v5385 = vpop.f32.mrb[0].mxu0
      %v5386 = vadd.f32 %v778, %v5385
      %v5387 = vpop.f32.mrb[0].mxu0
      %5388 = vmatprep.mubr.bf16.mxu0 %v2797
      %5389 = vmatmul.mubr.bf16.gmra.mrb[0].mxu0 %v2796
      %v5390 = vpop.f32.mrb[0].mxu0
      %v5391 = vadd.f32 %v778, %v5390
      %v5392 = vpop.f32.mrb[0].mxu0
      %v5393 = vpop.f32.mrb[0].mxu0
      %v5394 = vadd.f32 %v778, %v5393
      %v5395 = vpop.f32.mrb[0].mxu0
      %5396 = vmatprep.mubr.bf16.mxu0 %v2799
      %5397 = vmatmul.mubr.bf16.gmra.mrb[0].mxu0 %v2798
      %v5398 = vpop.f32.mrb[0].mxu0
      %v5399 = vadd.f32 %v778, %v5398
      %v5400 = vpop.f32.mrb[0].mxu0
      %v5401 = vpop.f32.mrb[0].mxu0
      %v5402 = vadd.f32 %v778, %v5401
      %v5403 = vpop.f32.mrb[0].mxu0
      %5404 = vmatprep.mubr.bf16.mxu0 %v2801
      %5405 = vmatmul.mubr.bf16.gmra.mrb[0].mxu0 %v2800
      %v5406 = vpop.f32.mrb[0].mxu0
      %v5407 = vadd.f32 %v778, %v5406
      %v5408 = vpop.f32.mrb[0].mxu0
      %v5409 = vpop.f32.mrb[0].mxu0
      %v5410 = vadd.f32 %v778, %v5409
      %v5411 = vpop.f32.mrb[0].mxu0
      %5412 = vmatprep.mubr.bf16.mxu0 %v2803
      %5413 = vmatmul.mubr.bf16.gmra.mrb[0].mxu0 %v2802
      %v5414 = vpop.f32.mrb[0].mxu0
      %v5415 = vadd.f32 %v778, %v5414
      %v5416 = vpop.f32.mrb[0].mxu0
      %v5417 = vpop.f32.mrb[0].mxu0
      %v5418 = vadd.f32 %v778, %v5417
      %v5419 = vpop.f32.mrb[0].mxu0
      %5420 = vmatprep.mubr.bf16.mxu0 %v2805
      %5421 = vmatmul.mubr.bf16.gmra.mrb[0].mxu0 %v2804
      %v5422 = vpop.f32.mrb[0].mxu0
      %v5423 = vadd.f32 %v778, %v5422
      %v5424 = vpop.f32.mrb[0].mxu0
      %v5425 = vpop.f32.mrb[0].mxu0
      %v5426 = vadd.f32 %v778, %v5425
      %v5427 = vpop.f32.mrb[0].mxu0
      %5428 = vmatprep.mubr.bf16.mxu0 %v2807
      %5429 = vmatmul.mubr.bf16.gmra.mrb[0].mxu0 %v2806
      %v5430 = vpop.f32.mrb[0].mxu0
      %v5431 = vadd.f32 %v778, %v5430
      %v5432 = vpop.f32.mrb[0].mxu0
      %v5433 = vpop.f32.mrb[0].mxu0
      %v5434 = vadd.f32 %v778, %v5433
      %v5435 = vpop.f32.mrb[0].mxu0
      %5436 = vmatprep.mubr.bf16.mxu0 %v2809
      %5437 = vmatmul.mubr.bf16.gmra.mrb[0].mxu0 %v2808
      %v5438 = vpop.f32.mrb[0].mxu0
      %v5439 = vadd.f32 %v778, %v5438
      %v5440 = vpop.f32.mrb[0].mxu0
      %v5441 = vpop.f32.mrb[0].mxu0
      %v5442 = vadd.f32 %v778, %v5441
      %v5443 = vpop.f32.mrb[0].mxu0
      %5444 = vmatprep.mubr.bf16.mxu0 %v2811
      %5445 = vmatmul.mubr.bf16.gmra.mrb[0].mxu0 %v2810
      %v5446 = vpop.f32.mrb[0].mxu0
      %v5447 = vadd.f32 %v778, %v5446
      %v5448 = vpop.f32.mrb[0].mxu0
      %v5449 = vpop.f32.mrb[0].mxu0
      %v5450 = vadd.f32 %v778, %v5449
      %v5451 = vpop.f32.mrb[0].mxu0
      %5452 = vmatprep.mubr.bf16.mxu0 %v2813
      %5453 = vmatmul.mubr.bf16.gmra.mrb[0].mxu0 %v2812
      %v5454 = vpop.f32.mrb[0].mxu0
      %v5455 = vadd.f32 %v778, %v5454
      %v5456 = vpop.f32.mrb[0].mxu0
      %v5457 = vpop.f32.mrb[0].mxu0
      %v5458 = vadd.f32 %v778, %v5457
      %v5459 = vpop.f32.mrb[0].mxu0
      %5460 = vmatprep.mubr.bf16.mxu0 %v2815
      %5461 = vmatmul.mubr.bf16.gmra.mrb[0].mxu0 %v2814
      %v5462 = vpop.f32.mrb[0].mxu0
      %v5463 = vadd.f32 %v778, %v5462
      %v5464 = vpop.f32.mrb[0].mxu0
      %v5465 = vpop.f32.mrb[0].mxu0
      %v5466 = vadd.f32 %v778, %v5465
      %v5467 = vpop.f32.mrb[0].mxu0
      %5468 = vmatprep.mubr.bf16.mxu0 %v2817
      %5469 = vmatmul.mubr.bf16.gmra.mrb[0].mxu0 %v2816
      %v5470 = vpop.f32.mrb[0].mxu0
      %v5471 = vadd.f32 %v778, %v5470
      %v5472 = vpop.f32.mrb[0].mxu0
      %v5473 = vpop.f32.mrb[0].mxu0
      %v5474 = vadd.f32 %v778, %v5473
      %v5475 = vpop.f32.mrb[0].mxu0
      %5476 = vmatprep.mubr.bf16.mxu0 %v2819
      %5477 = vmatmul.mubr.bf16.gmra.mrb[0].mxu0 %v2818
      %v5478 = vpop.f32.mrb[0].mxu0
      %v5479 = vadd.f32 %v778, %v5478
      %v5480 = vpop.f32.mrb[0].mxu0
      %v5481 = vpop.f32.mrb[0].mxu0
      %v5482 = vadd.f32 %v778, %v5481
      %v5483 = vpop.f32.mrb[0].mxu0
      %5484 = vmatprep.mubr.bf16.mxu0 %v2821
      %5485 = vmatmul.mubr.bf16.gmra.mrb[0].mxu0 %v2820
      %v5486 = vpop.f32.mrb[0].mxu0
      %v5487 = vadd.f32 %v778, %v5486
      %v5488 = vpop.f32.mrb[0].mxu0
      %v5489 = vpop.f32.mrb[0].mxu0
      %v5490 = vadd.f32 %v778, %v5489
      %v5491 = vpop.f32.mrb[0].mxu0
      %5492 = vmatprep.mubr.bf16.mxu0 %v2823
      %5493 = vmatmul.mubr.bf16.gmra.mrb[0].mxu0 %v2822
      %v5494 = vpop.f32.mrb[0].mxu0
      %v5495 = vadd.f32 %v778, %v5494
      %v5496 = vpop.f32.mrb[0].mxu0
      %v5497 = vpop.f32.mrb[0].mxu0
      %v5498 = vadd.f32 %v778, %v5497
      %v5499 = vpop.f32.mrb[0].mxu0
      %5500 = vmatprep.mubr.bf16.mxu0 %v2825
      %5501 = vmatmul.mubr.bf16.gmra.mrb[0].mxu0 %v2824
      %v5502 = vpop.f32.mrb[0].mxu0
      %v5503 = vadd.f32 %v778, %v5502
      %v5504 = vpop.f32.mrb[0].mxu0
      %v5505 = vpop.f32.mrb[0].mxu0
      %v5506 = vadd.f32 %v778, %v5505
      %v5507 = vpop.f32.mrb[0].mxu0
      %5508 = vmatprep.mubr.bf16.mxu0 %v2827
      %5509 = vmatmul.mubr.bf16.gmra.mrb[0].mxu0 %v2826
      %v5510 = vpop.f32.mrb[0].mxu0
      %v5511 = vadd.f32 %v778, %v5510
      %v5512 = vpop.f32.mrb[0].mxu0
      %v5513 = vpop.f32.mrb[0].mxu0
      %v5514 = vadd.f32 %v778, %v5513
      %v5515 = vpop.f32.mrb[0].mxu0
      %5516 = vdwg.mxu0
      %vm5517 = vcmp.ge.f32.partialorder %v3471, 0.0
      %vm5518 = vcmp.ge.f32.partialorder %v3474, 0.0
      %vm5519 = vcmp.ge.f32.partialorder %v3479, 0.0
      %vm5520 = vcmp.ge.f32.partialorder %v3482, 0.0
      %vm5521 = vcmp.ge.f32.partialorder %v3487, 0.0
      %vm5522 = vcmp.ge.f32.partialorder %v3490, 0.0
      %vm5523 = vcmp.ge.f32.partialorder %v3495, 0.0
      %vm5524 = vcmp.ge.f32.partialorder %v3498, 0.0
      %vm5525 = vcmp.ge.f32.partialorder %v3503, 0.0
      %vm5526 = vcmp.ge.f32.partialorder %v3506, 0.0
      %vm5527 = vcmp.ge.f32.partialorder %v3511, 0.0
      %vm5528 = vcmp.ge.f32.partialorder %v3514, 0.0
      %vm5529 = vcmp.ge.f32.partialorder %v3519, 0.0
      %vm5530 = vcmp.ge.f32.partialorder %v3522, 0.0
      %vm5531 = vcmp.ge.f32.partialorder %v3527, 0.0
      %vm5532 = vcmp.ge.f32.partialorder %v3530, 0.0
      %vm5533 = vcmp.ge.f32.partialorder %v3535, 0.0
      %vm5534 = vcmp.ge.f32.partialorder %v3538, 0.0
      %vm5535 = vcmp.ge.f32.partialorder %v3543, 0.0
      %vm5536 = vcmp.ge.f32.partialorder %v3546, 0.0
      %vm5537 = vcmp.ge.f32.partialorder %v3551, 0.0
      %vm5538 = vcmp.ge.f32.partialorder %v3554, 0.0
      %vm5539 = vcmp.ge.f32.partialorder %v3559, 0.0
      %vm5540 = vcmp.ge.f32.partialorder %v3562, 0.0
      %vm5541 = vcmp.ge.f32.partialorder %v3567, 0.0
      %vm5542 = vcmp.ge.f32.partialorder %v3570, 0.0
      %vm5543 = vcmp.ge.f32.partialorder %v3575, 0.0
      %vm5544 = vcmp.ge.f32.partialorder %v3578, 0.0
      %vm5545 = vcmp.ge.f32.partialorder %v3583, 0.0
      %vm5546 = vcmp.ge.f32.partialorder %v3586, 0.0
      %vm5547 = vcmp.ge.f32.partialorder %v3591, 0.0
      %vm5548 = vcmp.ge.f32.partialorder %v3594, 0.0
      %vm5549 = vcmp.ge.f32.partialorder %v3599, 0.0
      %vm5550 = vcmp.ge.f32.partialorder %v3602, 0.0
      %vm5551 = vcmp.ge.f32.partialorder %v3607, 0.0
      %vm5552 = vcmp.ge.f32.partialorder %v3610, 0.0
      %vm5553 = vcmp.ge.f32.partialorder %v3615, 0.0
      %vm5554 = vcmp.ge.f32.partialorder %v3618, 0.0
      %vm5555 = vcmp.ge.f32.partialorder %v3623, 0.0
      %vm5556 = vcmp.ge.f32.partialorder %v3626, 0.0
      %vm5557 = vcmp.ge.f32.partialorder %v3631, 0.0
      %vm5558 = vcmp.ge.f32.partialorder %v3634, 0.0
      %vm5559 = vcmp.ge.f32.partialorder %v3639, 0.0
      %vm5560 = vcmp.ge.f32.partialorder %v3642, 0.0
      %vm5561 = vcmp.ge.f32.partialorder %v3647, 0.0
      %vm5562 = vcmp.ge.f32.partialorder %v3650, 0.0
      %vm5563 = vcmp.ge.f32.partialorder %v3655, 0.0
      %vm5564 = vcmp.ge.f32.partialorder %v3658, 0.0
      %vm5565 = vcmp.ge.f32.partialorder %v3663, 0.0
      %vm5566 = vcmp.ge.f32.partialorder %v3666, 0.0
      %vm5567 = vcmp.ge.f32.partialorder %v3671, 0.0
      %vm5568 = vcmp.ge.f32.partialorder %v3674, 0.0
      %vm5569 = vcmp.ge.f32.partialorder %v3679, 0.0
      %vm5570 = vcmp.ge.f32.partialorder %v3682, 0.0
      %vm5571 = vcmp.ge.f32.partialorder %v3687, 0.0
      %vm5572 = vcmp.ge.f32.partialorder %v3690, 0.0
      %vm5573 = vcmp.ge.f32.partialorder %v3695, 0.0
      %vm5574 = vcmp.ge.f32.partialorder %v3698, 0.0
      %vm5575 = vcmp.ge.f32.partialorder %v3703, 0.0
      %vm5576 = vcmp.ge.f32.partialorder %v3706, 0.0
      %vm5577 = vcmp.ge.f32.partialorder %v3711, 0.0
      %vm5578 = vcmp.ge.f32.partialorder %v3714, 0.0
      %vm5579 = vcmp.ge.f32.partialorder %v3719, 0.0
      %vm5580 = vcmp.ge.f32.partialorder %v3722, 0.0
      %vm5581 = vcmp.ge.f32.partialorder %v3727, 0.0
      %vm5582 = vcmp.ge.f32.partialorder %v3730, 0.0
      %vm5583 = vcmp.ge.f32.partialorder %v3735, 0.0
      %vm5584 = vcmp.ge.f32.partialorder %v3738, 0.0
      %vm5585 = vcmp.ge.f32.partialorder %v3743, 0.0
      %vm5586 = vcmp.ge.f32.partialorder %v3746, 0.0
      %vm5587 = vcmp.ge.f32.partialorder %v3751, 0.0
      %vm5588 = vcmp.ge.f32.partialorder %v3754, 0.0
      %vm5589 = vcmp.ge.f32.partialorder %v3759, 0.0
      %vm5590 = vcmp.ge.f32.partialorder %v3762, 0.0
      %vm5591 = vcmp.ge.f32.partialorder %v3767, 0.0
      %vm5592 = vcmp.ge.f32.partialorder %v3770, 0.0
      %vm5593 = vcmp.ge.f32.partialorder %v3775, 0.0
      %vm5594 = vcmp.ge.f32.partialorder %v3778, 0.0
      %vm5595 = vcmp.ge.f32.partialorder %v3783, 0.0
      %vm5596 = vcmp.ge.f32.partialorder %v3786, 0.0
      %vm5597 = vcmp.ge.f32.partialorder %v3791, 0.0
      %vm5598 = vcmp.ge.f32.partialorder %v3794, 0.0
      %vm5599 = vcmp.ge.f32.partialorder %v3799, 0.0
      %vm5600 = vcmp.ge.f32.partialorder %v3802, 0.0
      %vm5601 = vcmp.ge.f32.partialorder %v3807, 0.0
      %vm5602 = vcmp.ge.f32.partialorder %v3810, 0.0
      %vm5603 = vcmp.ge.f32.partialorder %v3815, 0.0
      %vm5604 = vcmp.ge.f32.partialorder %v3818, 0.0
      %vm5605 = vcmp.ge.f32.partialorder %v3823, 0.0
      %vm5606 = vcmp.ge.f32.partialorder %v3826, 0.0
      %vm5607 = vcmp.ge.f32.partialorder %v3831, 0.0
      %vm5608 = vcmp.ge.f32.partialorder %v3834, 0.0
      %vm5609 = vcmp.ge.f32.partialorder %v3839, 0.0
      %vm5610 = vcmp.ge.f32.partialorder %v3842, 0.0
      %vm5611 = vcmp.ge.f32.partialorder %v3847, 0.0
      %vm5612 = vcmp.ge.f32.partialorder %v3850, 0.0
      %vm5613 = vcmp.ge.f32.partialorder %v3855, 0.0
      %vm5614 = vcmp.ge.f32.partialorder %v3858, 0.0
      %vm5615 = vcmp.ge.f32.partialorder %v3863, 0.0
      %vm5616 = vcmp.ge.f32.partialorder %v3866, 0.0
      %vm5617 = vcmp.ge.f32.partialorder %v3871, 0.0
      %vm5618 = vcmp.ge.f32.partialorder %v3874, 0.0
      %vm5619 = vcmp.ge.f32.partialorder %v3879, 0.0
      %vm5620 = vcmp.ge.f32.partialorder %v3882, 0.0
      %vm5621 = vcmp.ge.f32.partialorder %v3887, 0.0
      %vm5622 = vcmp.ge.f32.partialorder %v3890, 0.0
      %vm5623 = vcmp.ge.f32.partialorder %v3895, 0.0
      %vm5624 = vcmp.ge.f32.partialorder %v3898, 0.0
      %vm5625 = vcmp.ge.f32.partialorder %v3903, 0.0
      %vm5626 = vcmp.ge.f32.partialorder %v3906, 0.0
      %vm5627 = vcmp.ge.f32.partialorder %v3911, 0.0
      %vm5628 = vcmp.ge.f32.partialorder %v3914, 0.0
      %vm5629 = vcmp.ge.f32.partialorder %v3919, 0.0
      %vm5630 = vcmp.ge.f32.partialorder %v3922, 0.0
      %vm5631 = vcmp.ge.f32.partialorder %v3927, 0.0
      %vm5632 = vcmp.ge.f32.partialorder %v3930, 0.0
      %vm5633 = vcmp.ge.f32.partialorder %v3935, 0.0
      %vm5634 = vcmp.ge.f32.partialorder %v3938, 0.0
      %vm5635 = vcmp.ge.f32.partialorder %v3943, 0.0
      %vm5636 = vcmp.ge.f32.partialorder %v3946, 0.0
      %vm5637 = vcmp.ge.f32.partialorder %v3951, 0.0
      %vm5638 = vcmp.ge.f32.partialorder %v3954, 0.0
      %vm5639 = vcmp.ge.f32.partialorder %v3959, 0.0
      %vm5640 = vcmp.ge.f32.partialorder %v3962, 0.0
      %vm5641 = vcmp.ge.f32.partialorder %v3967, 0.0
      %vm5642 = vcmp.ge.f32.partialorder %v3970, 0.0
      %vm5643 = vcmp.ge.f32.partialorder %v3975, 0.0
      %vm5644 = vcmp.ge.f32.partialorder %v3978, 0.0
      %vm5645 = vcmp.ge.f32.partialorder %v3983, 0.0
      %vm5646 = vcmp.ge.f32.partialorder %v3986, 0.0
      %vm5647 = vcmp.ge.f32.partialorder %v3991, 0.0
      %vm5648 = vcmp.ge.f32.partialorder %v3994, 0.0
      %vm5649 = vcmp.ge.f32.partialorder %v3999, 0.0
      %vm5650 = vcmp.ge.f32.partialorder %v4002, 0.0
      %vm5651 = vcmp.ge.f32.partialorder %v4007, 0.0
      %vm5652 = vcmp.ge.f32.partialorder %v4010, 0.0
      %vm5653 = vcmp.ge.f32.partialorder %v4015, 0.0
      %vm5654 = vcmp.ge.f32.partialorder %v4018, 0.0
      %vm5655 = vcmp.ge.f32.partialorder %v4023, 0.0
      %vm5656 = vcmp.ge.f32.partialorder %v4026, 0.0
      %vm5657 = vcmp.ge.f32.partialorder %v4031, 0.0
      %vm5658 = vcmp.ge.f32.partialorder %v4034, 0.0
      %vm5659 = vcmp.ge.f32.partialorder %v4039, 0.0
      %vm5660 = vcmp.ge.f32.partialorder %v4042, 0.0
      %vm5661 = vcmp.ge.f32.partialorder %v4047, 0.0
      %vm5662 = vcmp.ge.f32.partialorder %v4050, 0.0
      %vm5663 = vcmp.ge.f32.partialorder %v4055, 0.0
      %vm5664 = vcmp.ge.f32.partialorder %v4058, 0.0
      %vm5665 = vcmp.ge.f32.partialorder %v4063, 0.0
      %vm5666 = vcmp.ge.f32.partialorder %v4066, 0.0
      %vm5667 = vcmp.ge.f32.partialorder %v4071, 0.0
      %vm5668 = vcmp.ge.f32.partialorder %v4074, 0.0
      %vm5669 = vcmp.ge.f32.partialorder %v4079, 0.0
      %vm5670 = vcmp.ge.f32.partialorder %v4082, 0.0
      %vm5671 = vcmp.ge.f32.partialorder %v4087, 0.0
      %vm5672 = vcmp.ge.f32.partialorder %v4090, 0.0
      %vm5673 = vcmp.ge.f32.partialorder %v4095, 0.0
      %vm5674 = vcmp.ge.f32.partialorder %v4098, 0.0
      %vm5675 = vcmp.ge.f32.partialorder %v4103, 0.0
      %vm5676 = vcmp.ge.f32.partialorder %v4106, 0.0
      %vm5677 = vcmp.ge.f32.partialorder %v4111, 0.0
      %vm5678 = vcmp.ge.f32.partialorder %v4114, 0.0
      %vm5679 = vcmp.ge.f32.partialorder %v4119, 0.0
      %vm5680 = vcmp.ge.f32.partialorder %v4122, 0.0
      %vm5681 = vcmp.ge.f32.partialorder %v4127, 0.0
      %vm5682 = vcmp.ge.f32.partialorder %v4130, 0.0
      %vm5683 = vcmp.ge.f32.partialorder %v4135, 0.0
      %vm5684 = vcmp.ge.f32.partialorder %v4138, 0.0
      %vm5685 = vcmp.ge.f32.partialorder %v4143, 0.0
      %vm5686 = vcmp.ge.f32.partialorder %v4146, 0.0
      %vm5687 = vcmp.ge.f32.partialorder %v4151, 0.0
      %vm5688 = vcmp.ge.f32.partialorder %v4154, 0.0
      %vm5689 = vcmp.ge.f32.partialorder %v4159, 0.0
      %vm5690 = vcmp.ge.f32.partialorder %v4162, 0.0
      %vm5691 = vcmp.ge.f32.partialorder %v4167, 0.0
      %vm5692 = vcmp.ge.f32.partialorder %v4170, 0.0
      %vm5693 = vcmp.ge.f32.partialorder %v4175, 0.0
      %vm5694 = vcmp.ge.f32.partialorder %v4178, 0.0
      %vm5695 = vcmp.ge.f32.partialorder %v4183, 0.0
      %vm5696 = vcmp.ge.f32.partialorder %v4186, 0.0
      %vm5697 = vcmp.ge.f32.partialorder %v4191, 0.0
      %vm5698 = vcmp.ge.f32.partialorder %v4194, 0.0
      %vm5699 = vcmp.ge.f32.partialorder %v4199, 0.0
      %vm5700 = vcmp.ge.f32.partialorder %v4202, 0.0
      %vm5701 = vcmp.ge.f32.partialorder %v4207, 0.0
      %vm5702 = vcmp.ge.f32.partialorder %v4210, 0.0
      %vm5703 = vcmp.ge.f32.partialorder %v4215, 0.0
      %vm5704 = vcmp.ge.f32.partialorder %v4218, 0.0
      %vm5705 = vcmp.ge.f32.partialorder %v4223, 0.0
      %vm5706 = vcmp.ge.f32.partialorder %v4226, 0.0
      %vm5707 = vcmp.ge.f32.partialorder %v4231, 0.0
      %vm5708 = vcmp.ge.f32.partialorder %v4234, 0.0
      %vm5709 = vcmp.ge.f32.partialorder %v4239, 0.0
      %vm5710 = vcmp.ge.f32.partialorder %v4242, 0.0
      %vm5711 = vcmp.ge.f32.partialorder %v4247, 0.0
      %vm5712 = vcmp.ge.f32.partialorder %v4250, 0.0
      %vm5713 = vcmp.ge.f32.partialorder %v4255, 0.0
      %vm5714 = vcmp.ge.f32.partialorder %v4258, 0.0
      %vm5715 = vcmp.ge.f32.partialorder %v4263, 0.0
      %vm5716 = vcmp.ge.f32.partialorder %v4266, 0.0
      %vm5717 = vcmp.ge.f32.partialorder %v4271, 0.0
      %vm5718 = vcmp.ge.f32.partialorder %v4274, 0.0
      %vm5719 = vcmp.ge.f32.partialorder %v4279, 0.0
      %vm5720 = vcmp.ge.f32.partialorder %v4282, 0.0
      %vm5721 = vcmp.ge.f32.partialorder %v4287, 0.0
      %vm5722 = vcmp.ge.f32.partialorder %v4290, 0.0
      %vm5723 = vcmp.ge.f32.partialorder %v4295, 0.0
      %vm5724 = vcmp.ge.f32.partialorder %v4298, 0.0
      %vm5725 = vcmp.ge.f32.partialorder %v4303, 0.0
      %vm5726 = vcmp.ge.f32.partialorder %v4306, 0.0
      %vm5727 = vcmp.ge.f32.partialorder %v4311, 0.0
      %vm5728 = vcmp.ge.f32.partialorder %v4314, 0.0
      %vm5729 = vcmp.ge.f32.partialorder %v4319, 0.0
      %vm5730 = vcmp.ge.f32.partialorder %v4322, 0.0
      %vm5731 = vcmp.ge.f32.partialorder %v4327, 0.0
      %vm5732 = vcmp.ge.f32.partialorder %v4330, 0.0
      %vm5733 = vcmp.ge.f32.partialorder %v4335, 0.0
      %vm5734 = vcmp.ge.f32.partialorder %v4338, 0.0
      %vm5735 = vcmp.ge.f32.partialorder %v4343, 0.0
      %vm5736 = vcmp.ge.f32.partialorder %v4346, 0.0
      %vm5737 = vcmp.ge.f32.partialorder %v4351, 0.0
      %vm5738 = vcmp.ge.f32.partialorder %v4354, 0.0
      %vm5739 = vcmp.ge.f32.partialorder %v4359, 0.0
      %vm5740 = vcmp.ge.f32.partialorder %v4362, 0.0
      %vm5741 = vcmp.ge.f32.partialorder %v4367, 0.0
      %vm5742 = vcmp.ge.f32.partialorder %v4370, 0.0
      %vm5743 = vcmp.ge.f32.partialorder %v4375, 0.0
      %vm5744 = vcmp.ge.f32.partialorder %v4378, 0.0
      %vm5745 = vcmp.ge.f32.partialorder %v4383, 0.0
      %vm5746 = vcmp.ge.f32.partialorder %v4386, 0.0
      %vm5747 = vcmp.ge.f32.partialorder %v4391, 0.0
      %vm5748 = vcmp.ge.f32.partialorder %v4394, 0.0
      %vm5749 = vcmp.ge.f32.partialorder %v4399, 0.0
      %vm5750 = vcmp.ge.f32.partialorder %v4402, 0.0
      %vm5751 = vcmp.ge.f32.partialorder %v4407, 0.0
      %vm5752 = vcmp.ge.f32.partialorder %v4410, 0.0
      %vm5753 = vcmp.ge.f32.partialorder %v4415, 0.0
      %vm5754 = vcmp.ge.f32.partialorder %v4418, 0.0
      %vm5755 = vcmp.ge.f32.partialorder %v4423, 0.0
      %vm5756 = vcmp.ge.f32.partialorder %v4426, 0.0
      %vm5757 = vcmp.ge.f32.partialorder %v4431, 0.0
      %vm5758 = vcmp.ge.f32.partialorder %v4434, 0.0
      %vm5759 = vcmp.ge.f32.partialorder %v4439, 0.0
      %vm5760 = vcmp.ge.f32.partialorder %v4442, 0.0
      %vm5761 = vcmp.ge.f32.partialorder %v4447, 0.0
      %vm5762 = vcmp.ge.f32.partialorder %v4450, 0.0
      %vm5763 = vcmp.ge.f32.partialorder %v4455, 0.0
      %vm5764 = vcmp.ge.f32.partialorder %v4458, 0.0
      %vm5765 = vcmp.ge.f32.partialorder %v4463, 0.0
      %vm5766 = vcmp.ge.f32.partialorder %v4466, 0.0
      %vm5767 = vcmp.ge.f32.partialorder %v4471, 0.0
      %vm5768 = vcmp.ge.f32.partialorder %v4474, 0.0
      %vm5769 = vcmp.ge.f32.partialorder %v4479, 0.0
      %vm5770 = vcmp.ge.f32.partialorder %v4482, 0.0
      %vm5771 = vcmp.ge.f32.partialorder %v4487, 0.0
      %vm5772 = vcmp.ge.f32.partialorder %v4490, 0.0
      %vm5773 = vcmp.ge.f32.partialorder %v4495, 0.0
      %vm5774 = vcmp.ge.f32.partialorder %v4498, 0.0
      %vm5775 = vcmp.ge.f32.partialorder %v4503, 0.0
      %vm5776 = vcmp.ge.f32.partialorder %v4506, 0.0
      %vm5777 = vcmp.ge.f32.partialorder %v4511, 0.0
      %vm5778 = vcmp.ge.f32.partialorder %v4514, 0.0
      %vm5779 = vcmp.ge.f32.partialorder %v4519, 0.0
      %vm5780 = vcmp.ge.f32.partialorder %v4522, 0.0
      %vm5781 = vcmp.ge.f32.partialorder %v4527, 0.0
      %vm5782 = vcmp.ge.f32.partialorder %v4530, 0.0
      %vm5783 = vcmp.ge.f32.partialorder %v4535, 0.0
      %vm5784 = vcmp.ge.f32.partialorder %v4538, 0.0
      %vm5785 = vcmp.ge.f32.partialorder %v4543, 0.0
      %vm5786 = vcmp.ge.f32.partialorder %v4546, 0.0
      %vm5787 = vcmp.ge.f32.partialorder %v4551, 0.0
      %vm5788 = vcmp.ge.f32.partialorder %v4554, 0.0
      %vm5789 = vcmp.ge.f32.partialorder %v4559, 0.0
      %vm5790 = vcmp.ge.f32.partialorder %v4562, 0.0
      %vm5791 = vcmp.ge.f32.partialorder %v4567, 0.0
      %vm5792 = vcmp.ge.f32.partialorder %v4570, 0.0
      %vm5793 = vcmp.ge.f32.partialorder %v4575, 0.0
      %vm5794 = vcmp.ge.f32.partialorder %v4578, 0.0
      %vm5795 = vcmp.ge.f32.partialorder %v4583, 0.0
      %vm5796 = vcmp.ge.f32.partialorder %v4586, 0.0
      %vm5797 = vcmp.ge.f32.partialorder %v4591, 0.0
      %vm5798 = vcmp.ge.f32.partialorder %v4594, 0.0
      %vm5799 = vcmp.ge.f32.partialorder %v4599, 0.0
      %vm5800 = vcmp.ge.f32.partialorder %v4602, 0.0
      %vm5801 = vcmp.ge.f32.partialorder %v4607, 0.0
      %vm5802 = vcmp.ge.f32.partialorder %v4610, 0.0
      %vm5803 = vcmp.ge.f32.partialorder %v4615, 0.0
      %vm5804 = vcmp.ge.f32.partialorder %v4618, 0.0
      %vm5805 = vcmp.ge.f32.partialorder %v4623, 0.0
      %vm5806 = vcmp.ge.f32.partialorder %v4626, 0.0
      %vm5807 = vcmp.ge.f32.partialorder %v4631, 0.0
      %vm5808 = vcmp.ge.f32.partialorder %v4634, 0.0
      %vm5809 = vcmp.ge.f32.partialorder %v4639, 0.0
      %vm5810 = vcmp.ge.f32.partialorder %v4642, 0.0
      %vm5811 = vcmp.ge.f32.partialorder %v4647, 0.0
      %vm5812 = vcmp.ge.f32.partialorder %v4650, 0.0
      %vm5813 = vcmp.ge.f32.partialorder %v4655, 0.0
      %vm5814 = vcmp.ge.f32.partialorder %v4658, 0.0
      %vm5815 = vcmp.ge.f32.partialorder %v4663, 0.0
      %vm5816 = vcmp.ge.f32.partialorder %v4666, 0.0
      %vm5817 = vcmp.ge.f32.partialorder %v4671, 0.0
      %vm5818 = vcmp.ge.f32.partialorder %v4674, 0.0
      %vm5819 = vcmp.ge.f32.partialorder %v4679, 0.0
      %vm5820 = vcmp.ge.f32.partialorder %v4682, 0.0
      %vm5821 = vcmp.ge.f32.partialorder %v4687, 0.0
      %vm5822 = vcmp.ge.f32.partialorder %v4690, 0.0
      %vm5823 = vcmp.ge.f32.partialorder %v4695, 0.0
      %vm5824 = vcmp.ge.f32.partialorder %v4698, 0.0
      %vm5825 = vcmp.ge.f32.partialorder %v4703, 0.0
      %vm5826 = vcmp.ge.f32.partialorder %v4706, 0.0
      %vm5827 = vcmp.ge.f32.partialorder %v4711, 0.0
      %vm5828 = vcmp.ge.f32.partialorder %v4714, 0.0
      %vm5829 = vcmp.ge.f32.partialorder %v4719, 0.0
      %vm5830 = vcmp.ge.f32.partialorder %v4722, 0.0
      %vm5831 = vcmp.ge.f32.partialorder %v4727, 0.0
      %vm5832 = vcmp.ge.f32.partialorder %v4730, 0.0
      %vm5833 = vcmp.ge.f32.partialorder %v4735, 0.0
      %vm5834 = vcmp.ge.f32.partialorder %v4738, 0.0
      %vm5835 = vcmp.ge.f32.partialorder %v4743, 0.0
      %vm5836 = vcmp.ge.f32.partialorder %v4746, 0.0
      %vm5837 = vcmp.ge.f32.partialorder %v4751, 0.0
      %vm5838 = vcmp.ge.f32.partialorder %v4754, 0.0
      %vm5839 = vcmp.ge.f32.partialorder %v4759, 0.0
      %vm5840 = vcmp.ge.f32.partialorder %v4762, 0.0
      %vm5841 = vcmp.ge.f32.partialorder %v4767, 0.0
      %vm5842 = vcmp.ge.f32.partialorder %v4770, 0.0
      %vm5843 = vcmp.ge.f32.partialorder %v4775, 0.0
      %vm5844 = vcmp.ge.f32.partialorder %v4778, 0.0
      %vm5845 = vcmp.ge.f32.partialorder %v4783, 0.0
      %vm5846 = vcmp.ge.f32.partialorder %v4786, 0.0
      %vm5847 = vcmp.ge.f32.partialorder %v4791, 0.0
      %vm5848 = vcmp.ge.f32.partialorder %v4794, 0.0
      %vm5849 = vcmp.ge.f32.partialorder %v4799, 0.0
      %vm5850 = vcmp.ge.f32.partialorder %v4802, 0.0
      %vm5851 = vcmp.ge.f32.partialorder %v4807, 0.0
      %vm5852 = vcmp.ge.f32.partialorder %v4810, 0.0
      %vm5853 = vcmp.ge.f32.partialorder %v4815, 0.0
      %vm5854 = vcmp.ge.f32.partialorder %v4818, 0.0
      %vm5855 = vcmp.ge.f32.partialorder %v4823, 0.0
      %vm5856 = vcmp.ge.f32.partialorder %v4826, 0.0
      %vm5857 = vcmp.ge.f32.partialorder %v4831, 0.0
      %vm5858 = vcmp.ge.f32.partialorder %v4834, 0.0
      %vm5859 = vcmp.ge.f32.partialorder %v4839, 0.0
      %vm5860 = vcmp.ge.f32.partialorder %v4842, 0.0
      %vm5861 = vcmp.ge.f32.partialorder %v4847, 0.0
      %vm5862 = vcmp.ge.f32.partialorder %v4850, 0.0
      %vm5863 = vcmp.ge.f32.partialorder %v4855, 0.0
      %vm5864 = vcmp.ge.f32.partialorder %v4858, 0.0
      %vm5865 = vcmp.ge.f32.partialorder %v4863, 0.0
      %vm5866 = vcmp.ge.f32.partialorder %v4866, 0.0
      %vm5867 = vcmp.ge.f32.partialorder %v4871, 0.0
      %vm5868 = vcmp.ge.f32.partialorder %v4874, 0.0
      %vm5869 = vcmp.ge.f32.partialorder %v4879, 0.0
      %vm5870 = vcmp.ge.f32.partialorder %v4882, 0.0
      %vm5871 = vcmp.ge.f32.partialorder %v4887, 0.0
      %vm5872 = vcmp.ge.f32.partialorder %v4890, 0.0
      %vm5873 = vcmp.ge.f32.partialorder %v4895, 0.0
      %vm5874 = vcmp.ge.f32.partialorder %v4898, 0.0
      %vm5875 = vcmp.ge.f32.partialorder %v4903, 0.0
      %vm5876 = vcmp.ge.f32.partialorder %v4906, 0.0
      %vm5877 = vcmp.ge.f32.partialorder %v4911, 0.0
      %vm5878 = vcmp.ge.f32.partialorder %v4914, 0.0
      %vm5879 = vcmp.ge.f32.partialorder %v4919, 0.0
      %vm5880 = vcmp.ge.f32.partialorder %v4922, 0.0
      %vm5881 = vcmp.ge.f32.partialorder %v4927, 0.0
      %vm5882 = vcmp.ge.f32.partialorder %v4930, 0.0
      %vm5883 = vcmp.ge.f32.partialorder %v4935, 0.0
      %vm5884 = vcmp.ge.f32.partialorder %v4938, 0.0
      %vm5885 = vcmp.ge.f32.partialorder %v4943, 0.0
      %vm5886 = vcmp.ge.f32.partialorder %v4946, 0.0
      %vm5887 = vcmp.ge.f32.partialorder %v4951, 0.0
      %vm5888 = vcmp.ge.f32.partialorder %v4954, 0.0
      %vm5889 = vcmp.ge.f32.partialorder %v4959, 0.0
      %vm5890 = vcmp.ge.f32.partialorder %v4962, 0.0
      %vm5891 = vcmp.ge.f32.partialorder %v4967, 0.0
      %vm5892 = vcmp.ge.f32.partialorder %v4970, 0.0
      %vm5893 = vcmp.ge.f32.partialorder %v4975, 0.0
      %vm5894 = vcmp.ge.f32.partialorder %v4978, 0.0
      %vm5895 = vcmp.ge.f32.partialorder %v4983, 0.0
      %vm5896 = vcmp.ge.f32.partialorder %v4986, 0.0
      %vm5897 = vcmp.ge.f32.partialorder %v4991, 0.0
      %vm5898 = vcmp.ge.f32.partialorder %v4994, 0.0
      %vm5899 = vcmp.ge.f32.partialorder %v4999, 0.0
      %vm5900 = vcmp.ge.f32.partialorder %v5002, 0.0
      %vm5901 = vcmp.ge.f32.partialorder %v5007, 0.0
      %vm5902 = vcmp.ge.f32.partialorder %v5010, 0.0
      %vm5903 = vcmp.ge.f32.partialorder %v5015, 0.0
      %vm5904 = vcmp.ge.f32.partialorder %v5018, 0.0
      %vm5905 = vcmp.ge.f32.partialorder %v5023, 0.0
      %vm5906 = vcmp.ge.f32.partialorder %v5026, 0.0
      %vm5907 = vcmp.ge.f32.partialorder %v5031, 0.0
      %vm5908 = vcmp.ge.f32.partialorder %v5034, 0.0
      %vm5909 = vcmp.ge.f32.partialorder %v5039, 0.0
      %vm5910 = vcmp.ge.f32.partialorder %v5042, 0.0
      %vm5911 = vcmp.ge.f32.partialorder %v5047, 0.0
      %vm5912 = vcmp.ge.f32.partialorder %v5050, 0.0
      %vm5913 = vcmp.ge.f32.partialorder %v5055, 0.0
      %vm5914 = vcmp.ge.f32.partialorder %v5058, 0.0
      %vm5915 = vcmp.ge.f32.partialorder %v5063, 0.0
      %vm5916 = vcmp.ge.f32.partialorder %v5066, 0.0
      %vm5917 = vcmp.ge.f32.partialorder %v5071, 0.0
      %vm5918 = vcmp.ge.f32.partialorder %v5074, 0.0
      %vm5919 = vcmp.ge.f32.partialorder %v5079, 0.0
      %vm5920 = vcmp.ge.f32.partialorder %v5082, 0.0
      %vm5921 = vcmp.ge.f32.partialorder %v5087, 0.0
      %vm5922 = vcmp.ge.f32.partialorder %v5090, 0.0
      %vm5923 = vcmp.ge.f32.partialorder %v5095, 0.0
      %vm5924 = vcmp.ge.f32.partialorder %v5098, 0.0
      %vm5925 = vcmp.ge.f32.partialorder %v5103, 0.0
      %vm5926 = vcmp.ge.f32.partialorder %v5106, 0.0
      %vm5927 = vcmp.ge.f32.partialorder %v5111, 0.0
      %vm5928 = vcmp.ge.f32.partialorder %v5114, 0.0
      %vm5929 = vcmp.ge.f32.partialorder %v5119, 0.0
      %vm5930 = vcmp.ge.f32.partialorder %v5122, 0.0
      %vm5931 = vcmp.ge.f32.partialorder %v5127, 0.0
      %vm5932 = vcmp.ge.f32.partialorder %v5130, 0.0
      %vm5933 = vcmp.ge.f32.partialorder %v5135, 0.0
      %vm5934 = vcmp.ge.f32.partialorder %v5138, 0.0
      %vm5935 = vcmp.ge.f32.partialorder %v5143, 0.0
      %vm5936 = vcmp.ge.f32.partialorder %v5146, 0.0
      %vm5937 = vcmp.ge.f32.partialorder %v5151, 0.0
      %vm5938 = vcmp.ge.f32.partialorder %v5154, 0.0
      %vm5939 = vcmp.ge.f32.partialorder %v5159, 0.0
      %vm5940 = vcmp.ge.f32.partialorder %v5162, 0.0
      %vm5941 = vcmp.ge.f32.partialorder %v5167, 0.0
      %vm5942 = vcmp.ge.f32.partialorder %v5170, 0.0
      %vm5943 = vcmp.ge.f32.partialorder %v5175, 0.0
      %vm5944 = vcmp.ge.f32.partialorder %v5178, 0.0
      %vm5945 = vcmp.ge.f32.partialorder %v5183, 0.0
      %vm5946 = vcmp.ge.f32.partialorder %v5186, 0.0
      %vm5947 = vcmp.ge.f32.partialorder %v5191, 0.0
      %vm5948 = vcmp.ge.f32.partialorder %v5194, 0.0
      %vm5949 = vcmp.ge.f32.partialorder %v5199, 0.0
      %vm5950 = vcmp.ge.f32.partialorder %v5202, 0.0
      %vm5951 = vcmp.ge.f32.partialorder %v5207, 0.0
      %vm5952 = vcmp.ge.f32.partialorder %v5210, 0.0
      %vm5953 = vcmp.ge.f32.partialorder %v5215, 0.0
      %vm5954 = vcmp.ge.f32.partialorder %v5218, 0.0
      %vm5955 = vcmp.ge.f32.partialorder %v5223, 0.0
      %vm5956 = vcmp.ge.f32.partialorder %v5226, 0.0
      %vm5957 = vcmp.ge.f32.partialorder %v5231, 0.0
      %vm5958 = vcmp.ge.f32.partialorder %v5234, 0.0
      %vm5959 = vcmp.ge.f32.partialorder %v5239, 0.0
      %vm5960 = vcmp.ge.f32.partialorder %v5242, 0.0
      %vm5961 = vcmp.ge.f32.partialorder %v5247, 0.0
      %vm5962 = vcmp.ge.f32.partialorder %v5250, 0.0
      %vm5963 = vcmp.ge.f32.partialorder %v5255, 0.0
      %vm5964 = vcmp.ge.f32.partialorder %v5258, 0.0
      %vm5965 = vcmp.ge.f32.partialorder %v5263, 0.0
      %vm5966 = vcmp.ge.f32.partialorder %v5266, 0.0
      %vm5967 = vcmp.ge.f32.partialorder %v5271, 0.0
      %vm5968 = vcmp.ge.f32.partialorder %v5274, 0.0
      %vm5969 = vcmp.ge.f32.partialorder %v5279, 0.0
      %vm5970 = vcmp.ge.f32.partialorder %v5282, 0.0
      %vm5971 = vcmp.ge.f32.partialorder %v5287, 0.0
      %vm5972 = vcmp.ge.f32.partialorder %v5290, 0.0
      %vm5973 = vcmp.ge.f32.partialorder %v5295, 0.0
      %vm5974 = vcmp.ge.f32.partialorder %v5298, 0.0
      %vm5975 = vcmp.ge.f32.partialorder %v5303, 0.0
      %vm5976 = vcmp.ge.f32.partialorder %v5306, 0.0
      %vm5977 = vcmp.ge.f32.partialorder %v5311, 0.0
      %vm5978 = vcmp.ge.f32.partialorder %v5314, 0.0
      %vm5979 = vcmp.ge.f32.partialorder %v5319, 0.0
      %vm5980 = vcmp.ge.f32.partialorder %v5322, 0.0
      %vm5981 = vcmp.ge.f32.partialorder %v5327, 0.0
      %vm5982 = vcmp.ge.f32.partialorder %v5330, 0.0
      %vm5983 = vcmp.ge.f32.partialorder %v5335, 0.0
      %vm5984 = vcmp.ge.f32.partialorder %v5338, 0.0
      %vm5985 = vcmp.ge.f32.partialorder %v5343, 0.0
      %vm5986 = vcmp.ge.f32.partialorder %v5346, 0.0
      %vm5987 = vcmp.ge.f32.partialorder %v5351, 0.0
      %vm5988 = vcmp.ge.f32.partialorder %v5354, 0.0
      %vm5989 = vcmp.ge.f32.partialorder %v5359, 0.0
      %vm5990 = vcmp.ge.f32.partialorder %v5362, 0.0
      %vm5991 = vcmp.ge.f32.partialorder %v5367, 0.0
      %vm5992 = vcmp.ge.f32.partialorder %v5370, 0.0
      %vm5993 = vcmp.ge.f32.partialorder %v5375, 0.0
      %vm5994 = vcmp.ge.f32.partialorder %v5378, 0.0
      %vm5995 = vcmp.ge.f32.partialorder %v5383, 0.0
      %vm5996 = vcmp.ge.f32.partialorder %v5386, 0.0
      %vm5997 = vcmp.ge.f32.partialorder %v5391, 0.0
      %vm5998 = vcmp.ge.f32.partialorder %v5394, 0.0
      %vm5999 = vcmp.ge.f32.partialorder %v5399, 0.0
      %vm6000 = vcmp.ge.f32.partialorder %v5402, 0.0
      %vm6001 = vcmp.ge.f32.partialorder %v5407, 0.0
      %vm6002 = vcmp.ge.f32.partialorder %v5410, 0.0
      %vm6003 = vcmp.ge.f32.partialorder %v5415, 0.0
      %vm6004 = vcmp.ge.f32.partialorder %v5418, 0.0
      %vm6005 = vcmp.ge.f32.partialorder %v5423, 0.0
      %vm6006 = vcmp.ge.f32.partialorder %v5426, 0.0
      %vm6007 = vcmp.ge.f32.partialorder %v5431, 0.0
      %vm6008 = vcmp.ge.f32.partialorder %v5434, 0.0
      %vm6009 = vcmp.ge.f32.partialorder %v5439, 0.0
      %vm6010 = vcmp.ge.f32.partialorder %v5442, 0.0
      %vm6011 = vcmp.ge.f32.partialorder %v5447, 0.0
      %vm6012 = vcmp.ge.f32.partialorder %v5450, 0.0
      %vm6013 = vcmp.ge.f32.partialorder %v5455, 0.0
      %vm6014 = vcmp.ge.f32.partialorder %v5458, 0.0
      %vm6015 = vcmp.ge.f32.partialorder %v5463, 0.0
      %vm6016 = vcmp.ge.f32.partialorder %v5466, 0.0
      %vm6017 = vcmp.ge.f32.partialorder %v5471, 0.0
      %vm6018 = vcmp.ge.f32.partialorder %v5474, 0.0
      %vm6019 = vcmp.ge.f32.partialorder %v5479, 0.0
      %vm6020 = vcmp.ge.f32.partialorder %v5482, 0.0
      %vm6021 = vcmp.ge.f32.partialorder %v5487, 0.0
      %vm6022 = vcmp.ge.f32.partialorder %v5490, 0.0
      %vm6023 = vcmp.ge.f32.partialorder %v5495, 0.0
      %vm6024 = vcmp.ge.f32.partialorder %v5498, 0.0
      %vm6025 = vcmp.ge.f32.partialorder %v5503, 0.0
      %vm6026 = vcmp.ge.f32.partialorder %v5506, 0.0
      %vm6027 = vcmp.ge.f32.partialorder %v5511, 0.0
      %vm6028 = vcmp.ge.f32.partialorder %v5514, 0.0
      %v6029 = vmul.f32 %v3471, 0.2
      %v6030 = vmul.f32 %v3474, 0.2
      %v6031 = vmul.f32 %v3479, 0.2
      %v6032 = vmul.f32 %v3482, 0.2
      %v6033 = vmul.f32 %v3487, 0.2
      %v6034 = vmul.f32 %v3490, 0.2
      %v6035 = vmul.f32 %v3495, 0.2
      %v6036 = vmul.f32 %v3498, 0.2
      %v6037 = vmul.f32 %v3503, 0.2
      %v6038 = vmul.f32 %v3506, 0.2
      %v6039 = vmul.f32 %v3511, 0.2
      %v6040 = vmul.f32 %v3514, 0.2
      %v6041 = vmul.f32 %v3519, 0.2
      %v6042 = vmul.f32 %v3522, 0.2
      %v6043 = vmul.f32 %v3527, 0.2
      %v6044 = vmul.f32 %v3530, 0.2
      %v6045 = vmul.f32 %v3535, 0.2
      %v6046 = vmul.f32 %v3538, 0.2
      %v6047 = vmul.f32 %v3543, 0.2
      %v6048 = vmul.f32 %v3546, 0.2
      %v6049 = vmul.f32 %v3551, 0.2
      %v6050 = vmul.f32 %v3554, 0.2
      %v6051 = vmul.f32 %v3559, 0.2
      %v6052 = vmul.f32 %v3562, 0.2
      %v6053 = vmul.f32 %v3567, 0.2
      %v6054 = vmul.f32 %v3570, 0.2
      %v6055 = vmul.f32 %v3575, 0.2
      %v6056 = vmul.f32 %v3578, 0.2
      %v6057 = vmul.f32 %v3583, 0.2
      %v6058 = vmul.f32 %v3586, 0.2
      %v6059 = vmul.f32 %v3591, 0.2
      %v6060 = vmul.f32 %v3594, 0.2
      %v6061 = vmul.f32 %v3599, 0.2
      %v6062 = vmul.f32 %v3602, 0.2
      %v6063 = vmul.f32 %v3607, 0.2
      %v6064 = vmul.f32 %v3610, 0.2
      %v6065 = vmul.f32 %v3615, 0.2
      %v6066 = vmul.f32 %v3618, 0.2
      %v6067 = vmul.f32 %v3623, 0.2
      %v6068 = vmul.f32 %v3626, 0.2
      %v6069 = vmul.f32 %v3631, 0.2
      %v6070 = vmul.f32 %v3634, 0.2
      %v6071 = vmul.f32 %v3639, 0.2
      %v6072 = vmul.f32 %v3642, 0.2
      %v6073 = vmul.f32 %v3647, 0.2
      %v6074 = vmul.f32 %v3650, 0.2
      %v6075 = vmul.f32 %v3655, 0.2
      %v6076 = vmul.f32 %v3658, 0.2
      %v6077 = vmul.f32 %v3663, 0.2
      %v6078 = vmul.f32 %v3666, 0.2
      %v6079 = vmul.f32 %v3671, 0.2
      %v6080 = vmul.f32 %v3674, 0.2
      %v6081 = vmul.f32 %v3679, 0.2
      %v6082 = vmul.f32 %v3682, 0.2
      %v6083 = vmul.f32 %v3687, 0.2
      %v6084 = vmul.f32 %v3690, 0.2
      %v6085 = vmul.f32 %v3695, 0.2
      %v6086 = vmul.f32 %v3698, 0.2
      %v6087 = vmul.f32 %v3703, 0.2
      %v6088 = vmul.f32 %v3706, 0.2
      %v6089 = vmul.f32 %v3711, 0.2
      %v6090 = vmul.f32 %v3714, 0.2
      %v6091 = vmul.f32 %v3719, 0.2
      %v6092 = vmul.f32 %v3722, 0.2
      %v6093 = vmul.f32 %v3727, 0.2
      %v6094 = vmul.f32 %v3730, 0.2
      %v6095 = vmul.f32 %v3735, 0.2
      %v6096 = vmul.f32 %v3738, 0.2
      %v6097 = vmul.f32 %v3743, 0.2
      %v6098 = vmul.f32 %v3746, 0.2
      %v6099 = vmul.f32 %v3751, 0.2
      %v6100 = vmul.f32 %v3754, 0.2
      %v6101 = vmul.f32 %v3759, 0.2
      %v6102 = vmul.f32 %v3762, 0.2
      %v6103 = vmul.f32 %v3767, 0.2
      %v6104 = vmul.f32 %v3770, 0.2
      %v6105 = vmul.f32 %v3775, 0.2
      %v6106 = vmul.f32 %v3778, 0.2
      %v6107 = vmul.f32 %v3783, 0.2
      %v6108 = vmul.f32 %v3786, 0.2
      %v6109 = vmul.f32 %v3791, 0.2
      %v6110 = vmul.f32 %v3794, 0.2
      %v6111 = vmul.f32 %v3799, 0.2
      %v6112 = vmul.f32 %v3802, 0.2
      %v6113 = vmul.f32 %v3807, 0.2
      %v6114 = vmul.f32 %v3810, 0.2
      %v6115 = vmul.f32 %v3815, 0.2
      %v6116 = vmul.f32 %v3818, 0.2
      %v6117 = vmul.f32 %v3823, 0.2
      %v6118 = vmul.f32 %v3826, 0.2
      %v6119 = vmul.f32 %v3831, 0.2
      %v6120 = vmul.f32 %v3834, 0.2
      %v6121 = vmul.f32 %v3839, 0.2
      %v6122 = vmul.f32 %v3842, 0.2
      %v6123 = vmul.f32 %v3847, 0.2
      %v6124 = vmul.f32 %v3850, 0.2
      %v6125 = vmul.f32 %v3855, 0.2
      %v6126 = vmul.f32 %v3858, 0.2
      %v6127 = vmul.f32 %v3863, 0.2
      %v6128 = vmul.f32 %v3866, 0.2
      %v6129 = vmul.f32 %v3871, 0.2
      %v6130 = vmul.f32 %v3874, 0.2
      %v6131 = vmul.f32 %v3879, 0.2
      %v6132 = vmul.f32 %v3882, 0.2
      %v6133 = vmul.f32 %v3887, 0.2
      %v6134 = vmul.f32 %v3890, 0.2
      %v6135 = vmul.f32 %v3895, 0.2
      %v6136 = vmul.f32 %v3898, 0.2
      %v6137 = vmul.f32 %v3903, 0.2
      %v6138 = vmul.f32 %v3906, 0.2
      %v6139 = vmul.f32 %v3911, 0.2
      %v6140 = vmul.f32 %v3914, 0.2
      %v6141 = vmul.f32 %v3919, 0.2
      %v6142 = vmul.f32 %v3922, 0.2
      %v6143 = vmul.f32 %v3927, 0.2
      %v6144 = vmul.f32 %v3930, 0.2
      %v6145 = vmul.f32 %v3935, 0.2
      %v6146 = vmul.f32 %v3938, 0.2
      %v6147 = vmul.f32 %v3943, 0.2
      %v6148 = vmul.f32 %v3946, 0.2
      %v6149 = vmul.f32 %v3951, 0.2
      %v6150 = vmul.f32 %v3954, 0.2
      %v6151 = vmul.f32 %v3959, 0.2
      %v6152 = vmul.f32 %v3962, 0.2
      %v6153 = vmul.f32 %v3967, 0.2
      %v6154 = vmul.f32 %v3970, 0.2
      %v6155 = vmul.f32 %v3975, 0.2
      %v6156 = vmul.f32 %v3978, 0.2
      %v6157 = vmul.f32 %v3983, 0.2
      %v6158 = vmul.f32 %v3986, 0.2
      %v6159 = vmul.f32 %v3991, 0.2
      %v6160 = vmul.f32 %v3994, 0.2
      %v6161 = vmul.f32 %v3999, 0.2
      %v6162 = vmul.f32 %v4002, 0.2
      %v6163 = vmul.f32 %v4007, 0.2
      %v6164 = vmul.f32 %v4010, 0.2
      %v6165 = vmul.f32 %v4015, 0.2
      %v6166 = vmul.f32 %v4018, 0.2
      %v6167 = vmul.f32 %v4023, 0.2
      %v6168 = vmul.f32 %v4026, 0.2
      %v6169 = vmul.f32 %v4031, 0.2
      %v6170 = vmul.f32 %v4034, 0.2
      %v6171 = vmul.f32 %v4039, 0.2
      %v6172 = vmul.f32 %v4042, 0.2
      %v6173 = vmul.f32 %v4047, 0.2
      %v6174 = vmul.f32 %v4050, 0.2
      %v6175 = vmul.f32 %v4055, 0.2
      %v6176 = vmul.f32 %v4058, 0.2
      %v6177 = vmul.f32 %v4063, 0.2
      %v6178 = vmul.f32 %v4066, 0.2
      %v6179 = vmul.f32 %v4071, 0.2
      %v6180 = vmul.f32 %v4074, 0.2
      %v6181 = vmul.f32 %v4079, 0.2
      %v6182 = vmul.f32 %v4082, 0.2
      %v6183 = vmul.f32 %v4087, 0.2
      %v6184 = vmul.f32 %v4090, 0.2
      %v6185 = vmul.f32 %v4095, 0.2
      %v6186 = vmul.f32 %v4098, 0.2
      %v6187 = vmul.f32 %v4103, 0.2
      %v6188 = vmul.f32 %v4106, 0.2
      %v6189 = vmul.f32 %v4111, 0.2
      %v6190 = vmul.f32 %v4114, 0.2
      %v6191 = vmul.f32 %v4119, 0.2
      %v6192 = vmul.f32 %v4122, 0.2
      %v6193 = vmul.f32 %v4127, 0.2
      %v6194 = vmul.f32 %v4130, 0.2
      %v6195 = vmul.f32 %v4135, 0.2
      %v6196 = vmul.f32 %v4138, 0.2
      %v6197 = vmul.f32 %v4143, 0.2
      %v6198 = vmul.f32 %v4146, 0.2
      %v6199 = vmul.f32 %v4151, 0.2
      %v6200 = vmul.f32 %v4154, 0.2
      %v6201 = vmul.f32 %v4159, 0.2
      %v6202 = vmul.f32 %v4162, 0.2
      %v6203 = vmul.f32 %v4167, 0.2
      %v6204 = vmul.f32 %v4170, 0.2
      %v6205 = vmul.f32 %v4175, 0.2
      %v6206 = vmul.f32 %v4178, 0.2
      %v6207 = vmul.f32 %v4183, 0.2
      %v6208 = vmul.f32 %v4186, 0.2
      %v6209 = vmul.f32 %v4191, 0.2
      %v6210 = vmul.f32 %v4194, 0.2
      %v6211 = vmul.f32 %v4199, 0.2
      %v6212 = vmul.f32 %v4202, 0.2
      %v6213 = vmul.f32 %v4207, 0.2
      %v6214 = vmul.f32 %v4210, 0.2
      %v6215 = vmul.f32 %v4215, 0.2
      %v6216 = vmul.f32 %v4218, 0.2
      %v6217 = vmul.f32 %v4223, 0.2
      %v6218 = vmul.f32 %v4226, 0.2
      %v6219 = vmul.f32 %v4231, 0.2
      %v6220 = vmul.f32 %v4234, 0.2
      %v6221 = vmul.f32 %v4239, 0.2
      %v6222 = vmul.f32 %v4242, 0.2
      %v6223 = vmul.f32 %v4247, 0.2
      %v6224 = vmul.f32 %v4250, 0.2
      %v6225 = vmul.f32 %v4255, 0.2
      %v6226 = vmul.f32 %v4258, 0.2
      %v6227 = vmul.f32 %v4263, 0.2
      %v6228 = vmul.f32 %v4266, 0.2
      %v6229 = vmul.f32 %v4271, 0.2
      %v6230 = vmul.f32 %v4274, 0.2
      %v6231 = vmul.f32 %v4279, 0.2
      %v6232 = vmul.f32 %v4282, 0.2
      %v6233 = vmul.f32 %v4287, 0.2
      %v6234 = vmul.f32 %v4290, 0.2
      %v6235 = vmul.f32 %v4295, 0.2
      %v6236 = vmul.f32 %v4298, 0.2
      %v6237 = vmul.f32 %v4303, 0.2
      %v6238 = vmul.f32 %v4306, 0.2
      %v6239 = vmul.f32 %v4311, 0.2
      %v6240 = vmul.f32 %v4314, 0.2
      %v6241 = vmul.f32 %v4319, 0.2
      %v6242 = vmul.f32 %v4322, 0.2
      %v6243 = vmul.f32 %v4327, 0.2
      %v6244 = vmul.f32 %v4330, 0.2
      %v6245 = vmul.f32 %v4335, 0.2
      %v6246 = vmul.f32 %v4338, 0.2
      %v6247 = vmul.f32 %v4343, 0.2
      %v6248 = vmul.f32 %v4346, 0.2
      %v6249 = vmul.f32 %v4351, 0.2
      %v6250 = vmul.f32 %v4354, 0.2
      %v6251 = vmul.f32 %v4359, 0.2
      %v6252 = vmul.f32 %v4362, 0.2
      %v6253 = vmul.f32 %v4367, 0.2
      %v6254 = vmul.f32 %v4370, 0.2
      %v6255 = vmul.f32 %v4375, 0.2
      %v6256 = vmul.f32 %v4378, 0.2
      %v6257 = vmul.f32 %v4383, 0.2
      %v6258 = vmul.f32 %v4386, 0.2
      %v6259 = vmul.f32 %v4391, 0.2
      %v6260 = vmul.f32 %v4394, 0.2
      %v6261 = vmul.f32 %v4399, 0.2
      %v6262 = vmul.f32 %v4402, 0.2
      %v6263 = vmul.f32 %v4407, 0.2
      %v6264 = vmul.f32 %v4410, 0.2
      %v6265 = vmul.f32 %v4415, 0.2
      %v6266 = vmul.f32 %v4418, 0.2
      %v6267 = vmul.f32 %v4423, 0.2
      %v6268 = vmul.f32 %v4426, 0.2
      %v6269 = vmul.f32 %v4431, 0.2
      %v6270 = vmul.f32 %v4434, 0.2
      %v6271 = vmul.f32 %v4439, 0.2
      %v6272 = vmul.f32 %v4442, 0.2
      %v6273 = vmul.f32 %v4447, 0.2
      %v6274 = vmul.f32 %v4450, 0.2
      %v6275 = vmul.f32 %v4455, 0.2
      %v6276 = vmul.f32 %v4458, 0.2
      %v6277 = vmul.f32 %v4463, 0.2
      %v6278 = vmul.f32 %v4466, 0.2
      %v6279 = vmul.f32 %v4471, 0.2
      %v6280 = vmul.f32 %v4474, 0.2
      %v6281 = vmul.f32 %v4479, 0.2
      %v6282 = vmul.f32 %v4482, 0.2
      %v6283 = vmul.f32 %v4487, 0.2
      %v6284 = vmul.f32 %v4490, 0.2
      %v6285 = vmul.f32 %v4495, 0.2
      %v6286 = vmul.f32 %v4498, 0.2
      %v6287 = vmul.f32 %v4503, 0.2
      %v6288 = vmul.f32 %v4506, 0.2
      %v6289 = vmul.f32 %v4511, 0.2
      %v6290 = vmul.f32 %v4514, 0.2
      %v6291 = vmul.f32 %v4519, 0.2
      %v6292 = vmul.f32 %v4522, 0.2
      %v6293 = vmul.f32 %v4527, 0.2
      %v6294 = vmul.f32 %v4530, 0.2
      %v6295 = vmul.f32 %v4535, 0.2
      %v6296 = vmul.f32 %v4538, 0.2
      %v6297 = vmul.f32 %v4543, 0.2
      %v6298 = vmul.f32 %v4546, 0.2
      %v6299 = vmul.f32 %v4551, 0.2
      %v6300 = vmul.f32 %v4554, 0.2
      %v6301 = vmul.f32 %v4559, 0.2
      %v6302 = vmul.f32 %v4562, 0.2
      %v6303 = vmul.f32 %v4567, 0.2
      %v6304 = vmul.f32 %v4570, 0.2
      %v6305 = vmul.f32 %v4575, 0.2
      %v6306 = vmul.f32 %v4578, 0.2
      %v6307 = vmul.f32 %v4583, 0.2
      %v6308 = vmul.f32 %v4586, 0.2
      %v6309 = vmul.f32 %v4591, 0.2
      %v6310 = vmul.f32 %v4594, 0.2
      %v6311 = vmul.f32 %v4599, 0.2
      %v6312 = vmul.f32 %v4602, 0.2
      %v6313 = vmul.f32 %v4607, 0.2
      %v6314 = vmul.f32 %v4610, 0.2
      %v6315 = vmul.f32 %v4615, 0.2
      %v6316 = vmul.f32 %v4618, 0.2
      %v6317 = vmul.f32 %v4623, 0.2
      %v6318 = vmul.f32 %v4626, 0.2
      %v6319 = vmul.f32 %v4631, 0.2
      %v6320 = vmul.f32 %v4634, 0.2
      %v6321 = vmul.f32 %v4639, 0.2
      %v6322 = vmul.f32 %v4642, 0.2
      %v6323 = vmul.f32 %v4647, 0.2
      %v6324 = vmul.f32 %v4650, 0.2
      %v6325 = vmul.f32 %v4655, 0.2
      %v6326 = vmul.f32 %v4658, 0.2
      %v6327 = vmul.f32 %v4663, 0.2
      %v6328 = vmul.f32 %v4666, 0.2
      %v6329 = vmul.f32 %v4671, 0.2
      %v6330 = vmul.f32 %v4674, 0.2
      %v6331 = vmul.f32 %v4679, 0.2
      %v6332 = vmul.f32 %v4682, 0.2
      %v6333 = vmul.f32 %v4687, 0.2
      %v6334 = vmul.f32 %v4690, 0.2
      %v6335 = vmul.f32 %v4695, 0.2
      %v6336 = vmul.f32 %v4698, 0.2
      %v6337 = vmul.f32 %v4703, 0.2
      %v6338 = vmul.f32 %v4706, 0.2
      %v6339 = vmul.f32 %v4711, 0.2
      %v6340 = vmul.f32 %v4714, 0.2
      %v6341 = vmul.f32 %v4719, 0.2
      %v6342 = vmul.f32 %v4722, 0.2
      %v6343 = vmul.f32 %v4727, 0.2
      %v6344 = vmul.f32 %v4730, 0.2
      %v6345 = vmul.f32 %v4735, 0.2
      %v6346 = vmul.f32 %v4738, 0.2
      %v6347 = vmul.f32 %v4743, 0.2
      %v6348 = vmul.f32 %v4746, 0.2
      %v6349 = vmul.f32 %v4751, 0.2
      %v6350 = vmul.f32 %v4754, 0.2
      %v6351 = vmul.f32 %v4759, 0.2
      %v6352 = vmul.f32 %v4762, 0.2
      %v6353 = vmul.f32 %v4767, 0.2
      %v6354 = vmul.f32 %v4770, 0.2
      %v6355 = vmul.f32 %v4775, 0.2
      %v6356 = vmul.f32 %v4778, 0.2
      %v6357 = vmul.f32 %v4783, 0.2
      %v6358 = vmul.f32 %v4786, 0.2
      %v6359 = vmul.f32 %v4791, 0.2
      %v6360 = vmul.f32 %v4794, 0.2
      %v6361 = vmul.f32 %v4799, 0.2
      %v6362 = vmul.f32 %v4802, 0.2
      %v6363 = vmul.f32 %v4807, 0.2
      %v6364 = vmul.f32 %v4810, 0.2
      %v6365 = vmul.f32 %v4815, 0.2
      %v6366 = vmul.f32 %v4818, 0.2
      %v6367 = vmul.f32 %v4823, 0.2
      %v6368 = vmul.f32 %v4826, 0.2
      %v6369 = vmul.f32 %v4831, 0.2
      %v6370 = vmul.f32 %v4834, 0.2
      %v6371 = vmul.f32 %v4839, 0.2
      %v6372 = vmul.f32 %v4842, 0.2
      %v6373 = vmul.f32 %v4847, 0.2
      %v6374 = vmul.f32 %v4850, 0.2
      %v6375 = vmul.f32 %v4855, 0.2
      %v6376 = vmul.f32 %v4858, 0.2
      %v6377 = vmul.f32 %v4863, 0.2
      %v6378 = vmul.f32 %v4866, 0.2
      %v6379 = vmul.f32 %v4871, 0.2
      %v6380 = vmul.f32 %v4874, 0.2
      %v6381 = vmul.f32 %v4879, 0.2
      %v6382 = vmul.f32 %v4882, 0.2
      %v6383 = vmul.f32 %v4887, 0.2
      %v6384 = vmul.f32 %v4890, 0.2
      %v6385 = vmul.f32 %v4895, 0.2
      %v6386 = vmul.f32 %v4898, 0.2
      %v6387 = vmul.f32 %v4903, 0.2
      %v6388 = vmul.f32 %v4906, 0.2
      %v6389 = vmul.f32 %v4911, 0.2
      %v6390 = vmul.f32 %v4914, 0.2
      %v6391 = vmul.f32 %v4919, 0.2
      %v6392 = vmul.f32 %v4922, 0.2
      %v6393 = vmul.f32 %v4927, 0.2
      %v6394 = vmul.f32 %v4930, 0.2
      %v6395 = vmul.f32 %v4935, 0.2
      %v6396 = vmul.f32 %v4938, 0.2
      %v6397 = vmul.f32 %v4943, 0.2
      %v6398 = vmul.f32 %v4946, 0.2
      %v6399 = vmul.f32 %v4951, 0.2
      %v6400 = vmul.f32 %v4954, 0.2
      %v6401 = vmul.f32 %v4959, 0.2
      %v6402 = vmul.f32 %v4962, 0.2
      %v6403 = vmul.f32 %v4967, 0.2
      %v6404 = vmul.f32 %v4970, 0.2
      %v6405 = vmul.f32 %v4975, 0.2
      %v6406 = vmul.f32 %v4978, 0.2
      %v6407 = vmul.f32 %v4983, 0.2
      %v6408 = vmul.f32 %v4986, 0.2
      %v6409 = vmul.f32 %v4991, 0.2
      %v6410 = vmul.f32 %v4994, 0.2
      %v6411 = vmul.f32 %v4999, 0.2
      %v6412 = vmul.f32 %v5002, 0.2
      %v6413 = vmul.f32 %v5007, 0.2
      %v6414 = vmul.f32 %v5010, 0.2
      %v6415 = vmul.f32 %v5015, 0.2
      %v6416 = vmul.f32 %v5018, 0.2
      %v6417 = vmul.f32 %v5023, 0.2
      %v6418 = vmul.f32 %v5026, 0.2
      %v6419 = vmul.f32 %v5031, 0.2
      %v6420 = vmul.f32 %v5034, 0.2
      %v6421 = vmul.f32 %v5039, 0.2
      %v6422 = vmul.f32 %v5042, 0.2
      %v6423 = vmul.f32 %v5047, 0.2
      %v6424 = vmul.f32 %v5050, 0.2
      %v6425 = vmul.f32 %v5055, 0.2
      %v6426 = vmul.f32 %v5058, 0.2
      %v6427 = vmul.f32 %v5063, 0.2
      %v6428 = vmul.f32 %v5066, 0.2
      %v6429 = vmul.f32 %v5071, 0.2
      %v6430 = vmul.f32 %v5074, 0.2
      %v6431 = vmul.f32 %v5079, 0.2
      %v6432 = vmul.f32 %v5082, 0.2
      %v6433 = vmul.f32 %v5087, 0.2
      %v6434 = vmul.f32 %v5090, 0.2
      %v6435 = vmul.f32 %v5095, 0.2
      %v6436 = vmul.f32 %v5098, 0.2
      %v6437 = vmul.f32 %v5103, 0.2
      %v6438 = vmul.f32 %v5106, 0.2
      %v6439 = vmul.f32 %v5111, 0.2
      %v6440 = vmul.f32 %v5114, 0.2
      %v6441 = vmul.f32 %v5119, 0.2
      %v6442 = vmul.f32 %v5122, 0.2
      %v6443 = vmul.f32 %v5127, 0.2
      %v6444 = vmul.f32 %v5130, 0.2
      %v6445 = vmul.f32 %v5135, 0.2
      %v6446 = vmul.f32 %v5138, 0.2
      %v6447 = vmul.f32 %v5143, 0.2
      %v6448 = vmul.f32 %v5146, 0.2
      %v6449 = vmul.f32 %v5151, 0.2
      %v6450 = vmul.f32 %v5154, 0.2
      %v6451 = vmul.f32 %v5159, 0.2
      %v6452 = vmul.f32 %v5162, 0.2
      %v6453 = vmul.f32 %v5167, 0.2
      %v6454 = vmul.f32 %v5170, 0.2
      %v6455 = vmul.f32 %v5175, 0.2
      %v6456 = vmul.f32 %v5178, 0.2
      %v6457 = vmul.f32 %v5183, 0.2
      %v6458 = vmul.f32 %v5186, 0.2
      %v6459 = vmul.f32 %v5191, 0.2
      %v6460 = vmul.f32 %v5194, 0.2
      %v6461 = vmul.f32 %v5199, 0.2
      %v6462 = vmul.f32 %v5202, 0.2
      %v6463 = vmul.f32 %v5207, 0.2
      %v6464 = vmul.f32 %v5210, 0.2
      %v6465 = vmul.f32 %v5215, 0.2
      %v6466 = vmul.f32 %v5218, 0.2
      %v6467 = vmul.f32 %v5223, 0.2
      %v6468 = vmul.f32 %v5226, 0.2
      %v6469 = vmul.f32 %v5231, 0.2
      %v6470 = vmul.f32 %v5234, 0.2
      %v6471 = vmul.f32 %v5239, 0.2
      %v6472 = vmul.f32 %v5242, 0.2
      %v6473 = vmul.f32 %v5247, 0.2
      %v6474 = vmul.f32 %v5250, 0.2
      %v6475 = vmul.f32 %v5255, 0.2
      %v6476 = vmul.f32 %v5258, 0.2
      %v6477 = vmul.f32 %v5263, 0.2
      %v6478 = vmul.f32 %v5266, 0.2
      %v6479 = vmul.f32 %v5271, 0.2
      %v6480 = vmul.f32 %v5274, 0.2
      %v6481 = vmul.f32 %v5279, 0.2
      %v6482 = vmul.f32 %v5282, 0.2
      %v6483 = vmul.f32 %v5287, 0.2
      %v6484 = vmul.f32 %v5290, 0.2
      %v6485 = vmul.f32 %v5295, 0.2
      %v6486 = vmul.f32 %v5298, 0.2
      %v6487 = vmul.f32 %v5303, 0.2
      %v6488 = vmul.f32 %v5306, 0.2
      %v6489 = vmul.f32 %v5311, 0.2
      %v6490 = vmul.f32 %v5314, 0.2
      %v6491 = vmul.f32 %v5319, 0.2
      %v6492 = vmul.f32 %v5322, 0.2
      %v6493 = vmul.f32 %v5327, 0.2
      %v6494 = vmul.f32 %v5330, 0.2
      %v6495 = vmul.f32 %v5335, 0.2
      %v6496 = vmul.f32 %v5338, 0.2
      %v6497 = vmul.f32 %v5343, 0.2
      %v6498 = vmul.f32 %v5346, 0.2
      %v6499 = vmul.f32 %v5351, 0.2
      %v6500 = vmul.f32 %v5354, 0.2
      %v6501 = vmul.f32 %v5359, 0.2
      %v6502 = vmul.f32 %v5362, 0.2
      %v6503 = vmul.f32 %v5367, 0.2
      %v6504 = vmul.f32 %v5370, 0.2
      %v6505 = vmul.f32 %v5375, 0.2
      %v6506 = vmul.f32 %v5378, 0.2
      %v6507 = vmul.f32 %v5383, 0.2
      %v6508 = vmul.f32 %v5386, 0.2
      %v6509 = vmul.f32 %v5391, 0.2
      %v6510 = vmul.f32 %v5394, 0.2
      %v6511 = vmul.f32 %v5399, 0.2
      %v6512 = vmul.f32 %v5402, 0.2
      %v6513 = vmul.f32 %v5407, 0.2
      %v6514 = vmul.f32 %v5410, 0.2
      %v6515 = vmul.f32 %v5415, 0.2
      %v6516 = vmul.f32 %v5418, 0.2
      %v6517 = vmul.f32 %v5423, 0.2
      %v6518 = vmul.f32 %v5426, 0.2
      %v6519 = vmul.f32 %v5431, 0.2
      %v6520 = vmul.f32 %v5434, 0.2
      %v6521 = vmul.f32 %v5439, 0.2
      %v6522 = vmul.f32 %v5442, 0.2
      %v6523 = vmul.f32 %v5447, 0.2
      %v6524 = vmul.f32 %v5450, 0.2
      %v6525 = vmul.f32 %v5455, 0.2
      %v6526 = vmul.f32 %v5458, 0.2
      %v6527 = vmul.f32 %v5463, 0.2
      %v6528 = vmul.f32 %v5466, 0.2
      %v6529 = vmul.f32 %v5471, 0.2
      %v6530 = vmul.f32 %v5474, 0.2
      %v6531 = vmul.f32 %v5479, 0.2
      %v6532 = vmul.f32 %v5482, 0.2
      %v6533 = vmul.f32 %v5487, 0.2
      %v6534 = vmul.f32 %v5490, 0.2
      %v6535 = vmul.f32 %v5495, 0.2
      %v6536 = vmul.f32 %v5498, 0.2
      %v6537 = vmul.f32 %v5503, 0.2
      %v6538 = vmul.f32 %v5506, 0.2
      %v6539 = vmul.f32 %v5511, 0.2
      %v6540 = vmul.f32 %v5514, 0.2
      %v6541 = vsel %vm5517, %v3471, %v6029
      %v6542 = vsel %vm5518, %v3474, %v6030
      %v6543 = vsel %vm5519, %v3479, %v6031
      %v6544 = vsel %vm5520, %v3482, %v6032
      %v6545 = vsel %vm5521, %v3487, %v6033
      %v6546 = vsel %vm5522, %v3490, %v6034
      %v6547 = vsel %vm5523, %v3495, %v6035
      %v6548 = vsel %vm5524, %v3498, %v6036
      %v6549 = vsel %vm5525, %v3503, %v6037
      %v6550 = vsel %vm5526, %v3506, %v6038
      %v6551 = vsel %vm5527, %v3511, %v6039
      %v6552 = vsel %vm5528, %v3514, %v6040
      %v6553 = vsel %vm5529, %v3519, %v6041
      %v6554 = vsel %vm5530, %v3522, %v6042
      %v6555 = vsel %vm5531, %v3527, %v6043
      %v6556 = vsel %vm5532, %v3530, %v6044
      %v6557 = vsel %vm5533, %v3535, %v6045
      %v6558 = vsel %vm5534, %v3538, %v6046
      %v6559 = vsel %vm5535, %v3543, %v6047
      %v6560 = vsel %vm5536, %v3546, %v6048
      %v6561 = vsel %vm5537, %v3551, %v6049
      %v6562 = vsel %vm5538, %v3554, %v6050
      %v6563 = vsel %vm5539, %v3559, %v6051
      %v6564 = vsel %vm5540, %v3562, %v6052
      %v6565 = vsel %vm5541, %v3567, %v6053
      %v6566 = vsel %vm5542, %v3570, %v6054
      %v6567 = vsel %vm5543, %v3575, %v6055
      %v6568 = vsel %vm5544, %v3578, %v6056
      %v6569 = vsel %vm5545, %v3583, %v6057
      %v6570 = vsel %vm5546, %v3586, %v6058
      %v6571 = vsel %vm5547, %v3591, %v6059
      %v6572 = vsel %vm5548, %v3594, %v6060
      %v6573 = vsel %vm5549, %v3599, %v6061
      %v6574 = vsel %vm5550, %v3602, %v6062
      %v6575 = vsel %vm5551, %v3607, %v6063
      %v6576 = vsel %vm5552, %v3610, %v6064
      %v6577 = vsel %vm5553, %v3615, %v6065
      %v6578 = vsel %vm5554, %v3618, %v6066
      %v6579 = vsel %vm5555, %v3623, %v6067
      %v6580 = vsel %vm5556, %v3626, %v6068
      %v6581 = vsel %vm5557, %v3631, %v6069
      %v6582 = vsel %vm5558, %v3634, %v6070
      %v6583 = vsel %vm5559, %v3639, %v6071
      %v6584 = vsel %vm5560, %v3642, %v6072
      %v6585 = vsel %vm5561, %v3647, %v6073
      %v6586 = vsel %vm5562, %v3650, %v6074
      %v6587 = vsel %vm5563, %v3655, %v6075
      %v6588 = vsel %vm5564, %v3658, %v6076
      %v6589 = vsel %vm5565, %v3663, %v6077
      %v6590 = vsel %vm5566, %v3666, %v6078
      %v6591 = vsel %vm5567, %v3671, %v6079
      %v6592 = vsel %vm5568, %v3674, %v6080
      %v6593 = vsel %vm5569, %v3679, %v6081
      %v6594 = vsel %vm5570, %v3682, %v6082
      %v6595 = vsel %vm5571, %v3687, %v6083
      %v6596 = vsel %vm5572, %v3690, %v6084
      %v6597 = vsel %vm5573, %v3695, %v6085
      %v6598 = vsel %vm5574, %v3698, %v6086
      %v6599 = vsel %vm5575, %v3703, %v6087
      %v6600 = vsel %vm5576, %v3706, %v6088
      %v6601 = vsel %vm5577, %v3711, %v6089
      %v6602 = vsel %vm5578, %v3714, %v6090
      %v6603 = vsel %vm5579, %v3719, %v6091
      %v6604 = vsel %vm5580, %v3722, %v6092
      %v6605 = vsel %vm5581, %v3727, %v6093
      %v6606 = vsel %vm5582, %v3730, %v6094
      %v6607 = vsel %vm5583, %v3735, %v6095
      %v6608 = vsel %vm5584, %v3738, %v6096
      %v6609 = vsel %vm5585, %v3743, %v6097
      %v6610 = vsel %vm5586, %v3746, %v6098
      %v6611 = vsel %vm5587, %v3751, %v6099
      %v6612 = vsel %vm5588, %v3754, %v6100
      %v6613 = vsel %vm5589, %v3759, %v6101
      %v6614 = vsel %vm5590, %v3762, %v6102
      %v6615 = vsel %vm5591, %v3767, %v6103
      %v6616 = vsel %vm5592, %v3770, %v6104
      %v6617 = vsel %vm5593, %v3775, %v6105
      %v6618 = vsel %vm5594, %v3778, %v6106
      %v6619 = vsel %vm5595, %v3783, %v6107
      %v6620 = vsel %vm5596, %v3786, %v6108
      %v6621 = vsel %vm5597, %v3791, %v6109
      %v6622 = vsel %vm5598, %v3794, %v6110
      %v6623 = vsel %vm5599, %v3799, %v6111
      %v6624 = vsel %vm5600, %v3802, %v6112
      %v6625 = vsel %vm5601, %v3807, %v6113
      %v6626 = vsel %vm5602, %v3810, %v6114
      %v6627 = vsel %vm5603, %v3815, %v6115
      %v6628 = vsel %vm5604, %v3818, %v6116
      %v6629 = vsel %vm5605, %v3823, %v6117
      %v6630 = vsel %vm5606, %v3826, %v6118
      %v6631 = vsel %vm5607, %v3831, %v6119
      %v6632 = vsel %vm5608, %v3834, %v6120
      %v6633 = vsel %vm5609, %v3839, %v6121
      %v6634 = vsel %vm5610, %v3842, %v6122
      %v6635 = vsel %vm5611, %v3847, %v6123
      %v6636 = vsel %vm5612, %v3850, %v6124
      %v6637 = vsel %vm5613, %v3855, %v6125
      %v6638 = vsel %vm5614, %v3858, %v6126
      %v6639 = vsel %vm5615, %v3863, %v6127
      %v6640 = vsel %vm5616, %v3866, %v6128
      %v6641 = vsel %vm5617, %v3871, %v6129
      %v6642 = vsel %vm5618, %v3874, %v6130
      %v6643 = vsel %vm5619, %v3879, %v6131
      %v6644 = vsel %vm5620, %v3882, %v6132
      %v6645 = vsel %vm5621, %v3887, %v6133
      %v6646 = vsel %vm5622, %v3890, %v6134
      %v6647 = vsel %vm5623, %v3895, %v6135
      %v6648 = vsel %vm5624, %v3898, %v6136
      %v6649 = vsel %vm5625, %v3903, %v6137
      %v6650 = vsel %vm5626, %v3906, %v6138
      %v6651 = vsel %vm5627, %v3911, %v6139
      %v6652 = vsel %vm5628, %v3914, %v6140
      %v6653 = vsel %vm5629, %v3919, %v6141
      %v6654 = vsel %vm5630, %v3922, %v6142
      %v6655 = vsel %vm5631, %v3927, %v6143
      %v6656 = vsel %vm5632, %v3930, %v6144
      %v6657 = vsel %vm5633, %v3935, %v6145
      %v6658 = vsel %vm5634, %v3938, %v6146
      %v6659 = vsel %vm5635, %v3943, %v6147
      %v6660 = vsel %vm5636, %v3946, %v6148
      %v6661 = vsel %vm5637, %v3951, %v6149
      %v6662 = vsel %vm5638, %v3954, %v6150
      %v6663 = vsel %vm5639, %v3959, %v6151
      %v6664 = vsel %vm5640, %v3962, %v6152
      %v6665 = vsel %vm5641, %v3967, %v6153
      %v6666 = vsel %vm5642, %v3970, %v6154
      %v6667 = vsel %vm5643, %v3975, %v6155
      %v6668 = vsel %vm5644, %v3978, %v6156
      %v6669 = vsel %vm5645, %v3983, %v6157
      %v6670 = vsel %vm5646, %v3986, %v6158
      %v6671 = vsel %vm5647, %v3991, %v6159
      %v6672 = vsel %vm5648, %v3994, %v6160
      %v6673 = vsel %vm5649, %v3999, %v6161
      %v6674 = vsel %vm5650, %v4002, %v6162
      %v6675 = vsel %vm5651, %v4007, %v6163
      %v6676 = vsel %vm5652, %v4010, %v6164
      %v6677 = vsel %vm5653, %v4015, %v6165
      %v6678 = vsel %vm5654, %v4018, %v6166
      %v6679 = vsel %vm5655, %v4023, %v6167
      %v6680 = vsel %vm5656, %v4026, %v6168
      %v6681 = vsel %vm5657, %v4031, %v6169
      %v6682 = vsel %vm5658, %v4034, %v6170
      %v6683 = vsel %vm5659, %v4039, %v6171
      %v6684 = vsel %vm5660, %v4042, %v6172
      %v6685 = vsel %vm5661, %v4047, %v6173
      %v6686 = vsel %vm5662, %v4050, %v6174
      %v6687 = vsel %vm5663, %v4055, %v6175
      %v6688 = vsel %vm5664, %v4058, %v6176
      %v6689 = vsel %vm5665, %v4063, %v6177
      %v6690 = vsel %vm5666, %v4066, %v6178
      %v6691 = vsel %vm5667, %v4071, %v6179
      %v6692 = vsel %vm5668, %v4074, %v6180
      %v6693 = vsel %vm5669, %v4079, %v6181
      %v6694 = vsel %vm5670, %v4082, %v6182
      %v6695 = vsel %vm5671, %v4087, %v6183
      %v6696 = vsel %vm5672, %v4090, %v6184
      %v6697 = vsel %vm5673, %v4095, %v6185
      %v6698 = vsel %vm5674, %v4098, %v6186
      %v6699 = vsel %vm5675, %v4103, %v6187
      %v6700 = vsel %vm5676, %v4106, %v6188
      %v6701 = vsel %vm5677, %v4111, %v6189
      %v6702 = vsel %vm5678, %v4114, %v6190
      %v6703 = vsel %vm5679, %v4119, %v6191
      %v6704 = vsel %vm5680, %v4122, %v6192
      %v6705 = vsel %vm5681, %v4127, %v6193
      %v6706 = vsel %vm5682, %v4130, %v6194
      %v6707 = vsel %vm5683, %v4135, %v6195
      %v6708 = vsel %vm5684, %v4138, %v6196
      %v6709 = vsel %vm5685, %v4143, %v6197
      %v6710 = vsel %vm5686, %v4146, %v6198
      %v6711 = vsel %vm5687, %v4151, %v6199
      %v6712 = vsel %vm5688, %v4154, %v6200
      %v6713 = vsel %vm5689, %v4159, %v6201
      %v6714 = vsel %vm5690, %v4162, %v6202
      %v6715 = vsel %vm5691, %v4167, %v6203
      %v6716 = vsel %vm5692, %v4170, %v6204
      %v6717 = vsel %vm5693, %v4175, %v6205
      %v6718 = vsel %vm5694, %v4178, %v6206
      %v6719 = vsel %vm5695, %v4183, %v6207
      %v6720 = vsel %vm5696, %v4186, %v6208
      %v6721 = vsel %vm5697, %v4191, %v6209
      %v6722 = vsel %vm5698, %v4194, %v6210
      %v6723 = vsel %vm5699, %v4199, %v6211
      %v6724 = vsel %vm5700, %v4202, %v6212
      %v6725 = vsel %vm5701, %v4207, %v6213
      %v6726 = vsel %vm5702, %v4210, %v6214
      %v6727 = vsel %vm5703, %v4215, %v6215
      %v6728 = vsel %vm5704, %v4218, %v6216
      %v6729 = vsel %vm5705, %v4223, %v6217
      %v6730 = vsel %vm5706, %v4226, %v6218
      %v6731 = vsel %vm5707, %v4231, %v6219
      %v6732 = vsel %vm5708, %v4234, %v6220
      %v6733 = vsel %vm5709, %v4239, %v6221
      %v6734 = vsel %vm5710, %v4242, %v6222
      %v6735 = vsel %vm5711, %v4247, %v6223
      %v6736 = vsel %vm5712, %v4250, %v6224
      %v6737 = vsel %vm5713, %v4255, %v6225
      %v6738 = vsel %vm5714, %v4258, %v6226
      %v6739 = vsel %vm5715, %v4263, %v6227
      %v6740 = vsel %vm5716, %v4266, %v6228
      %v6741 = vsel %vm5717, %v4271, %v6229
      %v6742 = vsel %vm5718, %v4274, %v6230
      %v6743 = vsel %vm5719, %v4279, %v6231
      %v6744 = vsel %vm5720, %v4282, %v6232
      %v6745 = vsel %vm5721, %v4287, %v6233
      %v6746 = vsel %vm5722, %v4290, %v6234
      %v6747 = vsel %vm5723, %v4295, %v6235
      %v6748 = vsel %vm5724, %v4298, %v6236
      %v6749 = vsel %vm5725, %v4303, %v6237
      %v6750 = vsel %vm5726, %v4306, %v6238
      %v6751 = vsel %vm5727, %v4311, %v6239
      %v6752 = vsel %vm5728, %v4314, %v6240
      %v6753 = vsel %vm5729, %v4319, %v6241
      %v6754 = vsel %vm5730, %v4322, %v6242
      %v6755 = vsel %vm5731, %v4327, %v6243
      %v6756 = vsel %vm5732, %v4330, %v6244
      %v6757 = vsel %vm5733, %v4335, %v6245
      %v6758 = vsel %vm5734, %v4338, %v6246
      %v6759 = vsel %vm5735, %v4343, %v6247
      %v6760 = vsel %vm5736, %v4346, %v6248
      %v6761 = vsel %vm5737, %v4351, %v6249
      %v6762 = vsel %vm5738, %v4354, %v6250
      %v6763 = vsel %vm5739, %v4359, %v6251
      %v6764 = vsel %vm5740, %v4362, %v6252
      %v6765 = vsel %vm5741, %v4367, %v6253
      %v6766 = vsel %vm5742, %v4370, %v6254
      %v6767 = vsel %vm5743, %v4375, %v6255
      %v6768 = vsel %vm5744, %v4378, %v6256
      %v6769 = vsel %vm5745, %v4383, %v6257
      %v6770 = vsel %vm5746, %v4386, %v6258
      %v6771 = vsel %vm5747, %v4391, %v6259
      %v6772 = vsel %vm5748, %v4394, %v6260
      %v6773 = vsel %vm5749, %v4399, %v6261
      %v6774 = vsel %vm5750, %v4402, %v6262
      %v6775 = vsel %vm5751, %v4407, %v6263
      %v6776 = vsel %vm5752, %v4410, %v6264
      %v6777 = vsel %vm5753, %v4415, %v6265
      %v6778 = vsel %vm5754, %v4418, %v6266
      %v6779 = vsel %vm5755, %v4423, %v6267
      %v6780 = vsel %vm5756, %v4426, %v6268
      %v6781 = vsel %vm5757, %v4431, %v6269
      %v6782 = vsel %vm5758, %v4434, %v6270
      %v6783 = vsel %vm5759, %v4439, %v6271
      %v6784 = vsel %vm5760, %v4442, %v6272
      %v6785 = vsel %vm5761, %v4447, %v6273
      %v6786 = vsel %vm5762, %v4450, %v6274
      %v6787 = vsel %vm5763, %v4455, %v6275
      %v6788 = vsel %vm5764, %v4458, %v6276
      %v6789 = vsel %vm5765, %v4463, %v6277
      %v6790 = vsel %vm5766, %v4466, %v6278
      %v6791 = vsel %vm5767, %v4471, %v6279
      %v6792 = vsel %vm5768, %v4474, %v6280
      %v6793 = vsel %vm5769, %v4479, %v6281
      %v6794 = vsel %vm5770, %v4482, %v6282
      %v6795 = vsel %vm5771, %v4487, %v6283
      %v6796 = vsel %vm5772, %v4490, %v6284
      %v6797 = vsel %vm5773, %v4495, %v6285
      %v6798 = vsel %vm5774, %v4498, %v6286
      %v6799 = vsel %vm5775, %v4503, %v6287
      %v6800 = vsel %vm5776, %v4506, %v6288
      %v6801 = vsel %vm5777, %v4511, %v6289
      %v6802 = vsel %vm5778, %v4514, %v6290
      %v6803 = vsel %vm5779, %v4519, %v6291
      %v6804 = vsel %vm5780, %v4522, %v6292
      %v6805 = vsel %vm5781, %v4527, %v6293
      %v6806 = vsel %vm5782, %v4530, %v6294
      %v6807 = vsel %vm5783, %v4535, %v6295
      %v6808 = vsel %vm5784, %v4538, %v6296
      %v6809 = vsel %vm5785, %v4543, %v6297
      %v6810 = vsel %vm5786, %v4546, %v6298
      %v6811 = vsel %vm5787, %v4551, %v6299
      %v6812 = vsel %vm5788, %v4554, %v6300
      %v6813 = vsel %vm5789, %v4559, %v6301
      %v6814 = vsel %vm5790, %v4562, %v6302
      %v6815 = vsel %vm5791, %v4567, %v6303
      %v6816 = vsel %vm5792, %v4570, %v6304
      %v6817 = vsel %vm5793, %v4575, %v6305
      %v6818 = vsel %vm5794, %v4578, %v6306
      %v6819 = vsel %vm5795, %v4583, %v6307
      %v6820 = vsel %vm5796, %v4586, %v6308
      %v6821 = vsel %vm5797, %v4591, %v6309
      %v6822 = vsel %vm5798, %v4594, %v6310
      %v6823 = vsel %vm5799, %v4599, %v6311
      %v6824 = vsel %vm5800, %v4602, %v6312
      %v6825 = vsel %vm5801, %v4607, %v6313
      %v6826 = vsel %vm5802, %v4610, %v6314
      %v6827 = vsel %vm5803, %v4615, %v6315
      %v6828 = vsel %vm5804, %v4618, %v6316
      %v6829 = vsel %vm5805, %v4623, %v6317
      %v6830 = vsel %vm5806, %v4626, %v6318
      %v6831 = vsel %vm5807, %v4631, %v6319
      %v6832 = vsel %vm5808, %v4634, %v6320
      %v6833 = vsel %vm5809, %v4639, %v6321
      %v6834 = vsel %vm5810, %v4642, %v6322
      %v6835 = vsel %vm5811, %v4647, %v6323
      %v6836 = vsel %vm5812, %v4650, %v6324
      %v6837 = vsel %vm5813, %v4655, %v6325
      %v6838 = vsel %vm5814, %v4658, %v6326
      %v6839 = vsel %vm5815, %v4663, %v6327
      %v6840 = vsel %vm5816, %v4666, %v6328
      %v6841 = vsel %vm5817, %v4671, %v6329
      %v6842 = vsel %vm5818, %v4674, %v6330
      %v6843 = vsel %vm5819, %v4679, %v6331
      %v6844 = vsel %vm5820, %v4682, %v6332
      %v6845 = vsel %vm5821, %v4687, %v6333
      %v6846 = vsel %vm5822, %v4690, %v6334
      %v6847 = vsel %vm5823, %v4695, %v6335
      %v6848 = vsel %vm5824, %v4698, %v6336
      %v6849 = vsel %vm5825, %v4703, %v6337
      %v6850 = vsel %vm5826, %v4706, %v6338
      %v6851 = vsel %vm5827, %v4711, %v6339
      %v6852 = vsel %vm5828, %v4714, %v6340
      %v6853 = vsel %vm5829, %v4719, %v6341
      %v6854 = vsel %vm5830, %v4722, %v6342
      %v6855 = vsel %vm5831, %v4727, %v6343
      %v6856 = vsel %vm5832, %v4730, %v6344
      %v6857 = vsel %vm5833, %v4735, %v6345
      %v6858 = vsel %vm5834, %v4738, %v6346
      %v6859 = vsel %vm5835, %v4743, %v6347
      %v6860 = vsel %vm5836, %v4746, %v6348
      %v6861 = vsel %vm5837, %v4751, %v6349
      %v6862 = vsel %vm5838, %v4754, %v6350
      %v6863 = vsel %vm5839, %v4759, %v6351
      %v6864 = vsel %vm5840, %v4762, %v6352
      %v6865 = vsel %vm5841, %v4767, %v6353
      %v6866 = vsel %vm5842, %v4770, %v6354
      %v6867 = vsel %vm5843, %v4775, %v6355
      %v6868 = vsel %vm5844, %v4778, %v6356
      %v6869 = vsel %vm5845, %v4783, %v6357
      %v6870 = vsel %vm5846, %v4786, %v6358
      %v6871 = vsel %vm5847, %v4791, %v6359
      %v6872 = vsel %vm5848, %v4794, %v6360
      %v6873 = vsel %vm5849, %v4799, %v6361
      %v6874 = vsel %vm5850, %v4802, %v6362
      %v6875 = vsel %vm5851, %v4807, %v6363
      %v6876 = vsel %vm5852, %v4810, %v6364
      %v6877 = vsel %vm5853, %v4815, %v6365
      %v6878 = vsel %vm5854, %v4818, %v6366
      %v6879 = vsel %vm5855, %v4823, %v6367
      %v6880 = vsel %vm5856, %v4826, %v6368
      %v6881 = vsel %vm5857, %v4831, %v6369
      %v6882 = vsel %vm5858, %v4834, %v6370
      %v6883 = vsel %vm5859, %v4839, %v6371
      %v6884 = vsel %vm5860, %v4842, %v6372
      %v6885 = vsel %vm5861, %v4847, %v6373
      %v6886 = vsel %vm5862, %v4850, %v6374
      %v6887 = vsel %vm5863, %v4855, %v6375
      %v6888 = vsel %vm5864, %v4858, %v6376
      %v6889 = vsel %vm5865, %v4863, %v6377
      %v6890 = vsel %vm5866, %v4866, %v6378
      %v6891 = vsel %vm5867, %v4871, %v6379
      %v6892 = vsel %vm5868, %v4874, %v6380
      %v6893 = vsel %vm5869, %v4879, %v6381
      %v6894 = vsel %vm5870, %v4882, %v6382
      %v6895 = vsel %vm5871, %v4887, %v6383
      %v6896 = vsel %vm5872, %v4890, %v6384
      %v6897 = vsel %vm5873, %v4895, %v6385
      %v6898 = vsel %vm5874, %v4898, %v6386
      %v6899 = vsel %vm5875, %v4903, %v6387
      %v6900 = vsel %vm5876, %v4906, %v6388
      %v6901 = vsel %vm5877, %v4911, %v6389
      %v6902 = vsel %vm5878, %v4914, %v6390
      %v6903 = vsel %vm5879, %v4919, %v6391
      %v6904 = vsel %vm5880, %v4922, %v6392
      %v6905 = vsel %vm5881, %v4927, %v6393
      %v6906 = vsel %vm5882, %v4930, %v6394
      %v6907 = vsel %vm5883, %v4935, %v6395
      %v6908 = vsel %vm5884, %v4938, %v6396
      %v6909 = vsel %vm5885, %v4943, %v6397
      %v6910 = vsel %vm5886, %v4946, %v6398
      %v6911 = vsel %vm5887, %v4951, %v6399
      %v6912 = vsel %vm5888, %v4954, %v6400
      %v6913 = vsel %vm5889, %v4959, %v6401
      %v6914 = vsel %vm5890, %v4962, %v6402
      %v6915 = vsel %vm5891, %v4967, %v6403
      %v6916 = vsel %vm5892, %v4970, %v6404
      %v6917 = vsel %vm5893, %v4975, %v6405
      %v6918 = vsel %vm5894, %v4978, %v6406
      %v6919 = vsel %vm5895, %v4983, %v6407
      %v6920 = vsel %vm5896, %v4986, %v6408
      %v6921 = vsel %vm5897, %v4991, %v6409
      %v6922 = vsel %vm5898, %v4994, %v6410
      %v6923 = vsel %vm5899, %v4999, %v6411
      %v6924 = vsel %vm5900, %v5002, %v6412
      %v6925 = vsel %vm5901, %v5007, %v6413
      %v6926 = vsel %vm5902, %v5010, %v6414
      %v6927 = vsel %vm5903, %v5015, %v6415
      %v6928 = vsel %vm5904, %v5018, %v6416
      %v6929 = vsel %vm5905, %v5023, %v6417
      %v6930 = vsel %vm5906, %v5026, %v6418
      %v6931 = vsel %vm5907, %v5031, %v6419
      %v6932 = vsel %vm5908, %v5034, %v6420
      %v6933 = vsel %vm5909, %v5039, %v6421
      %v6934 = vsel %vm5910, %v5042, %v6422
      %v6935 = vsel %vm5911, %v5047, %v6423
      %v6936 = vsel %vm5912, %v5050, %v6424
      %v6937 = vsel %vm5913, %v5055, %v6425
      %v6938 = vsel %vm5914, %v5058, %v6426
      %v6939 = vsel %vm5915, %v5063, %v6427
      %v6940 = vsel %vm5916, %v5066, %v6428
      %v6941 = vsel %vm5917, %v5071, %v6429
      %v6942 = vsel %vm5918, %v5074, %v6430
      %v6943 = vsel %vm5919, %v5079, %v6431
      %v6944 = vsel %vm5920, %v5082, %v6432
      %v6945 = vsel %vm5921, %v5087, %v6433
      %v6946 = vsel %vm5922, %v5090, %v6434
      %v6947 = vsel %vm5923, %v5095, %v6435
      %v6948 = vsel %vm5924, %v5098, %v6436
      %v6949 = vsel %vm5925, %v5103, %v6437
      %v6950 = vsel %vm5926, %v5106, %v6438
      %v6951 = vsel %vm5927, %v5111, %v6439
      %v6952 = vsel %vm5928, %v5114, %v6440
      %v6953 = vsel %vm5929, %v5119, %v6441
      %v6954 = vsel %vm5930, %v5122, %v6442
      %v6955 = vsel %vm5931, %v5127, %v6443
      %v6956 = vsel %vm5932, %v5130, %v6444
      %v6957 = vsel %vm5933, %v5135, %v6445
      %v6958 = vsel %vm5934, %v5138, %v6446
      %v6959 = vsel %vm5935, %v5143, %v6447
      %v6960 = vsel %vm5936, %v5146, %v6448
      %v6961 = vsel %vm5937, %v5151, %v6449
      %v6962 = vsel %vm5938, %v5154, %v6450
      %v6963 = vsel %vm5939, %v5159, %v6451
      %v6964 = vsel %vm5940, %v5162, %v6452
      %v6965 = vsel %vm5941, %v5167, %v6453
      %v6966 = vsel %vm5942, %v5170, %v6454
      %v6967 = vsel %vm5943, %v5175, %v6455
      %v6968 = vsel %vm5944, %v5178, %v6456
      %v6969 = vsel %vm5945, %v5183, %v6457
      %v6970 = vsel %vm5946, %v5186, %v6458
      %v6971 = vsel %vm5947, %v5191, %v6459
      %v6972 = vsel %vm5948, %v5194, %v6460
      %v6973 = vsel %vm5949, %v5199, %v6461
      %v6974 = vsel %vm5950, %v5202, %v6462
      %v6975 = vsel %vm5951, %v5207, %v6463
      %v6976 = vsel %vm5952, %v5210, %v6464
      %v6977 = vsel %vm5953, %v5215, %v6465
      %v6978 = vsel %vm5954, %v5218, %v6466
      %v6979 = vsel %vm5955, %v5223, %v6467
      %v6980 = vsel %vm5956, %v5226, %v6468
      %v6981 = vsel %vm5957, %v5231, %v6469
      %v6982 = vsel %vm5958, %v5234, %v6470
      %v6983 = vsel %vm5959, %v5239, %v6471
      %v6984 = vsel %vm5960, %v5242, %v6472
      %v6985 = vsel %vm5961, %v5247, %v6473
      %v6986 = vsel %vm5962, %v5250, %v6474
      %v6987 = vsel %vm5963, %v5255, %v6475
      %v6988 = vsel %vm5964, %v5258, %v6476
      %v6989 = vsel %vm5965, %v5263, %v6477
      %v6990 = vsel %vm5966, %v5266, %v6478
      %v6991 = vsel %vm5967, %v5271, %v6479
      %v6992 = vsel %vm5968, %v5274, %v6480
      %v6993 = vsel %vm5969, %v5279, %v6481
      %v6994 = vsel %vm5970, %v5282, %v6482
      %v6995 = vsel %vm5971, %v5287, %v6483
      %v6996 = vsel %vm5972, %v5290, %v6484
      %v6997 = vsel %vm5973, %v5295, %v6485
      %v6998 = vsel %vm5974, %v5298, %v6486
      %v6999 = vsel %vm5975, %v5303, %v6487
      %v7000 = vsel %vm5976, %v5306, %v6488
      %v7001 = vsel %vm5977, %v5311, %v6489
      %v7002 = vsel %vm5978, %v5314, %v6490
      %v7003 = vsel %vm5979, %v5319, %v6491
      %v7004 = vsel %vm5980, %v5322, %v6492
      %v7005 = vsel %vm5981, %v5327, %v6493
      %v7006 = vsel %vm5982, %v5330, %v6494
      %v7007 = vsel %vm5983, %v5335, %v6495
      %v7008 = vsel %vm5984, %v5338, %v6496
      %v7009 = vsel %vm5985, %v5343, %v6497
      %v7010 = vsel %vm5986, %v5346, %v6498
      %v7011 = vsel %vm5987, %v5351, %v6499
      %v7012 = vsel %vm5988, %v5354, %v6500
      %v7013 = vsel %vm5989, %v5359, %v6501
      %v7014 = vsel %vm5990, %v5362, %v6502
      %v7015 = vsel %vm5991, %v5367, %v6503
      %v7016 = vsel %vm5992, %v5370, %v6504
      %v7017 = vsel %vm5993, %v5375, %v6505
      %v7018 = vsel %vm5994, %v5378, %v6506
      %v7019 = vsel %vm5995, %v5383, %v6507
      %v7020 = vsel %vm5996, %v5386, %v6508
      %v7021 = vsel %vm5997, %v5391, %v6509
      %v7022 = vsel %vm5998, %v5394, %v6510
      %v7023 = vsel %vm5999, %v5399, %v6511
      %v7024 = vsel %vm6000, %v5402, %v6512
      %v7025 = vsel %vm6001, %v5407, %v6513
      %v7026 = vsel %vm6002, %v5410, %v6514
      %v7027 = vsel %vm6003, %v5415, %v6515
      %v7028 = vsel %vm6004, %v5418, %v6516
      %v7029 = vsel %vm6005, %v5423, %v6517
      %v7030 = vsel %vm6006, %v5426, %v6518
      %v7031 = vsel %vm6007, %v5431, %v6519
      %v7032 = vsel %vm6008, %v5434, %v6520
      %v7033 = vsel %vm6009, %v5439, %v6521
      %v7034 = vsel %vm6010, %v5442, %v6522
      %v7035 = vsel %vm6011, %v5447, %v6523
      %v7036 = vsel %vm6012, %v5450, %v6524
      %v7037 = vsel %vm6013, %v5455, %v6525
      %v7038 = vsel %vm6014, %v5458, %v6526
      %v7039 = vsel %vm6015, %v5463, %v6527
      %v7040 = vsel %vm6016, %v5466, %v6528
      %v7041 = vsel %vm6017, %v5471, %v6529
      %v7042 = vsel %vm6018, %v5474, %v6530
      %v7043 = vsel %vm6019, %v5479, %v6531
      %v7044 = vsel %vm6020, %v5482, %v6532
      %v7045 = vsel %vm6021, %v5487, %v6533
      %v7046 = vsel %vm6022, %v5490, %v6534
      %v7047 = vsel %vm6023, %v5495, %v6535
      %v7048 = vsel %vm6024, %v5498, %v6536
      %v7049 = vsel %vm6025, %v5503, %v6537
      %v7050 = vsel %vm6026, %v5506, %v6538
      %v7051 = vsel %vm6027, %v5511, %v6539
      %v7052 = vsel %vm6028, %v5514, %v6540
      %v7053 = vpack.c.bf16 %v6542, %v6541
      %v7054 = vpack.c.bf16 %v6544, %v6543
      %v7055 = vpack.c.bf16 %v6546, %v6545
      %v7056 = vpack.c.bf16 %v6548, %v6547
      %v7057 = vpack.c.bf16 %v6550, %v6549
      %v7058 = vpack.c.bf16 %v6552, %v6551
      %v7059 = vpack.c.bf16 %v6554, %v6553
      %v7060 = vpack.c.bf16 %v6556, %v6555
      %v7061 = vpack.c.bf16 %v6558, %v6557
      %v7062 = vpack.c.bf16 %v6560, %v6559
      %v7063 = vpack.c.bf16 %v6562, %v6561
      %v7064 = vpack.c.bf16 %v6564, %v6563
      %v7065 = vpack.c.bf16 %v6566, %v6565
      %v7066 = vpack.c.bf16 %v6568, %v6567
      %v7067 = vpack.c.bf16 %v6570, %v6569
      %v7068 = vpack.c.bf16 %v6572, %v6571
      %v7069 = vpack.c.bf16 %v6574, %v6573
      %v7070 = vpack.c.bf16 %v6576, %v6575
      %v7071 = vpack.c.bf16 %v6578, %v6577
      %v7072 = vpack.c.bf16 %v6580, %v6579
      %v7073 = vpack.c.bf16 %v6582, %v6581
      %v7074 = vpack.c.bf16 %v6584, %v6583
      %v7075 = vpack.c.bf16 %v6586, %v6585
      %v7076 = vpack.c.bf16 %v6588, %v6587
      %v7077 = vpack.c.bf16 %v6590, %v6589
      %v7078 = vpack.c.bf16 %v6592, %v6591
      %v7079 = vpack.c.bf16 %v6594, %v6593
      %v7080 = vpack.c.bf16 %v6596, %v6595
      %v7081 = vpack.c.bf16 %v6598, %v6597
      %v7082 = vpack.c.bf16 %v6600, %v6599
      %v7083 = vpack.c.bf16 %v6602, %v6601
      %v7084 = vpack.c.bf16 %v6604, %v6603
      %v7085 = vpack.c.bf16 %v6606, %v6605
      %v7086 = vpack.c.bf16 %v6608, %v6607
      %v7087 = vpack.c.bf16 %v6610, %v6609
      %v7088 = vpack.c.bf16 %v6612, %v6611
      %v7089 = vpack.c.bf16 %v6614, %v6613
      %v7090 = vpack.c.bf16 %v6616, %v6615
      %v7091 = vpack.c.bf16 %v6618, %v6617
      %v7092 = vpack.c.bf16 %v6620, %v6619
      %v7093 = vpack.c.bf16 %v6622, %v6621
      %v7094 = vpack.c.bf16 %v6624, %v6623
      %v7095 = vpack.c.bf16 %v6626, %v6625
      %v7096 = vpack.c.bf16 %v6628, %v6627
      %v7097 = vpack.c.bf16 %v6630, %v6629
      %v7098 = vpack.c.bf16 %v6632, %v6631
      %v7099 = vpack.c.bf16 %v6634, %v6633
      %v7100 = vpack.c.bf16 %v6636, %v6635
      %v7101 = vpack.c.bf16 %v6638, %v6637
      %v7102 = vpack.c.bf16 %v6640, %v6639
      %v7103 = vpack.c.bf16 %v6642, %v6641
      %v7104 = vpack.c.bf16 %v6644, %v6643
      %v7105 = vpack.c.bf16 %v6646, %v6645
      %v7106 = vpack.c.bf16 %v6648, %v6647
      %v7107 = vpack.c.bf16 %v6650, %v6649
      %v7108 = vpack.c.bf16 %v6652, %v6651
      %v7109 = vpack.c.bf16 %v6654, %v6653
      %v7110 = vpack.c.bf16 %v6656, %v6655
      %v7111 = vpack.c.bf16 %v6658, %v6657
      %v7112 = vpack.c.bf16 %v6660, %v6659
      %v7113 = vpack.c.bf16 %v6662, %v6661
      %v7114 = vpack.c.bf16 %v6664, %v6663
      %v7115 = vpack.c.bf16 %v6666, %v6665
      %v7116 = vpack.c.bf16 %v6668, %v6667
      %v7117 = vpack.c.bf16 %v6670, %v6669
      %v7118 = vpack.c.bf16 %v6672, %v6671
      %v7119 = vpack.c.bf16 %v6674, %v6673
      %v7120 = vpack.c.bf16 %v6676, %v6675
      %v7121 = vpack.c.bf16 %v6678, %v6677
      %v7122 = vpack.c.bf16 %v6680, %v6679
      %v7123 = vpack.c.bf16 %v6682, %v6681
      %v7124 = vpack.c.bf16 %v6684, %v6683
      %v7125 = vpack.c.bf16 %v6686, %v6685
      %v7126 = vpack.c.bf16 %v6688, %v6687
      %v7127 = vpack.c.bf16 %v6690, %v6689
      %v7128 = vpack.c.bf16 %v6692, %v6691
      %v7129 = vpack.c.bf16 %v6694, %v6693
      %v7130 = vpack.c.bf16 %v6696, %v6695
      %v7131 = vpack.c.bf16 %v6698, %v6697
      %v7132 = vpack.c.bf16 %v6700, %v6699
      %v7133 = vpack.c.bf16 %v6702, %v6701
      %v7134 = vpack.c.bf16 %v6704, %v6703
      %v7135 = vpack.c.bf16 %v6706, %v6705
      %v7136 = vpack.c.bf16 %v6708, %v6707
      %v7137 = vpack.c.bf16 %v6710, %v6709
      %v7138 = vpack.c.bf16 %v6712, %v6711
      %v7139 = vpack.c.bf16 %v6714, %v6713
      %v7140 = vpack.c.bf16 %v6716, %v6715
      %v7141 = vpack.c.bf16 %v6718, %v6717
      %v7142 = vpack.c.bf16 %v6720, %v6719
      %v7143 = vpack.c.bf16 %v6722, %v6721
      %v7144 = vpack.c.bf16 %v6724, %v6723
      %v7145 = vpack.c.bf16 %v6726, %v6725
      %v7146 = vpack.c.bf16 %v6728, %v6727
      %v7147 = vpack.c.bf16 %v6730, %v6729
      %v7148 = vpack.c.bf16 %v6732, %v6731
      %v7149 = vpack.c.bf16 %v6734, %v6733
      %v7150 = vpack.c.bf16 %v6736, %v6735
      %v7151 = vpack.c.bf16 %v6738, %v6737
      %v7152 = vpack.c.bf16 %v6740, %v6739
      %v7153 = vpack.c.bf16 %v6742, %v6741
      %v7154 = vpack.c.bf16 %v6744, %v6743
      %v7155 = vpack.c.bf16 %v6746, %v6745
      %v7156 = vpack.c.bf16 %v6748, %v6747
      %v7157 = vpack.c.bf16 %v6750, %v6749
      %v7158 = vpack.c.bf16 %v6752, %v6751
      %v7159 = vpack.c.bf16 %v6754, %v6753
      %v7160 = vpack.c.bf16 %v6756, %v6755
      %v7161 = vpack.c.bf16 %v6758, %v6757
      %v7162 = vpack.c.bf16 %v6760, %v6759
      %v7163 = vpack.c.bf16 %v6762, %v6761
      %v7164 = vpack.c.bf16 %v6764, %v6763
      %v7165 = vpack.c.bf16 %v6766, %v6765
      %v7166 = vpack.c.bf16 %v6768, %v6767
      %v7167 = vpack.c.bf16 %v6770, %v6769
      %v7168 = vpack.c.bf16 %v6772, %v6771
      %v7169 = vpack.c.bf16 %v6774, %v6773
      %v7170 = vpack.c.bf16 %v6776, %v6775
      %v7171 = vpack.c.bf16 %v6778, %v6777
      %v7172 = vpack.c.bf16 %v6780, %v6779
      %v7173 = vpack.c.bf16 %v6782, %v6781
      %v7174 = vpack.c.bf16 %v6784, %v6783
      %v7175 = vpack.c.bf16 %v6786, %v6785
      %v7176 = vpack.c.bf16 %v6788, %v6787
      %v7177 = vpack.c.bf16 %v6790, %v6789
      %v7178 = vpack.c.bf16 %v6792, %v6791
      %v7179 = vpack.c.bf16 %v6794, %v6793
      %v7180 = vpack.c.bf16 %v6796, %v6795
      %v7181 = vpack.c.bf16 %v6798, %v6797
      %v7182 = vpack.c.bf16 %v6800, %v6799
      %v7183 = vpack.c.bf16 %v6802, %v6801
      %v7184 = vpack.c.bf16 %v6804, %v6803
      %v7185 = vpack.c.bf16 %v6806, %v6805
      %v7186 = vpack.c.bf16 %v6808, %v6807
      %v7187 = vpack.c.bf16 %v6810, %v6809
      %v7188 = vpack.c.bf16 %v6812, %v6811
      %v7189 = vpack.c.bf16 %v6814, %v6813
      %v7190 = vpack.c.bf16 %v6816, %v6815
      %v7191 = vpack.c.bf16 %v6818, %v6817
      %v7192 = vpack.c.bf16 %v6820, %v6819
      %v7193 = vpack.c.bf16 %v6822, %v6821
      %v7194 = vpack.c.bf16 %v6824, %v6823
      %v7195 = vpack.c.bf16 %v6826, %v6825
      %v7196 = vpack.c.bf16 %v6828, %v6827
      %v7197 = vpack.c.bf16 %v6830, %v6829
      %v7198 = vpack.c.bf16 %v6832, %v6831
      %v7199 = vpack.c.bf16 %v6834, %v6833
      %v7200 = vpack.c.bf16 %v6836, %v6835
      %v7201 = vpack.c.bf16 %v6838, %v6837
      %v7202 = vpack.c.bf16 %v6840, %v6839
      %v7203 = vpack.c.bf16 %v6842, %v6841
      %v7204 = vpack.c.bf16 %v6844, %v6843
      %v7205 = vpack.c.bf16 %v6846, %v6845
      %v7206 = vpack.c.bf16 %v6848, %v6847
      %v7207 = vpack.c.bf16 %v6850, %v6849
      %v7208 = vpack.c.bf16 %v6852, %v6851
      %v7209 = vpack.c.bf16 %v6854, %v6853
      %v7210 = vpack.c.bf16 %v6856, %v6855
      %v7211 = vpack.c.bf16 %v6858, %v6857
      %v7212 = vpack.c.bf16 %v6860, %v6859
      %v7213 = vpack.c.bf16 %v6862, %v6861
      %v7214 = vpack.c.bf16 %v6864, %v6863
      %v7215 = vpack.c.bf16 %v6866, %v6865
      %v7216 = vpack.c.bf16 %v6868, %v6867
      %v7217 = vpack.c.bf16 %v6870, %v6869
      %v7218 = vpack.c.bf16 %v6872, %v6871
      %v7219 = vpack.c.bf16 %v6874, %v6873
      %v7220 = vpack.c.bf16 %v6876, %v6875
      %v7221 = vpack.c.bf16 %v6878, %v6877
      %v7222 = vpack.c.bf16 %v6880, %v6879
      %v7223 = vpack.c.bf16 %v6882, %v6881
      %v7224 = vpack.c.bf16 %v6884, %v6883
      %v7225 = vpack.c.bf16 %v6886, %v6885
      %v7226 = vpack.c.bf16 %v6888, %v6887
      %v7227 = vpack.c.bf16 %v6890, %v6889
      %v7228 = vpack.c.bf16 %v6892, %v6891
      %v7229 = vpack.c.bf16 %v6894, %v6893
      %v7230 = vpack.c.bf16 %v6896, %v6895
      %v7231 = vpack.c.bf16 %v6898, %v6897
      %v7232 = vpack.c.bf16 %v6900, %v6899
      %v7233 = vpack.c.bf16 %v6902, %v6901
      %v7234 = vpack.c.bf16 %v6904, %v6903
      %v7235 = vpack.c.bf16 %v6906, %v6905
      %v7236 = vpack.c.bf16 %v6908, %v6907
      %v7237 = vpack.c.bf16 %v6910, %v6909
      %v7238 = vpack.c.bf16 %v6912, %v6911
      %v7239 = vpack.c.bf16 %v6914, %v6913
      %v7240 = vpack.c.bf16 %v6916, %v6915
      %v7241 = vpack.c.bf16 %v6918, %v6917
      %v7242 = vpack.c.bf16 %v6920, %v6919
      %v7243 = vpack.c.bf16 %v6922, %v6921
      %v7244 = vpack.c.bf16 %v6924, %v6923
      %v7245 = vpack.c.bf16 %v6926, %v6925
      %v7246 = vpack.c.bf16 %v6928, %v6927
      %v7247 = vpack.c.bf16 %v6930, %v6929
      %v7248 = vpack.c.bf16 %v6932, %v6931
      %v7249 = vpack.c.bf16 %v6934, %v6933
      %v7250 = vpack.c.bf16 %v6936, %v6935
      %v7251 = vpack.c.bf16 %v6938, %v6937
      %v7252 = vpack.c.bf16 %v6940, %v6939
      %v7253 = vpack.c.bf16 %v6942, %v6941
      %v7254 = vpack.c.bf16 %v6944, %v6943
      %v7255 = vpack.c.bf16 %v6946, %v6945
      %v7256 = vpack.c.bf16 %v6948, %v6947
      %v7257 = vpack.c.bf16 %v6950, %v6949
      %v7258 = vpack.c.bf16 %v6952, %v6951
      %v7259 = vpack.c.bf16 %v6954, %v6953
      %v7260 = vpack.c.bf16 %v6956, %v6955
      %v7261 = vpack.c.bf16 %v6958, %v6957
      %v7262 = vpack.c.bf16 %v6960, %v6959
      %v7263 = vpack.c.bf16 %v6962, %v6961
      %v7264 = vpack.c.bf16 %v6964, %v6963
      %v7265 = vpack.c.bf16 %v6966, %v6965
      %v7266 = vpack.c.bf16 %v6968, %v6967
      %v7267 = vpack.c.bf16 %v6970, %v6969
      %v7268 = vpack.c.bf16 %v6972, %v6971
      %v7269 = vpack.c.bf16 %v6974, %v6973
      %v7270 = vpack.c.bf16 %v6976, %v6975
      %v7271 = vpack.c.bf16 %v6978, %v6977
      %v7272 = vpack.c.bf16 %v6980, %v6979
      %v7273 = vpack.c.bf16 %v6982, %v6981
      %v7274 = vpack.c.bf16 %v6984, %v6983
      %v7275 = vpack.c.bf16 %v6986, %v6985
      %v7276 = vpack.c.bf16 %v6988, %v6987
      %v7277 = vpack.c.bf16 %v6990, %v6989
      %v7278 = vpack.c.bf16 %v6992, %v6991
      %v7279 = vpack.c.bf16 %v6994, %v6993
      %v7280 = vpack.c.bf16 %v6996, %v6995
      %v7281 = vpack.c.bf16 %v6998, %v6997
      %v7282 = vpack.c.bf16 %v7000, %v6999
      %v7283 = vpack.c.bf16 %v7002, %v7001
      %v7284 = vpack.c.bf16 %v7004, %v7003
      %v7285 = vpack.c.bf16 %v7006, %v7005
      %v7286 = vpack.c.bf16 %v7008, %v7007
      %v7287 = vpack.c.bf16 %v7010, %v7009
      %v7288 = vpack.c.bf16 %v7012, %v7011
      %v7289 = vpack.c.bf16 %v7014, %v7013
      %v7290 = vpack.c.bf16 %v7016, %v7015
      %v7291 = vpack.c.bf16 %v7018, %v7017
      %v7292 = vpack.c.bf16 %v7020, %v7019
      %v7293 = vpack.c.bf16 %v7022, %v7021
      %v7294 = vpack.c.bf16 %v7024, %v7023
      %v7295 = vpack.c.bf16 %v7026, %v7025
      %v7296 = vpack.c.bf16 %v7028, %v7027
      %v7297 = vpack.c.bf16 %v7030, %v7029
      %v7298 = vpack.c.bf16 %v7032, %v7031
      %v7299 = vpack.c.bf16 %v7034, %v7033
      %v7300 = vpack.c.bf16 %v7036, %v7035
      %v7301 = vpack.c.bf16 %v7038, %v7037
      %v7302 = vpack.c.bf16 %v7040, %v7039
      %v7303 = vpack.c.bf16 %v7042, %v7041
      %v7304 = vpack.c.bf16 %v7044, %v7043
      %v7305 = vpack.c.bf16 %v7046, %v7045
      %v7306 = vpack.c.bf16 %v7048, %v7047
      %v7307 = vpack.c.bf16 %v7050, %v7049
      %v7308 = vpack.c.bf16 %v7052, %v7051
      %v7565 = vunpack.c.l.b16 %v7053
      %v7566 = vunpack.c.h.b16 %v7053
      %v7567 = vunpack.c.l.b16 %v7054
      %v7568 = vunpack.c.h.b16 %v7054
      %v7569 = vunpack.c.l.b16 %v7055
      %v7570 = vunpack.c.h.b16 %v7055
      %v7571 = vunpack.c.l.b16 %v7056
      %v7572 = vunpack.c.h.b16 %v7056
      %v7573 = vunpack.c.l.b16 %v7057
      %v7574 = vunpack.c.h.b16 %v7057
      %v7575 = vunpack.c.l.b16 %v7058
      %v7576 = vunpack.c.h.b16 %v7058
      %v7577 = vunpack.c.l.b16 %v7059
      %v7578 = vunpack.c.h.b16 %v7059
      %v7579 = vunpack.c.l.b16 %v7060
      %v7580 = vunpack.c.h.b16 %v7060
      %v7581 = vunpack.c.l.b16 %v7061
      %v7582 = vunpack.c.h.b16 %v7061
      %v7583 = vunpack.c.l.b16 %v7062
      %v7584 = vunpack.c.h.b16 %v7062
      %v7585 = vunpack.c.l.b16 %v7063
      %v7586 = vunpack.c.h.b16 %v7063
      %v7587 = vunpack.c.l.b16 %v7064
      %v7588 = vunpack.c.h.b16 %v7064
      %v7589 = vunpack.c.l.b16 %v7065
      %v7590 = vunpack.c.h.b16 %v7065
      %v7591 = vunpack.c.l.b16 %v7066
      %v7592 = vunpack.c.h.b16 %v7066
      %v7593 = vunpack.c.l.b16 %v7067
      %v7594 = vunpack.c.h.b16 %v7067
      %v7595 = vunpack.c.l.b16 %v7068
      %v7596 = vunpack.c.h.b16 %v7068
      %v7597 = vunpack.c.l.b16 %v7069
      %v7598 = vunpack.c.h.b16 %v7069
      %v7599 = vunpack.c.l.b16 %v7070
      %v7600 = vunpack.c.h.b16 %v7070
      %v7601 = vunpack.c.l.b16 %v7071
      %v7602 = vunpack.c.h.b16 %v7071
      %v7603 = vunpack.c.l.b16 %v7072
      %v7604 = vunpack.c.h.b16 %v7072
      %v7605 = vunpack.c.l.b16 %v7073
      %v7606 = vunpack.c.h.b16 %v7073
      %v7607 = vunpack.c.l.b16 %v7074
      %v7608 = vunpack.c.h.b16 %v7074
      %v7609 = vunpack.c.l.b16 %v7075
      %v7610 = vunpack.c.h.b16 %v7075
      %v7611 = vunpack.c.l.b16 %v7076
      %v7612 = vunpack.c.h.b16 %v7076
      %v7613 = vunpack.c.l.b16 %v7077
      %v7614 = vunpack.c.h.b16 %v7077
      %v7615 = vunpack.c.l.b16 %v7078
      %v7616 = vunpack.c.h.b16 %v7078
      %v7617 = vunpack.c.l.b16 %v7079
      %v7618 = vunpack.c.h.b16 %v7079
      %v7619 = vunpack.c.l.b16 %v7080
      %v7620 = vunpack.c.h.b16 %v7080
      %v7621 = vunpack.c.l.b16 %v7081
      %v7622 = vunpack.c.h.b16 %v7081
      %v7623 = vunpack.c.l.b16 %v7082
      %v7624 = vunpack.c.h.b16 %v7082
      %v7625 = vunpack.c.l.b16 %v7083
      %v7626 = vunpack.c.h.b16 %v7083
      %v7627 = vunpack.c.l.b16 %v7084
      %v7628 = vunpack.c.h.b16 %v7084
      %v7629 = vunpack.c.l.b16 %v7085
      %v7630 = vunpack.c.h.b16 %v7085
      %v7631 = vunpack.c.l.b16 %v7086
      %v7632 = vunpack.c.h.b16 %v7086
      %v7633 = vunpack.c.l.b16 %v7087
      %v7634 = vunpack.c.h.b16 %v7087
      %v7635 = vunpack.c.l.b16 %v7088
      %v7636 = vunpack.c.h.b16 %v7088
      %v7637 = vunpack.c.l.b16 %v7089
      %v7638 = vunpack.c.h.b16 %v7089
      %v7639 = vunpack.c.l.b16 %v7090
      %v7640 = vunpack.c.h.b16 %v7090
      %v7641 = vunpack.c.l.b16 %v7091
      %v7642 = vunpack.c.h.b16 %v7091
      %v7643 = vunpack.c.l.b16 %v7092
      %v7644 = vunpack.c.h.b16 %v7092
      %v7645 = vunpack.c.l.b16 %v7093
      %v7646 = vunpack.c.h.b16 %v7093
      %v7647 = vunpack.c.l.b16 %v7094
      %v7648 = vunpack.c.h.b16 %v7094
      %v7649 = vunpack.c.l.b16 %v7095
      %v7650 = vunpack.c.h.b16 %v7095
      %v7651 = vunpack.c.l.b16 %v7096
      %v7652 = vunpack.c.h.b16 %v7096
      %v7653 = vunpack.c.l.b16 %v7097
      %v7654 = vunpack.c.h.b16 %v7097
      %v7655 = vunpack.c.l.b16 %v7098
      %v7656 = vunpack.c.h.b16 %v7098
      %v7657 = vunpack.c.l.b16 %v7099
      %v7658 = vunpack.c.h.b16 %v7099
      %v7659 = vunpack.c.l.b16 %v7100
      %v7660 = vunpack.c.h.b16 %v7100
      %v7661 = vunpack.c.l.b16 %v7101
      %v7662 = vunpack.c.h.b16 %v7101
      %v7663 = vunpack.c.l.b16 %v7102
      %v7664 = vunpack.c.h.b16 %v7102
      %v7665 = vunpack.c.l.b16 %v7103
      %v7666 = vunpack.c.h.b16 %v7103
      %v7667 = vunpack.c.l.b16 %v7104
      %v7668 = vunpack.c.h.b16 %v7104
      %v7669 = vunpack.c.l.b16 %v7105
      %v7670 = vunpack.c.h.b16 %v7105
      %v7671 = vunpack.c.l.b16 %v7106
      %v7672 = vunpack.c.h.b16 %v7106
      %v7673 = vunpack.c.l.b16 %v7107
      %v7674 = vunpack.c.h.b16 %v7107
      %v7675 = vunpack.c.l.b16 %v7108
      %v7676 = vunpack.c.h.b16 %v7108
      %v7677 = vunpack.c.l.b16 %v7109
      %v7678 = vunpack.c.h.b16 %v7109
      %v7679 = vunpack.c.l.b16 %v7110
      %v7680 = vunpack.c.h.b16 %v7110
      %v7681 = vunpack.c.l.b16 %v7111
      %v7682 = vunpack.c.h.b16 %v7111
      %v7683 = vunpack.c.l.b16 %v7112
      %v7684 = vunpack.c.h.b16 %v7112
      %v7685 = vunpack.c.l.b16 %v7113
      %v7686 = vunpack.c.h.b16 %v7113
      %v7687 = vunpack.c.l.b16 %v7114
      %v7688 = vunpack.c.h.b16 %v7114
      %v7689 = vunpack.c.l.b16 %v7115
      %v7690 = vunpack.c.h.b16 %v7115
      %v7691 = vunpack.c.l.b16 %v7116
      %v7692 = vunpack.c.h.b16 %v7116
      %v7693 = vunpack.c.l.b16 %v7117
      %v7694 = vunpack.c.h.b16 %v7117
      %v7695 = vunpack.c.l.b16 %v7118
      %v7696 = vunpack.c.h.b16 %v7118
      %v7697 = vunpack.c.l.b16 %v7119
      %v7698 = vunpack.c.h.b16 %v7119
      %v7699 = vunpack.c.l.b16 %v7120
      %v7700 = vunpack.c.h.b16 %v7120
      %v7701 = vunpack.c.l.b16 %v7121
      %v7702 = vunpack.c.h.b16 %v7121
      %v7703 = vunpack.c.l.b16 %v7122
      %v7704 = vunpack.c.h.b16 %v7122
      %v7705 = vunpack.c.l.b16 %v7123
      %v7706 = vunpack.c.h.b16 %v7123
      %v7707 = vunpack.c.l.b16 %v7124
      %v7708 = vunpack.c.h.b16 %v7124
      %v7709 = vunpack.c.l.b16 %v7125
      %v7710 = vunpack.c.h.b16 %v7125
      %v7711 = vunpack.c.l.b16 %v7126
      %v7712 = vunpack.c.h.b16 %v7126
      %v7713 = vunpack.c.l.b16 %v7127
      %v7714 = vunpack.c.h.b16 %v7127
      %v7715 = vunpack.c.l.b16 %v7128
      %v7716 = vunpack.c.h.b16 %v7128
      %v7717 = vunpack.c.l.b16 %v7129
      %v7718 = vunpack.c.h.b16 %v7129
      %v7719 = vunpack.c.l.b16 %v7130
      %v7720 = vunpack.c.h.b16 %v7130
      %v7721 = vunpack.c.l.b16 %v7131
      %v7722 = vunpack.c.h.b16 %v7131
      %v7723 = vunpack.c.l.b16 %v7132
      %v7724 = vunpack.c.h.b16 %v7132
      %v7725 = vunpack.c.l.b16 %v7133
      %v7726 = vunpack.c.h.b16 %v7133
      %v7727 = vunpack.c.l.b16 %v7134
      %v7728 = vunpack.c.h.b16 %v7134
      %v7729 = vunpack.c.l.b16 %v7135
      %v7730 = vunpack.c.h.b16 %v7135
      %v7731 = vunpack.c.l.b16 %v7136
      %v7732 = vunpack.c.h.b16 %v7136
      %v7733 = vunpack.c.l.b16 %v7137
      %v7734 = vunpack.c.h.b16 %v7137
      %v7735 = vunpack.c.l.b16 %v7138
      %v7736 = vunpack.c.h.b16 %v7138
      %v7737 = vunpack.c.l.b16 %v7139
      %v7738 = vunpack.c.h.b16 %v7139
      %v7739 = vunpack.c.l.b16 %v7140
      %v7740 = vunpack.c.h.b16 %v7140
      %v7741 = vunpack.c.l.b16 %v7141
      %v7742 = vunpack.c.h.b16 %v7141
      %v7743 = vunpack.c.l.b16 %v7142
      %v7744 = vunpack.c.h.b16 %v7142
      %v7745 = vunpack.c.l.b16 %v7143
      %v7746 = vunpack.c.h.b16 %v7143
      %v7747 = vunpack.c.l.b16 %v7144
      %v7748 = vunpack.c.h.b16 %v7144
      %v7749 = vunpack.c.l.b16 %v7145
      %v7750 = vunpack.c.h.b16 %v7145
      %v7751 = vunpack.c.l.b16 %v7146
      %v7752 = vunpack.c.h.b16 %v7146
      %v7753 = vunpack.c.l.b16 %v7147
      %v7754 = vunpack.c.h.b16 %v7147
      %v7755 = vunpack.c.l.b16 %v7148
      %v7756 = vunpack.c.h.b16 %v7148
      %v7757 = vunpack.c.l.b16 %v7149
      %v7758 = vunpack.c.h.b16 %v7149
      %v7759 = vunpack.c.l.b16 %v7150
      %v7760 = vunpack.c.h.b16 %v7150
      %v7761 = vunpack.c.l.b16 %v7151
      %v7762 = vunpack.c.h.b16 %v7151
      %v7763 = vunpack.c.l.b16 %v7152
      %v7764 = vunpack.c.h.b16 %v7152
      %v7765 = vunpack.c.l.b16 %v7153
      %v7766 = vunpack.c.h.b16 %v7153
      %v7767 = vunpack.c.l.b16 %v7154
      %v7768 = vunpack.c.h.b16 %v7154
      %v7769 = vunpack.c.l.b16 %v7155
      %v7770 = vunpack.c.h.b16 %v7155
      %v7771 = vunpack.c.l.b16 %v7156
      %v7772 = vunpack.c.h.b16 %v7156
      %v7773 = vunpack.c.l.b16 %v7157
      %v7774 = vunpack.c.h.b16 %v7157
      %v7775 = vunpack.c.l.b16 %v7158
      %v7776 = vunpack.c.h.b16 %v7158
      %v7777 = vunpack.c.l.b16 %v7159
      %v7778 = vunpack.c.h.b16 %v7159
      %v7779 = vunpack.c.l.b16 %v7160
      %v7780 = vunpack.c.h.b16 %v7160
      %v7781 = vunpack.c.l.b16 %v7161
      %v7782 = vunpack.c.h.b16 %v7161
      %v7783 = vunpack.c.l.b16 %v7162
      %v7784 = vunpack.c.h.b16 %v7162
      %v7785 = vunpack.c.l.b16 %v7163
      %v7786 = vunpack.c.h.b16 %v7163
      %v7787 = vunpack.c.l.b16 %v7164
      %v7788 = vunpack.c.h.b16 %v7164
      %v7789 = vunpack.c.l.b16 %v7165
      %v7790 = vunpack.c.h.b16 %v7165
      %v7791 = vunpack.c.l.b16 %v7166
      %v7792 = vunpack.c.h.b16 %v7166
      %v7793 = vunpack.c.l.b16 %v7167
      %v7794 = vunpack.c.h.b16 %v7167
      %v7795 = vunpack.c.l.b16 %v7168
      %v7796 = vunpack.c.h.b16 %v7168
      %v7797 = vunpack.c.l.b16 %v7169
      %v7798 = vunpack.c.h.b16 %v7169
      %v7799 = vunpack.c.l.b16 %v7170
      %v7800 = vunpack.c.h.b16 %v7170
      %v7801 = vunpack.c.l.b16 %v7171
      %v7802 = vunpack.c.h.b16 %v7171
      %v7803 = vunpack.c.l.b16 %v7172
      %v7804 = vunpack.c.h.b16 %v7172
      %v7805 = vunpack.c.l.b16 %v7173
      %v7806 = vunpack.c.h.b16 %v7173
      %v7807 = vunpack.c.l.b16 %v7174
      %v7808 = vunpack.c.h.b16 %v7174
      %v7809 = vunpack.c.l.b16 %v7175
      %v7810 = vunpack.c.h.b16 %v7175
      %v7811 = vunpack.c.l.b16 %v7176
      %v7812 = vunpack.c.h.b16 %v7176
      %v7813 = vunpack.c.l.b16 %v7177
      %v7814 = vunpack.c.h.b16 %v7177
      %v7815 = vunpack.c.l.b16 %v7178
      %v7816 = vunpack.c.h.b16 %v7178
      %v7817 = vunpack.c.l.b16 %v7179
      %v7818 = vunpack.c.h.b16 %v7179
      %v7819 = vunpack.c.l.b16 %v7180
      %v7820 = vunpack.c.h.b16 %v7180
      %v7821 = vunpack.c.l.b16 %v7181
      %v7822 = vunpack.c.h.b16 %v7181
      %v7823 = vunpack.c.l.b16 %v7182
      %v7824 = vunpack.c.h.b16 %v7182
      %v7825 = vunpack.c.l.b16 %v7183
      %v7826 = vunpack.c.h.b16 %v7183
      %v7827 = vunpack.c.l.b16 %v7184
      %v7828 = vunpack.c.h.b16 %v7184
      %v7829 = vunpack.c.l.b16 %v7185
      %v7830 = vunpack.c.h.b16 %v7185
      %v7831 = vunpack.c.l.b16 %v7186
      %v7832 = vunpack.c.h.b16 %v7186
      %v7833 = vunpack.c.l.b16 %v7187
      %v7834 = vunpack.c.h.b16 %v7187
      %v7835 = vunpack.c.l.b16 %v7188
      %v7836 = vunpack.c.h.b16 %v7188
      %v7837 = vunpack.c.l.b16 %v7189
      %v7838 = vunpack.c.h.b16 %v7189
      %v7839 = vunpack.c.l.b16 %v7190
      %v7840 = vunpack.c.h.b16 %v7190
      %v7841 = vunpack.c.l.b16 %v7191
      %v7842 = vunpack.c.h.b16 %v7191
      %v7843 = vunpack.c.l.b16 %v7192
      %v7844 = vunpack.c.h.b16 %v7192
      %v7845 = vunpack.c.l.b16 %v7193
      %v7846 = vunpack.c.h.b16 %v7193
      %v7847 = vunpack.c.l.b16 %v7194
      %v7848 = vunpack.c.h.b16 %v7194
      %v7849 = vunpack.c.l.b16 %v7195
      %v7850 = vunpack.c.h.b16 %v7195
      %v7851 = vunpack.c.l.b16 %v7196
      %v7852 = vunpack.c.h.b16 %v7196
      %v7853 = vunpack.c.l.b16 %v7197
      %v7854 = vunpack.c.h.b16 %v7197
      %v7855 = vunpack.c.l.b16 %v7198
      %v7856 = vunpack.c.h.b16 %v7198
      %v7857 = vunpack.c.l.b16 %v7199
      %v7858 = vunpack.c.h.b16 %v7199
      %v7859 = vunpack.c.l.b16 %v7200
      %v7860 = vunpack.c.h.b16 %v7200
      %v7861 = vunpack.c.l.b16 %v7201
      %v7862 = vunpack.c.h.b16 %v7201
      %v7863 = vunpack.c.l.b16 %v7202
      %v7864 = vunpack.c.h.b16 %v7202
      %v7865 = vunpack.c.l.b16 %v7203
      %v7866 = vunpack.c.h.b16 %v7203
      %v7867 = vunpack.c.l.b16 %v7204
      %v7868 = vunpack.c.h.b16 %v7204
      %v7869 = vunpack.c.l.b16 %v7205
      %v7870 = vunpack.c.h.b16 %v7205
      %v7871 = vunpack.c.l.b16 %v7206
      %v7872 = vunpack.c.h.b16 %v7206
      %v7873 = vunpack.c.l.b16 %v7207
      %v7874 = vunpack.c.h.b16 %v7207
      %v7875 = vunpack.c.l.b16 %v7208
      %v7876 = vunpack.c.h.b16 %v7208
      %v7877 = vunpack.c.l.b16 %v7209
      %v7878 = vunpack.c.h.b16 %v7209
      %v7879 = vunpack.c.l.b16 %v7210
      %v7880 = vunpack.c.h.b16 %v7210
      %v7881 = vunpack.c.l.b16 %v7211
      %v7882 = vunpack.c.h.b16 %v7211
      %v7883 = vunpack.c.l.b16 %v7212
      %v7884 = vunpack.c.h.b16 %v7212
      %v7885 = vunpack.c.l.b16 %v7213
      %v7886 = vunpack.c.h.b16 %v7213
      %v7887 = vunpack.c.l.b16 %v7214
      %v7888 = vunpack.c.h.b16 %v7214
      %v7889 = vunpack.c.l.b16 %v7215
      %v7890 = vunpack.c.h.b16 %v7215
      %v7891 = vunpack.c.l.b16 %v7216
      %v7892 = vunpack.c.h.b16 %v7216
      %v7893 = vunpack.c.l.b16 %v7217
      %v7894 = vunpack.c.h.b16 %v7217
      %v7895 = vunpack.c.l.b16 %v7218
      %v7896 = vunpack.c.h.b16 %v7218
      %v7897 = vunpack.c.l.b16 %v7219
      %v7898 = vunpack.c.h.b16 %v7219
      %v7899 = vunpack.c.l.b16 %v7220
      %v7900 = vunpack.c.h.b16 %v7220
      %v7901 = vunpack.c.l.b16 %v7221
      %v7902 = vunpack.c.h.b16 %v7221
      %v7903 = vunpack.c.l.b16 %v7222
      %v7904 = vunpack.c.h.b16 %v7222
      %v7905 = vunpack.c.l.b16 %v7223
      %v7906 = vunpack.c.h.b16 %v7223
      %v7907 = vunpack.c.l.b16 %v7224
      %v7908 = vunpack.c.h.b16 %v7224
      %v7909 = vunpack.c.l.b16 %v7225
      %v7910 = vunpack.c.h.b16 %v7225
      %v7911 = vunpack.c.l.b16 %v7226
      %v7912 = vunpack.c.h.b16 %v7226
      %v7913 = vunpack.c.l.b16 %v7227
      %v7914 = vunpack.c.h.b16 %v7227
      %v7915 = vunpack.c.l.b16 %v7228
      %v7916 = vunpack.c.h.b16 %v7228
      %v7917 = vunpack.c.l.b16 %v7229
      %v7918 = vunpack.c.h.b16 %v7229
      %v7919 = vunpack.c.l.b16 %v7230
      %v7920 = vunpack.c.h.b16 %v7230
      %v7921 = vunpack.c.l.b16 %v7231
      %v7922 = vunpack.c.h.b16 %v7231
      %v7923 = vunpack.c.l.b16 %v7232
      %v7924 = vunpack.c.h.b16 %v7232
      %v7925 = vunpack.c.l.b16 %v7233
      %v7926 = vunpack.c.h.b16 %v7233
      %v7927 = vunpack.c.l.b16 %v7234
      %v7928 = vunpack.c.h.b16 %v7234
      %v7929 = vunpack.c.l.b16 %v7235
      %v7930 = vunpack.c.h.b16 %v7235
      %v7931 = vunpack.c.l.b16 %v7236
      %v7932 = vunpack.c.h.b16 %v7236
      %v7933 = vunpack.c.l.b16 %v7237
      %v7934 = vunpack.c.h.b16 %v7237
      %v7935 = vunpack.c.l.b16 %v7238
      %v7936 = vunpack.c.h.b16 %v7238
      %v7937 = vunpack.c.l.b16 %v7239
      %v7938 = vunpack.c.h.b16 %v7239
      %v7939 = vunpack.c.l.b16 %v7240
      %v7940 = vunpack.c.h.b16 %v7240
      %v7941 = vunpack.c.l.b16 %v7241
      %v7942 = vunpack.c.h.b16 %v7241
      %v7943 = vunpack.c.l.b16 %v7242
      %v7944 = vunpack.c.h.b16 %v7242
      %v7945 = vunpack.c.l.b16 %v7243
      %v7946 = vunpack.c.h.b16 %v7243
      %v7947 = vunpack.c.l.b16 %v7244
      %v7948 = vunpack.c.h.b16 %v7244
      %v7949 = vunpack.c.l.b16 %v7245
      %v7950 = vunpack.c.h.b16 %v7245
      %v7951 = vunpack.c.l.b16 %v7246
      %v7952 = vunpack.c.h.b16 %v7246
      %v7953 = vunpack.c.l.b16 %v7247
      %v7954 = vunpack.c.h.b16 %v7247
      %v7955 = vunpack.c.l.b16 %v7248
      %v7956 = vunpack.c.h.b16 %v7248
      %v7957 = vunpack.c.l.b16 %v7249
      %v7958 = vunpack.c.h.b16 %v7249
      %v7959 = vunpack.c.l.b16 %v7250
      %v7960 = vunpack.c.h.b16 %v7250
      %v7961 = vunpack.c.l.b16 %v7251
      %v7962 = vunpack.c.h.b16 %v7251
      %v7963 = vunpack.c.l.b16 %v7252
      %v7964 = vunpack.c.h.b16 %v7252
      %v7965 = vunpack.c.l.b16 %v7253
      %v7966 = vunpack.c.h.b16 %v7253
      %v7967 = vunpack.c.l.b16 %v7254
      %v7968 = vunpack.c.h.b16 %v7254
      %v7969 = vunpack.c.l.b16 %v7255
      %v7970 = vunpack.c.h.b16 %v7255
      %v7971 = vunpack.c.l.b16 %v7256
      %v7972 = vunpack.c.h.b16 %v7256
      %v7973 = vunpack.c.l.b16 %v7257
      %v7974 = vunpack.c.h.b16 %v7257
      %v7975 = vunpack.c.l.b16 %v7258
      %v7976 = vunpack.c.h.b16 %v7258
      %v7977 = vunpack.c.l.b16 %v7259
      %v7978 = vunpack.c.h.b16 %v7259
      %v7979 = vunpack.c.l.b16 %v7260
      %v7980 = vunpack.c.h.b16 %v7260
      %v7981 = vunpack.c.l.b16 %v7261
      %v7982 = vunpack.c.h.b16 %v7261
      %v7983 = vunpack.c.l.b16 %v7262
      %v7984 = vunpack.c.h.b16 %v7262
      %v7985 = vunpack.c.l.b16 %v7263
      %v7986 = vunpack.c.h.b16 %v7263
      %v7987 = vunpack.c.l.b16 %v7264
      %v7988 = vunpack.c.h.b16 %v7264
      %v7989 = vunpack.c.l.b16 %v7265
      %v7990 = vunpack.c.h.b16 %v7265
      %v7991 = vunpack.c.l.b16 %v7266
      %v7992 = vunpack.c.h.b16 %v7266
      %v7993 = vunpack.c.l.b16 %v7267
      %v7994 = vunpack.c.h.b16 %v7267
      %v7995 = vunpack.c.l.b16 %v7268
      %v7996 = vunpack.c.h.b16 %v7268
      %v7997 = vunpack.c.l.b16 %v7269
      %v7998 = vunpack.c.h.b16 %v7269
      %v7999 = vunpack.c.l.b16 %v7270
      %v8000 = vunpack.c.h.b16 %v7270
      %v8001 = vunpack.c.l.b16 %v7271
      %v8002 = vunpack.c.h.b16 %v7271
      %v8003 = vunpack.c.l.b16 %v7272
      %v8004 = vunpack.c.h.b16 %v7272
      %v8005 = vunpack.c.l.b16 %v7273
      %v8006 = vunpack.c.h.b16 %v7273
      %v8007 = vunpack.c.l.b16 %v7274
      %v8008 = vunpack.c.h.b16 %v7274
      %v8009 = vunpack.c.l.b16 %v7275
      %v8010 = vunpack.c.h.b16 %v7275
      %v8011 = vunpack.c.l.b16 %v7276
      %v8012 = vunpack.c.h.b16 %v7276
      %v8013 = vunpack.c.l.b16 %v7277
      %v8014 = vunpack.c.h.b16 %v7277
      %v8015 = vunpack.c.l.b16 %v7278
      %v8016 = vunpack.c.h.b16 %v7278
      %v8017 = vunpack.c.l.b16 %v7279
      %v8018 = vunpack.c.h.b16 %v7279
      %v8019 = vunpack.c.l.b16 %v7280
      %v8020 = vunpack.c.h.b16 %v7280
      %v8021 = vunpack.c.l.b16 %v7281
      %v8022 = vunpack.c.h.b16 %v7281
      %v8023 = vunpack.c.l.b16 %v7282
      %v8024 = vunpack.c.h.b16 %v7282
      %v8025 = vunpack.c.l.b16 %v7283
      %v8026 = vunpack.c.h.b16 %v7283
      %v8027 = vunpack.c.l.b16 %v7284
      %v8028 = vunpack.c.h.b16 %v7284
      %v8029 = vunpack.c.l.b16 %v7285
      %v8030 = vunpack.c.h.b16 %v7285
      %v8031 = vunpack.c.l.b16 %v7286
      %v8032 = vunpack.c.h.b16 %v7286
      %v8033 = vunpack.c.l.b16 %v7287
      %v8034 = vunpack.c.h.b16 %v7287
      %v8035 = vunpack.c.l.b16 %v7288
      %v8036 = vunpack.c.h.b16 %v7288
      %v8037 = vunpack.c.l.b16 %v7289
      %v8038 = vunpack.c.h.b16 %v7289
      %v8039 = vunpack.c.l.b16 %v7290
      %v8040 = vunpack.c.h.b16 %v7290
      %v8041 = vunpack.c.l.b16 %v7291
      %v8042 = vunpack.c.h.b16 %v7291
      %v8043 = vunpack.c.l.b16 %v7292
      %v8044 = vunpack.c.h.b16 %v7292
      %v8045 = vunpack.c.l.b16 %v7293
      %v8046 = vunpack.c.h.b16 %v7293
      %v8047 = vunpack.c.l.b16 %v7294
      %v8048 = vunpack.c.h.b16 %v7294
      %v8049 = vunpack.c.l.b16 %v7295
      %v8050 = vunpack.c.h.b16 %v7295
      %v8051 = vunpack.c.l.b16 %v7296
      %v8052 = vunpack.c.h.b16 %v7296
      %v8053 = vunpack.c.l.b16 %v7297
      %v8054 = vunpack.c.h.b16 %v7297
      %v8055 = vunpack.c.l.b16 %v7298
      %v8056 = vunpack.c.h.b16 %v7298
      %v8057 = vunpack.c.l.b16 %v7299
      %v8058 = vunpack.c.h.b16 %v7299
      %v8059 = vunpack.c.l.b16 %v7300
      %v8060 = vunpack.c.h.b16 %v7300
      %v8061 = vunpack.c.l.b16 %v7301
      %v8062 = vunpack.c.h.b16 %v7301
      %v8063 = vunpack.c.l.b16 %v7302
      %v8064 = vunpack.c.h.b16 %v7302
      %v8065 = vunpack.c.l.b16 %v7303
      %v8066 = vunpack.c.h.b16 %v7303
      %v8067 = vunpack.c.l.b16 %v7304
      %v8068 = vunpack.c.h.b16 %v7304
      %v8069 = vunpack.c.l.b16 %v7305
      %v8070 = vunpack.c.h.b16 %v7305
      %v8071 = vunpack.c.l.b16 %v7306
      %v8072 = vunpack.c.h.b16 %v7306
      %v8073 = vunpack.c.l.b16 %v7307
      %v8074 = vunpack.c.h.b16 %v7307
      %v8075 = vunpack.c.l.b16 %v7308
      %v8076 = vunpack.c.h.b16 %v7308
      %v8077 = vpack.c.b16 %v7565, %v7565
      %v8078 = vpack.c.b16 %v7566, %v7566
      %v8079 = vpack.c.b16 %v7567, %v7567
      %v8080 = vpack.c.b16 %v7568, %v7568
      %v8081 = vpack.c.b16 %v7569, %v7569
      %v8082 = vpack.c.b16 %v7570, %v7570
      %v8083 = vpack.c.b16 %v7571, %v7571
      %v8084 = vpack.c.b16 %v7572, %v7572
      %v8085 = vpack.c.b16 %v7573, %v7573
      %v8086 = vpack.c.b16 %v7574, %v7574
      %v8087 = vpack.c.b16 %v7575, %v7575
      %v8088 = vpack.c.b16 %v7576, %v7576
      %v8089 = vpack.c.b16 %v7577, %v7577
      %v8090 = vpack.c.b16 %v7578, %v7578
      %v8091 = vpack.c.b16 %v7579, %v7579
      %v8092 = vpack.c.b16 %v7580, %v7580
      %v8093 = vpack.c.b16 %v7581, %v7581
      %v8094 = vpack.c.b16 %v7582, %v7582
      %v8095 = vpack.c.b16 %v7583, %v7583
      %v8096 = vpack.c.b16 %v7584, %v7584
      %v8097 = vpack.c.b16 %v7585, %v7585
      %v8098 = vpack.c.b16 %v7586, %v7586
      %v8099 = vpack.c.b16 %v7587, %v7587
      %v8100 = vpack.c.b16 %v7588, %v7588
      %v8101 = vpack.c.b16 %v7589, %v7589
      %v8102 = vpack.c.b16 %v7590, %v7590
      %v8103 = vpack.c.b16 %v7591, %v7591
      %v8104 = vpack.c.b16 %v7592, %v7592
      %v8105 = vpack.c.b16 %v7593, %v7593
      %v8106 = vpack.c.b16 %v7594, %v7594
      %v8107 = vpack.c.b16 %v7595, %v7595
      %v8108 = vpack.c.b16 %v7596, %v7596
      %v8109 = vpack.c.b16 %v7597, %v7597
      %v8110 = vpack.c.b16 %v7598, %v7598
      %v8111 = vpack.c.b16 %v7599, %v7599
      %v8112 = vpack.c.b16 %v7600, %v7600
      %v8113 = vpack.c.b16 %v7601, %v7601
      %v8114 = vpack.c.b16 %v7602, %v7602
      %v8115 = vpack.c.b16 %v7603, %v7603
      %v8116 = vpack.c.b16 %v7604, %v7604
      %v8117 = vpack.c.b16 %v7605, %v7605
      %v8118 = vpack.c.b16 %v7606, %v7606
      %v8119 = vpack.c.b16 %v7607, %v7607
      %v8120 = vpack.c.b16 %v7608, %v7608
      %v8121 = vpack.c.b16 %v7609, %v7609
      %v8122 = vpack.c.b16 %v7610, %v7610
      %v8123 = vpack.c.b16 %v7611, %v7611
      %v8124 = vpack.c.b16 %v7612, %v7612
      %v8125 = vpack.c.b16 %v7613, %v7613
      %v8126 = vpack.c.b16 %v7614, %v7614
      %v8127 = vpack.c.b16 %v7615, %v7615
      %v8128 = vpack.c.b16 %v7616, %v7616
      %v8129 = vpack.c.b16 %v7617, %v7617
      %v8130 = vpack.c.b16 %v7618, %v7618
      %v8131 = vpack.c.b16 %v7619, %v7619
      %v8132 = vpack.c.b16 %v7620, %v7620
      %v8133 = vpack.c.b16 %v7621, %v7621
      %v8134 = vpack.c.b16 %v7622, %v7622
      %v8135 = vpack.c.b16 %v7623, %v7623
      %v8136 = vpack.c.b16 %v7624, %v7624
      %v8137 = vpack.c.b16 %v7625, %v7625
      %v8138 = vpack.c.b16 %v7626, %v7626
      %v8139 = vpack.c.b16 %v7627, %v7627
      %v8140 = vpack.c.b16 %v7628, %v7628
      %v8141 = vpack.c.b16 %v7629, %v7629
      %v8142 = vpack.c.b16 %v7630, %v7630
      %v8143 = vpack.c.b16 %v7631, %v7631
      %v8144 = vpack.c.b16 %v7632, %v7632
      %v8145 = vpack.c.b16 %v7633, %v7633
      %v8146 = vpack.c.b16 %v7634, %v7634
      %v8147 = vpack.c.b16 %v7635, %v7635
      %v8148 = vpack.c.b16 %v7636, %v7636
      %v8149 = vpack.c.b16 %v7637, %v7637
      %v8150 = vpack.c.b16 %v7638, %v7638
      %v8151 = vpack.c.b16 %v7639, %v7639
      %v8152 = vpack.c.b16 %v7640, %v7640
      %v8153 = vpack.c.b16 %v7641, %v7641
      %v8154 = vpack.c.b16 %v7642, %v7642
      %v8155 = vpack.c.b16 %v7643, %v7643
      %v8156 = vpack.c.b16 %v7644, %v7644
      %v8157 = vpack.c.b16 %v7645, %v7645
      %v8158 = vpack.c.b16 %v7646, %v7646
      %v8159 = vpack.c.b16 %v7647, %v7647
      %v8160 = vpack.c.b16 %v7648, %v7648
      %v8161 = vpack.c.b16 %v7649, %v7649
      %v8162 = vpack.c.b16 %v7650, %v7650
      %v8163 = vpack.c.b16 %v7651, %v7651
      %v8164 = vpack.c.b16 %v7652, %v7652
      %v8165 = vpack.c.b16 %v7653, %v7653
      %v8166 = vpack.c.b16 %v7654, %v7654
      %v8167 = vpack.c.b16 %v7655, %v7655
      %v8168 = vpack.c.b16 %v7656, %v7656
      %v8169 = vpack.c.b16 %v7657, %v7657
      %v8170 = vpack.c.b16 %v7658, %v7658
      %v8171 = vpack.c.b16 %v7659, %v7659
      %v8172 = vpack.c.b16 %v7660, %v7660
      %v8173 = vpack.c.b16 %v7661, %v7661
      %v8174 = vpack.c.b16 %v7662, %v7662
      %v8175 = vpack.c.b16 %v7663, %v7663
      %v8176 = vpack.c.b16 %v7664, %v7664
      %v8177 = vpack.c.b16 %v7665, %v7665
      %v8178 = vpack.c.b16 %v7666, %v7666
      %v8179 = vpack.c.b16 %v7667, %v7667
      %v8180 = vpack.c.b16 %v7668, %v7668
      %v8181 = vpack.c.b16 %v7669, %v7669
      %v8182 = vpack.c.b16 %v7670, %v7670
      %v8183 = vpack.c.b16 %v7671, %v7671
      %v8184 = vpack.c.b16 %v7672, %v7672
      %v8185 = vpack.c.b16 %v7673, %v7673
      %v8186 = vpack.c.b16 %v7674, %v7674
      %v8187 = vpack.c.b16 %v7675, %v7675
      %v8188 = vpack.c.b16 %v7676, %v7676
      %v8189 = vpack.c.b16 %v7677, %v7677
      %v8190 = vpack.c.b16 %v7678, %v7678
      %v8191 = vpack.c.b16 %v7679, %v7679
      %v8192 = vpack.c.b16 %v7680, %v7680
      %v8193 = vpack.c.b16 %v7681, %v7681
      %v8194 = vpack.c.b16 %v7682, %v7682
      %v8195 = vpack.c.b16 %v7683, %v7683
      %v8196 = vpack.c.b16 %v7684, %v7684
      %v8197 = vpack.c.b16 %v7685, %v7685
      %v8198 = vpack.c.b16 %v7686, %v7686
      %v8199 = vpack.c.b16 %v7687, %v7687
      %v8200 = vpack.c.b16 %v7688, %v7688
      %v8201 = vpack.c.b16 %v7689, %v7689
      %v8202 = vpack.c.b16 %v7690, %v7690
      %v8203 = vpack.c.b16 %v7691, %v7691
      %v8204 = vpack.c.b16 %v7692, %v7692
      %v8205 = vpack.c.b16 %v7693, %v7693
      %v8206 = vpack.c.b16 %v7694, %v7694
      %v8207 = vpack.c.b16 %v7695, %v7695
      %v8208 = vpack.c.b16 %v7696, %v7696
      %v8209 = vpack.c.b16 %v7697, %v7697
      %v8210 = vpack.c.b16 %v7698, %v7698
      %v8211 = vpack.c.b16 %v7699, %v7699
      %v8212 = vpack.c.b16 %v7700, %v7700
      %v8213 = vpack.c.b16 %v7701, %v7701
      %v8214 = vpack.c.b16 %v7702, %v7702
      %v8215 = vpack.c.b16 %v7703, %v7703
      %v8216 = vpack.c.b16 %v7704, %v7704
      %v8217 = vpack.c.b16 %v7705, %v7705
      %v8218 = vpack.c.b16 %v7706, %v7706
      %v8219 = vpack.c.b16 %v7707, %v7707
      %v8220 = vpack.c.b16 %v7708, %v7708
      %v8221 = vpack.c.b16 %v7709, %v7709
      %v8222 = vpack.c.b16 %v7710, %v7710
      %v8223 = vpack.c.b16 %v7711, %v7711
      %v8224 = vpack.c.b16 %v7712, %v7712
      %v8225 = vpack.c.b16 %v7713, %v7713
      %v8226 = vpack.c.b16 %v7714, %v7714
      %v8227 = vpack.c.b16 %v7715, %v7715
      %v8228 = vpack.c.b16 %v7716, %v7716
      %v8229 = vpack.c.b16 %v7717, %v7717
      %v8230 = vpack.c.b16 %v7718, %v7718
      %v8231 = vpack.c.b16 %v7719, %v7719
      %v8232 = vpack.c.b16 %v7720, %v7720
      %v8233 = vpack.c.b16 %v7721, %v7721
      %v8234 = vpack.c.b16 %v7722, %v7722
      %v8235 = vpack.c.b16 %v7723, %v7723
      %v8236 = vpack.c.b16 %v7724, %v7724
      %v8237 = vpack.c.b16 %v7725, %v7725
      %v8238 = vpack.c.b16 %v7726, %v7726
      %v8239 = vpack.c.b16 %v7727, %v7727
      %v8240 = vpack.c.b16 %v7728, %v7728
      %v8241 = vpack.c.b16 %v7729, %v7729
      %v8242 = vpack.c.b16 %v7730, %v7730
      %v8243 = vpack.c.b16 %v7731, %v7731
      %v8244 = vpack.c.b16 %v7732, %v7732
      %v8245 = vpack.c.b16 %v7733, %v7733
      %v8246 = vpack.c.b16 %v7734, %v7734
      %v8247 = vpack.c.b16 %v7735, %v7735
      %v8248 = vpack.c.b16 %v7736, %v7736
      %v8249 = vpack.c.b16 %v7737, %v7737
      %v8250 = vpack.c.b16 %v7738, %v7738
      %v8251 = vpack.c.b16 %v7739, %v7739
      %v8252 = vpack.c.b16 %v7740, %v7740
      %v8253 = vpack.c.b16 %v7741, %v7741
      %v8254 = vpack.c.b16 %v7742, %v7742
      %v8255 = vpack.c.b16 %v7743, %v7743
      %v8256 = vpack.c.b16 %v7744, %v7744
      %v8257 = vpack.c.b16 %v7745, %v7745
      %v8258 = vpack.c.b16 %v7746, %v7746
      %v8259 = vpack.c.b16 %v7747, %v7747
      %v8260 = vpack.c.b16 %v7748, %v7748
      %v8261 = vpack.c.b16 %v7749, %v7749
      %v8262 = vpack.c.b16 %v7750, %v7750
      %v8263 = vpack.c.b16 %v7751, %v7751
      %v8264 = vpack.c.b16 %v7752, %v7752
      %v8265 = vpack.c.b16 %v7753, %v7753
      %v8266 = vpack.c.b16 %v7754, %v7754
      %v8267 = vpack.c.b16 %v7755, %v7755
      %v8268 = vpack.c.b16 %v7756, %v7756
      %v8269 = vpack.c.b16 %v7757, %v7757
      %v8270 = vpack.c.b16 %v7758, %v7758
      %v8271 = vpack.c.b16 %v7759, %v7759
      %v8272 = vpack.c.b16 %v7760, %v7760
      %v8273 = vpack.c.b16 %v7761, %v7761
      %v8274 = vpack.c.b16 %v7762, %v7762
      %v8275 = vpack.c.b16 %v7763, %v7763
      %v8276 = vpack.c.b16 %v7764, %v7764
      %v8277 = vpack.c.b16 %v7765, %v7765
      %v8278 = vpack.c.b16 %v7766, %v7766
      %v8279 = vpack.c.b16 %v7767, %v7767
      %v8280 = vpack.c.b16 %v7768, %v7768
      %v8281 = vpack.c.b16 %v7769, %v7769
      %v8282 = vpack.c.b16 %v7770, %v7770
      %v8283 = vpack.c.b16 %v7771, %v7771
      %v8284 = vpack.c.b16 %v7772, %v7772
      %v8285 = vpack.c.b16 %v7773, %v7773
      %v8286 = vpack.c.b16 %v7774, %v7774
      %v8287 = vpack.c.b16 %v7775, %v7775
      %v8288 = vpack.c.b16 %v7776, %v7776
      %v8289 = vpack.c.b16 %v7777, %v7777
      %v8290 = vpack.c.b16 %v7778, %v7778
      %v8291 = vpack.c.b16 %v7779, %v7779
      %v8292 = vpack.c.b16 %v7780, %v7780
      %v8293 = vpack.c.b16 %v7781, %v7781
      %v8294 = vpack.c.b16 %v7782, %v7782
      %v8295 = vpack.c.b16 %v7783, %v7783
      %v8296 = vpack.c.b16 %v7784, %v7784
      %v8297 = vpack.c.b16 %v7785, %v7785
      %v8298 = vpack.c.b16 %v7786, %v7786
      %v8299 = vpack.c.b16 %v7787, %v7787
      %v8300 = vpack.c.b16 %v7788, %v7788
      %v8301 = vpack.c.b16 %v7789, %v7789
      %v8302 = vpack.c.b16 %v7790, %v7790
      %v8303 = vpack.c.b16 %v7791, %v7791
      %v8304 = vpack.c.b16 %v7792, %v7792
      %v8305 = vpack.c.b16 %v7793, %v7793
      %v8306 = vpack.c.b16 %v7794, %v7794
      %v8307 = vpack.c.b16 %v7795, %v7795
      %v8308 = vpack.c.b16 %v7796, %v7796
      %v8309 = vpack.c.b16 %v7797, %v7797
      %v8310 = vpack.c.b16 %v7798, %v7798
      %v8311 = vpack.c.b16 %v7799, %v7799
      %v8312 = vpack.c.b16 %v7800, %v7800
      %v8313 = vpack.c.b16 %v7801, %v7801
      %v8314 = vpack.c.b16 %v7802, %v7802
      %v8315 = vpack.c.b16 %v7803, %v7803
      %v8316 = vpack.c.b16 %v7804, %v7804
      %v8317 = vpack.c.b16 %v7805, %v7805
      %v8318 = vpack.c.b16 %v7806, %v7806
      %v8319 = vpack.c.b16 %v7807, %v7807
      %v8320 = vpack.c.b16 %v7808, %v7808
      %v8321 = vpack.c.b16 %v7809, %v7809
      %v8322 = vpack.c.b16 %v7810, %v7810
      %v8323 = vpack.c.b16 %v7811, %v7811
      %v8324 = vpack.c.b16 %v7812, %v7812
      %v8325 = vpack.c.b16 %v7813, %v7813
      %v8326 = vpack.c.b16 %v7814, %v7814
      %v8327 = vpack.c.b16 %v7815, %v7815
      %v8328 = vpack.c.b16 %v7816, %v7816
      %v8329 = vpack.c.b16 %v7817, %v7817
      %v8330 = vpack.c.b16 %v7818, %v7818
      %v8331 = vpack.c.b16 %v7819, %v7819
      %v8332 = vpack.c.b16 %v7820, %v7820
      %v8333 = vpack.c.b16 %v7821, %v7821
      %v8334 = vpack.c.b16 %v7822, %v7822
      %v8335 = vpack.c.b16 %v7823, %v7823
      %v8336 = vpack.c.b16 %v7824, %v7824
      %v8337 = vpack.c.b16 %v7825, %v7825
      %v8338 = vpack.c.b16 %v7826, %v7826
      %v8339 = vpack.c.b16 %v7827, %v7827
      %v8340 = vpack.c.b16 %v7828, %v7828
      %v8341 = vpack.c.b16 %v7829, %v7829
      %v8342 = vpack.c.b16 %v7830, %v7830
      %v8343 = vpack.c.b16 %v7831, %v7831
      %v8344 = vpack.c.b16 %v7832, %v7832
      %v8345 = vpack.c.b16 %v7833, %v7833
      %v8346 = vpack.c.b16 %v7834, %v7834
      %v8347 = vpack.c.b16 %v7835, %v7835
      %v8348 = vpack.c.b16 %v7836, %v7836
      %v8349 = vpack.c.b16 %v7837, %v7837
      %v8350 = vpack.c.b16 %v7838, %v7838
      %v8351 = vpack.c.b16 %v7839, %v7839
      %v8352 = vpack.c.b16 %v7840, %v7840
      %v8353 = vpack.c.b16 %v7841, %v7841
      %v8354 = vpack.c.b16 %v7842, %v7842
      %v8355 = vpack.c.b16 %v7843, %v7843
      %v8356 = vpack.c.b16 %v7844, %v7844
      %v8357 = vpack.c.b16 %v7845, %v7845
      %v8358 = vpack.c.b16 %v7846, %v7846
      %v8359 = vpack.c.b16 %v7847, %v7847
      %v8360 = vpack.c.b16 %v7848, %v7848
      %v8361 = vpack.c.b16 %v7849, %v7849
      %v8362 = vpack.c.b16 %v7850, %v7850
      %v8363 = vpack.c.b16 %v7851, %v7851
      %v8364 = vpack.c.b16 %v7852, %v7852
      %v8365 = vpack.c.b16 %v7853, %v7853
      %v8366 = vpack.c.b16 %v7854, %v7854
      %v8367 = vpack.c.b16 %v7855, %v7855
      %v8368 = vpack.c.b16 %v7856, %v7856
      %v8369 = vpack.c.b16 %v7857, %v7857
      %v8370 = vpack.c.b16 %v7858, %v7858
      %v8371 = vpack.c.b16 %v7859, %v7859
      %v8372 = vpack.c.b16 %v7860, %v7860
      %v8373 = vpack.c.b16 %v7861, %v7861
      %v8374 = vpack.c.b16 %v7862, %v7862
      %v8375 = vpack.c.b16 %v7863, %v7863
      %v8376 = vpack.c.b16 %v7864, %v7864
      %v8377 = vpack.c.b16 %v7865, %v7865
      %v8378 = vpack.c.b16 %v7866, %v7866
      %v8379 = vpack.c.b16 %v7867, %v7867
      %v8380 = vpack.c.b16 %v7868, %v7868
      %v8381 = vpack.c.b16 %v7869, %v7869
      %v8382 = vpack.c.b16 %v7870, %v7870
      %v8383 = vpack.c.b16 %v7871, %v7871
      %v8384 = vpack.c.b16 %v7872, %v7872
      %v8385 = vpack.c.b16 %v7873, %v7873
      %v8386 = vpack.c.b16 %v7874, %v7874
      %v8387 = vpack.c.b16 %v7875, %v7875
      %v8388 = vpack.c.b16 %v7876, %v7876
      %v8389 = vpack.c.b16 %v7877, %v7877
      %v8390 = vpack.c.b16 %v7878, %v7878
      %v8391 = vpack.c.b16 %v7879, %v7879
      %v8392 = vpack.c.b16 %v7880, %v7880
      %v8393 = vpack.c.b16 %v7881, %v7881
      %v8394 = vpack.c.b16 %v7882, %v7882
      %v8395 = vpack.c.b16 %v7883, %v7883
      %v8396 = vpack.c.b16 %v7884, %v7884
      %v8397 = vpack.c.b16 %v7885, %v7885
      %v8398 = vpack.c.b16 %v7886, %v7886
      %v8399 = vpack.c.b16 %v7887, %v7887
      %v8400 = vpack.c.b16 %v7888, %v7888
      %v8401 = vpack.c.b16 %v7889, %v7889
      %v8402 = vpack.c.b16 %v7890, %v7890
      %v8403 = vpack.c.b16 %v7891, %v7891
      %v8404 = vpack.c.b16 %v7892, %v7892
      %v8405 = vpack.c.b16 %v7893, %v7893
      %v8406 = vpack.c.b16 %v7894, %v7894
      %v8407 = vpack.c.b16 %v7895, %v7895
      %v8408 = vpack.c.b16 %v7896, %v7896
      %v8409 = vpack.c.b16 %v7897, %v7897
      %v8410 = vpack.c.b16 %v7898, %v7898
      %v8411 = vpack.c.b16 %v7899, %v7899
      %v8412 = vpack.c.b16 %v7900, %v7900
      %v8413 = vpack.c.b16 %v7901, %v7901
      %v8414 = vpack.c.b16 %v7902, %v7902
      %v8415 = vpack.c.b16 %v7903, %v7903
      %v8416 = vpack.c.b16 %v7904, %v7904
      %v8417 = vpack.c.b16 %v7905, %v7905
      %v8418 = vpack.c.b16 %v7906, %v7906
      %v8419 = vpack.c.b16 %v7907, %v7907
      %v8420 = vpack.c.b16 %v7908, %v7908
      %v8421 = vpack.c.b16 %v7909, %v7909
      %v8422 = vpack.c.b16 %v7910, %v7910
      %v8423 = vpack.c.b16 %v7911, %v7911
      %v8424 = vpack.c.b16 %v7912, %v7912
      %v8425 = vpack.c.b16 %v7913, %v7913
      %v8426 = vpack.c.b16 %v7914, %v7914
      %v8427 = vpack.c.b16 %v7915, %v7915
      %v8428 = vpack.c.b16 %v7916, %v7916
      %v8429 = vpack.c.b16 %v7917, %v7917
      %v8430 = vpack.c.b16 %v7918, %v7918
      %v8431 = vpack.c.b16 %v7919, %v7919
      %v8432 = vpack.c.b16 %v7920, %v7920
      %v8433 = vpack.c.b16 %v7921, %v7921
      %v8434 = vpack.c.b16 %v7922, %v7922
      %v8435 = vpack.c.b16 %v7923, %v7923
      %v8436 = vpack.c.b16 %v7924, %v7924
      %v8437 = vpack.c.b16 %v7925, %v7925
      %v8438 = vpack.c.b16 %v7926, %v7926
      %v8439 = vpack.c.b16 %v7927, %v7927
      %v8440 = vpack.c.b16 %v7928, %v7928
      %v8441 = vpack.c.b16 %v7929, %v7929
      %v8442 = vpack.c.b16 %v7930, %v7930
      %v8443 = vpack.c.b16 %v7931, %v7931
      %v8444 = vpack.c.b16 %v7932, %v7932
      %v8445 = vpack.c.b16 %v7933, %v7933
      %v8446 = vpack.c.b16 %v7934, %v7934
      %v8447 = vpack.c.b16 %v7935, %v7935
      %v8448 = vpack.c.b16 %v7936, %v7936
      %v8449 = vpack.c.b16 %v7937, %v7937
      %v8450 = vpack.c.b16 %v7938, %v7938
      %v8451 = vpack.c.b16 %v7939, %v7939
      %v8452 = vpack.c.b16 %v7940, %v7940
      %v8453 = vpack.c.b16 %v7941, %v7941
      %v8454 = vpack.c.b16 %v7942, %v7942
      %v8455 = vpack.c.b16 %v7943, %v7943
      %v8456 = vpack.c.b16 %v7944, %v7944
      %v8457 = vpack.c.b16 %v7945, %v7945
      %v8458 = vpack.c.b16 %v7946, %v7946
      %v8459 = vpack.c.b16 %v7947, %v7947
      %v8460 = vpack.c.b16 %v7948, %v7948
      %v8461 = vpack.c.b16 %v7949, %v7949
      %v8462 = vpack.c.b16 %v7950, %v7950
      %v8463 = vpack.c.b16 %v7951, %v7951
      %v8464 = vpack.c.b16 %v7952, %v7952
      %v8465 = vpack.c.b16 %v7953, %v7953
      %v8466 = vpack.c.b16 %v7954, %v7954
      %v8467 = vpack.c.b16 %v7955, %v7955
      %v8468 = vpack.c.b16 %v7956, %v7956
      %v8469 = vpack.c.b16 %v7957, %v7957
      %v8470 = vpack.c.b16 %v7958, %v7958
      %v8471 = vpack.c.b16 %v7959, %v7959
      %v8472 = vpack.c.b16 %v7960, %v7960
      %v8473 = vpack.c.b16 %v7961, %v7961
      %v8474 = vpack.c.b16 %v7962, %v7962
      %v8475 = vpack.c.b16 %v7963, %v7963
      %v8476 = vpack.c.b16 %v7964, %v7964
      %v8477 = vpack.c.b16 %v7965, %v7965
      %v8478 = vpack.c.b16 %v7966, %v7966
      %v8479 = vpack.c.b16 %v7967, %v7967
      %v8480 = vpack.c.b16 %v7968, %v7968
      %v8481 = vpack.c.b16 %v7969, %v7969
      %v8482 = vpack.c.b16 %v7970, %v7970
      %v8483 = vpack.c.b16 %v7971, %v7971
      %v8484 = vpack.c.b16 %v7972, %v7972
      %v8485 = vpack.c.b16 %v7973, %v7973
      %v8486 = vpack.c.b16 %v7974, %v7974
      %v8487 = vpack.c.b16 %v7975, %v7975
      %v8488 = vpack.c.b16 %v7976, %v7976
      %v8489 = vpack.c.b16 %v7977, %v7977
      %v8490 = vpack.c.b16 %v7978, %v7978
      %v8491 = vpack.c.b16 %v7979, %v7979
      %v8492 = vpack.c.b16 %v7980, %v7980
      %v8493 = vpack.c.b16 %v7981, %v7981
      %v8494 = vpack.c.b16 %v7982, %v7982
      %v8495 = vpack.c.b16 %v7983, %v7983
      %v8496 = vpack.c.b16 %v7984, %v7984
      %v8497 = vpack.c.b16 %v7985, %v7985
      %v8498 = vpack.c.b16 %v7986, %v7986
      %v8499 = vpack.c.b16 %v7987, %v7987
      %v8500 = vpack.c.b16 %v7988, %v7988
      %v8501 = vpack.c.b16 %v7989, %v7989
      %v8502 = vpack.c.b16 %v7990, %v7990
      %v8503 = vpack.c.b16 %v7991, %v7991
      %v8504 = vpack.c.b16 %v7992, %v7992
      %v8505 = vpack.c.b16 %v7993, %v7993
      %v8506 = vpack.c.b16 %v7994, %v7994
      %v8507 = vpack.c.b16 %v7995, %v7995
      %v8508 = vpack.c.b16 %v7996, %v7996
      %v8509 = vpack.c.b16 %v7997, %v7997
      %v8510 = vpack.c.b16 %v7998, %v7998
      %v8511 = vpack.c.b16 %v7999, %v7999
      %v8512 = vpack.c.b16 %v8000, %v8000
      %v8513 = vpack.c.b16 %v8001, %v8001
      %v8514 = vpack.c.b16 %v8002, %v8002
      %v8515 = vpack.c.b16 %v8003, %v8003
      %v8516 = vpack.c.b16 %v8004, %v8004
      %v8517 = vpack.c.b16 %v8005, %v8005
      %v8518 = vpack.c.b16 %v8006, %v8006
      %v8519 = vpack.c.b16 %v8007, %v8007
      %v8520 = vpack.c.b16 %v8008, %v8008
      %v8521 = vpack.c.b16 %v8009, %v8009
      %v8522 = vpack.c.b16 %v8010, %v8010
      %v8523 = vpack.c.b16 %v8011, %v8011
      %v8524 = vpack.c.b16 %v8012, %v8012
      %v8525 = vpack.c.b16 %v8013, %v8013
      %v8526 = vpack.c.b16 %v8014, %v8014
      %v8527 = vpack.c.b16 %v8015, %v8015
      %v8528 = vpack.c.b16 %v8016, %v8016
      %v8529 = vpack.c.b16 %v8017, %v8017
      %v8530 = vpack.c.b16 %v8018, %v8018
      %v8531 = vpack.c.b16 %v8019, %v8019
      %v8532 = vpack.c.b16 %v8020, %v8020
      %v8533 = vpack.c.b16 %v8021, %v8021
      %v8534 = vpack.c.b16 %v8022, %v8022
      %v8535 = vpack.c.b16 %v8023, %v8023
      %v8536 = vpack.c.b16 %v8024, %v8024
      %v8537 = vpack.c.b16 %v8025, %v8025
      %v8538 = vpack.c.b16 %v8026, %v8026
      %v8539 = vpack.c.b16 %v8027, %v8027
      %v8540 = vpack.c.b16 %v8028, %v8028
      %v8541 = vpack.c.b16 %v8029, %v8029
      %v8542 = vpack.c.b16 %v8030, %v8030
      %v8543 = vpack.c.b16 %v8031, %v8031
      %v8544 = vpack.c.b16 %v8032, %v8032
      %v8545 = vpack.c.b16 %v8033, %v8033
      %v8546 = vpack.c.b16 %v8034, %v8034
      %v8547 = vpack.c.b16 %v8035, %v8035
      %v8548 = vpack.c.b16 %v8036, %v8036
      %v8549 = vpack.c.b16 %v8037, %v8037
      %v8550 = vpack.c.b16 %v8038, %v8038
      %v8551 = vpack.c.b16 %v8039, %v8039
      %v8552 = vpack.c.b16 %v8040, %v8040
      %v8553 = vpack.c.b16 %v8041, %v8041
      %v8554 = vpack.c.b16 %v8042, %v8042
      %v8555 = vpack.c.b16 %v8043, %v8043
      %v8556 = vpack.c.b16 %v8044, %v8044
      %v8557 = vpack.c.b16 %v8045, %v8045
      %v8558 = vpack.c.b16 %v8046, %v8046
      %v8559 = vpack.c.b16 %v8047, %v8047
      %v8560 = vpack.c.b16 %v8048, %v8048
      %v8561 = vpack.c.b16 %v8049, %v8049
      %v8562 = vpack.c.b16 %v8050, %v8050
      %v8563 = vpack.c.b16 %v8051, %v8051
      %v8564 = vpack.c.b16 %v8052, %v8052
      %v8565 = vpack.c.b16 %v8053, %v8053
      %v8566 = vpack.c.b16 %v8054, %v8054
      %v8567 = vpack.c.b16 %v8055, %v8055
      %v8568 = vpack.c.b16 %v8056, %v8056
      %v8569 = vpack.c.b16 %v8057, %v8057
      %v8570 = vpack.c.b16 %v8058, %v8058
      %v8571 = vpack.c.b16 %v8059, %v8059
      %v8572 = vpack.c.b16 %v8060, %v8060
      %v8573 = vpack.c.b16 %v8061, %v8061
      %v8574 = vpack.c.b16 %v8062, %v8062
      %v8575 = vpack.c.b16 %v8063, %v8063
      %v8576 = vpack.c.b16 %v8064, %v8064
      %v8577 = vpack.c.b16 %v8065, %v8065
      %v8578 = vpack.c.b16 %v8066, %v8066
      %v8579 = vpack.c.b16 %v8067, %v8067
      %v8580 = vpack.c.b16 %v8068, %v8068
      %v8581 = vpack.c.b16 %v8069, %v8069
      %v8582 = vpack.c.b16 %v8070, %v8070
      %v8583 = vpack.c.b16 %v8071, %v8071
      %v8584 = vpack.c.b16 %v8072, %v8072
      %v8585 = vpack.c.b16 %v8073, %v8073
      %v8586 = vpack.c.b16 %v8074, %v8074
      %v8587 = vpack.c.b16 %v8075, %v8075
      %v8588 = vpack.c.b16 %v8076, %v8076
      %9101 = vst [vmem:[%s226] sm:$0xf] %v8077
      %9102 = vst [vmem:[%s226 + $0x4] sm:$0xf] %v8078
      %9103 = vst [vmem:[%s226 + $0x8] sm:$0xf] %v8079
      %9104 = vst [vmem:[%s226 + $0xc] sm:$0xf] %v8080
      %9105 = vst [vmem:[%s226 + $0x10] sm:$0xf] %v8081
      %9106 = vst [vmem:[%s226 + $0x14] sm:$0xf] %v8082
      %9107 = vst [vmem:[%s226 + $0x18] sm:$0xf] %v8083
      %9108 = vst [vmem:[%s226 + $0x1c] sm:$0xf] %v8084
      %9109 = vst [vmem:[%s226 + $0x20] sm:$0xf] %v8085
      %9110 = vst [vmem:[%s226 + $0x24] sm:$0xf] %v8086
      %9111 = vst [vmem:[%s226 + $0x28] sm:$0xf] %v8087
      %9112 = vst [vmem:[%s226 + $0x2c] sm:$0xf] %v8088
      %9113 = vst [vmem:[%s226 + $0x30] sm:$0xf] %v8089
      %9114 = vst [vmem:[%s226 + $0x34] sm:$0xf] %v8090
      %9115 = vst [vmem:[%s226 + $0x38] sm:$0xf] %v8091
      %9116 = vst [vmem:[%s226 + $0x3c] sm:$0xf] %v8092
      %9117 = vst [vmem:[%s226 + $0x40] sm:$0xf] %v8093
      %9118 = vst [vmem:[%s226 + $0x44] sm:$0xf] %v8094
      %9119 = vst [vmem:[%s226 + $0x48] sm:$0xf] %v8095
      %9120 = vst [vmem:[%s226 + $0x4c] sm:$0xf] %v8096
      %9121 = vst [vmem:[%s226 + $0x50] sm:$0xf] %v8097
      %9122 = vst [vmem:[%s226 + $0x54] sm:$0xf] %v8098
      %9123 = vst [vmem:[%s226 + $0x58] sm:$0xf] %v8099
      %9124 = vst [vmem:[%s226 + $0x5c] sm:$0xf] %v8100
      %9125 = vst [vmem:[%s226 + $0x60] sm:$0xf] %v8101
      %9126 = vst [vmem:[%s226 + $0x64] sm:$0xf] %v8102
      %9127 = vst [vmem:[%s226 + $0x68] sm:$0xf] %v8103
      %9128 = vst [vmem:[%s226 + $0x6c] sm:$0xf] %v8104
      %9129 = vst [vmem:[%s226 + $0x70] sm:$0xf] %v8105
      %9130 = vst [vmem:[%s226 + $0x74] sm:$0xf] %v8106
      %9131 = vst [vmem:[%s226 + $0x78] sm:$0xf] %v8107
      %9132 = vst [vmem:[%s226 + $0x7c] sm:$0xf] %v8108
      %9133 = vst [vmem:[%s226 + $0x80] sm:$0xf] %v8109
      %9134 = vst [vmem:[%s226 + $0x84] sm:$0xf] %v8110
      %9135 = vst [vmem:[%s226 + $0x88] sm:$0xf] %v8111
      %9136 = vst [vmem:[%s226 + $0x8c] sm:$0xf] %v8112
      %9137 = vst [vmem:[%s226 + $0x90] sm:$0xf] %v8113
      %9138 = vst [vmem:[%s226 + $0x94] sm:$0xf] %v8114
      %9139 = vst [vmem:[%s226 + $0x98] sm:$0xf] %v8115
      %9140 = vst [vmem:[%s226 + $0x9c] sm:$0xf] %v8116
      %9141 = vst [vmem:[%s226 + $0xa0] sm:$0xf] %v8117
      %9142 = vst [vmem:[%s226 + $0xa4] sm:$0xf] %v8118
      %9143 = vst [vmem:[%s226 + $0xa8] sm:$0xf] %v8119
      %9144 = vst [vmem:[%s226 + $0xac] sm:$0xf] %v8120
      %9145 = vst [vmem:[%s226 + $0xb0] sm:$0xf] %v8121
      %9146 = vst [vmem:[%s226 + $0xb4] sm:$0xf] %v8122
      %9147 = vst [vmem:[%s226 + $0xb8] sm:$0xf] %v8123
      %9148 = vst [vmem:[%s226 + $0xbc] sm:$0xf] %v8124
      %9149 = vst [vmem:[%s226 + $0xc0] sm:$0xf] %v8125
      %9150 = vst [vmem:[%s226 + $0xc4] sm:$0xf] %v8126
      %9151 = vst [vmem:[%s226 + $0xc8] sm:$0xf] %v8127
      %9152 = vst [vmem:[%s226 + $0xcc] sm:$0xf] %v8128
      %9153 = vst [vmem:[%s226 + $0xd0] sm:$0xf] %v8129
      %9154 = vst [vmem:[%s226 + $0xd4] sm:$0xf] %v8130
      %9155 = vst [vmem:[%s226 + $0xd8] sm:$0xf] %v8131
      %9156 = vst [vmem:[%s226 + $0xdc] sm:$0xf] %v8132
      %9157 = vst [vmem:[%s226 + $0xe0] sm:$0xf] %v8133
      %9158 = vst [vmem:[%s226 + $0xe4] sm:$0xf] %v8134
      %9159 = vst [vmem:[%s226 + $0xe8] sm:$0xf] %v8135
      %9160 = vst [vmem:[%s226 + $0xec] sm:$0xf] %v8136
      %9161 = vst [vmem:[%s226 + $0xf0] sm:$0xf] %v8137
      %9162 = vst [vmem:[%s226 + $0xf4] sm:$0xf] %v8138
      %9163 = vst [vmem:[%s226 + $0xf8] sm:$0xf] %v8139
      %9164 = vst [vmem:[%s226 + $0xfc] sm:$0xf] %v8140
      %9165 = vst [vmem:[%s226 + $0x100] sm:$0xf] %v8141
      %9166 = vst [vmem:[%s226 + $0x104] sm:$0xf] %v8142
      %9167 = vst [vmem:[%s226 + $0x108] sm:$0xf] %v8143
      %9168 = vst [vmem:[%s226 + $0x10c] sm:$0xf] %v8144
      %9169 = vst [vmem:[%s226 + $0x110] sm:$0xf] %v8145
      %9170 = vst [vmem:[%s226 + $0x114] sm:$0xf] %v8146
      %9171 = vst [vmem:[%s226 + $0x118] sm:$0xf] %v8147
      %9172 = vst [vmem:[%s226 + $0x11c] sm:$0xf] %v8148
      %9173 = vst [vmem:[%s226 + $0x120] sm:$0xf] %v8149
      %9174 = vst [vmem:[%s226 + $0x124] sm:$0xf] %v8150
      %9175 = vst [vmem:[%s226 + $0x128] sm:$0xf] %v8151
      %9176 = vst [vmem:[%s226 + $0x12c] sm:$0xf] %v8152
      %9177 = vst [vmem:[%s226 + $0x130] sm:$0xf] %v8153
      %9178 = vst [vmem:[%s226 + $0x134] sm:$0xf] %v8154
      %9179 = vst [vmem:[%s226 + $0x138] sm:$0xf] %v8155
      %9180 = vst [vmem:[%s226 + $0x13c] sm:$0xf] %v8156
      %9181 = vst [vmem:[%s226 + $0x140] sm:$0xf] %v8157
      %9182 = vst [vmem:[%s226 + $0x144] sm:$0xf] %v8158
      %9183 = vst [vmem:[%s226 + $0x148] sm:$0xf] %v8159
      %9184 = vst [vmem:[%s226 + $0x14c] sm:$0xf] %v8160
      %9185 = vst [vmem:[%s226 + $0x150] sm:$0xf] %v8161
      %9186 = vst [vmem:[%s226 + $0x154] sm:$0xf] %v8162
      %9187 = vst [vmem:[%s226 + $0x158] sm:$0xf] %v8163
      %9188 = vst [vmem:[%s226 + $0x15c] sm:$0xf] %v8164
      %9189 = vst [vmem:[%s226 + $0x160] sm:$0xf] %v8165
      %9190 = vst [vmem:[%s226 + $0x164] sm:$0xf] %v8166
      %9191 = vst [vmem:[%s226 + $0x168] sm:$0xf] %v8167
      %9192 = vst [vmem:[%s226 + $0x16c] sm:$0xf] %v8168
      %9193 = vst [vmem:[%s226 + $0x170] sm:$0xf] %v8169
      %9194 = vst [vmem:[%s226 + $0x174] sm:$0xf] %v8170
      %9195 = vst [vmem:[%s226 + $0x178] sm:$0xf] %v8171
      %9196 = vst [vmem:[%s226 + $0x17c] sm:$0xf] %v8172
      %9197 = vst [vmem:[%s226 + $0x180] sm:$0xf] %v8173
      %9198 = vst [vmem:[%s226 + $0x184] sm:$0xf] %v8174
      %9199 = vst [vmem:[%s226 + $0x188] sm:$0xf] %v8175
      %9200 = vst [vmem:[%s226 + $0x18c] sm:$0xf] %v8176
      %9201 = vst [vmem:[%s226 + $0x190] sm:$0xf] %v8177
      %9202 = vst [vmem:[%s226 + $0x194] sm:$0xf] %v8178
      %9203 = vst [vmem:[%s226 + $0x198] sm:$0xf] %v8179
      %9204 = vst [vmem:[%s226 + $0x19c] sm:$0xf] %v8180
      %9205 = vst [vmem:[%s226 + $0x1a0] sm:$0xf] %v8181
      %9206 = vst [vmem:[%s226 + $0x1a4] sm:$0xf] %v8182
      %9207 = vst [vmem:[%s226 + $0x1a8] sm:$0xf] %v8183
      %9208 = vst [vmem:[%s226 + $0x1ac] sm:$0xf] %v8184
      %9209 = vst [vmem:[%s226 + $0x1b0] sm:$0xf] %v8185
      %9210 = vst [vmem:[%s226 + $0x1b4] sm:$0xf] %v8186
      %9211 = vst [vmem:[%s226 + $0x1b8] sm:$0xf] %v8187
      %9212 = vst [vmem:[%s226 + $0x1bc] sm:$0xf] %v8188
      %9213 = vst [vmem:[%s226 + $0x1c0] sm:$0xf] %v8189
      %9214 = vst [vmem:[%s226 + $0x1c4] sm:$0xf] %v8190
      %9215 = vst [vmem:[%s226 + $0x1c8] sm:$0xf] %v8191
      %9216 = vst [vmem:[%s226 + $0x1cc] sm:$0xf] %v8192
      %9217 = vst [vmem:[%s226 + $0x1d0] sm:$0xf] %v8193
      %9218 = vst [vmem:[%s226 + $0x1d4] sm:$0xf] %v8194
      %9219 = vst [vmem:[%s226 + $0x1d8] sm:$0xf] %v8195
      %9220 = vst [vmem:[%s226 + $0x1dc] sm:$0xf] %v8196
      %9221 = vst [vmem:[%s226 + $0x1e0] sm:$0xf] %v8197
      %9222 = vst [vmem:[%s226 + $0x1e4] sm:$0xf] %v8198
      %9223 = vst [vmem:[%s226 + $0x1e8] sm:$0xf] %v8199
      %9224 = vst [vmem:[%s226 + $0x1ec] sm:$0xf] %v8200
      %9225 = vst [vmem:[%s226 + $0x1f0] sm:$0xf] %v8201
      %9226 = vst [vmem:[%s226 + $0x1f4] sm:$0xf] %v8202
      %9227 = vst [vmem:[%s226 + $0x1f8] sm:$0xf] %v8203
      %9228 = vst [vmem:[%s226 + $0x1fc] sm:$0xf] %v8204
      %9229 = vst [vmem:[%s226 + $0x200] sm:$0xf] %v8205
      %9230 = vst [vmem:[%s226 + $0x204] sm:$0xf] %v8206
      %9231 = vst [vmem:[%s226 + $0x208] sm:$0xf] %v8207
      %9232 = vst [vmem:[%s226 + $0x20c] sm:$0xf] %v8208
      %9233 = vst [vmem:[%s226 + $0x210] sm:$0xf] %v8209
      %9234 = vst [vmem:[%s226 + $0x214] sm:$0xf] %v8210
      %9235 = vst [vmem:[%s226 + $0x218] sm:$0xf] %v8211
      %9236 = vst [vmem:[%s226 + $0x21c] sm:$0xf] %v8212
      %9237 = vst [vmem:[%s226 + $0x220] sm:$0xf] %v8213
      %9238 = vst [vmem:[%s226 + $0x224] sm:$0xf] %v8214
      %9239 = vst [vmem:[%s226 + $0x228] sm:$0xf] %v8215
      %9240 = vst [vmem:[%s226 + $0x22c] sm:$0xf] %v8216
      %9241 = vst [vmem:[%s226 + $0x230] sm:$0xf] %v8217
      %9242 = vst [vmem:[%s226 + $0x234] sm:$0xf] %v8218
      %9243 = vst [vmem:[%s226 + $0x238] sm:$0xf] %v8219
      %9244 = vst [vmem:[%s226 + $0x23c] sm:$0xf] %v8220
      %9245 = vst [vmem:[%s226 + $0x240] sm:$0xf] %v8221
      %9246 = vst [vmem:[%s226 + $0x244] sm:$0xf] %v8222
      %9247 = vst [vmem:[%s226 + $0x248] sm:$0xf] %v8223
      %9248 = vst [vmem:[%s226 + $0x24c] sm:$0xf] %v8224
      %9249 = vst [vmem:[%s226 + $0x250] sm:$0xf] %v8225
      %9250 = vst [vmem:[%s226 + $0x254] sm:$0xf] %v8226
      %9251 = vst [vmem:[%s226 + $0x258] sm:$0xf] %v8227
      %9252 = vst [vmem:[%s226 + $0x25c] sm:$0xf] %v8228
      %9253 = vst [vmem:[%s226 + $0x260] sm:$0xf] %v8229
      %9254 = vst [vmem:[%s226 + $0x264] sm:$0xf] %v8230
      %9255 = vst [vmem:[%s226 + $0x268] sm:$0xf] %v8231
      %9256 = vst [vmem:[%s226 + $0x26c] sm:$0xf] %v8232
      %9257 = vst [vmem:[%s226 + $0x270] sm:$0xf] %v8233
      %9258 = vst [vmem:[%s226 + $0x274] sm:$0xf] %v8234
      %9259 = vst [vmem:[%s226 + $0x278] sm:$0xf] %v8235
      %9260 = vst [vmem:[%s226 + $0x27c] sm:$0xf] %v8236
      %9261 = vst [vmem:[%s226 + $0x280] sm:$0xf] %v8237
      %9262 = vst [vmem:[%s226 + $0x284] sm:$0xf] %v8238
      %9263 = vst [vmem:[%s226 + $0x288] sm:$0xf] %v8239
      %9264 = vst [vmem:[%s226 + $0x28c] sm:$0xf] %v8240
      %9265 = vst [vmem:[%s226 + $0x290] sm:$0xf] %v8241
      %9266 = vst [vmem:[%s226 + $0x294] sm:$0xf] %v8242
      %9267 = vst [vmem:[%s226 + $0x298] sm:$0xf] %v8243
      %9268 = vst [vmem:[%s226 + $0x29c] sm:$0xf] %v8244
      %9269 = vst [vmem:[%s226 + $0x2a0] sm:$0xf] %v8245
      %9270 = vst [vmem:[%s226 + $0x2a4] sm:$0xf] %v8246
      %9271 = vst [vmem:[%s226 + $0x2a8] sm:$0xf] %v8247
      %9272 = vst [vmem:[%s226 + $0x2ac] sm:$0xf] %v8248
      %9273 = vst [vmem:[%s226 + $0x2b0] sm:$0xf] %v8249
      %9274 = vst [vmem:[%s226 + $0x2b4] sm:$0xf] %v8250
      %9275 = vst [vmem:[%s226 + $0x2b8] sm:$0xf] %v8251
      %9276 = vst [vmem:[%s226 + $0x2bc] sm:$0xf] %v8252
      %9277 = vst [vmem:[%s226 + $0x2c0] sm:$0xf] %v8253
      %9278 = vst [vmem:[%s226 + $0x2c4] sm:$0xf] %v8254
      %9279 = vst [vmem:[%s226 + $0x2c8] sm:$0xf] %v8255
      %9280 = vst [vmem:[%s226 + $0x2cc] sm:$0xf] %v8256
      %9281 = vst [vmem:[%s226 + $0x2d0] sm:$0xf] %v8257
      %9282 = vst [vmem:[%s226 + $0x2d4] sm:$0xf] %v8258
      %9283 = vst [vmem:[%s226 + $0x2d8] sm:$0xf] %v8259
      %9284 = vst [vmem:[%s226 + $0x2dc] sm:$0xf] %v8260
      %9285 = vst [vmem:[%s226 + $0x2e0] sm:$0xf] %v8261
      %9286 = vst [vmem:[%s226 + $0x2e4] sm:$0xf] %v8262
      %9287 = vst [vmem:[%s226 + $0x2e8] sm:$0xf] %v8263
      %9288 = vst [vmem:[%s226 + $0x2ec] sm:$0xf] %v8264
      %9289 = vst [vmem:[%s226 + $0x2f0] sm:$0xf] %v8265
      %9290 = vst [vmem:[%s226 + $0x2f4] sm:$0xf] %v8266
      %9291 = vst [vmem:[%s226 + $0x2f8] sm:$0xf] %v8267
      %9292 = vst [vmem:[%s226 + $0x2fc] sm:$0xf] %v8268
      %9293 = vst [vmem:[%s226 + $0x300] sm:$0xf] %v8269
      %9294 = vst [vmem:[%s226 + $0x304] sm:$0xf] %v8270
      %9295 = vst [vmem:[%s226 + $0x308] sm:$0xf] %v8271
      %9296 = vst [vmem:[%s226 + $0x30c] sm:$0xf] %v8272
      %9297 = vst [vmem:[%s226 + $0x310] sm:$0xf] %v8273
      %9298 = vst [vmem:[%s226 + $0x314] sm:$0xf] %v8274
      %9299 = vst [vmem:[%s226 + $0x318] sm:$0xf] %v8275
      %9300 = vst [vmem:[%s226 + $0x31c] sm:$0xf] %v8276
      %9301 = vst [vmem:[%s226 + $0x320] sm:$0xf] %v8277
      %9302 = vst [vmem:[%s226 + $0x324] sm:$0xf] %v8278
      %9303 = vst [vmem:[%s226 + $0x328] sm:$0xf] %v8279
      %9304 = vst [vmem:[%s226 + $0x32c] sm:$0xf] %v8280
      %9305 = vst [vmem:[%s226 + $0x330] sm:$0xf] %v8281
      %9306 = vst [vmem:[%s226 + $0x334] sm:$0xf] %v8282
      %9307 = vst [vmem:[%s226 + $0x338] sm:$0xf] %v8283
      %9308 = vst [vmem:[%s226 + $0x33c] sm:$0xf] %v8284
      %9309 = vst [vmem:[%s226 + $0x340] sm:$0xf] %v8285
      %9310 = vst [vmem:[%s226 + $0x344] sm:$0xf] %v8286
      %9311 = vst [vmem:[%s226 + $0x348] sm:$0xf] %v8287
      %9312 = vst [vmem:[%s226 + $0x34c] sm:$0xf] %v8288
      %9313 = vst [vmem:[%s226 + $0x350] sm:$0xf] %v8289
      %9314 = vst [vmem:[%s226 + $0x354] sm:$0xf] %v8290
      %9315 = vst [vmem:[%s226 + $0x358] sm:$0xf] %v8291
      %9316 = vst [vmem:[%s226 + $0x35c] sm:$0xf] %v8292
      %9317 = vst [vmem:[%s226 + $0x360] sm:$0xf] %v8293
      %9318 = vst [vmem:[%s226 + $0x364] sm:$0xf] %v8294
      %9319 = vst [vmem:[%s226 + $0x368] sm:$0xf] %v8295
      %9320 = vst [vmem:[%s226 + $0x36c] sm:$0xf] %v8296
      %9321 = vst [vmem:[%s226 + $0x370] sm:$0xf] %v8297
      %9322 = vst [vmem:[%s226 + $0x374] sm:$0xf] %v8298
      %9323 = vst [vmem:[%s226 + $0x378] sm:$0xf] %v8299
      %9324 = vst [vmem:[%s226 + $0x37c] sm:$0xf] %v8300
      %9325 = vst [vmem:[%s226 + $0x380] sm:$0xf] %v8301
      %9326 = vst [vmem:[%s226 + $0x384] sm:$0xf] %v8302
      %9327 = vst [vmem:[%s226 + $0x388] sm:$0xf] %v8303
      %9328 = vst [vmem:[%s226 + $0x38c] sm:$0xf] %v8304
      %9329 = vst [vmem:[%s226 + $0x390] sm:$0xf] %v8305
      %9330 = vst [vmem:[%s226 + $0x394] sm:$0xf] %v8306
      %9331 = vst [vmem:[%s226 + $0x398] sm:$0xf] %v8307
      %9332 = vst [vmem:[%s226 + $0x39c] sm:$0xf] %v8308
      %9333 = vst [vmem:[%s226 + $0x3a0] sm:$0xf] %v8309
      %9334 = vst [vmem:[%s226 + $0x3a4] sm:$0xf] %v8310
      %9335 = vst [vmem:[%s226 + $0x3a8] sm:$0xf] %v8311
      %9336 = vst [vmem:[%s226 + $0x3ac] sm:$0xf] %v8312
      %9337 = vst [vmem:[%s226 + $0x3b0] sm:$0xf] %v8313
      %9338 = vst [vmem:[%s226 + $0x3b4] sm:$0xf] %v8314
      %9339 = vst [vmem:[%s226 + $0x3b8] sm:$0xf] %v8315
      %9340 = vst [vmem:[%s226 + $0x3bc] sm:$0xf] %v8316
      %9341 = vst [vmem:[%s226 + $0x3c0] sm:$0xf] %v8317
      %9342 = vst [vmem:[%s226 + $0x3c4] sm:$0xf] %v8318
      %9343 = vst [vmem:[%s226 + $0x3c8] sm:$0xf] %v8319
      %9344 = vst [vmem:[%s226 + $0x3cc] sm:$0xf] %v8320
      %9345 = vst [vmem:[%s226 + $0x3d0] sm:$0xf] %v8321
      %9346 = vst [vmem:[%s226 + $0x3d4] sm:$0xf] %v8322
      %9347 = vst [vmem:[%s226 + $0x3d8] sm:$0xf] %v8323
      %9348 = vst [vmem:[%s226 + $0x3dc] sm:$0xf] %v8324
      %9349 = vst [vmem:[%s226 + $0x3e0] sm:$0xf] %v8325
      %9350 = vst [vmem:[%s226 + $0x3e4] sm:$0xf] %v8326
      %9351 = vst [vmem:[%s226 + $0x3e8] sm:$0xf] %v8327
      %9352 = vst [vmem:[%s226 + $0x3ec] sm:$0xf] %v8328
      %9353 = vst [vmem:[%s226 + $0x3f0] sm:$0xf] %v8329
      %9354 = vst [vmem:[%s226 + $0x3f4] sm:$0xf] %v8330
      %9355 = vst [vmem:[%s226 + $0x3f8] sm:$0xf] %v8331
      %9356 = vst [vmem:[%s226 + $0x3fc] sm:$0xf] %v8332
      %9357 = vst [vmem:[%s226 + $0x400] sm:$0xf] %v8333
      %9358 = vst [vmem:[%s226 + $0x404] sm:$0xf] %v8334
      %9359 = vst [vmem:[%s226 + $0x408] sm:$0xf] %v8335
      %9360 = vst [vmem:[%s226 + $0x40c] sm:$0xf] %v8336
      %9361 = vst [vmem:[%s226 + $0x410] sm:$0xf] %v8337
      %9362 = vst [vmem:[%s226 + $0x414] sm:$0xf] %v8338
      %9363 = vst [vmem:[%s226 + $0x418] sm:$0xf] %v8339
      %9364 = vst [vmem:[%s226 + $0x41c] sm:$0xf] %v8340
      %9365 = vst [vmem:[%s226 + $0x420] sm:$0xf] %v8341
      %9366 = vst [vmem:[%s226 + $0x424] sm:$0xf] %v8342
      %9367 = vst [vmem:[%s226 + $0x428] sm:$0xf] %v8343
      %9368 = vst [vmem:[%s226 + $0x42c] sm:$0xf] %v8344
      %9369 = vst [vmem:[%s226 + $0x430] sm:$0xf] %v8345
      %9370 = vst [vmem:[%s226 + $0x434] sm:$0xf] %v8346
      %9371 = vst [vmem:[%s226 + $0x438] sm:$0xf] %v8347
      %9372 = vst [vmem:[%s226 + $0x43c] sm:$0xf] %v8348
      %9373 = vst [vmem:[%s226 + $0x440] sm:$0xf] %v8349
      %9374 = vst [vmem:[%s226 + $0x444] sm:$0xf] %v8350
      %9375 = vst [vmem:[%s226 + $0x448] sm:$0xf] %v8351
      %9376 = vst [vmem:[%s226 + $0x44c] sm:$0xf] %v8352
      %9377 = vst [vmem:[%s226 + $0x450] sm:$0xf] %v8353
      %9378 = vst [vmem:[%s226 + $0x454] sm:$0xf] %v8354
      %9379 = vst [vmem:[%s226 + $0x458] sm:$0xf] %v8355
      %9380 = vst [vmem:[%s226 + $0x45c] sm:$0xf] %v8356
      %9381 = vst [vmem:[%s226 + $0x460] sm:$0xf] %v8357
      %9382 = vst [vmem:[%s226 + $0x464] sm:$0xf] %v8358
      %9383 = vst [vmem:[%s226 + $0x468] sm:$0xf] %v8359
      %9384 = vst [vmem:[%s226 + $0x46c] sm:$0xf] %v8360
      %9385 = vst [vmem:[%s226 + $0x470] sm:$0xf] %v8361
      %9386 = vst [vmem:[%s226 + $0x474] sm:$0xf] %v8362
      %9387 = vst [vmem:[%s226 + $0x478] sm:$0xf] %v8363
      %9388 = vst [vmem:[%s226 + $0x47c] sm:$0xf] %v8364
      %9389 = vst [vmem:[%s226 + $0x480] sm:$0xf] %v8365
      %9390 = vst [vmem:[%s226 + $0x484] sm:$0xf] %v8366
      %9391 = vst [vmem:[%s226 + $0x488] sm:$0xf] %v8367
      %9392 = vst [vmem:[%s226 + $0x48c] sm:$0xf] %v8368
      %9393 = vst [vmem:[%s226 + $0x490] sm:$0xf] %v8369
      %9394 = vst [vmem:[%s226 + $0x494] sm:$0xf] %v8370
      %9395 = vst [vmem:[%s226 + $0x498] sm:$0xf] %v8371
      %9396 = vst [vmem:[%s226 + $0x49c] sm:$0xf] %v8372
      %9397 = vst [vmem:[%s226 + $0x4a0] sm:$0xf] %v8373
      %9398 = vst [vmem:[%s226 + $0x4a4] sm:$0xf] %v8374
      %9399 = vst [vmem:[%s226 + $0x4a8] sm:$0xf] %v8375
      %9400 = vst [vmem:[%s226 + $0x4ac] sm:$0xf] %v8376
      %9401 = vst [vmem:[%s226 + $0x4b0] sm:$0xf] %v8377
      %9402 = vst [vmem:[%s226 + $0x4b4] sm:$0xf] %v8378
      %9403 = vst [vmem:[%s226 + $0x4b8] sm:$0xf] %v8379
      %9404 = vst [vmem:[%s226 + $0x4bc] sm:$0xf] %v8380
      %9405 = vst [vmem:[%s226 + $0x4c0] sm:$0xf] %v8381
      %9406 = vst [vmem:[%s226 + $0x4c4] sm:$0xf] %v8382
      %9407 = vst [vmem:[%s226 + $0x4c8] sm:$0xf] %v8383
      %9408 = vst [vmem:[%s226 + $0x4cc] sm:$0xf] %v8384
      %9409 = vst [vmem:[%s226 + $0x4d0] sm:$0xf] %v8385
      %9410 = vst [vmem:[%s226 + $0x4d4] sm:$0xf] %v8386
      %9411 = vst [vmem:[%s226 + $0x4d8] sm:$0xf] %v8387
      %9412 = vst [vmem:[%s226 + $0x4dc] sm:$0xf] %v8388
      %9413 = vst [vmem:[%s226 + $0x4e0] sm:$0xf] %v8389
      %9414 = vst [vmem:[%s226 + $0x4e4] sm:$0xf] %v8390
      %9415 = vst [vmem:[%s226 + $0x4e8] sm:$0xf] %v8391
      %9416 = vst [vmem:[%s226 + $0x4ec] sm:$0xf] %v8392
      %9417 = vst [vmem:[%s226 + $0x4f0] sm:$0xf] %v8393
      %9418 = vst [vmem:[%s226 + $0x4f4] sm:$0xf] %v8394
      %9419 = vst [vmem:[%s226 + $0x4f8] sm:$0xf] %v8395
      %9420 = vst [vmem:[%s226 + $0x4fc] sm:$0xf] %v8396
      %9421 = vst [vmem:[%s226 + $0x500] sm:$0xf] %v8397
      %9422 = vst [vmem:[%s226 + $0x504] sm:$0xf] %v8398
      %9423 = vst [vmem:[%s226 + $0x508] sm:$0xf] %v8399
      %9424 = vst [vmem:[%s226 + $0x50c] sm:$0xf] %v8400
      %9425 = vst [vmem:[%s226 + $0x510] sm:$0xf] %v8401
      %9426 = vst [vmem:[%s226 + $0x514] sm:$0xf] %v8402
      %9427 = vst [vmem:[%s226 + $0x518] sm:$0xf] %v8403
      %9428 = vst [vmem:[%s226 + $0x51c] sm:$0xf] %v8404
      %9429 = vst [vmem:[%s226 + $0x520] sm:$0xf] %v8405
      %9430 = vst [vmem:[%s226 + $0x524] sm:$0xf] %v8406
      %9431 = vst [vmem:[%s226 + $0x528] sm:$0xf] %v8407
      %9432 = vst [vmem:[%s226 + $0x52c] sm:$0xf] %v8408
      %9433 = vst [vmem:[%s226 + $0x530] sm:$0xf] %v8409
      %9434 = vst [vmem:[%s226 + $0x534] sm:$0xf] %v8410
      %9435 = vst [vmem:[%s226 + $0x538] sm:$0xf] %v8411
      %9436 = vst [vmem:[%s226 + $0x53c] sm:$0xf] %v8412
      %9437 = vst [vmem:[%s226 + $0x540] sm:$0xf] %v8413
      %9438 = vst [vmem:[%s226 + $0x544] sm:$0xf] %v8414
      %9439 = vst [vmem:[%s226 + $0x548] sm:$0xf] %v8415
      %9440 = vst [vmem:[%s226 + $0x54c] sm:$0xf] %v8416
      %9441 = vst [vmem:[%s226 + $0x550] sm:$0xf] %v8417
      %9442 = vst [vmem:[%s226 + $0x554] sm:$0xf] %v8418
      %9443 = vst [vmem:[%s226 + $0x558] sm:$0xf] %v8419
      %9444 = vst [vmem:[%s226 + $0x55c] sm:$0xf] %v8420
      %9445 = vst [vmem:[%s226 + $0x560] sm:$0xf] %v8421
      %9446 = vst [vmem:[%s226 + $0x564] sm:$0xf] %v8422
      %9447 = vst [vmem:[%s226 + $0x568] sm:$0xf] %v8423
      %9448 = vst [vmem:[%s226 + $0x56c] sm:$0xf] %v8424
      %9449 = vst [vmem:[%s226 + $0x570] sm:$0xf] %v8425
      %9450 = vst [vmem:[%s226 + $0x574] sm:$0xf] %v8426
      %9451 = vst [vmem:[%s226 + $0x578] sm:$0xf] %v8427
      %9452 = vst [vmem:[%s226 + $0x57c] sm:$0xf] %v8428
      %9453 = vst [vmem:[%s226 + $0x580] sm:$0xf] %v8429
      %9454 = vst [vmem:[%s226 + $0x584] sm:$0xf] %v8430
      %9455 = vst [vmem:[%s226 + $0x588] sm:$0xf] %v8431
      %9456 = vst [vmem:[%s226 + $0x58c] sm:$0xf] %v8432
      %9457 = vst [vmem:[%s226 + $0x590] sm:$0xf] %v8433
      %9458 = vst [vmem:[%s226 + $0x594] sm:$0xf] %v8434
      %9459 = vst [vmem:[%s226 + $0x598] sm:$0xf] %v8435
      %9460 = vst [vmem:[%s226 + $0x59c] sm:$0xf] %v8436
      %9461 = vst [vmem:[%s226 + $0x5a0] sm:$0xf] %v8437
      %9462 = vst [vmem:[%s226 + $0x5a4] sm:$0xf] %v8438
      %9463 = vst [vmem:[%s226 + $0x5a8] sm:$0xf] %v8439
      %9464 = vst [vmem:[%s226 + $0x5ac] sm:$0xf] %v8440
      %9465 = vst [vmem:[%s226 + $0x5b0] sm:$0xf] %v8441
      %9466 = vst [vmem:[%s226 + $0x5b4] sm:$0xf] %v8442
      %9467 = vst [vmem:[%s226 + $0x5b8] sm:$0xf] %v8443
      %9468 = vst [vmem:[%s226 + $0x5bc] sm:$0xf] %v8444
      %9469 = vst [vmem:[%s226 + $0x5c0] sm:$0xf] %v8445
      %9470 = vst [vmem:[%s226 + $0x5c4] sm:$0xf] %v8446
      %9471 = vst [vmem:[%s226 + $0x5c8] sm:$0xf] %v8447
      %9472 = vst [vmem:[%s226 + $0x5cc] sm:$0xf] %v8448
      %9473 = vst [vmem:[%s226 + $0x5d0] sm:$0xf] %v8449
      %9474 = vst [vmem:[%s226 + $0x5d4] sm:$0xf] %v8450
      %9475 = vst [vmem:[%s226 + $0x5d8] sm:$0xf] %v8451
      %9476 = vst [vmem:[%s226 + $0x5dc] sm:$0xf] %v8452
      %9477 = vst [vmem:[%s226 + $0x5e0] sm:$0xf] %v8453
      %9478 = vst [vmem:[%s226 + $0x5e4] sm:$0xf] %v8454
      %9479 = vst [vmem:[%s226 + $0x5e8] sm:$0xf] %v8455
      %9480 = vst [vmem:[%s226 + $0x5ec] sm:$0xf] %v8456
      %9481 = vst [vmem:[%s226 + $0x5f0] sm:$0xf] %v8457
      %9482 = vst [vmem:[%s226 + $0x5f4] sm:$0xf] %v8458
      %9483 = vst [vmem:[%s226 + $0x5f8] sm:$0xf] %v8459
      %9484 = vst [vmem:[%s226 + $0x5fc] sm:$0xf] %v8460
      %9485 = vst [vmem:[%s226 + $0x600] sm:$0xf] %v8461
      %9486 = vst [vmem:[%s226 + $0x604] sm:$0xf] %v8462
      %9487 = vst [vmem:[%s226 + $0x608] sm:$0xf] %v8463
      %9488 = vst [vmem:[%s226 + $0x60c] sm:$0xf] %v8464
      %9489 = vst [vmem:[%s226 + $0x610] sm:$0xf] %v8465
      %9490 = vst [vmem:[%s226 + $0x614] sm:$0xf] %v8466
      %9491 = vst [vmem:[%s226 + $0x618] sm:$0xf] %v8467
      %9492 = vst [vmem:[%s226 + $0x61c] sm:$0xf] %v8468
      %9493 = vst [vmem:[%s226 + $0x620] sm:$0xf] %v8469
      %9494 = vst [vmem:[%s226 + $0x624] sm:$0xf] %v8470
      %9495 = vst [vmem:[%s226 + $0x628] sm:$0xf] %v8471
      %9496 = vst [vmem:[%s226 + $0x62c] sm:$0xf] %v8472
      %9497 = vst [vmem:[%s226 + $0x630] sm:$0xf] %v8473
      %9498 = vst [vmem:[%s226 + $0x634] sm:$0xf] %v8474
      %9499 = vst [vmem:[%s226 + $0x638] sm:$0xf] %v8475
      %9500 = vst [vmem:[%s226 + $0x63c] sm:$0xf] %v8476
      %9501 = vst [vmem:[%s226 + $0x640] sm:$0xf] %v8477
      %9502 = vst [vmem:[%s226 + $0x644] sm:$0xf] %v8478
      %9503 = vst [vmem:[%s226 + $0x648] sm:$0xf] %v8479
      %9504 = vst [vmem:[%s226 + $0x64c] sm:$0xf] %v8480
      %9505 = vst [vmem:[%s226 + $0x650] sm:$0xf] %v8481
      %9506 = vst [vmem:[%s226 + $0x654] sm:$0xf] %v8482
      %9507 = vst [vmem:[%s226 + $0x658] sm:$0xf] %v8483
      %9508 = vst [vmem:[%s226 + $0x65c] sm:$0xf] %v8484
      %9509 = vst [vmem:[%s226 + $0x660] sm:$0xf] %v8485
      %9510 = vst [vmem:[%s226 + $0x664] sm:$0xf] %v8486
      %9511 = vst [vmem:[%s226 + $0x668] sm:$0xf] %v8487
      %9512 = vst [vmem:[%s226 + $0x66c] sm:$0xf] %v8488
      %9513 = vst [vmem:[%s226 + $0x670] sm:$0xf] %v8489
      %9514 = vst [vmem:[%s226 + $0x674] sm:$0xf] %v8490
      %9515 = vst [vmem:[%s226 + $0x678] sm:$0xf] %v8491
      %9516 = vst [vmem:[%s226 + $0x67c] sm:$0xf] %v8492
      %9517 = vst [vmem:[%s226 + $0x680] sm:$0xf] %v8493
      %9518 = vst [vmem:[%s226 + $0x684] sm:$0xf] %v8494
      %9519 = vst [vmem:[%s226 + $0x688] sm:$0xf] %v8495
      %9520 = vst [vmem:[%s226 + $0x68c] sm:$0xf] %v8496
      %9521 = vst [vmem:[%s226 + $0x690] sm:$0xf] %v8497
      %9522 = vst [vmem:[%s226 + $0x694] sm:$0xf] %v8498
      %9523 = vst [vmem:[%s226 + $0x698] sm:$0xf] %v8499
      %9524 = vst [vmem:[%s226 + $0x69c] sm:$0xf] %v8500
      %9525 = vst [vmem:[%s226 + $0x6a0] sm:$0xf] %v8501
      %9526 = vst [vmem:[%s226 + $0x6a4] sm:$0xf] %v8502
      %9527 = vst [vmem:[%s226 + $0x6a8] sm:$0xf] %v8503
      %9528 = vst [vmem:[%s226 + $0x6ac] sm:$0xf] %v8504
      %9529 = vst [vmem:[%s226 + $0x6b0] sm:$0xf] %v8505
      %9530 = vst [vmem:[%s226 + $0x6b4] sm:$0xf] %v8506
      %9531 = vst [vmem:[%s226 + $0x6b8] sm:$0xf] %v8507
      %9532 = vst [vmem:[%s226 + $0x6bc] sm:$0xf] %v8508
      %9533 = vst [vmem:[%s226 + $0x6c0] sm:$0xf] %v8509
      %9534 = vst [vmem:[%s226 + $0x6c4] sm:$0xf] %v8510
      %9535 = vst [vmem:[%s226 + $0x6c8] sm:$0xf] %v8511
      %9536 = vst [vmem:[%s226 + $0x6cc] sm:$0xf] %v8512
      %9537 = vst [vmem:[%s226 + $0x6d0] sm:$0xf] %v8513
      %9538 = vst [vmem:[%s226 + $0x6d4] sm:$0xf] %v8514
      %9539 = vst [vmem:[%s226 + $0x6d8] sm:$0xf] %v8515
      %9540 = vst [vmem:[%s226 + $0x6dc] sm:$0xf] %v8516
      %9541 = vst [vmem:[%s226 + $0x6e0] sm:$0xf] %v8517
      %9542 = vst [vmem:[%s226 + $0x6e4] sm:$0xf] %v8518
      %9543 = vst [vmem:[%s226 + $0x6e8] sm:$0xf] %v8519
      %9544 = vst [vmem:[%s226 + $0x6ec] sm:$0xf] %v8520
      %9545 = vst [vmem:[%s226 + $0x6f0] sm:$0xf] %v8521
      %9546 = vst [vmem:[%s226 + $0x6f4] sm:$0xf] %v8522
      %9547 = vst [vmem:[%s226 + $0x6f8] sm:$0xf] %v8523
      %9548 = vst [vmem:[%s226 + $0x6fc] sm:$0xf] %v8524
      %9549 = vst [vmem:[%s226 + $0x700] sm:$0xf] %v8525
      %9550 = vst [vmem:[%s226 + $0x704] sm:$0xf] %v8526
      %9551 = vst [vmem:[%s226 + $0x708] sm:$0xf] %v8527
      %9552 = vst [vmem:[%s226 + $0x70c] sm:$0xf] %v8528
      %9553 = vst [vmem:[%s226 + $0x710] sm:$0xf] %v8529
      %9554 = vst [vmem:[%s226 + $0x714] sm:$0xf] %v8530
      %9555 = vst [vmem:[%s226 + $0x718] sm:$0xf] %v8531
      %9556 = vst [vmem:[%s226 + $0x71c] sm:$0xf] %v8532
      %9557 = vst [vmem:[%s226 + $0x720] sm:$0xf] %v8533
      %9558 = vst [vmem:[%s226 + $0x724] sm:$0xf] %v8534
      %9559 = vst [vmem:[%s226 + $0x728] sm:$0xf] %v8535
      %9560 = vst [vmem:[%s226 + $0x72c] sm:$0xf] %v8536
      %9561 = vst [vmem:[%s226 + $0x730] sm:$0xf] %v8537
      %9562 = vst [vmem:[%s226 + $0x734] sm:$0xf] %v8538
      %9563 = vst [vmem:[%s226 + $0x738] sm:$0xf] %v8539
      %9564 = vst [vmem:[%s226 + $0x73c] sm:$0xf] %v8540
      %9565 = vst [vmem:[%s226 + $0x740] sm:$0xf] %v8541
      %9566 = vst [vmem:[%s226 + $0x744] sm:$0xf] %v8542
      %9567 = vst [vmem:[%s226 + $0x748] sm:$0xf] %v8543
      %9568 = vst [vmem:[%s226 + $0x74c] sm:$0xf] %v8544
      %9569 = vst [vmem:[%s226 + $0x750] sm:$0xf] %v8545
      %9570 = vst [vmem:[%s226 + $0x754] sm:$0xf] %v8546
      %9571 = vst [vmem:[%s226 + $0x758] sm:$0xf] %v8547
      %9572 = vst [vmem:[%s226 + $0x75c] sm:$0xf] %v8548
      %9573 = vst [vmem:[%s226 + $0x760] sm:$0xf] %v8549
      %9574 = vst [vmem:[%s226 + $0x764] sm:$0xf] %v8550
      %9575 = vst [vmem:[%s226 + $0x768] sm:$0xf] %v8551
      %9576 = vst [vmem:[%s226 + $0x76c] sm:$0xf] %v8552
      %9577 = vst [vmem:[%s226 + $0x770] sm:$0xf] %v8553
      %9578 = vst [vmem:[%s226 + $0x774] sm:$0xf] %v8554
      %9579 = vst [vmem:[%s226 + $0x778] sm:$0xf] %v8555
      %9580 = vst [vmem:[%s226 + $0x77c] sm:$0xf] %v8556
      %9581 = vst [vmem:[%s226 + $0x780] sm:$0xf] %v8557
      %9582 = vst [vmem:[%s226 + $0x784] sm:$0xf] %v8558
      %9583 = vst [vmem:[%s226 + $0x788] sm:$0xf] %v8559
      %9584 = vst [vmem:[%s226 + $0x78c] sm:$0xf] %v8560
      %9585 = vst [vmem:[%s226 + $0x790] sm:$0xf] %v8561
      %9586 = vst [vmem:[%s226 + $0x794] sm:$0xf] %v8562
      %9587 = vst [vmem:[%s226 + $0x798] sm:$0xf] %v8563
      %9588 = vst [vmem:[%s226 + $0x79c] sm:$0xf] %v8564
      %9589 = vst [vmem:[%s226 + $0x7a0] sm:$0xf] %v8565
      %9590 = vst [vmem:[%s226 + $0x7a4] sm:$0xf] %v8566
      %9591 = vst [vmem:[%s226 + $0x7a8] sm:$0xf] %v8567
      %9592 = vst [vmem:[%s226 + $0x7ac] sm:$0xf] %v8568
      %9593 = vst [vmem:[%s226 + $0x7b0] sm:$0xf] %v8569
      %9594 = vst [vmem:[%s226 + $0x7b4] sm:$0xf] %v8570
      %9595 = vst [vmem:[%s226 + $0x7b8] sm:$0xf] %v8571
      %9596 = vst [vmem:[%s226 + $0x7bc] sm:$0xf] %v8572
      %9597 = vst [vmem:[%s226 + $0x7c0] sm:$0xf] %v8573
      %9598 = vst [vmem:[%s226 + $0x7c4] sm:$0xf] %v8574
      %9599 = vst [vmem:[%s226 + $0x7c8] sm:$0xf] %v8575
      %9600 = vst [vmem:[%s226 + $0x7cc] sm:$0xf] %v8576
      %9601 = vst [vmem:[%s226 + $0x7d0] sm:$0xf] %v8577
      %9602 = vst [vmem:[%s226 + $0x7d4] sm:$0xf] %v8578
      %9603 = vst [vmem:[%s226 + $0x7d8] sm:$0xf] %v8579
      %9604 = vst [vmem:[%s226 + $0x7dc] sm:$0xf] %v8580
      %9605 = vst [vmem:[%s226 + $0x7e0] sm:$0xf] %v8581
      %9606 = vst [vmem:[%s226 + $0x7e4] sm:$0xf] %v8582
      %9607 = vst [vmem:[%s226 + $0x7e8] sm:$0xf] %v8583
      %9608 = vst [vmem:[%s226 + $0x7ec] sm:$0xf] %v8584
      %9609 = vst [vmem:[%s226 + $0x7f0] sm:$0xf] %v8585
      %9610 = vst [vmem:[%s226 + $0x7f4] sm:$0xf] %v8586
      %9611 = vst [vmem:[%s226 + $0x7f8] sm:$0xf] %v8587
      %9612 = vst [vmem:[%s226 + $0x7fc] sm:$0xf] %v8588
      %s9613 = smul.u32 512, %s18
      %p9614 = scmp.lt.s32.totalorder %s9613, 1023
      %s9615 = scalar_select %p9614, %s9613, 1023
      %p9616 = scmp.lt.s32.totalorder %s19, 0
      %s9617 = scalar_select %p9616, %s19, 0
      %s9618 = sadd.s32 %s9617, %s9615
      %s9619 = smul.addr %s9618, 4
      %s9620 = scalar_lea.vmem %s3, %s9619
      // Predicated region
      $region33: #{codegan_discriminator_forward.3} parent=31 // pred_check
        %p9621 = pneg %p124
      $region34: #{codegan_discriminator_forward.3} parent=31 // pred_check_branch
        %9623 = sbr.rel (%p9621) target = $region36
      $region35: #{codegan_discriminator_forward.3} parent=31 // pred_region
        %s9624 = smul.u32 512, %s18
      $region36: #{codegan_discriminator_forward.3} parent=31 // pred_fallthru
        _
    $region32: #{codegan_discriminator_forward.3} parent=5 // pred_fallthru
      _
    %p9625 = scmp.le.s32.totalorder 2, %s9
    // Predicated region
    $region37: #{codegan_discriminator_forward.3} parent=5 // pred_check
      %p9626 = pneg %p9625
    $region38: #{codegan_discriminator_forward.3} parent=5 // pred_check_branch
      %9628 = sbr.rel (%p9626) target = $region40
    $region39: #{codegan_discriminator_forward.3} parent=5 // pred_region
      %s9629 = ssub.s32 %s9, 2
      // Predicated region
      $region41: #{codegan_discriminator_forward.3} parent=39 // pred_check
        %p9630 = pneg %p130
      $region42: #{codegan_discriminator_forward.3} parent=39 // pred_check_branch
        %9632 = sbr.rel (%p9630) target = $region44
      $region43: #{codegan_discriminator_forward.3} parent=39 // pred_region
        %s9633 = smul.u32 512, %s20
        %p9634 = scmp.lt.s32.totalorder %s9633, 1023
        %s9635 = scalar_select %p9634, %s9633, 1023
        %p9636 = scmp.lt.s32.totalorder %s21, 0
        %s9637 = scalar_select %p9636, %s21, 0
        %s9638 = sadd.s32 %s9637, %s9635
        %s9639 = smul.addr %s9638, 4
        %s9640 = scalar_lea.vmem %s3, %s9639
      $region44: #{codegan_discriminator_forward.3} parent=39 // pred_fallthru
        _
    $region40: #{codegan_discriminator_forward.3} parent=5 // pred_fallthru
      _
  $region6: #{codegan_discriminator_forward.3} parent=0 // loop_footer
    %s13 = sadd.s32 1, %s9
  $region7: #{codegan_discriminator_forward.3} parent=0 // loop_footer_branch
    %8 = sbr.rel target = $region3
  $region8: #{codegan_discriminator_forward.3} parent=0 // loop_exit
    _

// kernel: codegan_discriminator_forward.4
$region0: #{codegan_discriminator_forward.4}
  #allocation0 [shape = 'u32[]', space=smem, size = 0x4, offset = 0x4, fixed_abs, tag = 'smem constant byte address 0x4 - core index']
  #allocation1 [shape = 'u32[144,128]{1,0:T(1,128)}', space=vmem, size = 0x12000, scoped, tag = 'internal scratch']
  %s0 = inlined_call_operand.vmem [shape: bf16[2048,128], index: 0, kind: input, shape index: {}]
  %s1 = inlined_call_operand.vmem [shape: bf16[128,128], index: 1, kind: input, shape index: {}]
  %s2 = inlined_call_operand.vmem [shape: f32[1,128], index: 2, kind: input, shape index: {}]
  %s3 = inlined_call_operand.vmem [shape: bf16[2048,128], index: 3, kind: output, shape index: {}]
  %s4 = sld [smem:[#allocation0]]
  $region45: #{codegan_discriminator_forward.4} parent=0
    _
  %s6 = ssub.s32 1, %s4
  %s7 = scalar_select 0, %s6, %s4
  loop: start=0, step=1, limit=4
  $region2: #{codegan_discriminator_forward.4} parent=0 // loop_pre_header
    _
  $region3: #{codegan_discriminator_forward.4} parent=0 // loop_header
    %s9 = sphi 0, %s13
    %p10 = scmp.ge.s32.totalorder %s9, 4
    %s16 = sphi 0, %s28
    %s17 = sphi 0, %s24
    %s18 = sphi 0, %s16
    %s19 = sphi 0, %s17
    %s20 = sphi 0, %s18
    %s21 = sphi 0, %s19
    %s31 = sphi 0, %s33
    %s34 = sphi 0, %s31
    %s35 = sphi 0, %s34
    %s51 = sphi 0, %s35
    %s57 = sphi 0, %s59
    %s60 = sphi 0, %s57
    %s61 = sphi 0, %s60
    %s77 = sphi 0, %s61
    %s83 = sphi 0, %s85
    %s86 = sphi 0, %s83
    %s87 = sphi 0, %s86
    %s103 = sphi 0, %s87
    %s111 = sphi 0, %s113
    %s114 = sphi 0, %s111
    %s115 = sphi 0, %s114
    %s131 = sphi 0, %s115
  $region4: #{codegan_discriminator_forward.4} parent=0 // loop_header_branch
    %12 = sbr.rel (%p10) target = $region8
  $region5: #{codegan_discriminator_forward.4} parent=0 // loop_body
    %s14 = ssub.s32 %s9, 1
    %s15 = ssub.s32 %s9, 2
    %s22 = sadd.s32 1, %s17
    %p23 = scmp.ge.s32.totalorder %s22, 1
    %s24 = scalar_select %p23, 0, %s22
    %s25 = sadd.s32 1, %s16
    %s26 = scalar_select %p23, %s25, %s16
    %p27 = scmp.ge.s32.totalorder %s26, 2
    %s28 = scalar_select %p27, 0, %s26
    %s29 = ssub.s32 %s16, %s28
    %p30 = scmp.eq.s32.totalorder %s29, 0
    %s32 = sadd.s32 %s31, 1
    %s33 = scalar_select %p30, %s31, %s32
    %p36 = pneg %p30
    %p37 = scmp.eq.s32.totalorder %s9, 1
    %p38 = por %p36, %p37
    %p39 = scmp.ne.s32.totalorder %s31, %s34
    %p40 = scmp.eq.s32.totalorder %s9, 0
    %p41 = por %p39, %p40
    %p42 = scmp.ne.s32.totalorder %s31, %s34
    %p43 = scmp.eq.s32.totalorder %s14, 1
    %p44 = por %p42, %p43
    %p45 = scmp.ne.s32.totalorder %s34, %s35
    %p46 = scmp.eq.s32.totalorder %s14, 0
    %p47 = por %p45, %p46
    %p48 = scmp.ne.s32.totalorder %s34, %s35
    %p49 = scmp.eq.s32.totalorder %s15, 1
    %p50 = por %p48, %p49
    %p52 = scmp.ne.s32.totalorder %s35, %s51
    %p53 = scmp.eq.s32.totalorder %s15, 0
    %p54 = por %p52, %p53
    %s55 = ssub.s32 %s17, %s24
    %p56 = scmp.eq.s32.totalorder %s55, 0
    %s58 = sadd.s32 %s57, 1
    %s59 = scalar_select %p56, %s57, %s58
    %p62 = pneg %p56
    %p63 = scmp.eq.s32.totalorder %s9, 1
    %p64 = por %p62, %p63
    %p65 = scmp.ne.s32.totalorder %s57, %s60
    %p66 = scmp.eq.s32.totalorder %s9, 0
    %p67 = por %p65, %p66
    %p68 = scmp.ne.s32.totalorder %s57, %s60
    %p69 = scmp.eq.s32.totalorder %s14, 1
    %p70 = por %p68, %p69
    %p71 = scmp.ne.s32.totalorder %s60, %s61
    %p72 = scmp.eq.s32.totalorder %s14, 0
    %p73 = por %p71, %p72
    %p74 = scmp.ne.s32.totalorder %s60, %s61
    %p75 = scmp.eq.s32.totalorder %s15, 1
    %p76 = por %p74, %p75
    %p78 = scmp.ne.s32.totalorder %s61, %s77
    %p79 = scmp.eq.s32.totalorder %s15, 0
    %p80 = por %p78, %p79
    %s81 = ssub.s32 %s17, %s24
    %p82 = scmp.eq.s32.totalorder %s81, 0
    %s84 = sadd.s32 %s83, 1
    %s85 = scalar_select %p82, %s83, %s84
    %p88 = pneg %p82
    %p89 = scmp.eq.s32.totalorder %s9, 1
    %p90 = por %p88, %p89
    %p91 = scmp.ne.s32.totalorder %s83, %s86
    %p92 = scmp.eq.s32.totalorder %s9, 0
    %p93 = por %p91, %p92
    %p94 = scmp.ne.s32.totalorder %s83, %s86
    %p95 = scmp.eq.s32.totalorder %s14, 1
    %p96 = por %p94, %p95
    %p97 = scmp.ne.s32.totalorder %s86, %s87
    %p98 = scmp.eq.s32.totalorder %s14, 0
    %p99 = por %p97, %p98
    %p100 = scmp.ne.s32.totalorder %s86, %s87
    %p101 = scmp.eq.s32.totalorder %s15, 1
    %p102 = por %p100, %p101
    %p104 = scmp.ne.s32.totalorder %s87, %s103
    %p105 = scmp.eq.s32.totalorder %s15, 0
    %p106 = por %p104, %p105
    %s107 = ssub.s32 %s16, %s28
    %s108 = ssub.s32 %s17, %s24
    %s109 = sor.u32 %s107, %s108
    %p110 = scmp.eq.s32.totalorder %s109, 0
    %s112 = sadd.s32 %s111, 1
    %s113 = scalar_select %p110, %s111, %s112
    %p116 = pneg %p110
    %p117 = scmp.eq.s32.totalorder %s9, 1
    %p118 = por %p116, %p117
    %p119 = scmp.ne.s32.totalorder %s111, %s114
    %p120 = scmp.eq.s32.totalorder %s9, 0
    %p121 = por %p119, %p120
    %p122 = scmp.ne.s32.totalorder %s111, %s114
    %p123 = scmp.eq.s32.totalorder %s14, 1
    %p124 = por %p122, %p123
    %p125 = scmp.ne.s32.totalorder %s114, %s115
    %p126 = scmp.eq.s32.totalorder %s14, 0
    %p127 = por %p125, %p126
    %p128 = scmp.ne.s32.totalorder %s114, %s115
    %p129 = scmp.eq.s32.totalorder %s15, 1
    %p130 = por %p128, %p129
    %p132 = scmp.ne.s32.totalorder %s115, %s131
    %p133 = scmp.eq.s32.totalorder %s15, 0
    %p134 = por %p132, %p133
    %p135 = scmp.le.s32.totalorder 1, %s9
    %p136 = scmp.lt.s32.totalorder %s9, 3
    %p137 = pnand %p135, %p136
    %p138 = pneg %p137
    // Predicated region
    $region9: #{codegan_discriminator_forward.4} parent=5 // pred_check
      _
    $region10: #{codegan_discriminator_forward.4} parent=5 // pred_check_branch
      %140 = sbr.rel (%p137) target = $region12
    $region11: #{codegan_discriminator_forward.4} parent=5 // pred_region
      %s141 = ssub.s32 %s9, 1
      // Predicated region
      $region13: #{codegan_discriminator_forward.4} parent=11 // pred_check
        %p142 = pneg %p73
      $region14: #{codegan_discriminator_forward.4} parent=11 // pred_check_branch
        %144 = sbr.rel (%p142) target = $region16
      $region15: #{codegan_discriminator_forward.4} parent=11 // pred_region
        %p145 = scmp.lt.s32.totalorder %s19, 0
        %s146 = scalar_select %p145, %s19, 0
        %s147 = smul.addr %s146, 4
        %s148 = scalar_lea.vmem %s1, %s147
      $region16: #{codegan_discriminator_forward.4} parent=11 // pred_fallthru
        _
      // Predicated region
      $region17: #{codegan_discriminator_forward.4} parent=11 // pred_check
        %p149 = pneg %p99
      $region18: #{codegan_discriminator_forward.4} parent=11 // pred_check_branch
        %151 = sbr.rel (%p149) target = $region20
      $region19: #{codegan_discriminator_forward.4} parent=11 // pred_region
        %p152 = scmp.lt.s32.totalorder %s19, 0
        %s153 = scalar_select %p152, %s19, 0
        %s154 = scalar_lea.vmem %s2, %s153
      $region20: #{codegan_discriminator_forward.4} parent=11 // pred_fallthru
        _
    $region12: #{codegan_discriminator_forward.4} parent=5 // pred_fallthru
      _
    %p155 = scmp.lt.s32.totalorder %s9, 2
    // Predicated region
    $region21: #{codegan_discriminator_forward.4} parent=5 // pred_check
      %p156 = pneg %p155
    $region22: #{codegan_discriminator_forward.4} parent=5 // pred_check_branch
      %158 = sbr.rel (%p156) target = $region24
    $region23: #{codegan_discriminator_forward.4} parent=5 // pred_region
      // Predicated region
      $region25: #{codegan_discriminator_forward.4} parent=23 // pred_check
        %p159 = pneg %p41
      $region26: #{codegan_discriminator_forward.4} parent=23 // pred_check_branch
        %161 = sbr.rel (%p159) target = $region28
      $region27: #{codegan_discriminator_forward.4} parent=23 // pred_region
        %s162 = smul.u32 128, %s16
        %p163 = scmp.lt.s32.totalorder %s162, 255
        %s164 = scalar_select %p163, %s162, 255
        %s165 = smul.addr %s164, 4
        %s166 = scalar_lea.vmem %s0, %s165
        %s167 = smul.u32 128, %s16
      $region28: #{codegan_discriminator_forward.4} parent=23 // pred_fallthru
        _
    $region24: #{codegan_discriminator_forward.4} parent=5 // pred_fallthru
      _
    %p168 = scmp.le.s32.totalorder 1, %s9
    %p169 = scmp.lt.s32.totalorder %s9, 3
    %p170 = pnand %p168, %p169
    %p171 = pneg %p170
    // Predicated region
    $region29: #{codegan_discriminator_forward.4} parent=5 // pred_check
      _
    $region30: #{codegan_discriminator_forward.4} parent=5 // pred_check_branch
      %173 = sbr.rel (%p170) target = $region32
    $region31: #{codegan_discriminator_forward.4} parent=5 // pred_region
      %s174 = ssub.s32 %s9, 1
      %s175 = smul.u32 128, %s18
      %p176 = scmp.lt.s32.totalorder %s175, 255
      %s177 = scalar_select %p176, %s175, 255
      %s178 = smul.addr %s177, 4
      %s179 = scalar_lea.vmem %s0, %s178
      %p180 = pneg %p47
      %p181 = pneg %p44
      %p182 = scmp.lt.s32.totalorder %s19, 0
      %s183 = scalar_select %p182, %s19, 0
      %s184 = smul.addr %s183, 4
      %s185 = scalar_lea.vmem %s1, %s184
      %p186 = pneg %p73
      %p187 = pneg %p70
      %p188 = scmp.lt.s32.totalorder %s19, 0
      %s189 = scalar_select %p188, %s19, 0
      %s190 = scalar_lea.vmem %s2, %s189
      %p191 = pneg %p99
      %p192 = pneg %p96
      %p193 = pneg %p127
      %p194 = pneg %p124
      %s195 = smul.u32 128, %s18
      %p196 = scmp.lt.s32.totalorder %s195, 255
      %s197 = scalar_select %p196, %s195, 255
      %p198 = scmp.lt.s32.totalorder %s19, 0
      %s199 = scalar_select %p198, %s19, 0
      %s200 = sadd.s32 %s199, %s197
      %s201 = smul.addr %s200, 4
      %s202 = scalar_lea.vmem %s3, %s201
      %s203 = smul.u32 128, %s18
      %p204 = scmp.lt.s32.totalorder %s203, 255
      %s205 = scalar_select %p204, %s203, 255
      %s206 = smul.addr %s205, 4
      %s207 = scalar_lea.vmem %s0, %s206
      %s208 = smul.u32 128, %s18
      %p209 = scmp.lt.s32.totalorder %s19, 0
      %s210 = scalar_select %p209, %s19, 0
      %s211 = smul.addr %s210, 4
      %s212 = scalar_lea.vmem %s1, %s211
      %p213 = scmp.lt.s32.totalorder %s19, 0
      %s214 = scalar_select %p213, %s19, 0
      %s215 = scalar_lea.vmem %s2, %s214
      %s216 = smul.u32 128, %s18
      %p217 = scmp.lt.s32.totalorder %s216, 255
      %s218 = scalar_select %p217, %s216, 255
      %p219 = scmp.lt.s32.totalorder %s19, 0
      %s220 = scalar_select %p219, %s19, 0
      %s221 = sadd.s32 %s220, %s218
      %s222 = smul.addr %s221, 4
      %s223 = scalar_lea.vmem %s3, %s222
      %s224 = smul.u32 128, %s18
      %v226 = vld [vmem:[%s207] sm:$0xf]
      %v227 = vld [vmem:[%s207 + $0x4] sm:$0xf]
      %v228 = vld [vmem:[%s207 + $0x8] sm:$0xf]
      %v229 = vld [vmem:[%s207 + $0xc] sm:$0xf]
      %v230 = vld [vmem:[%s207 + $0x10] sm:$0xf]
      %v231 = vld [vmem:[%s207 + $0x14] sm:$0xf]
      %v232 = vld [vmem:[%s207 + $0x18] sm:$0xf]
      %v233 = vld [vmem:[%s207 + $0x1c] sm:$0xf]
      %v234 = vld [vmem:[%s207 + $0x20] sm:$0xf]
      %v235 = vld [vmem:[%s207 + $0x24] sm:$0xf]
      %v236 = vld [vmem:[%s207 + $0x28] sm:$0xf]
      %v237 = vld [vmem:[%s207 + $0x2c] sm:$0xf]
      %v238 = vld [vmem:[%s207 + $0x30] sm:$0xf]
      %v239 = vld [vmem:[%s207 + $0x34] sm:$0xf]
      %v240 = vld [vmem:[%s207 + $0x38] sm:$0xf]
      %v241 = vld [vmem:[%s207 + $0x3c] sm:$0xf]
      %v242 = vld [vmem:[%s207 + $0x40] sm:$0xf]
      %v243 = vld [vmem:[%s207 + $0x44] sm:$0xf]
      %v244 = vld [vmem:[%s207 + $0x48] sm:$0xf]
      %v245 = vld [vmem:[%s207 + $0x4c] sm:$0xf]
      %v246 = vld [vmem:[%s207 + $0x50] sm:$0xf]
      %v247 = vld [vmem:[%s207 + $0x54] sm:$0xf]
      %v248 = vld [vmem:[%s207 + $0x58] sm:$0xf]
      %v249 = vld [vmem:[%s207 + $0x5c] sm:$0xf]
      %v250 = vld [vmem:[%s207 + $0x60] sm:$0xf]
      %v251 = vld [vmem:[%s207 + $0x64] sm:$0xf]
      %v252 = vld [vmem:[%s207 + $0x68] sm:$0xf]
      %v253 = vld [vmem:[%s207 + $0x6c] sm:$0xf]
      %v254 = vld [vmem:[%s207 + $0x70] sm:$0xf]
      %v255 = vld [vmem:[%s207 + $0x74] sm:$0xf]
      %v256 = vld [vmem:[%s207 + $0x78] sm:$0xf]
      %v257 = vld [vmem:[%s207 + $0x7c] sm:$0xf]
      %v258 = vld [vmem:[%s207 + $0x80] sm:$0xf]
      %v259 = vld [vmem:[%s207 + $0x84] sm:$0xf]
      %v260 = vld [vmem:[%s207 + $0x88] sm:$0xf]
      %v261 = vld [vmem:[%s207 + $0x8c] sm:$0xf]
      %v262 = vld [vmem:[%s207 + $0x90] sm:$0xf]
      %v263 = vld [vmem:[%s207 + $0x94] sm:$0xf]
      %v264 = vld [vmem:[%s207 + $0x98] sm:$0xf]
      %v265 = vld [vmem:[%s207 + $0x9c] sm:$0xf]
      %v266 = vld [vmem:[%s207 + $0xa0] sm:$0xf]
      %v267 = vld [vmem:[%s207 + $0xa4] sm:$0xf]
      %v268 = vld [vmem:[%s207 + $0xa8] sm:$0xf]
      %v269 = vld [vmem:[%s207 + $0xac] sm:$0xf]
      %v270 = vld [vmem:[%s207 + $0xb0] sm:$0xf]
      %v271 = vld [vmem:[%s207 + $0xb4] sm:$0xf]
      %v272 = vld [vmem:[%s207 + $0xb8] sm:$0xf]
      %v273 = vld [vmem:[%s207 + $0xbc] sm:$0xf]
      %v274 = vld [vmem:[%s207 + $0xc0] sm:$0xf]
      %v275 = vld [vmem:[%s207 + $0xc4] sm:$0xf]
      %v276 = vld [vmem:[%s207 + $0xc8] sm:$0xf]
      %v277 = vld [vmem:[%s207 + $0xcc] sm:$0xf]
      %v278 = vld [vmem:[%s207 + $0xd0] sm:$0xf]
      %v279 = vld [vmem:[%s207 + $0xd4] sm:$0xf]
      %v280 = vld [vmem:[%s207 + $0xd8] sm:$0xf]
      %v281 = vld [vmem:[%s207 + $0xdc] sm:$0xf]
      %v282 = vld [vmem:[%s207 + $0xe0] sm:$0xf]
      %v283 = vld [vmem:[%s207 + $0xe4] sm:$0xf]
      %v284 = vld [vmem:[%s207 + $0xe8] sm:$0xf]
      %v285 = vld [vmem:[%s207 + $0xec] sm:$0xf]
      %v286 = vld [vmem:[%s207 + $0xf0] sm:$0xf]
      %v287 = vld [vmem:[%s207 + $0xf4] sm:$0xf]
      %v288 = vld [vmem:[%s207 + $0xf8] sm:$0xf]
      %v289 = vld [vmem:[%s207 + $0xfc] sm:$0xf]
      %v290 = vld [vmem:[%s207 + $0x100] sm:$0xf]
      %v291 = vld [vmem:[%s207 + $0x104] sm:$0xf]
      %v292 = vld [vmem:[%s207 + $0x108] sm:$0xf]
      %v293 = vld [vmem:[%s207 + $0x10c] sm:$0xf]
      %v294 = vld [vmem:[%s207 + $0x110] sm:$0xf]
      %v295 = vld [vmem:[%s207 + $0x114] sm:$0xf]
      %v296 = vld [vmem:[%s207 + $0x118] sm:$0xf]
      %v297 = vld [vmem:[%s207 + $0x11c] sm:$0xf]
      %v298 = vld [vmem:[%s207 + $0x120] sm:$0xf]
      %v299 = vld [vmem:[%s207 + $0x124] sm:$0xf]
      %v300 = vld [vmem:[%s207 + $0x128] sm:$0xf]
      %v301 = vld [vmem:[%s207 + $0x12c] sm:$0xf]
      %v302 = vld [vmem:[%s207 + $0x130] sm:$0xf]
      %v303 = vld [vmem:[%s207 + $0x134] sm:$0xf]
      %v304 = vld [vmem:[%s207 + $0x138] sm:$0xf]
      %v305 = vld [vmem:[%s207 + $0x13c] sm:$0xf]
      %v306 = vld [vmem:[%s207 + $0x140] sm:$0xf]
      %v307 = vld [vmem:[%s207 + $0x144] sm:$0xf]
      %v308 = vld [vmem:[%s207 + $0x148] sm:$0xf]
      %v309 = vld [vmem:[%s207 + $0x14c] sm:$0xf]
      %v310 = vld [vmem:[%s207 + $0x150] sm:$0xf]
      %v311 = vld [vmem:[%s207 + $0x154] sm:$0xf]
      %v312 = vld [vmem:[%s207 + $0x158] sm:$0xf]
      %v313 = vld [vmem:[%s207 + $0x15c] sm:$0xf]
      %v314 = vld [vmem:[%s207 + $0x160] sm:$0xf]
      %v315 = vld [vmem:[%s207 + $0x164] sm:$0xf]
      %v316 = vld [vmem:[%s207 + $0x168] sm:$0xf]
      %v317 = vld [vmem:[%s207 + $0x16c] sm:$0xf]
      %v318 = vld [vmem:[%s207 + $0x170] sm:$0xf]
      %v319 = vld [vmem:[%s207 + $0x174] sm:$0xf]
      %v320 = vld [vmem:[%s207 + $0x178] sm:$0xf]
      %v321 = vld [vmem:[%s207 + $0x17c] sm:$0xf]
      %v322 = vld [vmem:[%s207 + $0x180] sm:$0xf]
      %v323 = vld [vmem:[%s207 + $0x184] sm:$0xf]
      %v324 = vld [vmem:[%s207 + $0x188] sm:$0xf]
      %v325 = vld [vmem:[%s207 + $0x18c] sm:$0xf]
      %v326 = vld [vmem:[%s207 + $0x190] sm:$0xf]
      %v327 = vld [vmem:[%s207 + $0x194] sm:$0xf]
      %v328 = vld [vmem:[%s207 + $0x198] sm:$0xf]
      %v329 = vld [vmem:[%s207 + $0x19c] sm:$0xf]
      %v330 = vld [vmem:[%s207 + $0x1a0] sm:$0xf]
      %v331 = vld [vmem:[%s207 + $0x1a4] sm:$0xf]
      %v332 = vld [vmem:[%s207 + $0x1a8] sm:$0xf]
      %v333 = vld [vmem:[%s207 + $0x1ac] sm:$0xf]
      %v334 = vld [vmem:[%s207 + $0x1b0] sm:$0xf]
      %v335 = vld [vmem:[%s207 + $0x1b4] sm:$0xf]
      %v336 = vld [vmem:[%s207 + $0x1b8] sm:$0xf]
      %v337 = vld [vmem:[%s207 + $0x1bc] sm:$0xf]
      %v338 = vld [vmem:[%s207 + $0x1c0] sm:$0xf]
      %v339 = vld [vmem:[%s207 + $0x1c4] sm:$0xf]
      %v340 = vld [vmem:[%s207 + $0x1c8] sm:$0xf]
      %v341 = vld [vmem:[%s207 + $0x1cc] sm:$0xf]
      %v342 = vld [vmem:[%s207 + $0x1d0] sm:$0xf]
      %v343 = vld [vmem:[%s207 + $0x1d4] sm:$0xf]
      %v344 = vld [vmem:[%s207 + $0x1d8] sm:$0xf]
      %v345 = vld [vmem:[%s207 + $0x1dc] sm:$0xf]
      %v346 = vld [vmem:[%s207 + $0x1e0] sm:$0xf]
      %v347 = vld [vmem:[%s207 + $0x1e4] sm:$0xf]
      %v348 = vld [vmem:[%s207 + $0x1e8] sm:$0xf]
      %v349 = vld [vmem:[%s207 + $0x1ec] sm:$0xf]
      %v350 = vld [vmem:[%s207 + $0x1f0] sm:$0xf]
      %v351 = vld [vmem:[%s207 + $0x1f4] sm:$0xf]
      %v352 = vld [vmem:[%s207 + $0x1f8] sm:$0xf]
      %v353 = vld [vmem:[%s207 + $0x1fc] sm:$0xf]
      %v354 = vld [vmem:[%s212] sm:$0xf]
      %v355 = vld [vmem:[%s212 + $0x4] sm:$0xf]
      %v356 = vld [vmem:[%s212 + $0x8] sm:$0xf]
      %v357 = vld [vmem:[%s212 + $0xc] sm:$0xf]
      %v358 = vld [vmem:[%s212 + $0x10] sm:$0xf]
      %v359 = vld [vmem:[%s212 + $0x14] sm:$0xf]
      %v360 = vld [vmem:[%s212 + $0x18] sm:$0xf]
      %v361 = vld [vmem:[%s212 + $0x1c] sm:$0xf]
      %v362 = vld [vmem:[%s212 + $0x20] sm:$0xf]
      %v363 = vld [vmem:[%s212 + $0x24] sm:$0xf]
      %v364 = vld [vmem:[%s212 + $0x28] sm:$0xf]
      %v365 = vld [vmem:[%s212 + $0x2c] sm:$0xf]
      %v366 = vld [vmem:[%s212 + $0x30] sm:$0xf]
      %v367 = vld [vmem:[%s212 + $0x34] sm:$0xf]
      %v368 = vld [vmem:[%s212 + $0x38] sm:$0xf]
      %v369 = vld [vmem:[%s212 + $0x3c] sm:$0xf]
      %v370 = vld [vmem:[%s215] sm:$0x1]
      %v372 = vlaneseq
      %v373 = vshrl.u32 %v372, 7
      %v374 = vsub.s32 0, %v373
      %v375 = vrot.slane %v370, %v374
      %v505 = vunpack.c.l.b16 %v226
      %v506 = vunpack.c.l.b16 %v227
      %v507 = vunpack.c.l.b16 %v228
      %v508 = vunpack.c.l.b16 %v229
      %v509 = vunpack.c.l.b16 %v230
      %v510 = vunpack.c.l.b16 %v231
      %v511 = vunpack.c.l.b16 %v232
      %v512 = vunpack.c.l.b16 %v233
      %v513 = vunpack.c.l.b16 %v234
      %v514 = vunpack.c.l.b16 %v235
      %v515 = vunpack.c.l.b16 %v236
      %v516 = vunpack.c.l.b16 %v237
      %v517 = vunpack.c.l.b16 %v238
      %v518 = vunpack.c.l.b16 %v239
      %v519 = vunpack.c.l.b16 %v240
      %v520 = vunpack.c.l.b16 %v241
      %v521 = vunpack.c.l.b16 %v242
      %v522 = vunpack.c.l.b16 %v243
      %v523 = vunpack.c.l.b16 %v244
      %v524 = vunpack.c.l.b16 %v245
      %v525 = vunpack.c.l.b16 %v246
      %v526 = vunpack.c.l.b16 %v247
      %v527 = vunpack.c.l.b16 %v248
      %v528 = vunpack.c.l.b16 %v249
      %v529 = vunpack.c.l.b16 %v250
      %v530 = vunpack.c.l.b16 %v251
      %v531 = vunpack.c.l.b16 %v252
      %v532 = vunpack.c.l.b16 %v253
      %v533 = vunpack.c.l.b16 %v254
      %v534 = vunpack.c.l.b16 %v255
      %v535 = vunpack.c.l.b16 %v256
      %v536 = vunpack.c.l.b16 %v257
      %v537 = vunpack.c.l.b16 %v258
      %v538 = vunpack.c.l.b16 %v259
      %v539 = vunpack.c.l.b16 %v260
      %v540 = vunpack.c.l.b16 %v261
      %v541 = vunpack.c.l.b16 %v262
      %v542 = vunpack.c.l.b16 %v263
      %v543 = vunpack.c.l.b16 %v264
      %v544 = vunpack.c.l.b16 %v265
      %v545 = vunpack.c.l.b16 %v266
      %v546 = vunpack.c.l.b16 %v267
      %v547 = vunpack.c.l.b16 %v268
      %v548 = vunpack.c.l.b16 %v269
      %v549 = vunpack.c.l.b16 %v270
      %v550 = vunpack.c.l.b16 %v271
      %v551 = vunpack.c.l.b16 %v272
      %v552 = vunpack.c.l.b16 %v273
      %v553 = vunpack.c.l.b16 %v274
      %v554 = vunpack.c.l.b16 %v275
      %v555 = vunpack.c.l.b16 %v276
      %v556 = vunpack.c.l.b16 %v277
      %v557 = vunpack.c.l.b16 %v278
      %v558 = vunpack.c.l.b16 %v279
      %v559 = vunpack.c.l.b16 %v280
      %v560 = vunpack.c.l.b16 %v281
      %v561 = vunpack.c.l.b16 %v282
      %v562 = vunpack.c.l.b16 %v283
      %v563 = vunpack.c.l.b16 %v284
      %v564 = vunpack.c.l.b16 %v285
      %v565 = vunpack.c.l.b16 %v286
      %v566 = vunpack.c.l.b16 %v287
      %v567 = vunpack.c.l.b16 %v288
      %v568 = vunpack.c.l.b16 %v289
      %v569 = vunpack.c.l.b16 %v290
      %v570 = vunpack.c.l.b16 %v291
      %v571 = vunpack.c.l.b16 %v292
      %v572 = vunpack.c.l.b16 %v293
      %v573 = vunpack.c.l.b16 %v294
      %v574 = vunpack.c.l.b16 %v295
      %v575 = vunpack.c.l.b16 %v296
      %v576 = vunpack.c.l.b16 %v297
      %v577 = vunpack.c.l.b16 %v298
      %v578 = vunpack.c.l.b16 %v299
      %v579 = vunpack.c.l.b16 %v300
      %v580 = vunpack.c.l.b16 %v301
      %v581 = vunpack.c.l.b16 %v302
      %v582 = vunpack.c.l.b16 %v303
      %v583 = vunpack.c.l.b16 %v304
      %v584 = vunpack.c.l.b16 %v305
      %v585 = vunpack.c.l.b16 %v306
      %v586 = vunpack.c.l.b16 %v307
      %v587 = vunpack.c.l.b16 %v308
      %v588 = vunpack.c.l.b16 %v309
      %v589 = vunpack.c.l.b16 %v310
      %v590 = vunpack.c.l.b16 %v311
      %v591 = vunpack.c.l.b16 %v312
      %v592 = vunpack.c.l.b16 %v313
      %v593 = vunpack.c.l.b16 %v314
      %v594 = vunpack.c.l.b16 %v315
      %v595 = vunpack.c.l.b16 %v316
      %v596 = vunpack.c.l.b16 %v317
      %v597 = vunpack.c.l.b16 %v318
      %v598 = vunpack.c.l.b16 %v319
      %v599 = vunpack.c.l.b16 %v320
      %v600 = vunpack.c.l.b16 %v321
      %v601 = vunpack.c.l.b16 %v322
      %v602 = vunpack.c.l.b16 %v323
      %v603 = vunpack.c.l.b16 %v324
      %v604 = vunpack.c.l.b16 %v325
      %v605 = vunpack.c.l.b16 %v326
      %v606 = vunpack.c.l.b16 %v327
      %v607 = vunpack.c.l.b16 %v328
      %v608 = vunpack.c.l.b16 %v329
      %v609 = vunpack.c.l.b16 %v330
      %v610 = vunpack.c.l.b16 %v331
      %v611 = vunpack.c.l.b16 %v332
      %v612 = vunpack.c.l.b16 %v333
      %v613 = vunpack.c.l.b16 %v334
      %v614 = vunpack.c.l.b16 %v335
      %v615 = vunpack.c.l.b16 %v336
      %v616 = vunpack.c.l.b16 %v337
      %v617 = vunpack.c.l.b16 %v338
      %v618 = vunpack.c.l.b16 %v339
      %v619 = vunpack.c.l.b16 %v340
      %v620 = vunpack.c.l.b16 %v341
      %v621 = vunpack.c.l.b16 %v342
      %v622 = vunpack.c.l.b16 %v343
      %v623 = vunpack.c.l.b16 %v344
      %v624 = vunpack.c.l.b16 %v345
      %v625 = vunpack.c.l.b16 %v346
      %v626 = vunpack.c.l.b16 %v347
      %v627 = vunpack.c.l.b16 %v348
      %v628 = vunpack.c.l.b16 %v349
      %v629 = vunpack.c.l.b16 %v350
      %v630 = vunpack.c.l.b16 %v351
      %v631 = vunpack.c.l.b16 %v352
      %v632 = vunpack.c.l.b16 %v353
      %v633 = vpack.c.b16 %v506, %v505
      %v634 = vpack.c.b16 %v508, %v507
      %v635 = vpack.c.b16 %v510, %v509
      %v636 = vpack.c.b16 %v512, %v511
      %v637 = vpack.c.b16 %v514, %v513
      %v638 = vpack.c.b16 %v516, %v515
      %v639 = vpack.c.b16 %v518, %v517
      %v640 = vpack.c.b16 %v520, %v519
      %v641 = vpack.c.b16 %v522, %v521
      %v642 = vpack.c.b16 %v524, %v523
      %v643 = vpack.c.b16 %v526, %v525
      %v644 = vpack.c.b16 %v528, %v527
      %v645 = vpack.c.b16 %v530, %v529
      %v646 = vpack.c.b16 %v532, %v531
      %v647 = vpack.c.b16 %v534, %v533
      %v648 = vpack.c.b16 %v536, %v535
      %v649 = vpack.c.b16 %v538, %v537
      %v650 = vpack.c.b16 %v540, %v539
      %v651 = vpack.c.b16 %v542, %v541
      %v652 = vpack.c.b16 %v544, %v543
      %v653 = vpack.c.b16 %v546, %v545
      %v654 = vpack.c.b16 %v548, %v547
      %v655 = vpack.c.b16 %v550, %v549
      %v656 = vpack.c.b16 %v552, %v551
      %v657 = vpack.c.b16 %v554, %v553
      %v658 = vpack.c.b16 %v556, %v555
      %v659 = vpack.c.b16 %v558, %v557
      %v660 = vpack.c.b16 %v560, %v559
      %v661 = vpack.c.b16 %v562, %v561
      %v662 = vpack.c.b16 %v564, %v563
      %v663 = vpack.c.b16 %v566, %v565
      %v664 = vpack.c.b16 %v568, %v567
      %v665 = vpack.c.b16 %v570, %v569
      %v666 = vpack.c.b16 %v572, %v571
      %v667 = vpack.c.b16 %v574, %v573
      %v668 = vpack.c.b16 %v576, %v575
      %v669 = vpack.c.b16 %v578, %v577
      %v670 = vpack.c.b16 %v580, %v579
      %v671 = vpack.c.b16 %v582, %v581
      %v672 = vpack.c.b16 %v584, %v583
      %v673 = vpack.c.b16 %v586, %v585
      %v674 = vpack.c.b16 %v588, %v587
      %v675 = vpack.c.b16 %v590, %v589
      %v676 = vpack.c.b16 %v592, %v591
      %v677 = vpack.c.b16 %v594, %v593
      %v678 = vpack.c.b16 %v596, %v595
      %v679 = vpack.c.b16 %v598, %v597
      %v680 = vpack.c.b16 %v600, %v599
      %v681 = vpack.c.b16 %v602, %v601
      %v682 = vpack.c.b16 %v604, %v603
      %v683 = vpack.c.b16 %v606, %v605
      %v684 = vpack.c.b16 %v608, %v607
      %v685 = vpack.c.b16 %v610, %v609
      %v686 = vpack.c.b16 %v612, %v611
      %v687 = vpack.c.b16 %v614, %v613
      %v688 = vpack.c.b16 %v616, %v615
      %v689 = vpack.c.b16 %v618, %v617
      %v690 = vpack.c.b16 %v620, %v619
      %v691 = vpack.c.b16 %v622, %v621
      %v692 = vpack.c.b16 %v624, %v623
      %v693 = vpack.c.b16 %v626, %v625
      %v694 = vpack.c.b16 %v628, %v627
      %v695 = vpack.c.b16 %v630, %v629
      %v696 = vpack.c.b16 %v632, %v631
      %v777 = vunpack.c.l.b16 %v354
      %v778 = vunpack.c.l.b16 %v355
      %v779 = vunpack.c.l.b16 %v356
      %v780 = vunpack.c.l.b16 %v357
      %v781 = vunpack.c.l.b16 %v358
      %v782 = vunpack.c.l.b16 %v359
      %v783 = vunpack.c.l.b16 %v360
      %v784 = vunpack.c.l.b16 %v361
      %v785 = vunpack.c.l.b16 %v362
      %v786 = vunpack.c.l.b16 %v363
      %v787 = vunpack.c.l.b16 %v364
      %v788 = vunpack.c.l.b16 %v365
      %v789 = vunpack.c.l.b16 %v366
      %v790 = vunpack.c.l.b16 %v367
      %v791 = vunpack.c.l.b16 %v368
      %v792 = vunpack.c.l.b16 %v369
      %v793 = vpack.c.b16 %v778, %v777
      %v794 = vpack.c.b16 %v780, %v779
      %v795 = vpack.c.b16 %v782, %v781
      %v796 = vpack.c.b16 %v784, %v783
      %v797 = vpack.c.b16 %v786, %v785
      %v798 = vpack.c.b16 %v788, %v787
      %v799 = vpack.c.b16 %v790, %v789
      %v800 = vpack.c.b16 %v792, %v791
      %809 = vmatprep.subr.bf16.mxu0 0
      %810 = vmatpush1.bf16.msra.mxu0 %v793
      %811 = vmatprep.subr.bf16.mxu0 0
      %812 = vmatpush1.bf16.msra.mxu0 %v794
      %813 = vmatprep.subr.bf16.mxu0 0
      %814 = vmatpush1.bf16.msra.mxu0 %v795
      %815 = vmatprep.subr.bf16.mxu0 0
      %816 = vmatpush1.bf16.msra.mxu0 %v796
      %817 = vmatprep.subr.bf16.mxu0 0
      %818 = vmatpush1.bf16.msra.mxu0 %v797
      %819 = vmatprep.subr.bf16.mxu0 0
      %820 = vmatpush1.bf16.msra.mxu0 %v798
      %821 = vmatprep.subr.bf16.mxu0 0
      %822 = vmatpush1.bf16.msra.mxu0 %v799
      %823 = vmatprep.subr.bf16.mxu0 0
      %824 = vmatpush1.bf16.msra.mxu0 %v800
      %825 = vmatprep.subr.bf16.mxu0 0
      %826 = vmatpush1.bf16.msra.mxu0 0
      %827 = vmatprep.subr.bf16.mxu0 0
      %828 = vmatpush1.bf16.msra.mxu0 0
      %829 = vmatprep.subr.bf16.mxu0 0
      %830 = vmatpush1.bf16.msra.mxu0 0
      %831 = vmatprep.subr.bf16.mxu0 0
      %832 = vmatpush1.bf16.msra.mxu0 0
      %833 = vmatprep.subr.bf16.mxu0 0
      %834 = vmatpush1.bf16.msra.mxu0 0
      %835 = vmatprep.subr.bf16.mxu0 0
      %836 = vmatpush1.bf16.msra.mxu0 0
      %837 = vmatprep.subr.bf16.mxu0 0
      %838 = vmatpush1.bf16.msra.mxu0 0
      %839 = vmatprep.subr.bf16.mxu0 0
      %840 = vmatpush1.bf16.msra.mxu0 0
      %841 = vmatprep.mubr.bf16.mxu0 0
      %842 = vmatmul.mubr.bf16.gmra.mrb[0].mxu0 %v633
      %v843 = vpop.f32.mrb[0].mxu0
      %v844 = vadd.f32 %v375, %v843
      %v845 = vpop.f32.mrb[0].mxu0
      %v846 = vpop.f32.mrb[0].mxu0
      %v847 = vadd.f32 %v375, %v846
      %v848 = vpop.f32.mrb[0].mxu0
      %849 = vmatprep.mubr.bf16.mxu0 0
      %850 = vmatmul.mubr.bf16.gmra.mrb[0].mxu0 %v634
      %v851 = vpop.f32.mrb[0].mxu0
      %v852 = vadd.f32 %v375, %v851
      %v853 = vpop.f32.mrb[0].mxu0
      %v854 = vpop.f32.mrb[0].mxu0
      %v855 = vadd.f32 %v375, %v854
      %v856 = vpop.f32.mrb[0].mxu0
      %857 = vmatprep.mubr.bf16.mxu0 0
      %858 = vmatmul.mubr.bf16.gmra.mrb[0].mxu0 %v635
      %v859 = vpop.f32.mrb[0].mxu0
      %v860 = vadd.f32 %v375, %v859
      %v861 = vpop.f32.mrb[0].mxu0
      %v862 = vpop.f32.mrb[0].mxu0
      %v863 = vadd.f32 %v375, %v862
      %v864 = vpop.f32.mrb[0].mxu0
      %865 = vmatprep.mubr.bf16.mxu0 0
      %866 = vmatmul.mubr.bf16.gmra.mrb[0].mxu0 %v636
      %v867 = vpop.f32.mrb[0].mxu0
      %v868 = vadd.f32 %v375, %v867
      %v869 = vpop.f32.mrb[0].mxu0
      %v870 = vpop.f32.mrb[0].mxu0
      %v871 = vadd.f32 %v375, %v870
      %v872 = vpop.f32.mrb[0].mxu0
      %873 = vmatprep.mubr.bf16.mxu0 0
      %874 = vmatmul.mubr.bf16.gmra.mrb[0].mxu0 %v637
      %v875 = vpop.f32.mrb[0].mxu0
      %v876 = vadd.f32 %v375, %v875
      %v877 = vpop.f32.mrb[0].mxu0
      %v878 = vpop.f32.mrb[0].mxu0
      %v879 = vadd.f32 %v375, %v878
      %v880 = vpop.f32.mrb[0].mxu0
      %881 = vmatprep.mubr.bf16.mxu0 0
      %882 = vmatmul.mubr.bf16.gmra.mrb[0].mxu0 %v638
      %v883 = vpop.f32.mrb[0].mxu0
      %v884 = vadd.f32 %v375, %v883
      %v885 = vpop.f32.mrb[0].mxu0
      %v886 = vpop.f32.mrb[0].mxu0
      %v887 = vadd.f32 %v375, %v886
      %v888 = vpop.f32.mrb[0].mxu0
      %889 = vmatprep.mubr.bf16.mxu0 0
      %890 = vmatmul.mubr.bf16.gmra.mrb[0].mxu0 %v639
      %v891 = vpop.f32.mrb[0].mxu0
      %v892 = vadd.f32 %v375, %v891
      %v893 = vpop.f32.mrb[0].mxu0
      %v894 = vpop.f32.mrb[0].mxu0
      %v895 = vadd.f32 %v375, %v894
      %v896 = vpop.f32.mrb[0].mxu0
      %897 = vmatprep.mubr.bf16.mxu0 0
      %898 = vmatmul.mubr.bf16.gmra.mrb[0].mxu0 %v640
      %v899 = vpop.f32.mrb[0].mxu0
      %v900 = vadd.f32 %v375, %v899
      %v901 = vpop.f32.mrb[0].mxu0
      %v902 = vpop.f32.mrb[0].mxu0
      %v903 = vadd.f32 %v375, %v902
      %v904 = vpop.f32.mrb[0].mxu0
      %905 = vmatprep.mubr.bf16.mxu0 0
      %906 = vmatmul.mubr.bf16.gmra.mrb[0].mxu0 %v641
      %v907 = vpop.f32.mrb[0].mxu0
      %v908 = vadd.f32 %v375, %v907
      %v909 = vpop.f32.mrb[0].mxu0
      %v910 = vpop.f32.mrb[0].mxu0
      %v911 = vadd.f32 %v375, %v910
      %v912 = vpop.f32.mrb[0].mxu0
      %913 = vmatprep.mubr.bf16.mxu0 0
      %914 = vmatmul.mubr.bf16.gmra.mrb[0].mxu0 %v642
      %v915 = vpop.f32.mrb[0].mxu0
      %v916 = vadd.f32 %v375, %v915
      %v917 = vpop.f32.mrb[0].mxu0
      %v918 = vpop.f32.mrb[0].mxu0
      %v919 = vadd.f32 %v375, %v918
      %v920 = vpop.f32.mrb[0].mxu0
      %921 = vmatprep.mubr.bf16.mxu0 0
      %922 = vmatmul.mubr.bf16.gmra.mrb[0].mxu0 %v643
      %v923 = vpop.f32.mrb[0].mxu0
      %v924 = vadd.f32 %v375, %v923
      %v925 = vpop.f32.mrb[0].mxu0
      %v926 = vpop.f32.mrb[0].mxu0
      %v927 = vadd.f32 %v375, %v926
      %v928 = vpop.f32.mrb[0].mxu0
      %929 = vmatprep.mubr.bf16.mxu0 0
      %930 = vmatmul.mubr.bf16.gmra.mrb[0].mxu0 %v644
      %v931 = vpop.f32.mrb[0].mxu0
      %v932 = vadd.f32 %v375, %v931
      %v933 = vpop.f32.mrb[0].mxu0
      %v934 = vpop.f32.mrb[0].mxu0
      %v935 = vadd.f32 %v375, %v934
      %v936 = vpop.f32.mrb[0].mxu0
      %937 = vmatprep.mubr.bf16.mxu0 0
      %938 = vmatmul.mubr.bf16.gmra.mrb[0].mxu0 %v645
      %v939 = vpop.f32.mrb[0].mxu0
      %v940 = vadd.f32 %v375, %v939
      %v941 = vpop.f32.mrb[0].mxu0
      %v942 = vpop.f32.mrb[0].mxu0
      %v943 = vadd.f32 %v375, %v942
      %v944 = vpop.f32.mrb[0].mxu0
      %945 = vmatprep.mubr.bf16.mxu0 0
      %946 = vmatmul.mubr.bf16.gmra.mrb[0].mxu0 %v646
      %v947 = vpop.f32.mrb[0].mxu0
      %v948 = vadd.f32 %v375, %v947
      %v949 = vpop.f32.mrb[0].mxu0
      %v950 = vpop.f32.mrb[0].mxu0
      %v951 = vadd.f32 %v375, %v950
      %v952 = vpop.f32.mrb[0].mxu0
      %953 = vmatprep.mubr.bf16.mxu0 0
      %954 = vmatmul.mubr.bf16.gmra.mrb[0].mxu0 %v647
      %v955 = vpop.f32.mrb[0].mxu0
      %v956 = vadd.f32 %v375, %v955
      %v957 = vpop.f32.mrb[0].mxu0
      %v958 = vpop.f32.mrb[0].mxu0
      %v959 = vadd.f32 %v375, %v958
      %v960 = vpop.f32.mrb[0].mxu0
      %961 = vmatprep.mubr.bf16.mxu0 0
      %962 = vmatmul.mubr.bf16.gmra.mrb[0].mxu0 %v648
      %v963 = vpop.f32.mrb[0].mxu0
      %v964 = vadd.f32 %v375, %v963
      %v965 = vpop.f32.mrb[0].mxu0
      %v966 = vpop.f32.mrb[0].mxu0
      %v967 = vadd.f32 %v375, %v966
      %v968 = vpop.f32.mrb[0].mxu0
      %969 = vmatprep.mubr.bf16.mxu0 0
      %970 = vmatmul.mubr.bf16.gmra.mrb[0].mxu0 %v649
      %v971 = vpop.f32.mrb[0].mxu0
      %v972 = vadd.f32 %v375, %v971
      %v973 = vpop.f32.mrb[0].mxu0
      %v974 = vpop.f32.mrb[0].mxu0
      %v975 = vadd.f32 %v375, %v974
      %v976 = vpop.f32.mrb[0].mxu0
      %977 = vmatprep.mubr.bf16.mxu0 0
      %978 = vmatmul.mubr.bf16.gmra.mrb[0].mxu0 %v650
      %v979 = vpop.f32.mrb[0].mxu0
      %v980 = vadd.f32 %v375, %v979
      %v981 = vpop.f32.mrb[0].mxu0
      %v982 = vpop.f32.mrb[0].mxu0
      %v983 = vadd.f32 %v375, %v982
      %v984 = vpop.f32.mrb[0].mxu0
      %985 = vmatprep.mubr.bf16.mxu0 0
      %986 = vmatmul.mubr.bf16.gmra.mrb[0].mxu0 %v651
      %v987 = vpop.f32.mrb[0].mxu0
      %v988 = vadd.f32 %v375, %v987
      %v989 = vpop.f32.mrb[0].mxu0
      %v990 = vpop.f32.mrb[0].mxu0
      %v991 = vadd.f32 %v375, %v990
      %v992 = vpop.f32.mrb[0].mxu0
      %993 = vmatprep.mubr.bf16.mxu0 0
      %994 = vmatmul.mubr.bf16.gmra.mrb[0].mxu0 %v652
      %v995 = vpop.f32.mrb[0].mxu0
      %v996 = vadd.f32 %v375, %v995
      %v997 = vpop.f32.mrb[0].mxu0
      %v998 = vpop.f32.mrb[0].mxu0
      %v999 = vadd.f32 %v375, %v998
      %v1000 = vpop.f32.mrb[0].mxu0
      %1001 = vmatprep.mubr.bf16.mxu0 0
      %1002 = vmatmul.mubr.bf16.gmra.mrb[0].mxu0 %v653
      %v1003 = vpop.f32.mrb[0].mxu0
      %v1004 = vadd.f32 %v375, %v1003
      %v1005 = vpop.f32.mrb[0].mxu0
      %v1006 = vpop.f32.mrb[0].mxu0
      %v1007 = vadd.f32 %v375, %v1006
      %v1008 = vpop.f32.mrb[0].mxu0
      %1009 = vmatprep.mubr.bf16.mxu0 0
      %1010 = vmatmul.mubr.bf16.gmra.mrb[0].mxu0 %v654
      %v1011 = vpop.f32.mrb[0].mxu0
      %v1012 = vadd.f32 %v375, %v1011
      %v1013 = vpop.f32.mrb[0].mxu0
      %v1014 = vpop.f32.mrb[0].mxu0
      %v1015 = vadd.f32 %v375, %v1014
      %v1016 = vpop.f32.mrb[0].mxu0
      %1017 = vmatprep.mubr.bf16.mxu0 0
      %1018 = vmatmul.mubr.bf16.gmra.mrb[0].mxu0 %v655
      %v1019 = vpop.f32.mrb[0].mxu0
      %v1020 = vadd.f32 %v375, %v1019
      %v1021 = vpop.f32.mrb[0].mxu0
      %v1022 = vpop.f32.mrb[0].mxu0
      %v1023 = vadd.f32 %v375, %v1022
      %v1024 = vpop.f32.mrb[0].mxu0
      %1025 = vmatprep.mubr.bf16.mxu0 0
      %1026 = vmatmul.mubr.bf16.gmra.mrb[0].mxu0 %v656
      %v1027 = vpop.f32.mrb[0].mxu0
      %v1028 = vadd.f32 %v375, %v1027
      %v1029 = vpop.f32.mrb[0].mxu0
      %v1030 = vpop.f32.mrb[0].mxu0
      %v1031 = vadd.f32 %v375, %v1030
      %v1032 = vpop.f32.mrb[0].mxu0
      %1033 = vmatprep.mubr.bf16.mxu0 0
      %1034 = vmatmul.mubr.bf16.gmra.mrb[0].mxu0 %v657
      %v1035 = vpop.f32.mrb[0].mxu0
      %v1036 = vadd.f32 %v375, %v1035
      %v1037 = vpop.f32.mrb[0].mxu0
      %v1038 = vpop.f32.mrb[0].mxu0
      %v1039 = vadd.f32 %v375, %v1038
      %v1040 = vpop.f32.mrb[0].mxu0
      %1041 = vmatprep.mubr.bf16.mxu0 0
      %1042 = vmatmul.mubr.bf16.gmra.mrb[0].mxu0 %v658
      %v1043 = vpop.f32.mrb[0].mxu0
      %v1044 = vadd.f32 %v375, %v1043
      %v1045 = vpop.f32.mrb[0].mxu0
      %v1046 = vpop.f32.mrb[0].mxu0
      %v1047 = vadd.f32 %v375, %v1046
      %v1048 = vpop.f32.mrb[0].mxu0
      %1049 = vmatprep.mubr.bf16.mxu0 0
      %1050 = vmatmul.mubr.bf16.gmra.mrb[0].mxu0 %v659
      %v1051 = vpop.f32.mrb[0].mxu0
      %v1052 = vadd.f32 %v375, %v1051
      %v1053 = vpop.f32.mrb[0].mxu0
      %v1054 = vpop.f32.mrb[0].mxu0
      %v1055 = vadd.f32 %v375, %v1054
      %v1056 = vpop.f32.mrb[0].mxu0
      %1057 = vmatprep.mubr.bf16.mxu0 0
      %1058 = vmatmul.mubr.bf16.gmra.mrb[0].mxu0 %v660
      %v1059 = vpop.f32.mrb[0].mxu0
      %v1060 = vadd.f32 %v375, %v1059
      %v1061 = vpop.f32.mrb[0].mxu0
      %v1062 = vpop.f32.mrb[0].mxu0
      %v1063 = vadd.f32 %v375, %v1062
      %v1064 = vpop.f32.mrb[0].mxu0
      %1065 = vmatprep.mubr.bf16.mxu0 0
      %1066 = vmatmul.mubr.bf16.gmra.mrb[0].mxu0 %v661
      %v1067 = vpop.f32.mrb[0].mxu0
      %v1068 = vadd.f32 %v375, %v1067
      %v1069 = vpop.f32.mrb[0].mxu0
      %v1070 = vpop.f32.mrb[0].mxu0
      %v1071 = vadd.f32 %v375, %v1070
      %v1072 = vpop.f32.mrb[0].mxu0
      %1073 = vmatprep.mubr.bf16.mxu0 0
      %1074 = vmatmul.mubr.bf16.gmra.mrb[0].mxu0 %v662
      %v1075 = vpop.f32.mrb[0].mxu0
      %v1076 = vadd.f32 %v375, %v1075
      %v1077 = vpop.f32.mrb[0].mxu0
      %v1078 = vpop.f32.mrb[0].mxu0
      %v1079 = vadd.f32 %v375, %v1078
      %v1080 = vpop.f32.mrb[0].mxu0
      %1081 = vmatprep.mubr.bf16.mxu0 0
      %1082 = vmatmul.mubr.bf16.gmra.mrb[0].mxu0 %v663
      %v1083 = vpop.f32.mrb[0].mxu0
      %v1084 = vadd.f32 %v375, %v1083
      %v1085 = vpop.f32.mrb[0].mxu0
      %v1086 = vpop.f32.mrb[0].mxu0
      %v1087 = vadd.f32 %v375, %v1086
      %v1088 = vpop.f32.mrb[0].mxu0
      %1089 = vmatprep.mubr.bf16.mxu0 0
      %1090 = vmatmul.mubr.bf16.gmra.mrb[0].mxu0 %v664
      %v1091 = vpop.f32.mrb[0].mxu0
      %v1092 = vadd.f32 %v375, %v1091
      %v1093 = vpop.f32.mrb[0].mxu0
      %v1094 = vpop.f32.mrb[0].mxu0
      %v1095 = vadd.f32 %v375, %v1094
      %v1096 = vpop.f32.mrb[0].mxu0
      %1097 = vmatprep.mubr.bf16.mxu0 0
      %1098 = vmatmul.mubr.bf16.gmra.mrb[0].mxu0 %v665
      %v1099 = vpop.f32.mrb[0].mxu0
      %v1100 = vadd.f32 %v375, %v1099
      %v1101 = vpop.f32.mrb[0].mxu0
      %v1102 = vpop.f32.mrb[0].mxu0
      %v1103 = vadd.f32 %v375, %v1102
      %v1104 = vpop.f32.mrb[0].mxu0
      %1105 = vmatprep.mubr.bf16.mxu0 0
      %1106 = vmatmul.mubr.bf16.gmra.mrb[0].mxu0 %v666
      %v1107 = vpop.f32.mrb[0].mxu0
      %v1108 = vadd.f32 %v375, %v1107
      %v1109 = vpop.f32.mrb[0].mxu0
      %v1110 = vpop.f32.mrb[0].mxu0
      %v1111 = vadd.f32 %v375, %v1110
      %v1112 = vpop.f32.mrb[0].mxu0
      %1113 = vmatprep.mubr.bf16.mxu0 0
      %1114 = vmatmul.mubr.bf16.gmra.mrb[0].mxu0 %v667
      %v1115 = vpop.f32.mrb[0].mxu0
      %v1116 = vadd.f32 %v375, %v1115
      %v1117 = vpop.f32.mrb[0].mxu0
      %v1118 = vpop.f32.mrb[0].mxu0
      %v1119 = vadd.f32 %v375, %v1118
      %v1120 = vpop.f32.mrb[0].mxu0
      %1121 = vmatprep.mubr.bf16.mxu0 0
      %1122 = vmatmul.mubr.bf16.gmra.mrb[0].mxu0 %v668
      %v1123 = vpop.f32.mrb[0].mxu0
      %v1124 = vadd.f32 %v375, %v1123
      %v1125 = vpop.f32.mrb[0].mxu0
      %v1126 = vpop.f32.mrb[0].mxu0
      %v1127 = vadd.f32 %v375, %v1126
      %v1128 = vpop.f32.mrb[0].mxu0
      %1129 = vmatprep.mubr.bf16.mxu0 0
      %1130 = vmatmul.mubr.bf16.gmra.mrb[0].mxu0 %v669
      %v1131 = vpop.f32.mrb[0].mxu0
      %v1132 = vadd.f32 %v375, %v1131
      %v1133 = vpop.f32.mrb[0].mxu0
      %v1134 = vpop.f32.mrb[0].mxu0
      %v1135 = vadd.f32 %v375, %v1134
      %v1136 = vpop.f32.mrb[0].mxu0
      %1137 = vmatprep.mubr.bf16.mxu0 0
      %1138 = vmatmul.mubr.bf16.gmra.mrb[0].mxu0 %v670
      %v1139 = vpop.f32.mrb[0].mxu0
      %v1140 = vadd.f32 %v375, %v1139
      %v1141 = vpop.f32.mrb[0].mxu0
      %v1142 = vpop.f32.mrb[0].mxu0
      %v1143 = vadd.f32 %v375, %v1142
      %v1144 = vpop.f32.mrb[0].mxu0
      %1145 = vmatprep.mubr.bf16.mxu0 0
      %1146 = vmatmul.mubr.bf16.gmra.mrb[0].mxu0 %v671
      %v1147 = vpop.f32.mrb[0].mxu0
      %v1148 = vadd.f32 %v375, %v1147
      %v1149 = vpop.f32.mrb[0].mxu0
      %v1150 = vpop.f32.mrb[0].mxu0
      %v1151 = vadd.f32 %v375, %v1150
      %v1152 = vpop.f32.mrb[0].mxu0
      %1153 = vmatprep.mubr.bf16.mxu0 0
      %1154 = vmatmul.mubr.bf16.gmra.mrb[0].mxu0 %v672
      %v1155 = vpop.f32.mrb[0].mxu0
      %v1156 = vadd.f32 %v375, %v1155
      %v1157 = vpop.f32.mrb[0].mxu0
      %v1158 = vpop.f32.mrb[0].mxu0
      %v1159 = vadd.f32 %v375, %v1158
      %v1160 = vpop.f32.mrb[0].mxu0
      %1161 = vmatprep.mubr.bf16.mxu0 0
      %1162 = vmatmul.mubr.bf16.gmra.mrb[0].mxu0 %v673
      %v1163 = vpop.f32.mrb[0].mxu0
      %v1164 = vadd.f32 %v375, %v1163
      %v1165 = vpop.f32.mrb[0].mxu0
      %v1166 = vpop.f32.mrb[0].mxu0
      %v1167 = vadd.f32 %v375, %v1166
      %v1168 = vpop.f32.mrb[0].mxu0
      %1169 = vmatprep.mubr.bf16.mxu0 0
      %1170 = vmatmul.mubr.bf16.gmra.mrb[0].mxu0 %v674
      %v1171 = vpop.f32.mrb[0].mxu0
      %v1172 = vadd.f32 %v375, %v1171
      %v1173 = vpop.f32.mrb[0].mxu0
      %v1174 = vpop.f32.mrb[0].mxu0
      %v1175 = vadd.f32 %v375, %v1174
      %v1176 = vpop.f32.mrb[0].mxu0
      %1177 = vmatprep.mubr.bf16.mxu0 0
      %1178 = vmatmul.mubr.bf16.gmra.mrb[0].mxu0 %v675
      %v1179 = vpop.f32.mrb[0].mxu0
      %v1180 = vadd.f32 %v375, %v1179
      %v1181 = vpop.f32.mrb[0].mxu0
      %v1182 = vpop.f32.mrb[0].mxu0
      %v1183 = vadd.f32 %v375, %v1182
      %v1184 = vpop.f32.mrb[0].mxu0
      %1185 = vmatprep.mubr.bf16.mxu0 0
      %1186 = vmatmul.mubr.bf16.gmra.mrb[0].mxu0 %v676
      %v1187 = vpop.f32.mrb[0].mxu0
      %v1188 = vadd.f32 %v375, %v1187
      %v1189 = vpop.f32.mrb[0].mxu0
      %v1190 = vpop.f32.mrb[0].mxu0
      %v1191 = vadd.f32 %v375, %v1190
      %v1192 = vpop.f32.mrb[0].mxu0
      %1193 = vmatprep.mubr.bf16.mxu0 0
      %1194 = vmatmul.mubr.bf16.gmra.mrb[0].mxu0 %v677
      %v1195 = vpop.f32.mrb[0].mxu0
      %v1196 = vadd.f32 %v375, %v1195
      %v1197 = vpop.f32.mrb[0].mxu0
      %v1198 = vpop.f32.mrb[0].mxu0
      %v1199 = vadd.f32 %v375, %v1198
      %v1200 = vpop.f32.mrb[0].mxu0
      %1201 = vmatprep.mubr.bf16.mxu0 0
      %1202 = vmatmul.mubr.bf16.gmra.mrb[0].mxu0 %v678
      %v1203 = vpop.f32.mrb[0].mxu0
      %v1204 = vadd.f32 %v375, %v1203
      %v1205 = vpop.f32.mrb[0].mxu0
      %v1206 = vpop.f32.mrb[0].mxu0
      %v1207 = vadd.f32 %v375, %v1206
      %v1208 = vpop.f32.mrb[0].mxu0
      %1209 = vmatprep.mubr.bf16.mxu0 0
      %1210 = vmatmul.mubr.bf16.gmra.mrb[0].mxu0 %v679
      %v1211 = vpop.f32.mrb[0].mxu0
      %v1212 = vadd.f32 %v375, %v1211
      %v1213 = vpop.f32.mrb[0].mxu0
      %v1214 = vpop.f32.mrb[0].mxu0
      %v1215 = vadd.f32 %v375, %v1214
      %v1216 = vpop.f32.mrb[0].mxu0
      %1217 = vmatprep.mubr.bf16.mxu0 0
      %1218 = vmatmul.mubr.bf16.gmra.mrb[0].mxu0 %v680
      %v1219 = vpop.f32.mrb[0].mxu0
      %v1220 = vadd.f32 %v375, %v1219
      %v1221 = vpop.f32.mrb[0].mxu0
      %v1222 = vpop.f32.mrb[0].mxu0
      %v1223 = vadd.f32 %v375, %v1222
      %v1224 = vpop.f32.mrb[0].mxu0
      %1225 = vmatprep.mubr.bf16.mxu0 0
      %1226 = vmatmul.mubr.bf16.gmra.mrb[0].mxu0 %v681
      %v1227 = vpop.f32.mrb[0].mxu0
      %v1228 = vadd.f32 %v375, %v1227
      %v1229 = vpop.f32.mrb[0].mxu0
      %v1230 = vpop.f32.mrb[0].mxu0
      %v1231 = vadd.f32 %v375, %v1230
      %v1232 = vpop.f32.mrb[0].mxu0
      %1233 = vmatprep.mubr.bf16.mxu0 0
      %1234 = vmatmul.mubr.bf16.gmra.mrb[0].mxu0 %v682
      %v1235 = vpop.f32.mrb[0].mxu0
      %v1236 = vadd.f32 %v375, %v1235
      %v1237 = vpop.f32.mrb[0].mxu0
      %v1238 = vpop.f32.mrb[0].mxu0
      %v1239 = vadd.f32 %v375, %v1238
      %v1240 = vpop.f32.mrb[0].mxu0
      %1241 = vmatprep.mubr.bf16.mxu0 0
      %1242 = vmatmul.mubr.bf16.gmra.mrb[0].mxu0 %v683
      %v1243 = vpop.f32.mrb[0].mxu0
      %v1244 = vadd.f32 %v375, %v1243
      %v1245 = vpop.f32.mrb[0].mxu0
      %v1246 = vpop.f32.mrb[0].mxu0
      %v1247 = vadd.f32 %v375, %v1246
      %v1248 = vpop.f32.mrb[0].mxu0
      %1249 = vmatprep.mubr.bf16.mxu0 0
      %1250 = vmatmul.mubr.bf16.gmra.mrb[0].mxu0 %v684
      %v1251 = vpop.f32.mrb[0].mxu0
      %v1252 = vadd.f32 %v375, %v1251
      %v1253 = vpop.f32.mrb[0].mxu0
      %v1254 = vpop.f32.mrb[0].mxu0
      %v1255 = vadd.f32 %v375, %v1254
      %v1256 = vpop.f32.mrb[0].mxu0
      %1257 = vmatprep.mubr.bf16.mxu0 0
      %1258 = vmatmul.mubr.bf16.gmra.mrb[0].mxu0 %v685
      %v1259 = vpop.f32.mrb[0].mxu0
      %v1260 = vadd.f32 %v375, %v1259
      %v1261 = vpop.f32.mrb[0].mxu0
      %v1262 = vpop.f32.mrb[0].mxu0
      %v1263 = vadd.f32 %v375, %v1262
      %v1264 = vpop.f32.mrb[0].mxu0
      %1265 = vmatprep.mubr.bf16.mxu0 0
      %1266 = vmatmul.mubr.bf16.gmra.mrb[0].mxu0 %v686
      %v1267 = vpop.f32.mrb[0].mxu0
      %v1268 = vadd.f32 %v375, %v1267
      %v1269 = vpop.f32.mrb[0].mxu0
      %v1270 = vpop.f32.mrb[0].mxu0
      %v1271 = vadd.f32 %v375, %v1270
      %v1272 = vpop.f32.mrb[0].mxu0
      %1273 = vmatprep.mubr.bf16.mxu0 0
      %1274 = vmatmul.mubr.bf16.gmra.mrb[0].mxu0 %v687
      %v1275 = vpop.f32.mrb[0].mxu0
      %v1276 = vadd.f32 %v375, %v1275
      %v1277 = vpop.f32.mrb[0].mxu0
      %v1278 = vpop.f32.mrb[0].mxu0
      %v1279 = vadd.f32 %v375, %v1278
      %v1280 = vpop.f32.mrb[0].mxu0
      %1281 = vmatprep.mubr.bf16.mxu0 0
      %1282 = vmatmul.mubr.bf16.gmra.mrb[0].mxu0 %v688
      %v1283 = vpop.f32.mrb[0].mxu0
      %v1284 = vadd.f32 %v375, %v1283
      %v1285 = vpop.f32.mrb[0].mxu0
      %v1286 = vpop.f32.mrb[0].mxu0
      %v1287 = vadd.f32 %v375, %v1286
      %v1288 = vpop.f32.mrb[0].mxu0
      %1289 = vmatprep.mubr.bf16.mxu0 0
      %1290 = vmatmul.mubr.bf16.gmra.mrb[0].mxu0 %v689
      %v1291 = vpop.f32.mrb[0].mxu0
      %v1292 = vadd.f32 %v375, %v1291
      %v1293 = vpop.f32.mrb[0].mxu0
      %v1294 = vpop.f32.mrb[0].mxu0
      %v1295 = vadd.f32 %v375, %v1294
      %v1296 = vpop.f32.mrb[0].mxu0
      %1297 = vmatprep.mubr.bf16.mxu0 0
      %1298 = vmatmul.mubr.bf16.gmra.mrb[0].mxu0 %v690
      %v1299 = vpop.f32.mrb[0].mxu0
      %v1300 = vadd.f32 %v375, %v1299
      %v1301 = vpop.f32.mrb[0].mxu0
      %v1302 = vpop.f32.mrb[0].mxu0
      %v1303 = vadd.f32 %v375, %v1302
      %v1304 = vpop.f32.mrb[0].mxu0
      %1305 = vmatprep.mubr.bf16.mxu0 0
      %1306 = vmatmul.mubr.bf16.gmra.mrb[0].mxu0 %v691
      %v1307 = vpop.f32.mrb[0].mxu0
      %v1308 = vadd.f32 %v375, %v1307
      %v1309 = vpop.f32.mrb[0].mxu0
      %v1310 = vpop.f32.mrb[0].mxu0
      %v1311 = vadd.f32 %v375, %v1310
      %v1312 = vpop.f32.mrb[0].mxu0
      %1313 = vmatprep.mubr.bf16.mxu0 0
      %1314 = vmatmul.mubr.bf16.gmra.mrb[0].mxu0 %v692
      %v1315 = vpop.f32.mrb[0].mxu0
      %v1316 = vadd.f32 %v375, %v1315
      %v1317 = vpop.f32.mrb[0].mxu0
      %v1318 = vpop.f32.mrb[0].mxu0
      %v1319 = vadd.f32 %v375, %v1318
      %v1320 = vpop.f32.mrb[0].mxu0
      %1321 = vmatprep.mubr.bf16.mxu0 0
      %1322 = vmatmul.mubr.bf16.gmra.mrb[0].mxu0 %v693
      %v1323 = vpop.f32.mrb[0].mxu0
      %v1324 = vadd.f32 %v375, %v1323
      %v1325 = vpop.f32.mrb[0].mxu0
      %v1326 = vpop.f32.mrb[0].mxu0
      %v1327 = vadd.f32 %v375, %v1326
      %v1328 = vpop.f32.mrb[0].mxu0
      %1329 = vmatprep.mubr.bf16.mxu0 0
      %1330 = vmatmul.mubr.bf16.gmra.mrb[0].mxu0 %v694
      %v1331 = vpop.f32.mrb[0].mxu0
      %v1332 = vadd.f32 %v375, %v1331
      %v1333 = vpop.f32.mrb[0].mxu0
      %v1334 = vpop.f32.mrb[0].mxu0
      %v1335 = vadd.f32 %v375, %v1334
      %v1336 = vpop.f32.mrb[0].mxu0
      %1337 = vmatprep.mubr.bf16.mxu0 0
      %1338 = vmatmul.mubr.bf16.gmra.mrb[0].mxu0 %v695
      %v1339 = vpop.f32.mrb[0].mxu0
      %v1340 = vadd.f32 %v375, %v1339
      %v1341 = vpop.f32.mrb[0].mxu0
      %v1342 = vpop.f32.mrb[0].mxu0
      %v1343 = vadd.f32 %v375, %v1342
      %v1344 = vpop.f32.mrb[0].mxu0
      %1345 = vmatprep.mubr.bf16.mxu0 0
      %1346 = vmatmul.mubr.bf16.gmra.mrb[0].mxu0 %v696
      %v1347 = vpop.f32.mrb[0].mxu0
      %v1348 = vadd.f32 %v375, %v1347
      %v1349 = vpop.f32.mrb[0].mxu0
      %v1350 = vpop.f32.mrb[0].mxu0
      %v1351 = vadd.f32 %v375, %v1350
      %v1352 = vpop.f32.mrb[0].mxu0
      %1353 = vdwg.mxu0
      %vm1354 = vcmp.ge.f32.partialorder %v844, 0.0
      %vm1355 = vcmp.ge.f32.partialorder %v847, 0.0
      %vm1356 = vcmp.ge.f32.partialorder %v852, 0.0
      %vm1357 = vcmp.ge.f32.partialorder %v855, 0.0
      %vm1358 = vcmp.ge.f32.partialorder %v860, 0.0
      %vm1359 = vcmp.ge.f32.partialorder %v863, 0.0
      %vm1360 = vcmp.ge.f32.partialorder %v868, 0.0
      %vm1361 = vcmp.ge.f32.partialorder %v871, 0.0
      %vm1362 = vcmp.ge.f32.partialorder %v876, 0.0
      %vm1363 = vcmp.ge.f32.partialorder %v879, 0.0
      %vm1364 = vcmp.ge.f32.partialorder %v884, 0.0
      %vm1365 = vcmp.ge.f32.partialorder %v887, 0.0
      %vm1366 = vcmp.ge.f32.partialorder %v892, 0.0
      %vm1367 = vcmp.ge.f32.partialorder %v895, 0.0
      %vm1368 = vcmp.ge.f32.partialorder %v900, 0.0
      %vm1369 = vcmp.ge.f32.partialorder %v903, 0.0
      %vm1370 = vcmp.ge.f32.partialorder %v908, 0.0
      %vm1371 = vcmp.ge.f32.partialorder %v911, 0.0
      %vm1372 = vcmp.ge.f32.partialorder %v916, 0.0
      %vm1373 = vcmp.ge.f32.partialorder %v919, 0.0
      %vm1374 = vcmp.ge.f32.partialorder %v924, 0.0
      %vm1375 = vcmp.ge.f32.partialorder %v927, 0.0
      %vm1376 = vcmp.ge.f32.partialorder %v932, 0.0
      %vm1377 = vcmp.ge.f32.partialorder %v935, 0.0
      %vm1378 = vcmp.ge.f32.partialorder %v940, 0.0
      %vm1379 = vcmp.ge.f32.partialorder %v943, 0.0
      %vm1380 = vcmp.ge.f32.partialorder %v948, 0.0
      %vm1381 = vcmp.ge.f32.partialorder %v951, 0.0
      %vm1382 = vcmp.ge.f32.partialorder %v956, 0.0
      %vm1383 = vcmp.ge.f32.partialorder %v959, 0.0
      %vm1384 = vcmp.ge.f32.partialorder %v964, 0.0
      %vm1385 = vcmp.ge.f32.partialorder %v967, 0.0
      %vm1386 = vcmp.ge.f32.partialorder %v972, 0.0
      %vm1387 = vcmp.ge.f32.partialorder %v975, 0.0
      %vm1388 = vcmp.ge.f32.partialorder %v980, 0.0
      %vm1389 = vcmp.ge.f32.partialorder %v983, 0.0
      %vm1390 = vcmp.ge.f32.partialorder %v988, 0.0
      %vm1391 = vcmp.ge.f32.partialorder %v991, 0.0
      %vm1392 = vcmp.ge.f32.partialorder %v996, 0.0
      %vm1393 = vcmp.ge.f32.partialorder %v999, 0.0
      %vm1394 = vcmp.ge.f32.partialorder %v1004, 0.0
      %vm1395 = vcmp.ge.f32.partialorder %v1007, 0.0
      %vm1396 = vcmp.ge.f32.partialorder %v1012, 0.0
      %vm1397 = vcmp.ge.f32.partialorder %v1015, 0.0
      %vm1398 = vcmp.ge.f32.partialorder %v1020, 0.0
      %vm1399 = vcmp.ge.f32.partialorder %v1023, 0.0
      %vm1400 = vcmp.ge.f32.partialorder %v1028, 0.0
      %vm1401 = vcmp.ge.f32.partialorder %v1031, 0.0
      %vm1402 = vcmp.ge.f32.partialorder %v1036, 0.0
      %vm1403 = vcmp.ge.f32.partialorder %v1039, 0.0
      %vm1404 = vcmp.ge.f32.partialorder %v1044, 0.0
      %vm1405 = vcmp.ge.f32.partialorder %v1047, 0.0
      %vm1406 = vcmp.ge.f32.partialorder %v1052, 0.0
      %vm1407 = vcmp.ge.f32.partialorder %v1055, 0.0
      %vm1408 = vcmp.ge.f32.partialorder %v1060, 0.0
      %vm1409 = vcmp.ge.f32.partialorder %v1063, 0.0
      %vm1410 = vcmp.ge.f32.partialorder %v1068, 0.0
      %vm1411 = vcmp.ge.f32.partialorder %v1071, 0.0
      %vm1412 = vcmp.ge.f32.partialorder %v1076, 0.0
      %vm1413 = vcmp.ge.f32.partialorder %v1079, 0.0
      %vm1414 = vcmp.ge.f32.partialorder %v1084, 0.0
      %vm1415 = vcmp.ge.f32.partialorder %v1087, 0.0
      %vm1416 = vcmp.ge.f32.partialorder %v1092, 0.0
      %vm1417 = vcmp.ge.f32.partialorder %v1095, 0.0
      %vm1418 = vcmp.ge.f32.partialorder %v1100, 0.0
      %vm1419 = vcmp.ge.f32.partialorder %v1103, 0.0
      %vm1420 = vcmp.ge.f32.partialorder %v1108, 0.0
      %vm1421 = vcmp.ge.f32.partialorder %v1111, 0.0
      %vm1422 = vcmp.ge.f32.partialorder %v1116, 0.0
      %vm1423 = vcmp.ge.f32.partialorder %v1119, 0.0
      %vm1424 = vcmp.ge.f32.partialorder %v1124, 0.0
      %vm1425 = vcmp.ge.f32.partialorder %v1127, 0.0
      %vm1426 = vcmp.ge.f32.partialorder %v1132, 0.0
      %vm1427 = vcmp.ge.f32.partialorder %v1135, 0.0
      %vm1428 = vcmp.ge.f32.partialorder %v1140, 0.0
      %vm1429 = vcmp.ge.f32.partialorder %v1143, 0.0
      %vm1430 = vcmp.ge.f32.partialorder %v1148, 0.0
      %vm1431 = vcmp.ge.f32.partialorder %v1151, 0.0
      %vm1432 = vcmp.ge.f32.partialorder %v1156, 0.0
      %vm1433 = vcmp.ge.f32.partialorder %v1159, 0.0
      %vm1434 = vcmp.ge.f32.partialorder %v1164, 0.0
      %vm1435 = vcmp.ge.f32.partialorder %v1167, 0.0
      %vm1436 = vcmp.ge.f32.partialorder %v1172, 0.0
      %vm1437 = vcmp.ge.f32.partialorder %v1175, 0.0
      %vm1438 = vcmp.ge.f32.partialorder %v1180, 0.0
      %vm1439 = vcmp.ge.f32.partialorder %v1183, 0.0
      %vm1440 = vcmp.ge.f32.partialorder %v1188, 0.0
      %vm1441 = vcmp.ge.f32.partialorder %v1191, 0.0
      %vm1442 = vcmp.ge.f32.partialorder %v1196, 0.0
      %vm1443 = vcmp.ge.f32.partialorder %v1199, 0.0
      %vm1444 = vcmp.ge.f32.partialorder %v1204, 0.0
      %vm1445 = vcmp.ge.f32.partialorder %v1207, 0.0
      %vm1446 = vcmp.ge.f32.partialorder %v1212, 0.0
      %vm1447 = vcmp.ge.f32.partialorder %v1215, 0.0
      %vm1448 = vcmp.ge.f32.partialorder %v1220, 0.0
      %vm1449 = vcmp.ge.f32.partialorder %v1223, 0.0
      %vm1450 = vcmp.ge.f32.partialorder %v1228, 0.0
      %vm1451 = vcmp.ge.f32.partialorder %v1231, 0.0
      %vm1452 = vcmp.ge.f32.partialorder %v1236, 0.0
      %vm1453 = vcmp.ge.f32.partialorder %v1239, 0.0
      %vm1454 = vcmp.ge.f32.partialorder %v1244, 0.0
      %vm1455 = vcmp.ge.f32.partialorder %v1247, 0.0
      %vm1456 = vcmp.ge.f32.partialorder %v1252, 0.0
      %vm1457 = vcmp.ge.f32.partialorder %v1255, 0.0
      %vm1458 = vcmp.ge.f32.partialorder %v1260, 0.0
      %vm1459 = vcmp.ge.f32.partialorder %v1263, 0.0
      %vm1460 = vcmp.ge.f32.partialorder %v1268, 0.0
      %vm1461 = vcmp.ge.f32.partialorder %v1271, 0.0
      %vm1462 = vcmp.ge.f32.partialorder %v1276, 0.0
      %vm1463 = vcmp.ge.f32.partialorder %v1279, 0.0
      %vm1464 = vcmp.ge.f32.partialorder %v1284, 0.0
      %vm1465 = vcmp.ge.f32.partialorder %v1287, 0.0
      %vm1466 = vcmp.ge.f32.partialorder %v1292, 0.0
      %vm1467 = vcmp.ge.f32.partialorder %v1295, 0.0
      %vm1468 = vcmp.ge.f32.partialorder %v1300, 0.0
      %vm1469 = vcmp.ge.f32.partialorder %v1303, 0.0
      %vm1470 = vcmp.ge.f32.partialorder %v1308, 0.0
      %vm1471 = vcmp.ge.f32.partialorder %v1311, 0.0
      %vm1472 = vcmp.ge.f32.partialorder %v1316, 0.0
      %vm1473 = vcmp.ge.f32.partialorder %v1319, 0.0
      %vm1474 = vcmp.ge.f32.partialorder %v1324, 0.0
      %vm1475 = vcmp.ge.f32.partialorder %v1327, 0.0
      %vm1476 = vcmp.ge.f32.partialorder %v1332, 0.0
      %vm1477 = vcmp.ge.f32.partialorder %v1335, 0.0
      %vm1478 = vcmp.ge.f32.partialorder %v1340, 0.0
      %vm1479 = vcmp.ge.f32.partialorder %v1343, 0.0
      %vm1480 = vcmp.ge.f32.partialorder %v1348, 0.0
      %vm1481 = vcmp.ge.f32.partialorder %v1351, 0.0
      %v1482 = vmul.f32 %v844, 0.2
      %v1483 = vmul.f32 %v847, 0.2
      %v1484 = vmul.f32 %v852, 0.2
      %v1485 = vmul.f32 %v855, 0.2
      %v1486 = vmul.f32 %v860, 0.2
      %v1487 = vmul.f32 %v863, 0.2
      %v1488 = vmul.f32 %v868, 0.2
      %v1489 = vmul.f32 %v871, 0.2
      %v1490 = vmul.f32 %v876, 0.2
      %v1491 = vmul.f32 %v879, 0.2
      %v1492 = vmul.f32 %v884, 0.2
      %v1493 = vmul.f32 %v887, 0.2
      %v1494 = vmul.f32 %v892, 0.2
      %v1495 = vmul.f32 %v895, 0.2
      %v1496 = vmul.f32 %v900, 0.2
      %v1497 = vmul.f32 %v903, 0.2
      %v1498 = vmul.f32 %v908, 0.2
      %v1499 = vmul.f32 %v911, 0.2
      %v1500 = vmul.f32 %v916, 0.2
      %v1501 = vmul.f32 %v919, 0.2
      %v1502 = vmul.f32 %v924, 0.2
      %v1503 = vmul.f32 %v927, 0.2
      %v1504 = vmul.f32 %v932, 0.2
      %v1505 = vmul.f32 %v935, 0.2
      %v1506 = vmul.f32 %v940, 0.2
      %v1507 = vmul.f32 %v943, 0.2
      %v1508 = vmul.f32 %v948, 0.2
      %v1509 = vmul.f32 %v951, 0.2
      %v1510 = vmul.f32 %v956, 0.2
      %v1511 = vmul.f32 %v959, 0.2
      %v1512 = vmul.f32 %v964, 0.2
      %v1513 = vmul.f32 %v967, 0.2
      %v1514 = vmul.f32 %v972, 0.2
      %v1515 = vmul.f32 %v975, 0.2
      %v1516 = vmul.f32 %v980, 0.2
      %v1517 = vmul.f32 %v983, 0.2
      %v1518 = vmul.f32 %v988, 0.2
      %v1519 = vmul.f32 %v991, 0.2
      %v1520 = vmul.f32 %v996, 0.2
      %v1521 = vmul.f32 %v999, 0.2
      %v1522 = vmul.f32 %v1004, 0.2
      %v1523 = vmul.f32 %v1007, 0.2
      %v1524 = vmul.f32 %v1012, 0.2
      %v1525 = vmul.f32 %v1015, 0.2
      %v1526 = vmul.f32 %v1020, 0.2
      %v1527 = vmul.f32 %v1023, 0.2
      %v1528 = vmul.f32 %v1028, 0.2
      %v1529 = vmul.f32 %v1031, 0.2
      %v1530 = vmul.f32 %v1036, 0.2
      %v1531 = vmul.f32 %v1039, 0.2
      %v1532 = vmul.f32 %v1044, 0.2
      %v1533 = vmul.f32 %v1047, 0.2
      %v1534 = vmul.f32 %v1052, 0.2
      %v1535 = vmul.f32 %v1055, 0.2
      %v1536 = vmul.f32 %v1060, 0.2
      %v1537 = vmul.f32 %v1063, 0.2
      %v1538 = vmul.f32 %v1068, 0.2
      %v1539 = vmul.f32 %v1071, 0.2
      %v1540 = vmul.f32 %v1076, 0.2
      %v1541 = vmul.f32 %v1079, 0.2
      %v1542 = vmul.f32 %v1084, 0.2
      %v1543 = vmul.f32 %v1087, 0.2
      %v1544 = vmul.f32 %v1092, 0.2
      %v1545 = vmul.f32 %v1095, 0.2
      %v1546 = vmul.f32 %v1100, 0.2
      %v1547 = vmul.f32 %v1103, 0.2
      %v1548 = vmul.f32 %v1108, 0.2
      %v1549 = vmul.f32 %v1111, 0.2
      %v1550 = vmul.f32 %v1116, 0.2
      %v1551 = vmul.f32 %v1119, 0.2
      %v1552 = vmul.f32 %v1124, 0.2
      %v1553 = vmul.f32 %v1127, 0.2
      %v1554 = vmul.f32 %v1132, 0.2
      %v1555 = vmul.f32 %v1135, 0.2
      %v1556 = vmul.f32 %v1140, 0.2
      %v1557 = vmul.f32 %v1143, 0.2
      %v1558 = vmul.f32 %v1148, 0.2
      %v1559 = vmul.f32 %v1151, 0.2
      %v1560 = vmul.f32 %v1156, 0.2
      %v1561 = vmul.f32 %v1159, 0.2
      %v1562 = vmul.f32 %v1164, 0.2
      %v1563 = vmul.f32 %v1167, 0.2
      %v1564 = vmul.f32 %v1172, 0.2
      %v1565 = vmul.f32 %v1175, 0.2
      %v1566 = vmul.f32 %v1180, 0.2
      %v1567 = vmul.f32 %v1183, 0.2
      %v1568 = vmul.f32 %v1188, 0.2
      %v1569 = vmul.f32 %v1191, 0.2
      %v1570 = vmul.f32 %v1196, 0.2
      %v1571 = vmul.f32 %v1199, 0.2
      %v1572 = vmul.f32 %v1204, 0.2
      %v1573 = vmul.f32 %v1207, 0.2
      %v1574 = vmul.f32 %v1212, 0.2
      %v1575 = vmul.f32 %v1215, 0.2
      %v1576 = vmul.f32 %v1220, 0.2
      %v1577 = vmul.f32 %v1223, 0.2
      %v1578 = vmul.f32 %v1228, 0.2
      %v1579 = vmul.f32 %v1231, 0.2
      %v1580 = vmul.f32 %v1236, 0.2
      %v1581 = vmul.f32 %v1239, 0.2
      %v1582 = vmul.f32 %v1244, 0.2
      %v1583 = vmul.f32 %v1247, 0.2
      %v1584 = vmul.f32 %v1252, 0.2
      %v1585 = vmul.f32 %v1255, 0.2
      %v1586 = vmul.f32 %v1260, 0.2
      %v1587 = vmul.f32 %v1263, 0.2
      %v1588 = vmul.f32 %v1268, 0.2
      %v1589 = vmul.f32 %v1271, 0.2
      %v1590 = vmul.f32 %v1276, 0.2
      %v1591 = vmul.f32 %v1279, 0.2
      %v1592 = vmul.f32 %v1284, 0.2
      %v1593 = vmul.f32 %v1287, 0.2
      %v1594 = vmul.f32 %v1292, 0.2
      %v1595 = vmul.f32 %v1295, 0.2
      %v1596 = vmul.f32 %v1300, 0.2
      %v1597 = vmul.f32 %v1303, 0.2
      %v1598 = vmul.f32 %v1308, 0.2
      %v1599 = vmul.f32 %v1311, 0.2
      %v1600 = vmul.f32 %v1316, 0.2
      %v1601 = vmul.f32 %v1319, 0.2
      %v1602 = vmul.f32 %v1324, 0.2
      %v1603 = vmul.f32 %v1327, 0.2
      %v1604 = vmul.f32 %v1332, 0.2
      %v1605 = vmul.f32 %v1335, 0.2
      %v1606 = vmul.f32 %v1340, 0.2
      %v1607 = vmul.f32 %v1343, 0.2
      %v1608 = vmul.f32 %v1348, 0.2
      %v1609 = vmul.f32 %v1351, 0.2
      %v1610 = vsel %vm1354, %v844, %v1482
      %v1611 = vsel %vm1355, %v847, %v1483
      %v1612 = vsel %vm1356, %v852, %v1484
      %v1613 = vsel %vm1357, %v855, %v1485
      %v1614 = vsel %vm1358, %v860, %v1486
      %v1615 = vsel %vm1359, %v863, %v1487
      %v1616 = vsel %vm1360, %v868, %v1488
      %v1617 = vsel %vm1361, %v871, %v1489
      %v1618 = vsel %vm1362, %v876, %v1490
      %v1619 = vsel %vm1363, %v879, %v1491
      %v1620 = vsel %vm1364, %v884, %v1492
      %v1621 = vsel %vm1365, %v887, %v1493
      %v1622 = vsel %vm1366, %v892, %v1494
      %v1623 = vsel %vm1367, %v895, %v1495
      %v1624 = vsel %vm1368, %v900, %v1496
      %v1625 = vsel %vm1369, %v903, %v1497
      %v1626 = vsel %vm1370, %v908, %v1498
      %v1627 = vsel %vm1371, %v911, %v1499
      %v1628 = vsel %vm1372, %v916, %v1500
      %v1629 = vsel %vm1373, %v919, %v1501
      %v1630 = vsel %vm1374, %v924, %v1502
      %v1631 = vsel %vm1375, %v927, %v1503
      %v1632 = vsel %vm1376, %v932, %v1504
      %v1633 = vsel %vm1377, %v935, %v1505
      %v1634 = vsel %vm1378, %v940, %v1506
      %v1635 = vsel %vm1379, %v943, %v1507
      %v1636 = vsel %vm1380, %v948, %v1508
      %v1637 = vsel %vm1381, %v951, %v1509
      %v1638 = vsel %vm1382, %v956, %v1510
      %v1639 = vsel %vm1383, %v959, %v1511
      %v1640 = vsel %vm1384, %v964, %v1512
      %v1641 = vsel %vm1385, %v967, %v1513
      %v1642 = vsel %vm1386, %v972, %v1514
      %v1643 = vsel %vm1387, %v975, %v1515
      %v1644 = vsel %vm1388, %v980, %v1516
      %v1645 = vsel %vm1389, %v983, %v1517
      %v1646 = vsel %vm1390, %v988, %v1518
      %v1647 = vsel %vm1391, %v991, %v1519
      %v1648 = vsel %vm1392, %v996, %v1520
      %v1649 = vsel %vm1393, %v999, %v1521
      %v1650 = vsel %vm1394, %v1004, %v1522
      %v1651 = vsel %vm1395, %v1007, %v1523
      %v1652 = vsel %vm1396, %v1012, %v1524
      %v1653 = vsel %vm1397, %v1015, %v1525
      %v1654 = vsel %vm1398, %v1020, %v1526
      %v1655 = vsel %vm1399, %v1023, %v1527
      %v1656 = vsel %vm1400, %v1028, %v1528
      %v1657 = vsel %vm1401, %v1031, %v1529
      %v1658 = vsel %vm1402, %v1036, %v1530
      %v1659 = vsel %vm1403, %v1039, %v1531
      %v1660 = vsel %vm1404, %v1044, %v1532
      %v1661 = vsel %vm1405, %v1047, %v1533
      %v1662 = vsel %vm1406, %v1052, %v1534
      %v1663 = vsel %vm1407, %v1055, %v1535
      %v1664 = vsel %vm1408, %v1060, %v1536
      %v1665 = vsel %vm1409, %v1063, %v1537
      %v1666 = vsel %vm1410, %v1068, %v1538
      %v1667 = vsel %vm1411, %v1071, %v1539
      %v1668 = vsel %vm1412, %v1076, %v1540
      %v1669 = vsel %vm1413, %v1079, %v1541
      %v1670 = vsel %vm1414, %v1084, %v1542
      %v1671 = vsel %vm1415, %v1087, %v1543
      %v1672 = vsel %vm1416, %v1092, %v1544
      %v1673 = vsel %vm1417, %v1095, %v1545
      %v1674 = vsel %vm1418, %v1100, %v1546
      %v1675 = vsel %vm1419, %v1103, %v1547
      %v1676 = vsel %vm1420, %v1108, %v1548
      %v1677 = vsel %vm1421, %v1111, %v1549
      %v1678 = vsel %vm1422, %v1116, %v1550
      %v1679 = vsel %vm1423, %v1119, %v1551
      %v1680 = vsel %vm1424, %v1124, %v1552
      %v1681 = vsel %vm1425, %v1127, %v1553
      %v1682 = vsel %vm1426, %v1132, %v1554
      %v1683 = vsel %vm1427, %v1135, %v1555
      %v1684 = vsel %vm1428, %v1140, %v1556
      %v1685 = vsel %vm1429, %v1143, %v1557
      %v1686 = vsel %vm1430, %v1148, %v1558
      %v1687 = vsel %vm1431, %v1151, %v1559
      %v1688 = vsel %vm1432, %v1156, %v1560
      %v1689 = vsel %vm1433, %v1159, %v1561
      %v1690 = vsel %vm1434, %v1164, %v1562
      %v1691 = vsel %vm1435, %v1167, %v1563
      %v1692 = vsel %vm1436, %v1172, %v1564
      %v1693 = vsel %vm1437, %v1175, %v1565
      %v1694 = vsel %vm1438, %v1180, %v1566
      %v1695 = vsel %vm1439, %v1183, %v1567
      %v1696 = vsel %vm1440, %v1188, %v1568
      %v1697 = vsel %vm1441, %v1191, %v1569
      %v1698 = vsel %vm1442, %v1196, %v1570
      %v1699 = vsel %vm1443, %v1199, %v1571
      %v1700 = vsel %vm1444, %v1204, %v1572
      %v1701 = vsel %vm1445, %v1207, %v1573
      %v1702 = vsel %vm1446, %v1212, %v1574
      %v1703 = vsel %vm1447, %v1215, %v1575
      %v1704 = vsel %vm1448, %v1220, %v1576
      %v1705 = vsel %vm1449, %v1223, %v1577
      %v1706 = vsel %vm1450, %v1228, %v1578
      %v1707 = vsel %vm1451, %v1231, %v1579
      %v1708 = vsel %vm1452, %v1236, %v1580
      %v1709 = vsel %vm1453, %v1239, %v1581
      %v1710 = vsel %vm1454, %v1244, %v1582
      %v1711 = vsel %vm1455, %v1247, %v1583
      %v1712 = vsel %vm1456, %v1252, %v1584
      %v1713 = vsel %vm1457, %v1255, %v1585
      %v1714 = vsel %vm1458, %v1260, %v1586
      %v1715 = vsel %vm1459, %v1263, %v1587
      %v1716 = vsel %vm1460, %v1268, %v1588
      %v1717 = vsel %vm1461, %v1271, %v1589
      %v1718 = vsel %vm1462, %v1276, %v1590
      %v1719 = vsel %vm1463, %v1279, %v1591
      %v1720 = vsel %vm1464, %v1284, %v1592
      %v1721 = vsel %vm1465, %v1287, %v1593
      %v1722 = vsel %vm1466, %v1292, %v1594
      %v1723 = vsel %vm1467, %v1295, %v1595
      %v1724 = vsel %vm1468, %v1300, %v1596
      %v1725 = vsel %vm1469, %v1303, %v1597
      %v1726 = vsel %vm1470, %v1308, %v1598
      %v1727 = vsel %vm1471, %v1311, %v1599
      %v1728 = vsel %vm1472, %v1316, %v1600
      %v1729 = vsel %vm1473, %v1319, %v1601
      %v1730 = vsel %vm1474, %v1324, %v1602
      %v1731 = vsel %vm1475, %v1327, %v1603
      %v1732 = vsel %vm1476, %v1332, %v1604
      %v1733 = vsel %vm1477, %v1335, %v1605
      %v1734 = vsel %vm1478, %v1340, %v1606
      %v1735 = vsel %vm1479, %v1343, %v1607
      %v1736 = vsel %vm1480, %v1348, %v1608
      %v1737 = vsel %vm1481, %v1351, %v1609
      %v1738 = vpack.c.bf16 %v1611, %v1610
      %v1739 = vpack.c.bf16 %v1613, %v1612
      %v1740 = vpack.c.bf16 %v1615, %v1614
      %v1741 = vpack.c.bf16 %v1617, %v1616
      %v1742 = vpack.c.bf16 %v1619, %v1618
      %v1743 = vpack.c.bf16 %v1621, %v1620
      %v1744 = vpack.c.bf16 %v1623, %v1622
      %v1745 = vpack.c.bf16 %v1625, %v1624
      %v1746 = vpack.c.bf16 %v1627, %v1626
      %v1747 = vpack.c.bf16 %v1629, %v1628
      %v1748 = vpack.c.bf16 %v1631, %v1630
      %v1749 = vpack.c.bf16 %v1633, %v1632
      %v1750 = vpack.c.bf16 %v1635, %v1634
      %v1751 = vpack.c.bf16 %v1637, %v1636
      %v1752 = vpack.c.bf16 %v1639, %v1638
      %v1753 = vpack.c.bf16 %v1641, %v1640
      %v1754 = vpack.c.bf16 %v1643, %v1642
      %v1755 = vpack.c.bf16 %v1645, %v1644
      %v1756 = vpack.c.bf16 %v1647, %v1646
      %v1757 = vpack.c.bf16 %v1649, %v1648
      %v1758 = vpack.c.bf16 %v1651, %v1650
      %v1759 = vpack.c.bf16 %v1653, %v1652
      %v1760 = vpack.c.bf16 %v1655, %v1654
      %v1761 = vpack.c.bf16 %v1657, %v1656
      %v1762 = vpack.c.bf16 %v1659, %v1658
      %v1763 = vpack.c.bf16 %v1661, %v1660
      %v1764 = vpack.c.bf16 %v1663, %v1662
      %v1765 = vpack.c.bf16 %v1665, %v1664
      %v1766 = vpack.c.bf16 %v1667, %v1666
      %v1767 = vpack.c.bf16 %v1669, %v1668
      %v1768 = vpack.c.bf16 %v1671, %v1670
      %v1769 = vpack.c.bf16 %v1673, %v1672
      %v1770 = vpack.c.bf16 %v1675, %v1674
      %v1771 = vpack.c.bf16 %v1677, %v1676
      %v1772 = vpack.c.bf16 %v1679, %v1678
      %v1773 = vpack.c.bf16 %v1681, %v1680
      %v1774 = vpack.c.bf16 %v1683, %v1682
      %v1775 = vpack.c.bf16 %v1685, %v1684
      %v1776 = vpack.c.bf16 %v1687, %v1686
      %v1777 = vpack.c.bf16 %v1689, %v1688
      %v1778 = vpack.c.bf16 %v1691, %v1690
      %v1779 = vpack.c.bf16 %v1693, %v1692
      %v1780 = vpack.c.bf16 %v1695, %v1694
      %v1781 = vpack.c.bf16 %v1697, %v1696
      %v1782 = vpack.c.bf16 %v1699, %v1698
      %v1783 = vpack.c.bf16 %v1701, %v1700
      %v1784 = vpack.c.bf16 %v1703, %v1702
      %v1785 = vpack.c.bf16 %v1705, %v1704
      %v1786 = vpack.c.bf16 %v1707, %v1706
      %v1787 = vpack.c.bf16 %v1709, %v1708
      %v1788 = vpack.c.bf16 %v1711, %v1710
      %v1789 = vpack.c.bf16 %v1713, %v1712
      %v1790 = vpack.c.bf16 %v1715, %v1714
      %v1791 = vpack.c.bf16 %v1717, %v1716
      %v1792 = vpack.c.bf16 %v1719, %v1718
      %v1793 = vpack.c.bf16 %v1721, %v1720
      %v1794 = vpack.c.bf16 %v1723, %v1722
      %v1795 = vpack.c.bf16 %v1725, %v1724
      %v1796 = vpack.c.bf16 %v1727, %v1726
      %v1797 = vpack.c.bf16 %v1729, %v1728
      %v1798 = vpack.c.bf16 %v1731, %v1730
      %v1799 = vpack.c.bf16 %v1733, %v1732
      %v1800 = vpack.c.bf16 %v1735, %v1734
      %v1801 = vpack.c.bf16 %v1737, %v1736
      %v1866 = vunpack.c.l.b16 %v1738
      %v1867 = vunpack.c.h.b16 %v1738
      %v1868 = vunpack.c.l.b16 %v1739
      %v1869 = vunpack.c.h.b16 %v1739
      %v1870 = vunpack.c.l.b16 %v1740
      %v1871 = vunpack.c.h.b16 %v1740
      %v1872 = vunpack.c.l.b16 %v1741
      %v1873 = vunpack.c.h.b16 %v1741
      %v1874 = vunpack.c.l.b16 %v1742
      %v1875 = vunpack.c.h.b16 %v1742
      %v1876 = vunpack.c.l.b16 %v1743
      %v1877 = vunpack.c.h.b16 %v1743
      %v1878 = vunpack.c.l.b16 %v1744
      %v1879 = vunpack.c.h.b16 %v1744
      %v1880 = vunpack.c.l.b16 %v1745
      %v1881 = vunpack.c.h.b16 %v1745
      %v1882 = vunpack.c.l.b16 %v1746
      %v1883 = vunpack.c.h.b16 %v1746
      %v1884 = vunpack.c.l.b16 %v1747
      %v1885 = vunpack.c.h.b16 %v1747
      %v1886 = vunpack.c.l.b16 %v1748
      %v1887 = vunpack.c.h.b16 %v1748
      %v1888 = vunpack.c.l.b16 %v1749
      %v1889 = vunpack.c.h.b16 %v1749
      %v1890 = vunpack.c.l.b16 %v1750
      %v1891 = vunpack.c.h.b16 %v1750
      %v1892 = vunpack.c.l.b16 %v1751
      %v1893 = vunpack.c.h.b16 %v1751
      %v1894 = vunpack.c.l.b16 %v1752
      %v1895 = vunpack.c.h.b16 %v1752
      %v1896 = vunpack.c.l.b16 %v1753
      %v1897 = vunpack.c.h.b16 %v1753
      %v1898 = vunpack.c.l.b16 %v1754
      %v1899 = vunpack.c.h.b16 %v1754
      %v1900 = vunpack.c.l.b16 %v1755
      %v1901 = vunpack.c.h.b16 %v1755
      %v1902 = vunpack.c.l.b16 %v1756
      %v1903 = vunpack.c.h.b16 %v1756
      %v1904 = vunpack.c.l.b16 %v1757
      %v1905 = vunpack.c.h.b16 %v1757
      %v1906 = vunpack.c.l.b16 %v1758
      %v1907 = vunpack.c.h.b16 %v1758
      %v1908 = vunpack.c.l.b16 %v1759
      %v1909 = vunpack.c.h.b16 %v1759
      %v1910 = vunpack.c.l.b16 %v1760
      %v1911 = vunpack.c.h.b16 %v1760
      %v1912 = vunpack.c.l.b16 %v1761
      %v1913 = vunpack.c.h.b16 %v1761
      %v1914 = vunpack.c.l.b16 %v1762
      %v1915 = vunpack.c.h.b16 %v1762
      %v1916 = vunpack.c.l.b16 %v1763
      %v1917 = vunpack.c.h.b16 %v1763
      %v1918 = vunpack.c.l.b16 %v1764
      %v1919 = vunpack.c.h.b16 %v1764
      %v1920 = vunpack.c.l.b16 %v1765
      %v1921 = vunpack.c.h.b16 %v1765
      %v1922 = vunpack.c.l.b16 %v1766
      %v1923 = vunpack.c.h.b16 %v1766
      %v1924 = vunpack.c.l.b16 %v1767
      %v1925 = vunpack.c.h.b16 %v1767
      %v1926 = vunpack.c.l.b16 %v1768
      %v1927 = vunpack.c.h.b16 %v1768
      %v1928 = vunpack.c.l.b16 %v1769
      %v1929 = vunpack.c.h.b16 %v1769
      %v1930 = vunpack.c.l.b16 %v1770
      %v1931 = vunpack.c.h.b16 %v1770
      %v1932 = vunpack.c.l.b16 %v1771
      %v1933 = vunpack.c.h.b16 %v1771
      %v1934 = vunpack.c.l.b16 %v1772
      %v1935 = vunpack.c.h.b16 %v1772
      %v1936 = vunpack.c.l.b16 %v1773
      %v1937 = vunpack.c.h.b16 %v1773
      %v1938 = vunpack.c.l.b16 %v1774
      %v1939 = vunpack.c.h.b16 %v1774
      %v1940 = vunpack.c.l.b16 %v1775
      %v1941 = vunpack.c.h.b16 %v1775
      %v1942 = vunpack.c.l.b16 %v1776
      %v1943 = vunpack.c.h.b16 %v1776
      %v1944 = vunpack.c.l.b16 %v1777
      %v1945 = vunpack.c.h.b16 %v1777
      %v1946 = vunpack.c.l.b16 %v1778
      %v1947 = vunpack.c.h.b16 %v1778
      %v1948 = vunpack.c.l.b16 %v1779
      %v1949 = vunpack.c.h.b16 %v1779
      %v1950 = vunpack.c.l.b16 %v1780
      %v1951 = vunpack.c.h.b16 %v1780
      %v1952 = vunpack.c.l.b16 %v1781
      %v1953 = vunpack.c.h.b16 %v1781
      %v1954 = vunpack.c.l.b16 %v1782
      %v1955 = vunpack.c.h.b16 %v1782
      %v1956 = vunpack.c.l.b16 %v1783
      %v1957 = vunpack.c.h.b16 %v1783
      %v1958 = vunpack.c.l.b16 %v1784
      %v1959 = vunpack.c.h.b16 %v1784
      %v1960 = vunpack.c.l.b16 %v1785
      %v1961 = vunpack.c.h.b16 %v1785
      %v1962 = vunpack.c.l.b16 %v1786
      %v1963 = vunpack.c.h.b16 %v1786
      %v1964 = vunpack.c.l.b16 %v1787
      %v1965 = vunpack.c.h.b16 %v1787
      %v1966 = vunpack.c.l.b16 %v1788
      %v1967 = vunpack.c.h.b16 %v1788
      %v1968 = vunpack.c.l.b16 %v1789
      %v1969 = vunpack.c.h.b16 %v1789
      %v1970 = vunpack.c.l.b16 %v1790
      %v1971 = vunpack.c.h.b16 %v1790
      %v1972 = vunpack.c.l.b16 %v1791
      %v1973 = vunpack.c.h.b16 %v1791
      %v1974 = vunpack.c.l.b16 %v1792
      %v1975 = vunpack.c.h.b16 %v1792
      %v1976 = vunpack.c.l.b16 %v1793
      %v1977 = vunpack.c.h.b16 %v1793
      %v1978 = vunpack.c.l.b16 %v1794
      %v1979 = vunpack.c.h.b16 %v1794
      %v1980 = vunpack.c.l.b16 %v1795
      %v1981 = vunpack.c.h.b16 %v1795
      %v1982 = vunpack.c.l.b16 %v1796
      %v1983 = vunpack.c.h.b16 %v1796
      %v1984 = vunpack.c.l.b16 %v1797
      %v1985 = vunpack.c.h.b16 %v1797
      %v1986 = vunpack.c.l.b16 %v1798
      %v1987 = vunpack.c.h.b16 %v1798
      %v1988 = vunpack.c.l.b16 %v1799
      %v1989 = vunpack.c.h.b16 %v1799
      %v1990 = vunpack.c.l.b16 %v1800
      %v1991 = vunpack.c.h.b16 %v1800
      %v1992 = vunpack.c.l.b16 %v1801
      %v1993 = vunpack.c.h.b16 %v1801
      %v1994 = vpack.c.b16 %v1866, %v1866
      %v1995 = vpack.c.b16 %v1867, %v1867
      %v1996 = vpack.c.b16 %v1868, %v1868
      %v1997 = vpack.c.b16 %v1869, %v1869
      %v1998 = vpack.c.b16 %v1870, %v1870
      %v1999 = vpack.c.b16 %v1871, %v1871
      %v2000 = vpack.c.b16 %v1872, %v1872
      %v2001 = vpack.c.b16 %v1873, %v1873
      %v2002 = vpack.c.b16 %v1874, %v1874
      %v2003 = vpack.c.b16 %v1875, %v1875
      %v2004 = vpack.c.b16 %v1876, %v1876
      %v2005 = vpack.c.b16 %v1877, %v1877
      %v2006 = vpack.c.b16 %v1878, %v1878
      %v2007 = vpack.c.b16 %v1879, %v1879
      %v2008 = vpack.c.b16 %v1880, %v1880
      %v2009 = vpack.c.b16 %v1881, %v1881
      %v2010 = vpack.c.b16 %v1882, %v1882
      %v2011 = vpack.c.b16 %v1883, %v1883
      %v2012 = vpack.c.b16 %v1884, %v1884
      %v2013 = vpack.c.b16 %v1885, %v1885
      %v2014 = vpack.c.b16 %v1886, %v1886
      %v2015 = vpack.c.b16 %v1887, %v1887
      %v2016 = vpack.c.b16 %v1888, %v1888
      %v2017 = vpack.c.b16 %v1889, %v1889
      %v2018 = vpack.c.b16 %v1890, %v1890
      %v2019 = vpack.c.b16 %v1891, %v1891
      %v2020 = vpack.c.b16 %v1892, %v1892
      %v2021 = vpack.c.b16 %v1893, %v1893
      %v2022 = vpack.c.b16 %v1894, %v1894
      %v2023 = vpack.c.b16 %v1895, %v1895
      %v2024 = vpack.c.b16 %v1896, %v1896
      %v2025 = vpack.c.b16 %v1897, %v1897
      %v2026 = vpack.c.b16 %v1898, %v1898
      %v2027 = vpack.c.b16 %v1899, %v1899
      %v2028 = vpack.c.b16 %v1900, %v1900
      %v2029 = vpack.c.b16 %v1901, %v1901
      %v2030 = vpack.c.b16 %v1902, %v1902
      %v2031 = vpack.c.b16 %v1903, %v1903
      %v2032 = vpack.c.b16 %v1904, %v1904
      %v2033 = vpack.c.b16 %v1905, %v1905
      %v2034 = vpack.c.b16 %v1906, %v1906
      %v2035 = vpack.c.b16 %v1907, %v1907
      %v2036 = vpack.c.b16 %v1908, %v1908
      %v2037 = vpack.c.b16 %v1909, %v1909
      %v2038 = vpack.c.b16 %v1910, %v1910
      %v2039 = vpack.c.b16 %v1911, %v1911
      %v2040 = vpack.c.b16 %v1912, %v1912
      %v2041 = vpack.c.b16 %v1913, %v1913
      %v2042 = vpack.c.b16 %v1914, %v1914
      %v2043 = vpack.c.b16 %v1915, %v1915
      %v2044 = vpack.c.b16 %v1916, %v1916
      %v2045 = vpack.c.b16 %v1917, %v1917
      %v2046 = vpack.c.b16 %v1918, %v1918
      %v2047 = vpack.c.b16 %v1919, %v1919
      %v2048 = vpack.c.b16 %v1920, %v1920
      %v2049 = vpack.c.b16 %v1921, %v1921
      %v2050 = vpack.c.b16 %v1922, %v1922
      %v2051 = vpack.c.b16 %v1923, %v1923
      %v2052 = vpack.c.b16 %v1924, %v1924
      %v2053 = vpack.c.b16 %v1925, %v1925
      %v2054 = vpack.c.b16 %v1926, %v1926
      %v2055 = vpack.c.b16 %v1927, %v1927
      %v2056 = vpack.c.b16 %v1928, %v1928
      %v2057 = vpack.c.b16 %v1929, %v1929
      %v2058 = vpack.c.b16 %v1930, %v1930
      %v2059 = vpack.c.b16 %v1931, %v1931
      %v2060 = vpack.c.b16 %v1932, %v1932
      %v2061 = vpack.c.b16 %v1933, %v1933
      %v2062 = vpack.c.b16 %v1934, %v1934
      %v2063 = vpack.c.b16 %v1935, %v1935
      %v2064 = vpack.c.b16 %v1936, %v1936
      %v2065 = vpack.c.b16 %v1937, %v1937
      %v2066 = vpack.c.b16 %v1938, %v1938
      %v2067 = vpack.c.b16 %v1939, %v1939
      %v2068 = vpack.c.b16 %v1940, %v1940
      %v2069 = vpack.c.b16 %v1941, %v1941
      %v2070 = vpack.c.b16 %v1942, %v1942
      %v2071 = vpack.c.b16 %v1943, %v1943
      %v2072 = vpack.c.b16 %v1944, %v1944
      %v2073 = vpack.c.b16 %v1945, %v1945
      %v2074 = vpack.c.b16 %v1946, %v1946
      %v2075 = vpack.c.b16 %v1947, %v1947
      %v2076 = vpack.c.b16 %v1948, %v1948
      %v2077 = vpack.c.b16 %v1949, %v1949
      %v2078 = vpack.c.b16 %v1950, %v1950
      %v2079 = vpack.c.b16 %v1951, %v1951
      %v2080 = vpack.c.b16 %v1952, %v1952
      %v2081 = vpack.c.b16 %v1953, %v1953
      %v2082 = vpack.c.b16 %v1954, %v1954
      %v2083 = vpack.c.b16 %v1955, %v1955
      %v2084 = vpack.c.b16 %v1956, %v1956
      %v2085 = vpack.c.b16 %v1957, %v1957
      %v2086 = vpack.c.b16 %v1958, %v1958
      %v2087 = vpack.c.b16 %v1959, %v1959
      %v2088 = vpack.c.b16 %v1960, %v1960
      %v2089 = vpack.c.b16 %v1961, %v1961
      %v2090 = vpack.c.b16 %v1962, %v1962
      %v2091 = vpack.c.b16 %v1963, %v1963
      %v2092 = vpack.c.b16 %v1964, %v1964
      %v2093 = vpack.c.b16 %v1965, %v1965
      %v2094 = vpack.c.b16 %v1966, %v1966
      %v2095 = vpack.c.b16 %v1967, %v1967
      %v2096 = vpack.c.b16 %v1968, %v1968
      %v2097 = vpack.c.b16 %v1969, %v1969
      %v2098 = vpack.c.b16 %v1970, %v1970
      %v2099 = vpack.c.b16 %v1971, %v1971
      %v2100 = vpack.c.b16 %v1972, %v1972
      %v2101 = vpack.c.b16 %v1973, %v1973
      %v2102 = vpack.c.b16 %v1974, %v1974
      %v2103 = vpack.c.b16 %v1975, %v1975
      %v2104 = vpack.c.b16 %v1976, %v1976
      %v2105 = vpack.c.b16 %v1977, %v1977
      %v2106 = vpack.c.b16 %v1978, %v1978
      %v2107 = vpack.c.b16 %v1979, %v1979
      %v2108 = vpack.c.b16 %v1980, %v1980
      %v2109 = vpack.c.b16 %v1981, %v1981
      %v2110 = vpack.c.b16 %v1982, %v1982
      %v2111 = vpack.c.b16 %v1983, %v1983
      %v2112 = vpack.c.b16 %v1984, %v1984
      %v2113 = vpack.c.b16 %v1985, %v1985
      %v2114 = vpack.c.b16 %v1986, %v1986
      %v2115 = vpack.c.b16 %v1987, %v1987
      %v2116 = vpack.c.b16 %v1988, %v1988
      %v2117 = vpack.c.b16 %v1989, %v1989
      %v2118 = vpack.c.b16 %v1990, %v1990
      %v2119 = vpack.c.b16 %v1991, %v1991
      %v2120 = vpack.c.b16 %v1992, %v1992
      %v2121 = vpack.c.b16 %v1993, %v1993
      %2250 = vst [vmem:[%s223] sm:$0xf] %v1994
      %2251 = vst [vmem:[%s223 + $0x4] sm:$0xf] %v1995
      %2252 = vst [vmem:[%s223 + $0x8] sm:$0xf] %v1996
      %2253 = vst [vmem:[%s223 + $0xc] sm:$0xf] %v1997
      %2254 = vst [vmem:[%s223 + $0x10] sm:$0xf] %v1998
      %2255 = vst [vmem:[%s223 + $0x14] sm:$0xf] %v1999
      %2256 = vst [vmem:[%s223 + $0x18] sm:$0xf] %v2000
      %2257 = vst [vmem:[%s223 + $0x1c] sm:$0xf] %v2001
      %2258 = vst [vmem:[%s223 + $0x20] sm:$0xf] %v2002
      %2259 = vst [vmem:[%s223 + $0x24] sm:$0xf] %v2003
      %2260 = vst [vmem:[%s223 + $0x28] sm:$0xf] %v2004
      %2261 = vst [vmem:[%s223 + $0x2c] sm:$0xf] %v2005
      %2262 = vst [vmem:[%s223 + $0x30] sm:$0xf] %v2006
      %2263 = vst [vmem:[%s223 + $0x34] sm:$0xf] %v2007
      %2264 = vst [vmem:[%s223 + $0x38] sm:$0xf] %v2008
      %2265 = vst [vmem:[%s223 + $0x3c] sm:$0xf] %v2009
      %2266 = vst [vmem:[%s223 + $0x40] sm:$0xf] %v2010
      %2267 = vst [vmem:[%s223 + $0x44] sm:$0xf] %v2011
      %2268 = vst [vmem:[%s223 + $0x48] sm:$0xf] %v2012
      %2269 = vst [vmem:[%s223 + $0x4c] sm:$0xf] %v2013
      %2270 = vst [vmem:[%s223 + $0x50] sm:$0xf] %v2014
      %2271 = vst [vmem:[%s223 + $0x54] sm:$0xf] %v2015
      %2272 = vst [vmem:[%s223 + $0x58] sm:$0xf] %v2016
      %2273 = vst [vmem:[%s223 + $0x5c] sm:$0xf] %v2017
      %2274 = vst [vmem:[%s223 + $0x60] sm:$0xf] %v2018
      %2275 = vst [vmem:[%s223 + $0x64] sm:$0xf] %v2019
      %2276 = vst [vmem:[%s223 + $0x68] sm:$0xf] %v2020
      %2277 = vst [vmem:[%s223 + $0x6c] sm:$0xf] %v2021
      %2278 = vst [vmem:[%s223 + $0x70] sm:$0xf] %v2022
      %2279 = vst [vmem:[%s223 + $0x74] sm:$0xf] %v2023
      %2280 = vst [vmem:[%s223 + $0x78] sm:$0xf] %v2024
      %2281 = vst [vmem:[%s223 + $0x7c] sm:$0xf] %v2025
      %2282 = vst [vmem:[%s223 + $0x80] sm:$0xf] %v2026
      %2283 = vst [vmem:[%s223 + $0x84] sm:$0xf] %v2027
      %2284 = vst [vmem:[%s223 + $0x88] sm:$0xf] %v2028
      %2285 = vst [vmem:[%s223 + $0x8c] sm:$0xf] %v2029
      %2286 = vst [vmem:[%s223 + $0x90] sm:$0xf] %v2030
      %2287 = vst [vmem:[%s223 + $0x94] sm:$0xf] %v2031
      %2288 = vst [vmem:[%s223 + $0x98] sm:$0xf] %v2032
      %2289 = vst [vmem:[%s223 + $0x9c] sm:$0xf] %v2033
      %2290 = vst [vmem:[%s223 + $0xa0] sm:$0xf] %v2034
      %2291 = vst [vmem:[%s223 + $0xa4] sm:$0xf] %v2035
      %2292 = vst [vmem:[%s223 + $0xa8] sm:$0xf] %v2036
      %2293 = vst [vmem:[%s223 + $0xac] sm:$0xf] %v2037
      %2294 = vst [vmem:[%s223 + $0xb0] sm:$0xf] %v2038
      %2295 = vst [vmem:[%s223 + $0xb4] sm:$0xf] %v2039
      %2296 = vst [vmem:[%s223 + $0xb8] sm:$0xf] %v2040
      %2297 = vst [vmem:[%s223 + $0xbc] sm:$0xf] %v2041
      %2298 = vst [vmem:[%s223 + $0xc0] sm:$0xf] %v2042
      %2299 = vst [vmem:[%s223 + $0xc4] sm:$0xf] %v2043
      %2300 = vst [vmem:[%s223 + $0xc8] sm:$0xf] %v2044
      %2301 = vst [vmem:[%s223 + $0xcc] sm:$0xf] %v2045
      %2302 = vst [vmem:[%s223 + $0xd0] sm:$0xf] %v2046
      %2303 = vst [vmem:[%s223 + $0xd4] sm:$0xf] %v2047
      %2304 = vst [vmem:[%s223 + $0xd8] sm:$0xf] %v2048
      %2305 = vst [vmem:[%s223 + $0xdc] sm:$0xf] %v2049
      %2306 = vst [vmem:[%s223 + $0xe0] sm:$0xf] %v2050
      %2307 = vst [vmem:[%s223 + $0xe4] sm:$0xf] %v2051
      %2308 = vst [vmem:[%s223 + $0xe8] sm:$0xf] %v2052
      %2309 = vst [vmem:[%s223 + $0xec] sm:$0xf] %v2053
      %2310 = vst [vmem:[%s223 + $0xf0] sm:$0xf] %v2054
      %2311 = vst [vmem:[%s223 + $0xf4] sm:$0xf] %v2055
      %2312 = vst [vmem:[%s223 + $0xf8] sm:$0xf] %v2056
      %2313 = vst [vmem:[%s223 + $0xfc] sm:$0xf] %v2057
      %2314 = vst [vmem:[%s223 + $0x100] sm:$0xf] %v2058
      %2315 = vst [vmem:[%s223 + $0x104] sm:$0xf] %v2059
      %2316 = vst [vmem:[%s223 + $0x108] sm:$0xf] %v2060
      %2317 = vst [vmem:[%s223 + $0x10c] sm:$0xf] %v2061
      %2318 = vst [vmem:[%s223 + $0x110] sm:$0xf] %v2062
      %2319 = vst [vmem:[%s223 + $0x114] sm:$0xf] %v2063
      %2320 = vst [vmem:[%s223 + $0x118] sm:$0xf] %v2064
      %2321 = vst [vmem:[%s223 + $0x11c] sm:$0xf] %v2065
      %2322 = vst [vmem:[%s223 + $0x120] sm:$0xf] %v2066
      %2323 = vst [vmem:[%s223 + $0x124] sm:$0xf] %v2067
      %2324 = vst [vmem:[%s223 + $0x128] sm:$0xf] %v2068
      %2325 = vst [vmem:[%s223 + $0x12c] sm:$0xf] %v2069
      %2326 = vst [vmem:[%s223 + $0x130] sm:$0xf] %v2070
      %2327 = vst [vmem:[%s223 + $0x134] sm:$0xf] %v2071
      %2328 = vst [vmem:[%s223 + $0x138] sm:$0xf] %v2072
      %2329 = vst [vmem:[%s223 + $0x13c] sm:$0xf] %v2073
      %2330 = vst [vmem:[%s223 + $0x140] sm:$0xf] %v2074
      %2331 = vst [vmem:[%s223 + $0x144] sm:$0xf] %v2075
      %2332 = vst [vmem:[%s223 + $0x148] sm:$0xf] %v2076
      %2333 = vst [vmem:[%s223 + $0x14c] sm:$0xf] %v2077
      %2334 = vst [vmem:[%s223 + $0x150] sm:$0xf] %v2078
      %2335 = vst [vmem:[%s223 + $0x154] sm:$0xf] %v2079
      %2336 = vst [vmem:[%s223 + $0x158] sm:$0xf] %v2080
      %2337 = vst [vmem:[%s223 + $0x15c] sm:$0xf] %v2081
      %2338 = vst [vmem:[%s223 + $0x160] sm:$0xf] %v2082
      %2339 = vst [vmem:[%s223 + $0x164] sm:$0xf] %v2083
      %2340 = vst [vmem:[%s223 + $0x168] sm:$0xf] %v2084
      %2341 = vst [vmem:[%s223 + $0x16c] sm:$0xf] %v2085
      %2342 = vst [vmem:[%s223 + $0x170] sm:$0xf] %v2086
      %2343 = vst [vmem:[%s223 + $0x174] sm:$0xf] %v2087
      %2344 = vst [vmem:[%s223 + $0x178] sm:$0xf] %v2088
      %2345 = vst [vmem:[%s223 + $0x17c] sm:$0xf] %v2089
      %2346 = vst [vmem:[%s223 + $0x180] sm:$0xf] %v2090
      %2347 = vst [vmem:[%s223 + $0x184] sm:$0xf] %v2091
      %2348 = vst [vmem:[%s223 + $0x188] sm:$0xf] %v2092
      %2349 = vst [vmem:[%s223 + $0x18c] sm:$0xf] %v2093
      %2350 = vst [vmem:[%s223 + $0x190] sm:$0xf] %v2094
      %2351 = vst [vmem:[%s223 + $0x194] sm:$0xf] %v2095
      %2352 = vst [vmem:[%s223 + $0x198] sm:$0xf] %v2096
      %2353 = vst [vmem:[%s223 + $0x19c] sm:$0xf] %v2097
      %2354 = vst [vmem:[%s223 + $0x1a0] sm:$0xf] %v2098
      %2355 = vst [vmem:[%s223 + $0x1a4] sm:$0xf] %v2099
      %2356 = vst [vmem:[%s223 + $0x1a8] sm:$0xf] %v2100
      %2357 = vst [vmem:[%s223 + $0x1ac] sm:$0xf] %v2101
      %2358 = vst [vmem:[%s223 + $0x1b0] sm:$0xf] %v2102
      %2359 = vst [vmem:[%s223 + $0x1b4] sm:$0xf] %v2103
      %2360 = vst [vmem:[%s223 + $0x1b8] sm:$0xf] %v2104
      %2361 = vst [vmem:[%s223 + $0x1bc] sm:$0xf] %v2105
      %2362 = vst [vmem:[%s223 + $0x1c0] sm:$0xf] %v2106
      %2363 = vst [vmem:[%s223 + $0x1c4] sm:$0xf] %v2107
      %2364 = vst [vmem:[%s223 + $0x1c8] sm:$0xf] %v2108
      %2365 = vst [vmem:[%s223 + $0x1cc] sm:$0xf] %v2109
      %2366 = vst [vmem:[%s223 + $0x1d0] sm:$0xf] %v2110
      %2367 = vst [vmem:[%s223 + $0x1d4] sm:$0xf] %v2111
      %2368 = vst [vmem:[%s223 + $0x1d8] sm:$0xf] %v2112
      %2369 = vst [vmem:[%s223 + $0x1dc] sm:$0xf] %v2113
      %2370 = vst [vmem:[%s223 + $0x1e0] sm:$0xf] %v2114
      %2371 = vst [vmem:[%s223 + $0x1e4] sm:$0xf] %v2115
      %2372 = vst [vmem:[%s223 + $0x1e8] sm:$0xf] %v2116
      %2373 = vst [vmem:[%s223 + $0x1ec] sm:$0xf] %v2117
      %2374 = vst [vmem:[%s223 + $0x1f0] sm:$0xf] %v2118
      %2375 = vst [vmem:[%s223 + $0x1f4] sm:$0xf] %v2119
      %2376 = vst [vmem:[%s223 + $0x1f8] sm:$0xf] %v2120
      %2377 = vst [vmem:[%s223 + $0x1fc] sm:$0xf] %v2121
      %s2378 = smul.u32 128, %s18
      %p2379 = scmp.lt.s32.totalorder %s2378, 255
      %s2380 = scalar_select %p2379, %s2378, 255
      %p2381 = scmp.lt.s32.totalorder %s19, 0
      %s2382 = scalar_select %p2381, %s19, 0
      %s2383 = sadd.s32 %s2382, %s2380
      %s2384 = smul.addr %s2383, 4
      %s2385 = scalar_lea.vmem %s3, %s2384
      // Predicated region
      $region33: #{codegan_discriminator_forward.4} parent=31 // pred_check
        %p2386 = pneg %p124
      $region34: #{codegan_discriminator_forward.4} parent=31 // pred_check_branch
        %2388 = sbr.rel (%p2386) target = $region36
      $region35: #{codegan_discriminator_forward.4} parent=31 // pred_region
        %s2389 = smul.u32 128, %s18
      $region36: #{codegan_discriminator_forward.4} parent=31 // pred_fallthru
        _
    $region32: #{codegan_discriminator_forward.4} parent=5 // pred_fallthru
      _
    %p2390 = scmp.le.s32.totalorder 2, %s9
    // Predicated region
    $region37: #{codegan_discriminator_forward.4} parent=5 // pred_check
      %p2391 = pneg %p2390
    $region38: #{codegan_discriminator_forward.4} parent=5 // pred_check_branch
      %2393 = sbr.rel (%p2391) target = $region40
    $region39: #{codegan_discriminator_forward.4} parent=5 // pred_region
      %s2394 = ssub.s32 %s9, 2
      // Predicated region
      $region41: #{codegan_discriminator_forward.4} parent=39 // pred_check
        %p2395 = pneg %p130
      $region42: #{codegan_discriminator_forward.4} parent=39 // pred_check_branch
        %2397 = sbr.rel (%p2395) target = $region44
      $region43: #{codegan_discriminator_forward.4} parent=39 // pred_region
        %s2398 = smul.u32 128, %s20
        %p2399 = scmp.lt.s32.totalorder %s2398, 255
        %s2400 = scalar_select %p2399, %s2398, 255
        %p2401 = scmp.lt.s32.totalorder %s21, 0
        %s2402 = scalar_select %p2401, %s21, 0
        %s2403 = sadd.s32 %s2402, %s2400
        %s2404 = smul.addr %s2403, 4
        %s2405 = scalar_lea.vmem %s3, %s2404
      $region44: #{codegan_discriminator_forward.4} parent=39 // pred_fallthru
        _
    $region40: #{codegan_discriminator_forward.4} parent=5 // pred_fallthru
      _
  $region6: #{codegan_discriminator_forward.4} parent=0 // loop_footer
    %s13 = sadd.s32 1, %s9
  $region7: #{codegan_discriminator_forward.4} parent=0 // loop_footer_branch
    %8 = sbr.rel target = $region3
  $region8: #{codegan_discriminator_forward.4} parent=0 // loop_exit
    _

// kernel: codegan_discriminator_forward.5
$region0: #{codegan_discriminator_forward.5}
  #allocation0 [shape = 'u32[]', space=smem, size = 0x4, offset = 0x4, fixed_abs, tag = 'smem constant byte address 0x4 - core index']
  #allocation1 [shape = 'u32[144,128]{1,0:T(1,128)}', space=vmem, size = 0x12000, scoped, tag = 'internal scratch']
  %s0 = inlined_call_operand.vmem [shape: bf16[512,256], index: 0, kind: input, shape index: {}]
  %s1 = inlined_call_operand.vmem [shape: bf16[256,128], index: 1, kind: input, shape index: {}]
  %s2 = inlined_call_operand.vmem [shape: f32[1,128], index: 2, kind: input, shape index: {}]
  %s3 = inlined_call_operand.vmem [shape: bf16[512,128], index: 3, kind: output, shape index: {}]
  %s4 = sld [smem:[#allocation0]]
  $region22: #{codegan_discriminator_forward.5} parent=0
    _
  %s6 = ssub.s32 1, %s4
  %s7 = scalar_select 0, %s6, %s4
  // Predicated region
  $region2: #{codegan_discriminator_forward.5} parent=0 // pred_check
    _
  $region3: #{codegan_discriminator_forward.5} parent=0 // pred_check_branch
    %9 = sbr.rel (0) target = $region5
  $region4: #{codegan_discriminator_forward.5} parent=0 // pred_region
    _
  $region5: #{codegan_discriminator_forward.5} parent=0 // pred_fallthru
    _
  // Predicated region
  $region6: #{codegan_discriminator_forward.5} parent=0 // pred_check
    _
  $region7: #{codegan_discriminator_forward.5} parent=0 // pred_check_branch
    %11 = sbr.rel (0) target = $region9
  $region8: #{codegan_discriminator_forward.5} parent=0 // pred_region
    _
  $region9: #{codegan_discriminator_forward.5} parent=0 // pred_fallthru
    _
  // Predicated region
  $region10: #{codegan_discriminator_forward.5} parent=0 // pred_check
    _
  $region11: #{codegan_discriminator_forward.5} parent=0 // pred_check_branch
    %13 = sbr.rel (0) target = $region13
  $region12: #{codegan_discriminator_forward.5} parent=0 // pred_region
    _
  $region13: #{codegan_discriminator_forward.5} parent=0 // pred_fallthru
    _
  %v15 = vld [vmem:[%s0] sm:$0xff]
  %v16 = vld [vmem:[%s0 + $0x8] sm:$0xff]
  %v17 = vld [vmem:[%s0 + $0x10] sm:$0xff]
  %v18 = vld [vmem:[%s0 + $0x18] sm:$0xff]
  %v19 = vld [vmem:[%s0 + $0x20] sm:$0xff]
  %v20 = vld [vmem:[%s0 + $0x28] sm:$0xff]
  %v21 = vld [vmem:[%s0 + $0x30] sm:$0xff]
  %v22 = vld [vmem:[%s0 + $0x38] sm:$0xff]
  %v23 = vld [vmem:[%s0 + $0x40] sm:$0xff]
  %v24 = vld [vmem:[%s0 + $0x48] sm:$0xff]
  %v25 = vld [vmem:[%s0 + $0x50] sm:$0xff]
  %v26 = vld [vmem:[%s0 + $0x58] sm:$0xff]
  %v27 = vld [vmem:[%s0 + $0x60] sm:$0xff]
  %v28 = vld [vmem:[%s0 + $0x68] sm:$0xff]
  %v29 = vld [vmem:[%s0 + $0x70] sm:$0xff]
  %v30 = vld [vmem:[%s0 + $0x78] sm:$0xff]
  %v31 = vld [vmem:[%s0 + $0x80] sm:$0xff]
  %v32 = vld [vmem:[%s0 + $0x88] sm:$0xff]
  %v33 = vld [vmem:[%s0 + $0x90] sm:$0xff]
  %v34 = vld [vmem:[%s0 + $0x98] sm:$0xff]
  %v35 = vld [vmem:[%s0 + $0xa0] sm:$0xff]
  %v36 = vld [vmem:[%s0 + $0xa8] sm:$0xff]
  %v37 = vld [vmem:[%s0 + $0xb0] sm:$0xff]
  %v38 = vld [vmem:[%s0 + $0xb8] sm:$0xff]
  %v39 = vld [vmem:[%s0 + $0xc0] sm:$0xff]
  %v40 = vld [vmem:[%s0 + $0xc8] sm:$0xff]
  %v41 = vld [vmem:[%s0 + $0xd0] sm:$0xff]
  %v42 = vld [vmem:[%s0 + $0xd8] sm:$0xff]
  %v43 = vld [vmem:[%s0 + $0xe0] sm:$0xff]
  %v44 = vld [vmem:[%s0 + $0xe8] sm:$0xff]
  %v45 = vld [vmem:[%s0 + $0xf0] sm:$0xff]
  %v46 = vld [vmem:[%s0 + $0xf8] sm:$0xff]
  %v47 = vld [vmem:[%s0 + $0x100] sm:$0xff]
  %v48 = vld [vmem:[%s0 + $0x108] sm:$0xff]
  %v49 = vld [vmem:[%s0 + $0x110] sm:$0xff]
  %v50 = vld [vmem:[%s0 + $0x118] sm:$0xff]
  %v51 = vld [vmem:[%s0 + $0x120] sm:$0xff]
  %v52 = vld [vmem:[%s0 + $0x128] sm:$0xff]
  %v53 = vld [vmem:[%s0 + $0x130] sm:$0xff]
  %v54 = vld [vmem:[%s0 + $0x138] sm:$0xff]
  %v55 = vld [vmem:[%s0 + $0x140] sm:$0xff]
  %v56 = vld [vmem:[%s0 + $0x148] sm:$0xff]
  %v57 = vld [vmem:[%s0 + $0x150] sm:$0xff]
  %v58 = vld [vmem:[%s0 + $0x158] sm:$0xff]
  %v59 = vld [vmem:[%s0 + $0x160] sm:$0xff]
  %v60 = vld [vmem:[%s0 + $0x168] sm:$0xff]
  %v61 = vld [vmem:[%s0 + $0x170] sm:$0xff]
  %v62 = vld [vmem:[%s0 + $0x178] sm:$0xff]
  %v63 = vld [vmem:[%s0 + $0x180] sm:$0xff]
  %v64 = vld [vmem:[%s0 + $0x188] sm:$0xff]
  %v65 = vld [vmem:[%s0 + $0x190] sm:$0xff]
  %v66 = vld [vmem:[%s0 + $0x198] sm:$0xff]
  %v67 = vld [vmem:[%s0 + $0x1a0] sm:$0xff]
  %v68 = vld [vmem:[%s0 + $0x1a8] sm:$0xff]
  %v69 = vld [vmem:[%s0 + $0x1b0] sm:$0xff]
  %v70 = vld [vmem:[%s0 + $0x1b8] sm:$0xff]
  %v71 = vld [vmem:[%s0 + $0x1c0] sm:$0xff]
  %v72 = vld [vmem:[%s0 + $0x1c8] sm:$0xff]
  %v73 = vld [vmem:[%s0 + $0x1d0] sm:$0xff]
  %v74 = vld [vmem:[%s0 + $0x1d8] sm:$0xff]
  %v75 = vld [vmem:[%s0 + $0x1e0] sm:$0xff]
  %v76 = vld [vmem:[%s0 + $0x1e8] sm:$0xff]
  %v77 = vld [vmem:[%s0 + $0x1f0] sm:$0xff]
  %v78 = vld [vmem:[%s0 + $0x1f8] sm:$0xff]
  %v79 = vld [vmem:[%s1] sm:$0xf]
  %v80 = vld [vmem:[%s1 + $0x4] sm:$0xf]
  %v81 = vld [vmem:[%s1 + $0x8] sm:$0xf]
  %v82 = vld [vmem:[%s1 + $0xc] sm:$0xf]
  %v83 = vld [vmem:[%s1 + $0x10] sm:$0xf]
  %v84 = vld [vmem:[%s1 + $0x14] sm:$0xf]
  %v85 = vld [vmem:[%s1 + $0x18] sm:$0xf]
  %v86 = vld [vmem:[%s1 + $0x1c] sm:$0xf]
  %v87 = vld [vmem:[%s1 + $0x20] sm:$0xf]
  %v88 = vld [vmem:[%s1 + $0x24] sm:$0xf]
  %v89 = vld [vmem:[%s1 + $0x28] sm:$0xf]
  %v90 = vld [vmem:[%s1 + $0x2c] sm:$0xf]
  %v91 = vld [vmem:[%s1 + $0x30] sm:$0xf]
  %v92 = vld [vmem:[%s1 + $0x34] sm:$0xf]
  %v93 = vld [vmem:[%s1 + $0x38] sm:$0xf]
  %v94 = vld [vmem:[%s1 + $0x3c] sm:$0xf]
  %v95 = vld [vmem:[%s1 + $0x40] sm:$0xf]
  %v96 = vld [vmem:[%s1 + $0x44] sm:$0xf]
  %v97 = vld [vmem:[%s1 + $0x48] sm:$0xf]
  %v98 = vld [vmem:[%s1 + $0x4c] sm:$0xf]
  %v99 = vld [vmem:[%s1 + $0x50] sm:$0xf]
  %v100 = vld [vmem:[%s1 + $0x54] sm:$0xf]
  %v101 = vld [vmem:[%s1 + $0x58] sm:$0xf]
  %v102 = vld [vmem:[%s1 + $0x5c] sm:$0xf]
  %v103 = vld [vmem:[%s1 + $0x60] sm:$0xf]
  %v104 = vld [vmem:[%s1 + $0x64] sm:$0xf]
  %v105 = vld [vmem:[%s1 + $0x68] sm:$0xf]
  %v106 = vld [vmem:[%s1 + $0x6c] sm:$0xf]
  %v107 = vld [vmem:[%s1 + $0x70] sm:$0xf]
  %v108 = vld [vmem:[%s1 + $0x74] sm:$0xf]
  %v109 = vld [vmem:[%s1 + $0x78] sm:$0xf]
  %v110 = vld [vmem:[%s1 + $0x7c] sm:$0xf]
  %v111 = vld [vmem:[%s2] sm:$0x1]
  %v113 = vlaneseq
  %v114 = vshrl.u32 %v113, 7
  %v115 = vsub.s32 0, %v114
  %v116 = vrot.slane %v111, %v115
  %v182 = vunpack.c.l.b16 %v15
  %v183 = vunpack.c.h.b16 %v15
  %v184 = vunpack.c.l.b16 %v16
  %v185 = vunpack.c.h.b16 %v16
  %v186 = vunpack.c.l.b16 %v17
  %v187 = vunpack.c.h.b16 %v17
  %v188 = vunpack.c.l.b16 %v18
  %v189 = vunpack.c.h.b16 %v18
  %v190 = vunpack.c.l.b16 %v19
  %v191 = vunpack.c.h.b16 %v19
  %v192 = vunpack.c.l.b16 %v20
  %v193 = vunpack.c.h.b16 %v20
  %v194 = vunpack.c.l.b16 %v21
  %v195 = vunpack.c.h.b16 %v21
  %v196 = vunpack.c.l.b16 %v22
  %v197 = vunpack.c.h.b16 %v22
  %v198 = vunpack.c.l.b16 %v23
  %v199 = vunpack.c.h.b16 %v23
  %v200 = vunpack.c.l.b16 %v24
  %v201 = vunpack.c.h.b16 %v24
  %v202 = vunpack.c.l.b16 %v25
  %v203 = vunpack.c.h.b16 %v25
  %v204 = vunpack.c.l.b16 %v26
  %v205 = vunpack.c.h.b16 %v26
  %v206 = vunpack.c.l.b16 %v27
  %v207 = vunpack.c.h.b16 %v27
  %v208 = vunpack.c.l.b16 %v28
  %v209 = vunpack.c.h.b16 %v28
  %v210 = vunpack.c.l.b16 %v29
  %v211 = vunpack.c.h.b16 %v29
  %v212 = vunpack.c.l.b16 %v30
  %v213 = vunpack.c.h.b16 %v30
  %v214 = vunpack.c.l.b16 %v31
  %v215 = vunpack.c.h.b16 %v31
  %v216 = vunpack.c.l.b16 %v32
  %v217 = vunpack.c.h.b16 %v32
  %v218 = vunpack.c.l.b16 %v33
  %v219 = vunpack.c.h.b16 %v33
  %v220 = vunpack.c.l.b16 %v34
  %v221 = vunpack.c.h.b16 %v34
  %v222 = vunpack.c.l.b16 %v35
  %v223 = vunpack.c.h.b16 %v35
  %v224 = vunpack.c.l.b16 %v36
  %v225 = vunpack.c.h.b16 %v36
  %v226 = vunpack.c.l.b16 %v37
  %v227 = vunpack.c.h.b16 %v37
  %v228 = vunpack.c.l.b16 %v38
  %v229 = vunpack.c.h.b16 %v38
  %v230 = vunpack.c.l.b16 %v39
  %v231 = vunpack.c.h.b16 %v39
  %v232 = vunpack.c.l.b16 %v40
  %v233 = vunpack.c.h.b16 %v40
  %v234 = vunpack.c.l.b16 %v41
  %v235 = vunpack.c.h.b16 %v41
  %v236 = vunpack.c.l.b16 %v42
  %v237 = vunpack.c.h.b16 %v42
  %v238 = vunpack.c.l.b16 %v43
  %v239 = vunpack.c.h.b16 %v43
  %v240 = vunpack.c.l.b16 %v44
  %v241 = vunpack.c.h.b16 %v44
  %v242 = vunpack.c.l.b16 %v45
  %v243 = vunpack.c.h.b16 %v45
  %v244 = vunpack.c.l.b16 %v46
  %v245 = vunpack.c.h.b16 %v46
  %v246 = vunpack.c.l.b16 %v47
  %v247 = vunpack.c.h.b16 %v47
  %v248 = vunpack.c.l.b16 %v48
  %v249 = vunpack.c.h.b16 %v48
  %v250 = vunpack.c.l.b16 %v49
  %v251 = vunpack.c.h.b16 %v49
  %v252 = vunpack.c.l.b16 %v50
  %v253 = vunpack.c.h.b16 %v50
  %v254 = vunpack.c.l.b16 %v51
  %v255 = vunpack.c.h.b16 %v51
  %v256 = vunpack.c.l.b16 %v52
  %v257 = vunpack.c.h.b16 %v52
  %v258 = vunpack.c.l.b16 %v53
  %v259 = vunpack.c.h.b16 %v53
  %v260 = vunpack.c.l.b16 %v54
  %v261 = vunpack.c.h.b16 %v54
  %v262 = vunpack.c.l.b16 %v55
  %v263 = vunpack.c.h.b16 %v55
  %v264 = vunpack.c.l.b16 %v56
  %v265 = vunpack.c.h.b16 %v56
  %v266 = vunpack.c.l.b16 %v57
  %v267 = vunpack.c.h.b16 %v57
  %v268 = vunpack.c.l.b16 %v58
  %v269 = vunpack.c.h.b16 %v58
  %v270 = vunpack.c.l.b16 %v59
  %v271 = vunpack.c.h.b16 %v59
  %v272 = vunpack.c.l.b16 %v60
  %v273 = vunpack.c.h.b16 %v60
  %v274 = vunpack.c.l.b16 %v61
  %v275 = vunpack.c.h.b16 %v61
  %v276 = vunpack.c.l.b16 %v62
  %v277 = vunpack.c.h.b16 %v62
  %v278 = vunpack.c.l.b16 %v63
  %v279 = vunpack.c.h.b16 %v63
  %v280 = vunpack.c.l.b16 %v64
  %v281 = vunpack.c.h.b16 %v64
  %v282 = vunpack.c.l.b16 %v65
  %v283 = vunpack.c.h.b16 %v65
  %v284 = vunpack.c.l.b16 %v66
  %v285 = vunpack.c.h.b16 %v66
  %v286 = vunpack.c.l.b16 %v67
  %v287 = vunpack.c.h.b16 %v67
  %v288 = vunpack.c.l.b16 %v68
  %v289 = vunpack.c.h.b16 %v68
  %v290 = vunpack.c.l.b16 %v69
  %v291 = vunpack.c.h.b16 %v69
  %v292 = vunpack.c.l.b16 %v70
  %v293 = vunpack.c.h.b16 %v70
  %v294 = vunpack.c.l.b16 %v71
  %v295 = vunpack.c.h.b16 %v71
  %v296 = vunpack.c.l.b16 %v72
  %v297 = vunpack.c.h.b16 %v72
  %v298 = vunpack.c.l.b16 %v73
  %v299 = vunpack.c.h.b16 %v73
  %v300 = vunpack.c.l.b16 %v74
  %v301 = vunpack.c.h.b16 %v74
  %v302 = vunpack.c.l.b16 %v75
  %v303 = vunpack.c.h.b16 %v75
  %v304 = vunpack.c.l.b16 %v76
  %v305 = vunpack.c.h.b16 %v76
  %v306 = vunpack.c.l.b16 %v77
  %v307 = vunpack.c.h.b16 %v77
  %v308 = vunpack.c.l.b16 %v78
  %v309 = vunpack.c.h.b16 %v78
  %v310 = vpack.c.b16 %v184, %v182
  %v311 = vpack.c.b16 %v185, %v183
  %v312 = vpack.c.b16 %v188, %v186
  %v313 = vpack.c.b16 %v189, %v187
  %v314 = vpack.c.b16 %v192, %v190
  %v315 = vpack.c.b16 %v193, %v191
  %v316 = vpack.c.b16 %v196, %v194
  %v317 = vpack.c.b16 %v197, %v195
  %v318 = vpack.c.b16 %v200, %v198
  %v319 = vpack.c.b16 %v201, %v199
  %v320 = vpack.c.b16 %v204, %v202
  %v321 = vpack.c.b16 %v205, %v203
  %v322 = vpack.c.b16 %v208, %v206
  %v323 = vpack.c.b16 %v209, %v207
  %v324 = vpack.c.b16 %v212, %v210
  %v325 = vpack.c.b16 %v213, %v211
  %v326 = vpack.c.b16 %v216, %v214
  %v327 = vpack.c.b16 %v217, %v215
  %v328 = vpack.c.b16 %v220, %v218
  %v329 = vpack.c.b16 %v221, %v219
  %v330 = vpack.c.b16 %v224, %v222
  %v331 = vpack.c.b16 %v225, %v223
  %v332 = vpack.c.b16 %v228, %v226
  %v333 = vpack.c.b16 %v229, %v227
  %v334 = vpack.c.b16 %v232, %v230
  %v335 = vpack.c.b16 %v233, %v231
  %v336 = vpack.c.b16 %v236, %v234
  %v337 = vpack.c.b16 %v237, %v235
  %v338 = vpack.c.b16 %v240, %v238
  %v339 = vpack.c.b16 %v241, %v239
  %v340 = vpack.c.b16 %v244, %v242
  %v341 = vpack.c.b16 %v245, %v243
  %v342 = vpack.c.b16 %v248, %v246
  %v343 = vpack.c.b16 %v249, %v247
  %v344 = vpack.c.b16 %v252, %v250
  %v345 = vpack.c.b16 %v253, %v251
  %v346 = vpack.c.b16 %v256, %v254
  %v347 = vpack.c.b16 %v257, %v255
  %v348 = vpack.c.b16 %v260, %v258
  %v349 = vpack.c.b16 %v261, %v259
  %v350 = vpack.c.b16 %v264, %v262
  %v351 = vpack.c.b16 %v265, %v263
  %v352 = vpack.c.b16 %v268, %v266
  %v353 = vpack.c.b16 %v269, %v267
  %v354 = vpack.c.b16 %v272, %v270
  %v355 = vpack.c.b16 %v273, %v271
  %v356 = vpack.c.b16 %v276, %v274
  %v357 = vpack.c.b16 %v277, %v275
  %v358 = vpack.c.b16 %v280, %v278
  %v359 = vpack.c.b16 %v281, %v279
  %v360 = vpack.c.b16 %v284, %v282
  %v361 = vpack.c.b16 %v285, %v283
  %v362 = vpack.c.b16 %v288, %v286
  %v363 = vpack.c.b16 %v289, %v287
  %v364 = vpack.c.b16 %v292, %v290
  %v365 = vpack.c.b16 %v293, %v291
  %v366 = vpack.c.b16 %v296, %v294
  %v367 = vpack.c.b16 %v297, %v295
  %v368 = vpack.c.b16 %v300, %v298
  %v369 = vpack.c.b16 %v301, %v299
  %v370 = vpack.c.b16 %v304, %v302
  %v371 = vpack.c.b16 %v305, %v303
  %v372 = vpack.c.b16 %v308, %v306
  %v373 = vpack.c.b16 %v309, %v307
  %v470 = vunpack.c.l.b16 %v79
  %v471 = vunpack.c.l.b16 %v80
  %v472 = vunpack.c.l.b16 %v81
  %v473 = vunpack.c.l.b16 %v82
  %v474 = vunpack.c.l.b16 %v83
  %v475 = vunpack.c.l.b16 %v84
  %v476 = vunpack.c.l.b16 %v85
  %v477 = vunpack.c.l.b16 %v86
  %v478 = vunpack.c.l.b16 %v87
  %v479 = vunpack.c.l.b16 %v88
  %v480 = vunpack.c.l.b16 %v89
  %v481 = vunpack.c.l.b16 %v90
  %v482 = vunpack.c.l.b16 %v91
  %v483 = vunpack.c.l.b16 %v92
  %v484 = vunpack.c.l.b16 %v93
  %v485 = vunpack.c.l.b16 %v94
  %v486 = vunpack.c.l.b16 %v95
  %v487 = vunpack.c.l.b16 %v96
  %v488 = vunpack.c.l.b16 %v97
  %v489 = vunpack.c.l.b16 %v98
  %v490 = vunpack.c.l.b16 %v99
  %v491 = vunpack.c.l.b16 %v100
  %v492 = vunpack.c.l.b16 %v101
  %v493 = vunpack.c.l.b16 %v102
  %v494 = vunpack.c.l.b16 %v103
  %v495 = vunpack.c.l.b16 %v104
  %v496 = vunpack.c.l.b16 %v105
  %v497 = vunpack.c.l.b16 %v106
  %v498 = vunpack.c.l.b16 %v107
  %v499 = vunpack.c.l.b16 %v108
  %v500 = vunpack.c.l.b16 %v109
  %v501 = vunpack.c.l.b16 %v110
  %v502 = vpack.c.b16 %v471, %v470
  %v503 = vpack.c.b16 %v473, %v472
  %v504 = vpack.c.b16 %v475, %v474
  %v505 = vpack.c.b16 %v477, %v476
  %v506 = vpack.c.b16 %v479, %v478
  %v507 = vpack.c.b16 %v481, %v480
  %v508 = vpack.c.b16 %v483, %v482
  %v509 = vpack.c.b16 %v485, %v484
  %v510 = vpack.c.b16 %v487, %v486
  %v511 = vpack.c.b16 %v489, %v488
  %v512 = vpack.c.b16 %v491, %v490
  %v513 = vpack.c.b16 %v493, %v492
  %v514 = vpack.c.b16 %v495, %v494
  %v515 = vpack.c.b16 %v497, %v496
  %v516 = vpack.c.b16 %v499, %v498
  %v517 = vpack.c.b16 %v501, %v500
  %534 = vmatprep.subr.bf16.mxu0 0
  %535 = vmatpush1.bf16.msra.mxu0 %v502
  %536 = vmatprep.subr.bf16.mxu0 0
  %537 = vmatpush1.bf16.msra.mxu0 %v503
  %538 = vmatprep.subr.bf16.mxu0 0
  %539 = vmatpush1.bf16.msra.mxu0 %v504
  %540 = vmatprep.subr.bf16.mxu0 0
  %541 = vmatpush1.bf16.msra.mxu0 %v505
  %542 = vmatprep.subr.bf16.mxu0 0
  %543 = vmatpush1.bf16.msra.mxu0 %v506
  %544 = vmatprep.subr.bf16.mxu0 0
  %545 = vmatpush1.bf16.msra.mxu0 %v507
  %546 = vmatprep.subr.bf16.mxu0 0
  %547 = vmatpush1.bf16.msra.mxu0 %v508
  %548 = vmatprep.subr.bf16.mxu0 0
  %549 = vmatpush1.bf16.msra.mxu0 %v509
  %550 = vmatprep.subr.bf16.mxu0 0
  %551 = vmatpush1.bf16.msra.mxu0 %v510
  %552 = vmatprep.subr.bf16.mxu0 0
  %553 = vmatpush1.bf16.msra.mxu0 %v511
  %554 = vmatprep.subr.bf16.mxu0 0
  %555 = vmatpush1.bf16.msra.mxu0 %v512
  %556 = vmatprep.subr.bf16.mxu0 0
  %557 = vmatpush1.bf16.msra.mxu0 %v513
  %558 = vmatprep.subr.bf16.mxu0 0
  %559 = vmatpush1.bf16.msra.mxu0 %v514
  %560 = vmatprep.subr.bf16.mxu0 0
  %561 = vmatpush1.bf16.msra.mxu0 %v515
  %562 = vmatprep.subr.bf16.mxu0 0
  %563 = vmatpush1.bf16.msra.mxu0 %v516
  %564 = vmatprep.subr.bf16.mxu0 0
  %565 = vmatpush1.bf16.msra.mxu0 %v517
  %566 = vmatprep.mubr.bf16.mxu0 %v311
  %567 = vmatmul.mubr.bf16.gmra.mrb[0].mxu0 %v310
  %v568 = vpop.f32.mrb[0].mxu0
  %v569 = vadd.f32 %v116, %v568
  %v570 = vpop.f32.mrb[0].mxu0
  %v571 = vpop.f32.mrb[0].mxu0
  %v572 = vadd.f32 %v116, %v571
  %v573 = vpop.f32.mrb[0].mxu0
  %574 = vmatprep.mubr.bf16.mxu0 %v313
  %575 = vmatmul.mubr.bf16.gmra.mrb[0].mxu0 %v312
  %v576 = vpop.f32.mrb[0].mxu0
  %v577 = vadd.f32 %v116, %v576
  %v578 = vpop.f32.mrb[0].mxu0
  %v579 = vpop.f32.mrb[0].mxu0
  %v580 = vadd.f32 %v116, %v579
  %v581 = vpop.f32.mrb[0].mxu0
  %582 = vmatprep.mubr.bf16.mxu0 %v315
  %583 = vmatmul.mubr.bf16.gmra.mrb[0].mxu0 %v314
  %v584 = vpop.f32.mrb[0].mxu0
  %v585 = vadd.f32 %v116, %v584
  %v586 = vpop.f32.mrb[0].mxu0
  %v587 = vpop.f32.mrb[0].mxu0
  %v588 = vadd.f32 %v116, %v587
  %v589 = vpop.f32.mrb[0].mxu0
  %590 = vmatprep.mubr.bf16.mxu0 %v317
  %591 = vmatmul.mubr.bf16.gmra.mrb[0].mxu0 %v316
  %v592 = vpop.f32.mrb[0].mxu0
  %v593 = vadd.f32 %v116, %v592
  %v594 = vpop.f32.mrb[0].mxu0
  %v595 = vpop.f32.mrb[0].mxu0
  %v596 = vadd.f32 %v116, %v595
  %v597 = vpop.f32.mrb[0].mxu0
  %598 = vmatprep.mubr.bf16.mxu0 %v319
  %599 = vmatmul.mubr.bf16.gmra.mrb[0].mxu0 %v318
  %v600 = vpop.f32.mrb[0].mxu0
  %v601 = vadd.f32 %v116, %v600
  %v602 = vpop.f32.mrb[0].mxu0
  %v603 = vpop.f32.mrb[0].mxu0
  %v604 = vadd.f32 %v116, %v603
  %v605 = vpop.f32.mrb[0].mxu0
  %606 = vmatprep.mubr.bf16.mxu0 %v321
  %607 = vmatmul.mubr.bf16.gmra.mrb[0].mxu0 %v320
  %v608 = vpop.f32.mrb[0].mxu0
  %v609 = vadd.f32 %v116, %v608
  %v610 = vpop.f32.mrb[0].mxu0
  %v611 = vpop.f32.mrb[0].mxu0
  %v612 = vadd.f32 %v116, %v611
  %v613 = vpop.f32.mrb[0].mxu0
  %614 = vmatprep.mubr.bf16.mxu0 %v323
  %615 = vmatmul.mubr.bf16.gmra.mrb[0].mxu0 %v322
  %v616 = vpop.f32.mrb[0].mxu0
  %v617 = vadd.f32 %v116, %v616
  %v618 = vpop.f32.mrb[0].mxu0
  %v619 = vpop.f32.mrb[0].mxu0
  %v620 = vadd.f32 %v116, %v619
  %v621 = vpop.f32.mrb[0].mxu0
  %622 = vmatprep.mubr.bf16.mxu0 %v325
  %623 = vmatmul.mubr.bf16.gmra.mrb[0].mxu0 %v324
  %v624 = vpop.f32.mrb[0].mxu0
  %v625 = vadd.f32 %v116, %v624
  %v626 = vpop.f32.mrb[0].mxu0
  %v627 = vpop.f32.mrb[0].mxu0
  %v628 = vadd.f32 %v116, %v627
  %v629 = vpop.f32.mrb[0].mxu0
  %630 = vmatprep.mubr.bf16.mxu0 %v327
  %631 = vmatmul.mubr.bf16.gmra.mrb[0].mxu0 %v326
  %v632 = vpop.f32.mrb[0].mxu0
  %v633 = vadd.f32 %v116, %v632
  %v634 = vpop.f32.mrb[0].mxu0
  %v635 = vpop.f32.mrb[0].mxu0
  %v636 = vadd.f32 %v116, %v635
  %v637 = vpop.f32.mrb[0].mxu0
  %638 = vmatprep.mubr.bf16.mxu0 %v329
  %639 = vmatmul.mubr.bf16.gmra.mrb[0].mxu0 %v328
  %v640 = vpop.f32.mrb[0].mxu0
  %v641 = vadd.f32 %v116, %v640
  %v642 = vpop.f32.mrb[0].mxu0
  %v643 = vpop.f32.mrb[0].mxu0
  %v644 = vadd.f32 %v116, %v643
  %v645 = vpop.f32.mrb[0].mxu0
  %646 = vmatprep.mubr.bf16.mxu0 %v331
  %647 = vmatmul.mubr.bf16.gmra.mrb[0].mxu0 %v330
  %v648 = vpop.f32.mrb[0].mxu0
  %v649 = vadd.f32 %v116, %v648
  %v650 = vpop.f32.mrb[0].mxu0
  %v651 = vpop.f32.mrb[0].mxu0
  %v652 = vadd.f32 %v116, %v651
  %v653 = vpop.f32.mrb[0].mxu0
  %654 = vmatprep.mubr.bf16.mxu0 %v333
  %655 = vmatmul.mubr.bf16.gmra.mrb[0].mxu0 %v332
  %v656 = vpop.f32.mrb[0].mxu0
  %v657 = vadd.f32 %v116, %v656
  %v658 = vpop.f32.mrb[0].mxu0
  %v659 = vpop.f32.mrb[0].mxu0
  %v660 = vadd.f32 %v116, %v659
  %v661 = vpop.f32.mrb[0].mxu0
  %662 = vmatprep.mubr.bf16.mxu0 %v335
  %663 = vmatmul.mubr.bf16.gmra.mrb[0].mxu0 %v334
  %v664 = vpop.f32.mrb[0].mxu0
  %v665 = vadd.f32 %v116, %v664
  %v666 = vpop.f32.mrb[0].mxu0
  %v667 = vpop.f32.mrb[0].mxu0
  %v668 = vadd.f32 %v116, %v667
  %v669 = vpop.f32.mrb[0].mxu0
  %670 = vmatprep.mubr.bf16.mxu0 %v337
  %671 = vmatmul.mubr.bf16.gmra.mrb[0].mxu0 %v336
  %v672 = vpop.f32.mrb[0].mxu0
  %v673 = vadd.f32 %v116, %v672
  %v674 = vpop.f32.mrb[0].mxu0
  %v675 = vpop.f32.mrb[0].mxu0
  %v676 = vadd.f32 %v116, %v675
  %v677 = vpop.f32.mrb[0].mxu0
  %678 = vmatprep.mubr.bf16.mxu0 %v339
  %679 = vmatmul.mubr.bf16.gmra.mrb[0].mxu0 %v338
  %v680 = vpop.f32.mrb[0].mxu0
  %v681 = vadd.f32 %v116, %v680
  %v682 = vpop.f32.mrb[0].mxu0
  %v683 = vpop.f32.mrb[0].mxu0
  %v684 = vadd.f32 %v116, %v683
  %v685 = vpop.f32.mrb[0].mxu0
  %686 = vmatprep.mubr.bf16.mxu0 %v341
  %687 = vmatmul.mubr.bf16.gmra.mrb[0].mxu0 %v340
  %v688 = vpop.f32.mrb[0].mxu0
  %v689 = vadd.f32 %v116, %v688
  %v690 = vpop.f32.mrb[0].mxu0
  %v691 = vpop.f32.mrb[0].mxu0
  %v692 = vadd.f32 %v116, %v691
  %v693 = vpop.f32.mrb[0].mxu0
  %694 = vmatprep.mubr.bf16.mxu0 %v343
  %695 = vmatmul.mubr.bf16.gmra.mrb[0].mxu0 %v342
  %v696 = vpop.f32.mrb[0].mxu0
  %v697 = vadd.f32 %v116, %v696
  %v698 = vpop.f32.mrb[0].mxu0
  %v699 = vpop.f32.mrb[0].mxu0
  %v700 = vadd.f32 %v116, %v699
  %v701 = vpop.f32.mrb[0].mxu0
  %702 = vmatprep.mubr.bf16.mxu0 %v345
  %703 = vmatmul.mubr.bf16.gmra.mrb[0].mxu0 %v344
  %v704 = vpop.f32.mrb[0].mxu0
  %v705 = vadd.f32 %v116, %v704
  %v706 = vpop.f32.mrb[0].mxu0
  %v707 = vpop.f32.mrb[0].mxu0
  %v708 = vadd.f32 %v116, %v707
  %v709 = vpop.f32.mrb[0].mxu0
  %710 = vmatprep.mubr.bf16.mxu0 %v347
  %711 = vmatmul.mubr.bf16.gmra.mrb[0].mxu0 %v346
  %v712 = vpop.f32.mrb[0].mxu0
  %v713 = vadd.f32 %v116, %v712
  %v714 = vpop.f32.mrb[0].mxu0
  %v715 = vpop.f32.mrb[0].mxu0
  %v716 = vadd.f32 %v116, %v715
  %v717 = vpop.f32.mrb[0].mxu0
  %718 = vmatprep.mubr.bf16.mxu0 %v349
  %719 = vmatmul.mubr.bf16.gmra.mrb[0].mxu0 %v348
  %v720 = vpop.f32.mrb[0].mxu0
  %v721 = vadd.f32 %v116, %v720
  %v722 = vpop.f32.mrb[0].mxu0
  %v723 = vpop.f32.mrb[0].mxu0
  %v724 = vadd.f32 %v116, %v723
  %v725 = vpop.f32.mrb[0].mxu0
  %726 = vmatprep.mubr.bf16.mxu0 %v351
  %727 = vmatmul.mubr.bf16.gmra.mrb[0].mxu0 %v350
  %v728 = vpop.f32.mrb[0].mxu0
  %v729 = vadd.f32 %v116, %v728
  %v730 = vpop.f32.mrb[0].mxu0
  %v731 = vpop.f32.mrb[0].mxu0
  %v732 = vadd.f32 %v116, %v731
  %v733 = vpop.f32.mrb[0].mxu0
  %734 = vmatprep.mubr.bf16.mxu0 %v353
  %735 = vmatmul.mubr.bf16.gmra.mrb[0].mxu0 %v352
  %v736 = vpop.f32.mrb[0].mxu0
  %v737 = vadd.f32 %v116, %v736
  %v738 = vpop.f32.mrb[0].mxu0
  %v739 = vpop.f32.mrb[0].mxu0
  %v740 = vadd.f32 %v116, %v739
  %v741 = vpop.f32.mrb[0].mxu0
  %742 = vmatprep.mubr.bf16.mxu0 %v355
  %743 = vmatmul.mubr.bf16.gmra.mrb[0].mxu0 %v354
  %v744 = vpop.f32.mrb[0].mxu0
  %v745 = vadd.f32 %v116, %v744
  %v746 = vpop.f32.mrb[0].mxu0
  %v747 = vpop.f32.mrb[0].mxu0
  %v748 = vadd.f32 %v116, %v747
  %v749 = vpop.f32.mrb[0].mxu0
  %750 = vmatprep.mubr.bf16.mxu0 %v357
  %751 = vmatmul.mubr.bf16.gmra.mrb[0].mxu0 %v356
  %v752 = vpop.f32.mrb[0].mxu0
  %v753 = vadd.f32 %v116, %v752
  %v754 = vpop.f32.mrb[0].mxu0
  %v755 = vpop.f32.mrb[0].mxu0
  %v756 = vadd.f32 %v116, %v755
  %v757 = vpop.f32.mrb[0].mxu0
  %758 = vmatprep.mubr.bf16.mxu0 %v359
  %759 = vmatmul.mubr.bf16.gmra.mrb[0].mxu0 %v358
  %v760 = vpop.f32.mrb[0].mxu0
  %v761 = vadd.f32 %v116, %v760
  %v762 = vpop.f32.mrb[0].mxu0
  %v763 = vpop.f32.mrb[0].mxu0
  %v764 = vadd.f32 %v116, %v763
  %v765 = vpop.f32.mrb[0].mxu0
  %766 = vmatprep.mubr.bf16.mxu0 %v361
  %767 = vmatmul.mubr.bf16.gmra.mrb[0].mxu0 %v360
  %v768 = vpop.f32.mrb[0].mxu0
  %v769 = vadd.f32 %v116, %v768
  %v770 = vpop.f32.mrb[0].mxu0
  %v771 = vpop.f32.mrb[0].mxu0
  %v772 = vadd.f32 %v116, %v771
  %v773 = vpop.f32.mrb[0].mxu0
  %774 = vmatprep.mubr.bf16.mxu0 %v363
  %775 = vmatmul.mubr.bf16.gmra.mrb[0].mxu0 %v362
  %v776 = vpop.f32.mrb[0].mxu0
  %v777 = vadd.f32 %v116, %v776
  %v778 = vpop.f32.mrb[0].mxu0
  %v779 = vpop.f32.mrb[0].mxu0
  %v780 = vadd.f32 %v116, %v779
  %v781 = vpop.f32.mrb[0].mxu0
  %782 = vmatprep.mubr.bf16.mxu0 %v365
  %783 = vmatmul.mubr.bf16.gmra.mrb[0].mxu0 %v364
  %v784 = vpop.f32.mrb[0].mxu0
  %v785 = vadd.f32 %v116, %v784
  %v786 = vpop.f32.mrb[0].mxu0
  %v787 = vpop.f32.mrb[0].mxu0
  %v788 = vadd.f32 %v116, %v787
  %v789 = vpop.f32.mrb[0].mxu0
  %790 = vmatprep.mubr.bf16.mxu0 %v367
  %791 = vmatmul.mubr.bf16.gmra.mrb[0].mxu0 %v366
  %v792 = vpop.f32.mrb[0].mxu0
  %v793 = vadd.f32 %v116, %v792
  %v794 = vpop.f32.mrb[0].mxu0
  %v795 = vpop.f32.mrb[0].mxu0
  %v796 = vadd.f32 %v116, %v795
  %v797 = vpop.f32.mrb[0].mxu0
  %798 = vmatprep.mubr.bf16.mxu0 %v369
  %799 = vmatmul.mubr.bf16.gmra.mrb[0].mxu0 %v368
  %v800 = vpop.f32.mrb[0].mxu0
  %v801 = vadd.f32 %v116, %v800
  %v802 = vpop.f32.mrb[0].mxu0
  %v803 = vpop.f32.mrb[0].mxu0
  %v804 = vadd.f32 %v116, %v803
  %v805 = vpop.f32.mrb[0].mxu0
  %806 = vmatprep.mubr.bf16.mxu0 %v371
  %807 = vmatmul.mubr.bf16.gmra.mrb[0].mxu0 %v370
  %v808 = vpop.f32.mrb[0].mxu0
  %v809 = vadd.f32 %v116, %v808
  %v810 = vpop.f32.mrb[0].mxu0
  %v811 = vpop.f32.mrb[0].mxu0
  %v812 = vadd.f32 %v116, %v811
  %v813 = vpop.f32.mrb[0].mxu0
  %814 = vmatprep.mubr.bf16.mxu0 %v373
  %815 = vmatmul.mubr.bf16.gmra.mrb[0].mxu0 %v372
  %v816 = vpop.f32.mrb[0].mxu0
  %v817 = vadd.f32 %v116, %v816
  %v818 = vpop.f32.mrb[0].mxu0
  %v819 = vpop.f32.mrb[0].mxu0
  %v820 = vadd.f32 %v116, %v819
  %v821 = vpop.f32.mrb[0].mxu0
  %822 = vdwg.mxu0
  %vm823 = vcmp.ge.f32.partialorder %v569, 0.0
  %vm824 = vcmp.ge.f32.partialorder %v572, 0.0
  %vm825 = vcmp.ge.f32.partialorder %v577, 0.0
  %vm826 = vcmp.ge.f32.partialorder %v580, 0.0
  %vm827 = vcmp.ge.f32.partialorder %v585, 0.0
  %vm828 = vcmp.ge.f32.partialorder %v588, 0.0
  %vm829 = vcmp.ge.f32.partialorder %v593, 0.0
  %vm830 = vcmp.ge.f32.partialorder %v596, 0.0
  %vm831 = vcmp.ge.f32.partialorder %v601, 0.0
  %vm832 = vcmp.ge.f32.partialorder %v604, 0.0
  %vm833 = vcmp.ge.f32.partialorder %v609, 0.0
  %vm834 = vcmp.ge.f32.partialorder %v612, 0.0
  %vm835 = vcmp.ge.f32.partialorder %v617, 0.0
  %vm836 = vcmp.ge.f32.partialorder %v620, 0.0
  %vm837 = vcmp.ge.f32.partialorder %v625, 0.0
  %vm838 = vcmp.ge.f32.partialorder %v628, 0.0
  %vm839 = vcmp.ge.f32.partialorder %v633, 0.0
  %vm840 = vcmp.ge.f32.partialorder %v636, 0.0
  %vm841 = vcmp.ge.f32.partialorder %v641, 0.0
  %vm842 = vcmp.ge.f32.partialorder %v644, 0.0
  %vm843 = vcmp.ge.f32.partialorder %v649, 0.0
  %vm844 = vcmp.ge.f32.partialorder %v652, 0.0
  %vm845 = vcmp.ge.f32.partialorder %v657, 0.0
  %vm846 = vcmp.ge.f32.partialorder %v660, 0.0
  %vm847 = vcmp.ge.f32.partialorder %v665, 0.0
  %vm848 = vcmp.ge.f32.partialorder %v668, 0.0
  %vm849 = vcmp.ge.f32.partialorder %v673, 0.0
  %vm850 = vcmp.ge.f32.partialorder %v676, 0.0
  %vm851 = vcmp.ge.f32.partialorder %v681, 0.0
  %vm852 = vcmp.ge.f32.partialorder %v684, 0.0
  %vm853 = vcmp.ge.f32.partialorder %v689, 0.0
  %vm854 = vcmp.ge.f32.partialorder %v692, 0.0
  %vm855 = vcmp.ge.f32.partialorder %v697, 0.0
  %vm856 = vcmp.ge.f32.partialorder %v700, 0.0
  %vm857 = vcmp.ge.f32.partialorder %v705, 0.0
  %vm858 = vcmp.ge.f32.partialorder %v708, 0.0
  %vm859 = vcmp.ge.f32.partialorder %v713, 0.0
  %vm860 = vcmp.ge.f32.partialorder %v716, 0.0
  %vm861 = vcmp.ge.f32.partialorder %v721, 0.0
  %vm862 = vcmp.ge.f32.partialorder %v724, 0.0
  %vm863 = vcmp.ge.f32.partialorder %v729, 0.0
  %vm864 = vcmp.ge.f32.partialorder %v732, 0.0
  %vm865 = vcmp.ge.f32.partialorder %v737, 0.0
  %vm866 = vcmp.ge.f32.partialorder %v740, 0.0
  %vm867 = vcmp.ge.f32.partialorder %v745, 0.0
  %vm868 = vcmp.ge.f32.partialorder %v748, 0.0
  %vm869 = vcmp.ge.f32.partialorder %v753, 0.0
  %vm870 = vcmp.ge.f32.partialorder %v756, 0.0
  %vm871 = vcmp.ge.f32.partialorder %v761, 0.0
  %vm872 = vcmp.ge.f32.partialorder %v764, 0.0
  %vm873 = vcmp.ge.f32.partialorder %v769, 0.0
  %vm874 = vcmp.ge.f32.partialorder %v772, 0.0
  %vm875 = vcmp.ge.f32.partialorder %v777, 0.0
  %vm876 = vcmp.ge.f32.partialorder %v780, 0.0
  %vm877 = vcmp.ge.f32.partialorder %v785, 0.0
  %vm878 = vcmp.ge.f32.partialorder %v788, 0.0
  %vm879 = vcmp.ge.f32.partialorder %v793, 0.0
  %vm880 = vcmp.ge.f32.partialorder %v796, 0.0
  %vm881 = vcmp.ge.f32.partialorder %v801, 0.0
  %vm882 = vcmp.ge.f32.partialorder %v804, 0.0
  %vm883 = vcmp.ge.f32.partialorder %v809, 0.0
  %vm884 = vcmp.ge.f32.partialorder %v812, 0.0
  %vm885 = vcmp.ge.f32.partialorder %v817, 0.0
  %vm886 = vcmp.ge.f32.partialorder %v820, 0.0
  %v887 = vmul.f32 %v569, 0.2
  %v888 = vmul.f32 %v572, 0.2
  %v889 = vmul.f32 %v577, 0.2
  %v890 = vmul.f32 %v580, 0.2
  %v891 = vmul.f32 %v585, 0.2
  %v892 = vmul.f32 %v588, 0.2
  %v893 = vmul.f32 %v593, 0.2
  %v894 = vmul.f32 %v596, 0.2
  %v895 = vmul.f32 %v601, 0.2
  %v896 = vmul.f32 %v604, 0.2
  %v897 = vmul.f32 %v609, 0.2
  %v898 = vmul.f32 %v612, 0.2
  %v899 = vmul.f32 %v617, 0.2
  %v900 = vmul.f32 %v620, 0.2
  %v901 = vmul.f32 %v625, 0.2
  %v902 = vmul.f32 %v628, 0.2
  %v903 = vmul.f32 %v633, 0.2
  %v904 = vmul.f32 %v636, 0.2
  %v905 = vmul.f32 %v641, 0.2
  %v906 = vmul.f32 %v644, 0.2
  %v907 = vmul.f32 %v649, 0.2
  %v908 = vmul.f32 %v652, 0.2
  %v909 = vmul.f32 %v657, 0.2
  %v910 = vmul.f32 %v660, 0.2
  %v911 = vmul.f32 %v665, 0.2
  %v912 = vmul.f32 %v668, 0.2
  %v913 = vmul.f32 %v673, 0.2
  %v914 = vmul.f32 %v676, 0.2
  %v915 = vmul.f32 %v681, 0.2
  %v916 = vmul.f32 %v684, 0.2
  %v917 = vmul.f32 %v689, 0.2
  %v918 = vmul.f32 %v692, 0.2
  %v919 = vmul.f32 %v697, 0.2
  %v920 = vmul.f32 %v700, 0.2
  %v921 = vmul.f32 %v705, 0.2
  %v922 = vmul.f32 %v708, 0.2
  %v923 = vmul.f32 %v713, 0.2
  %v924 = vmul.f32 %v716, 0.2
  %v925 = vmul.f32 %v721, 0.2
  %v926 = vmul.f32 %v724, 0.2
  %v927 = vmul.f32 %v729, 0.2
  %v928 = vmul.f32 %v732, 0.2
  %v929 = vmul.f32 %v737, 0.2
  %v930 = vmul.f32 %v740, 0.2
  %v931 = vmul.f32 %v745, 0.2
  %v932 = vmul.f32 %v748, 0.2
  %v933 = vmul.f32 %v753, 0.2
  %v934 = vmul.f32 %v756, 0.2
  %v935 = vmul.f32 %v761, 0.2
  %v936 = vmul.f32 %v764, 0.2
  %v937 = vmul.f32 %v769, 0.2
  %v938 = vmul.f32 %v772, 0.2
  %v939 = vmul.f32 %v777, 0.2
  %v940 = vmul.f32 %v780, 0.2
  %v941 = vmul.f32 %v785, 0.2
  %v942 = vmul.f32 %v788, 0.2
  %v943 = vmul.f32 %v793, 0.2
  %v944 = vmul.f32 %v796, 0.2
  %v945 = vmul.f32 %v801, 0.2
  %v946 = vmul.f32 %v804, 0.2
  %v947 = vmul.f32 %v809, 0.2
  %v948 = vmul.f32 %v812, 0.2
  %v949 = vmul.f32 %v817, 0.2
  %v950 = vmul.f32 %v820, 0.2
  %v951 = vsel %vm823, %v569, %v887
  %v952 = vsel %vm824, %v572, %v888
  %v953 = vsel %vm825, %v577, %v889
  %v954 = vsel %vm826, %v580, %v890
  %v955 = vsel %vm827, %v585, %v891
  %v956 = vsel %vm828, %v588, %v892
  %v957 = vsel %vm829, %v593, %v893
  %v958 = vsel %vm830, %v596, %v894
  %v959 = vsel %vm831, %v601, %v895
  %v960 = vsel %vm832, %v604, %v896
  %v961 = vsel %vm833, %v609, %v897
  %v962 = vsel %vm834, %v612, %v898
  %v963 = vsel %vm835, %v617, %v899
  %v964 = vsel %vm836, %v620, %v900
  %v965 = vsel %vm837, %v625, %v901
  %v966 = vsel %vm838, %v628, %v902
  %v967 = vsel %vm839, %v633, %v903
  %v968 = vsel %vm840, %v636, %v904
  %v969 = vsel %vm841, %v641, %v905
  %v970 = vsel %vm842, %v644, %v906
  %v971 = vsel %vm843, %v649, %v907
  %v972 = vsel %vm844, %v652, %v908
  %v973 = vsel %vm845, %v657, %v909
  %v974 = vsel %vm846, %v660, %v910
  %v975 = vsel %vm847, %v665, %v911
  %v976 = vsel %vm848, %v668, %v912
  %v977 = vsel %vm849, %v673, %v913
  %v978 = vsel %vm850, %v676, %v914
  %v979 = vsel %vm851, %v681, %v915
  %v980 = vsel %vm852, %v684, %v916
  %v981 = vsel %vm853, %v689, %v917
  %v982 = vsel %vm854, %v692, %v918
  %v983 = vsel %vm855, %v697, %v919
  %v984 = vsel %vm856, %v700, %v920
  %v985 = vsel %vm857, %v705, %v921
  %v986 = vsel %vm858, %v708, %v922
  %v987 = vsel %vm859, %v713, %v923
  %v988 = vsel %vm860, %v716, %v924
  %v989 = vsel %vm861, %v721, %v925
  %v990 = vsel %vm862, %v724, %v926
  %v991 = vsel %vm863, %v729, %v927
  %v992 = vsel %vm864, %v732, %v928
  %v993 = vsel %vm865, %v737, %v929
  %v994 = vsel %vm866, %v740, %v930
  %v995 = vsel %vm867, %v745, %v931
  %v996 = vsel %vm868, %v748, %v932
  %v997 = vsel %vm869, %v753, %v933
  %v998 = vsel %vm870, %v756, %v934
  %v999 = vsel %vm871, %v761, %v935
  %v1000 = vsel %vm872, %v764, %v936
  %v1001 = vsel %vm873, %v769, %v937
  %v1002 = vsel %vm874, %v772, %v938
  %v1003 = vsel %vm875, %v777, %v939
  %v1004 = vsel %vm876, %v780, %v940
  %v1005 = vsel %vm877, %v785, %v941
  %v1006 = vsel %vm878, %v788, %v942
  %v1007 = vsel %vm879, %v793, %v943
  %v1008 = vsel %vm880, %v796, %v944
  %v1009 = vsel %vm881, %v801, %v945
  %v1010 = vsel %vm882, %v804, %v946
  %v1011 = vsel %vm883, %v809, %v947
  %v1012 = vsel %vm884, %v812, %v948
  %v1013 = vsel %vm885, %v817, %v949
  %v1014 = vsel %vm886, %v820, %v950
  %v1015 = vpack.c.bf16 %v952, %v951
  %v1016 = vpack.c.bf16 %v954, %v953
  %v1017 = vpack.c.bf16 %v956, %v955
  %v1018 = vpack.c.bf16 %v958, %v957
  %v1019 = vpack.c.bf16 %v960, %v959
  %v1020 = vpack.c.bf16 %v962, %v961
  %v1021 = vpack.c.bf16 %v964, %v963
  %v1022 = vpack.c.bf16 %v966, %v965
  %v1023 = vpack.c.bf16 %v968, %v967
  %v1024 = vpack.c.bf16 %v970, %v969
  %v1025 = vpack.c.bf16 %v972, %v971
  %v1026 = vpack.c.bf16 %v974, %v973
  %v1027 = vpack.c.bf16 %v976, %v975
  %v1028 = vpack.c.bf16 %v978, %v977
  %v1029 = vpack.c.bf16 %v980, %v979
  %v1030 = vpack.c.bf16 %v982, %v981
  %v1031 = vpack.c.bf16 %v984, %v983
  %v1032 = vpack.c.bf16 %v986, %v985
  %v1033 = vpack.c.bf16 %v988, %v987
  %v1034 = vpack.c.bf16 %v990, %v989
  %v1035 = vpack.c.bf16 %v992, %v991
  %v1036 = vpack.c.bf16 %v994, %v993
  %v1037 = vpack.c.bf16 %v996, %v995
  %v1038 = vpack.c.bf16 %v998, %v997
  %v1039 = vpack.c.bf16 %v1000, %v999
  %v1040 = vpack.c.bf16 %v1002, %v1001
  %v1041 = vpack.c.bf16 %v1004, %v1003
  %v1042 = vpack.c.bf16 %v1006, %v1005
  %v1043 = vpack.c.bf16 %v1008, %v1007
  %v1044 = vpack.c.bf16 %v1010, %v1009
  %v1045 = vpack.c.bf16 %v1012, %v1011
  %v1046 = vpack.c.bf16 %v1014, %v1013
  %v1079 = vunpack.c.l.b16 %v1015
  %v1080 = vunpack.c.h.b16 %v1015
  %v1081 = vunpack.c.l.b16 %v1016
  %v1082 = vunpack.c.h.b16 %v1016
  %v1083 = vunpack.c.l.b16 %v1017
  %v1084 = vunpack.c.h.b16 %v1017
  %v1085 = vunpack.c.l.b16 %v1018
  %v1086 = vunpack.c.h.b16 %v1018
  %v1087 = vunpack.c.l.b16 %v1019
  %v1088 = vunpack.c.h.b16 %v1019
  %v1089 = vunpack.c.l.b16 %v1020
  %v1090 = vunpack.c.h.b16 %v1020
  %v1091 = vunpack.c.l.b16 %v1021
  %v1092 = vunpack.c.h.b16 %v1021
  %v1093 = vunpack.c.l.b16 %v1022
  %v1094 = vunpack.c.h.b16 %v1022
  %v1095 = vunpack.c.l.b16 %v1023
  %v1096 = vunpack.c.h.b16 %v1023
  %v1097 = vunpack.c.l.b16 %v1024
  %v1098 = vunpack.c.h.b16 %v1024
  %v1099 = vunpack.c.l.b16 %v1025
  %v1100 = vunpack.c.h.b16 %v1025
  %v1101 = vunpack.c.l.b16 %v1026
  %v1102 = vunpack.c.h.b16 %v1026
  %v1103 = vunpack.c.l.b16 %v1027
  %v1104 = vunpack.c.h.b16 %v1027
  %v1105 = vunpack.c.l.b16 %v1028
  %v1106 = vunpack.c.h.b16 %v1028
  %v1107 = vunpack.c.l.b16 %v1029
  %v1108 = vunpack.c.h.b16 %v1029
  %v1109 = vunpack.c.l.b16 %v1030
  %v1110 = vunpack.c.h.b16 %v1030
  %v1111 = vunpack.c.l.b16 %v1031
  %v1112 = vunpack.c.h.b16 %v1031
  %v1113 = vunpack.c.l.b16 %v1032
  %v1114 = vunpack.c.h.b16 %v1032
  %v1115 = vunpack.c.l.b16 %v1033
  %v1116 = vunpack.c.h.b16 %v1033
  %v1117 = vunpack.c.l.b16 %v1034
  %v1118 = vunpack.c.h.b16 %v1034
  %v1119 = vunpack.c.l.b16 %v1035
  %v1120 = vunpack.c.h.b16 %v1035
  %v1121 = vunpack.c.l.b16 %v1036
  %v1122 = vunpack.c.h.b16 %v1036
  %v1123 = vunpack.c.l.b16 %v1037
  %v1124 = vunpack.c.h.b16 %v1037
  %v1125 = vunpack.c.l.b16 %v1038
  %v1126 = vunpack.c.h.b16 %v1038
  %v1127 = vunpack.c.l.b16 %v1039
  %v1128 = vunpack.c.h.b16 %v1039
  %v1129 = vunpack.c.l.b16 %v1040
  %v1130 = vunpack.c.h.b16 %v1040
  %v1131 = vunpack.c.l.b16 %v1041
  %v1132 = vunpack.c.h.b16 %v1041
  %v1133 = vunpack.c.l.b16 %v1042
  %v1134 = vunpack.c.h.b16 %v1042
  %v1135 = vunpack.c.l.b16 %v1043
  %v1136 = vunpack.c.h.b16 %v1043
  %v1137 = vunpack.c.l.b16 %v1044
  %v1138 = vunpack.c.h.b16 %v1044
  %v1139 = vunpack.c.l.b16 %v1045
  %v1140 = vunpack.c.h.b16 %v1045
  %v1141 = vunpack.c.l.b16 %v1046
  %v1142 = vunpack.c.h.b16 %v1046
  %v1143 = vpack.c.b16 %v1079, %v1079
  %v1144 = vpack.c.b16 %v1080, %v1080
  %v1145 = vpack.c.b16 %v1081, %v1081
  %v1146 = vpack.c.b16 %v1082, %v1082
  %v1147 = vpack.c.b16 %v1083, %v1083
  %v1148 = vpack.c.b16 %v1084, %v1084
  %v1149 = vpack.c.b16 %v1085, %v1085
  %v1150 = vpack.c.b16 %v1086, %v1086
  %v1151 = vpack.c.b16 %v1087, %v1087
  %v1152 = vpack.c.b16 %v1088, %v1088
  %v1153 = vpack.c.b16 %v1089, %v1089
  %v1154 = vpack.c.b16 %v1090, %v1090
  %v1155 = vpack.c.b16 %v1091, %v1091
  %v1156 = vpack.c.b16 %v1092, %v1092
  %v1157 = vpack.c.b16 %v1093, %v1093
  %v1158 = vpack.c.b16 %v1094, %v1094
  %v1159 = vpack.c.b16 %v1095, %v1095
  %v1160 = vpack.c.b16 %v1096, %v1096
  %v1161 = vpack.c.b16 %v1097, %v1097
  %v1162 = vpack.c.b16 %v1098, %v1098
  %v1163 = vpack.c.b16 %v1099, %v1099
  %v1164 = vpack.c.b16 %v1100, %v1100
  %v1165 = vpack.c.b16 %v1101, %v1101
  %v1166 = vpack.c.b16 %v1102, %v1102
  %v1167 = vpack.c.b16 %v1103, %v1103
  %v1168 = vpack.c.b16 %v1104, %v1104
  %v1169 = vpack.c.b16 %v1105, %v1105
  %v1170 = vpack.c.b16 %v1106, %v1106
  %v1171 = vpack.c.b16 %v1107, %v1107
  %v1172 = vpack.c.b16 %v1108, %v1108
  %v1173 = vpack.c.b16 %v1109, %v1109
  %v1174 = vpack.c.b16 %v1110, %v1110
  %v1175 = vpack.c.b16 %v1111, %v1111
  %v1176 = vpack.c.b16 %v1112, %v1112
  %v1177 = vpack.c.b16 %v1113, %v1113
  %v1178 = vpack.c.b16 %v1114, %v1114
  %v1179 = vpack.c.b16 %v1115, %v1115
  %v1180 = vpack.c.b16 %v1116, %v1116
  %v1181 = vpack.c.b16 %v1117, %v1117
  %v1182 = vpack.c.b16 %v1118, %v1118
  %v1183 = vpack.c.b16 %v1119, %v1119
  %v1184 = vpack.c.b16 %v1120, %v1120
  %v1185 = vpack.c.b16 %v1121, %v1121
  %v1186 = vpack.c.b16 %v1122, %v1122
  %v1187 = vpack.c.b16 %v1123, %v1123
  %v1188 = vpack.c.b16 %v1124, %v1124
  %v1189 = vpack.c.b16 %v1125, %v1125
  %v1190 = vpack.c.b16 %v1126, %v1126
  %v1191 = vpack.c.b16 %v1127, %v1127
  %v1192 = vpack.c.b16 %v1128, %v1128
  %v1193 = vpack.c.b16 %v1129, %v1129
  %v1194 = vpack.c.b16 %v1130, %v1130
  %v1195 = vpack.c.b16 %v1131, %v1131
  %v1196 = vpack.c.b16 %v1132, %v1132
  %v1197 = vpack.c.b16 %v1133, %v1133
  %v1198 = vpack.c.b16 %v1134, %v1134
  %v1199 = vpack.c.b16 %v1135, %v1135
  %v1200 = vpack.c.b16 %v1136, %v1136
  %v1201 = vpack.c.b16 %v1137, %v1137
  %v1202 = vpack.c.b16 %v1138, %v1138
  %v1203 = vpack.c.b16 %v1139, %v1139
  %v1204 = vpack.c.b16 %v1140, %v1140
  %v1205 = vpack.c.b16 %v1141, %v1141
  %v1206 = vpack.c.b16 %v1142, %v1142
  %1271 = vst [vmem:[%s3] sm:$0xf] %v1143
  %1272 = vst [vmem:[%s3 + $0x4] sm:$0xf] %v1144
  %1273 = vst [vmem:[%s3 + $0x8] sm:$0xf] %v1145
  %1274 = vst [vmem:[%s3 + $0xc] sm:$0xf] %v1146
  %1275 = vst [vmem:[%s3 + $0x10] sm:$0xf] %v1147
  %1276 = vst [vmem:[%s3 + $0x14] sm:$0xf] %v1148
  %1277 = vst [vmem:[%s3 + $0x18] sm:$0xf] %v1149
  %1278 = vst [vmem:[%s3 + $0x1c] sm:$0xf] %v1150
  %1279 = vst [vmem:[%s3 + $0x20] sm:$0xf] %v1151
  %1280 = vst [vmem:[%s3 + $0x24] sm:$0xf] %v1152
  %1281 = vst [vmem:[%s3 + $0x28] sm:$0xf] %v1153
  %1282 = vst [vmem:[%s3 + $0x2c] sm:$0xf] %v1154
  %1283 = vst [vmem:[%s3 + $0x30] sm:$0xf] %v1155
  %1284 = vst [vmem:[%s3 + $0x34] sm:$0xf] %v1156
  %1285 = vst [vmem:[%s3 + $0x38] sm:$0xf] %v1157
  %1286 = vst [vmem:[%s3 + $0x3c] sm:$0xf] %v1158
  %1287 = vst [vmem:[%s3 + $0x40] sm:$0xf] %v1159
  %1288 = vst [vmem:[%s3 + $0x44] sm:$0xf] %v1160
  %1289 = vst [vmem:[%s3 + $0x48] sm:$0xf] %v1161
  %1290 = vst [vmem:[%s3 + $0x4c] sm:$0xf] %v1162
  %1291 = vst [vmem:[%s3 + $0x50] sm:$0xf] %v1163
  %1292 = vst [vmem:[%s3 + $0x54] sm:$0xf] %v1164
  %1293 = vst [vmem:[%s3 + $0x58] sm:$0xf] %v1165
  %1294 = vst [vmem:[%s3 + $0x5c] sm:$0xf] %v1166
  %1295 = vst [vmem:[%s3 + $0x60] sm:$0xf] %v1167
  %1296 = vst [vmem:[%s3 + $0x64] sm:$0xf] %v1168
  %1297 = vst [vmem:[%s3 + $0x68] sm:$0xf] %v1169
  %1298 = vst [vmem:[%s3 + $0x6c] sm:$0xf] %v1170
  %1299 = vst [vmem:[%s3 + $0x70] sm:$0xf] %v1171
  %1300 = vst [vmem:[%s3 + $0x74] sm:$0xf] %v1172
  %1301 = vst [vmem:[%s3 + $0x78] sm:$0xf] %v1173
  %1302 = vst [vmem:[%s3 + $0x7c] sm:$0xf] %v1174
  %1303 = vst [vmem:[%s3 + $0x80] sm:$0xf] %v1175
  %1304 = vst [vmem:[%s3 + $0x84] sm:$0xf] %v1176
  %1305 = vst [vmem:[%s3 + $0x88] sm:$0xf] %v1177
  %1306 = vst [vmem:[%s3 + $0x8c] sm:$0xf] %v1178
  %1307 = vst [vmem:[%s3 + $0x90] sm:$0xf] %v1179
  %1308 = vst [vmem:[%s3 + $0x94] sm:$0xf] %v1180
  %1309 = vst [vmem:[%s3 + $0x98] sm:$0xf] %v1181
  %1310 = vst [vmem:[%s3 + $0x9c] sm:$0xf] %v1182
  %1311 = vst [vmem:[%s3 + $0xa0] sm:$0xf] %v1183
  %1312 = vst [vmem:[%s3 + $0xa4] sm:$0xf] %v1184
  %1313 = vst [vmem:[%s3 + $0xa8] sm:$0xf] %v1185
  %1314 = vst [vmem:[%s3 + $0xac] sm:$0xf] %v1186
  %1315 = vst [vmem:[%s3 + $0xb0] sm:$0xf] %v1187
  %1316 = vst [vmem:[%s3 + $0xb4] sm:$0xf] %v1188
  %1317 = vst [vmem:[%s3 + $0xb8] sm:$0xf] %v1189
  %1318 = vst [vmem:[%s3 + $0xbc] sm:$0xf] %v1190
  %1319 = vst [vmem:[%s3 + $0xc0] sm:$0xf] %v1191
  %1320 = vst [vmem:[%s3 + $0xc4] sm:$0xf] %v1192
  %1321 = vst [vmem:[%s3 + $0xc8] sm:$0xf] %v1193
  %1322 = vst [vmem:[%s3 + $0xcc] sm:$0xf] %v1194
  %1323 = vst [vmem:[%s3 + $0xd0] sm:$0xf] %v1195
  %1324 = vst [vmem:[%s3 + $0xd4] sm:$0xf] %v1196
  %1325 = vst [vmem:[%s3 + $0xd8] sm:$0xf] %v1197
  %1326 = vst [vmem:[%s3 + $0xdc] sm:$0xf] %v1198
  %1327 = vst [vmem:[%s3 + $0xe0] sm:$0xf] %v1199
  %1328 = vst [vmem:[%s3 + $0xe4] sm:$0xf] %v1200
  %1329 = vst [vmem:[%s3 + $0xe8] sm:$0xf] %v1201
  %1330 = vst [vmem:[%s3 + $0xec] sm:$0xf] %v1202
  %1331 = vst [vmem:[%s3 + $0xf0] sm:$0xf] %v1203
  %1332 = vst [vmem:[%s3 + $0xf4] sm:$0xf] %v1204
  %1333 = vst [vmem:[%s3 + $0xf8] sm:$0xf] %v1205
  %1334 = vst [vmem:[%s3 + $0xfc] sm:$0xf] %v1206
  // Predicated region
  $region14: #{codegan_discriminator_forward.5} parent=0 // pred_check
    _
  $region15: #{codegan_discriminator_forward.5} parent=0 // pred_check_branch
    %1336 = sbr.rel (0) target = $region17
  $region16: #{codegan_discriminator_forward.5} parent=0 // pred_region
    _
  $region17: #{codegan_discriminator_forward.5} parent=0 // pred_fallthru
    _
  // Predicated region
  $region18: #{codegan_discriminator_forward.5} parent=0 // pred_check
    _
  $region19: #{codegan_discriminator_forward.5} parent=0 // pred_check_branch
    %1338 = sbr.rel (0) target = $region21
  $region20: #{codegan_discriminator_forward.5} parent=0 // pred_region
    _
  $region21: #{codegan_discriminator_forward.5} parent=0 // pred_fallthru
    _

</llo_original>
